<compile_context>
chip_gen: v7x
topology: tpu7x:2x2x1
jax: 0.10.0
libtpu: 0.0.40
codegen_flags: <defaults>
</compile_context>

<pallas_src>
import functools

import jax
import jax.numpy as jnp
from jax.experimental import pallas as pl
from jax.experimental.pallas import tpu as pltpu


def lstm_fc_kernel(xp_ref,    # (Tc, Bblk, 4H)  matmul dtype : x @ W_ih^T + b
                   whh_ref,   # (H, 4H)         matmul dtype : W_hh^T (i,f,g,o)
                   wfc_ref,   # (H, Opad)       f32          : W_fc^T, lane padded
                   bfc_ref,   # (1, Opad)       f32
                   out_ref,   # (Bblk, Opad)    f32
                   h_ref,     # scratch (Bblk, H) f32
                   c_ref,     # scratch (Bblk, H) f32
                   *, unroll_chunk: bool):
    t = pl.program_id(1)

    @pl.when(t == 0)
    def _init():
        # torch default: h0 = c0 = 0, re-init at the start of each batch block
        h_ref[...] = jnp.zeros_like(h_ref)
        c_ref[...] = jnp.zeros_like(c_ref)

    H = h_ref.shape[-1]
    t_chunk = xp_ref.shape[0]
    mm_dtype = whh_ref.dtype
    whh = whh_ref[...]                      # VMEM resident across the chunk

    def cell_step(x_pre, h, c):
        # x_pre is the precomputed (Bblk, 4H) pre-activation; only h @ W_hh
        # sits on the serialized critical path.  Gate math stays f32.
        gates = x_pre + jnp.dot(h.astype(mm_dtype), whh,
                                preferred_element_type=jnp.float32)
        if_g = jax.nn.sigmoid(gates[:, 0:2 * H])   # one wide EUP push (i & f)
        i_g = if_g[:, 0:H]
        f_g = if_g[:, H:2 * H]
        g_g = jnp.tanh(gates[:, 2 * H:3 * H])
        o_g = jax.nn.sigmoid(gates[:, 3 * H:4 * H])
        c_new = f_g * c + i_g * g_g
        h_new = o_g * jnp.tanh(c_new)
        return h_new, c_new

    if unroll_chunk:
        # Small batch block (<= 128 rows): carry h/c as values across the
        # statically unrolled chunk; one scratch load/store per chunk.
        h = h_ref[...]
        c = c_ref[...]
        for s in range(t_chunk):
            h, c = cell_step(xp_ref[s], h, c)
        h_ref[...] = h
        c_ref[...] = c
    else:
        # Large batch block: value-carried h/c would exhaust the register
        # file, so stream state through VMEM scratch each step (the vld/vst
        # hides under the recurrent matmul, spills would not).
        def body(s, carry):
            h, c = cell_step(xp_ref[s], h_ref[...], c_ref[...])
            h_ref[...] = h
            c_ref[...] = c
            return carry

        jax.lax.fori_loop(0, t_chunk, body, 0)

    @pl.when(t == pl.num_programs(1) - 1)
    def _finalize():
        # fc(hidden.squeeze(0)) fused into the last time chunk, lane-dense store
        out_ref[...] = (jnp.dot(h_ref[...], wfc_ref[...],
                                preferred_element_type=jnp.float32)
                        + bfc_ref[...])


def _device_kind():
    try:
        return jax.devices()[0].device_kind.lower()
    except Exception:
        return ""


def _largest_divisor_leq(n, cap):
    cap = max(1, min(n, cap))
    for d in range(cap, 0, -1):
        if n % d == 0:
            return d
    return 1


@functools.partial(
    jax.jit,
    static_argnames=("b_block", "t_chunk", "matmul_dtype", "carry_in_regs"))
def sentence_classifier_forward(x, params, *, b_block=None, t_chunk=None,
                                matmul_dtype=jnp.bfloat16, carry_in_regs=None):
    """x: (batch, seq) int32 token ids -> (batch, output_dim) f32 logits."""
    emb_table = params["embedding"]          # (V, E)
    w_ih_t = params["w_ih_t"]                # (E, 4H)
    w_hh_t = params["w_hh_t"]                # (H, 4H)
    b_gates = params["b_gates"]              # (1, 4H)  (= b_ih + b_hh)
    w_fc_t = params["w_fc_t"]                # (H, O)
    b_fc = params["b_fc"]                    # (1, O)

    B, S = x.shape
    H = w_hh_t.shape[0]
    O = w_fc_t.shape[1]

    # ---- per-generation tiling / VMEM defaults -----------------------------
    kind = _device_kind()
    dual_core = "v7" in kind
    if dual_core:
        vmem_limit = 48 * 1024 * 1024        # v7x: 64 MiB physical per TC
    elif ("v5" in kind) or ("v6" in kind):
        vmem_limit = 100 * 1024 * 1024       # v5e/v6e: 128 MiB physical
    else:
        vmem_limit = 48 * 1024 * 1024        # conservative fallback

    if b_block is None:
        if dual_core and B % 2 == 0 and B // 2 >= 128:
            # feed both TensorCores with >=128-row MXU tiles
            b_block = _largest_divisor_leq(B, min(B // 2, 256))
        else:
            # single TC: do not split the batch unless B > 256
            b_block = _largest_divisor_leq(B, 256)
        if b_block % 8 != 0 and b_block != B:
            b_block = B                      # keep sublane-aligned blocks

    if carry_in_regs is None:
        carry_in_regs = b_block <= 128       # vreg budget for value-carried h/c

    if t_chunk is None:
        t_chunk = _largest_divisor_leq(S, 32)
        itemsize = jnp.dtype(matmul_dtype).itemsize
        # keep the double-buffered xp tile comfortably inside the VMEM budget
        while (2 * t_chunk * b_block * 4 * H * itemsize > vmem_limit // 2
               and t_chunk % 2 == 0 and t_chunk > 1):
            t_chunk //= 2

    assert B % b_block == 0, "b_block must divide batch"
    assert S % t_chunk == 0, "t_chunk must divide seq"

    # ---- glue: gather + hoisted input projection (time-major, no transpose
    # of the big activation tensor: gather is done on x.T directly) ----------
    embedded = jnp.take(emb_table, x.T, axis=0)                # (S, B, E)
    x_proj = (embedded @ w_ih_t + b_gates).astype(matmul_dtype)  # (S, B, 4H)
    w_hh_mm = w_hh_t.astype(matmul_dtype)                      # (H, 4H)

    # Lane-pad the tiny FC so the kernel's output store is lane-dense.
    o_pad = ((O + 127) // 128) * 128
    w_fc_p = jnp.pad(w_fc_t, ((0, 0), (0, o_pad - O)))
    b_fc_p = jnp.pad(b_fc, ((0, 0), (0, o_pad - O)))

    grid = (B // b_block, S // t_chunk)
    kernel = functools.partial(lstm_fc_kernel, unroll_chunk=carry_in_regs)
    out = pl.pallas_call(
        kernel,
        out_shape=jax.ShapeDtypeStruct((B, o_pad), jnp.float32),
        grid_spec=pltpu.PrefetchScalarGridSpec(
            num_scalar_prefetch=0,
            grid=grid,
            in_specs=[
                pl.BlockSpec((t_chunk, b_block, 4 * H), lambda b, t: (t, b, 0)),
                pl.BlockSpec((H, 4 * H), lambda b, t: (0, 0)),
                pl.BlockSpec((H, o_pad), lambda b, t: (0, 0)),
                pl.BlockSpec((1, o_pad), lambda b, t: (0, 0)),
            ],
            out_specs=pl.BlockSpec((b_block, o_pad), lambda b, t: (b, 0)),
            scratch_shapes=[
                pltpu.VMEM((b_block, H), jnp.float32),   # h state
                pltpu.VMEM((b_block, H), jnp.float32),   # c state
            ],
        ),
        compiler_params=pltpu.CompilerParams(
            dimension_semantics=("parallel", "arbitrary"),
            vmem_limit_bytes=vmem_limit,
        ),
    )(x_proj, w_hh_mm, w_fc_p, b_fc_p)
    return out[:, :O]


def init_params(key, vocab_size, embedding_dim, hidden_dim, output_dim):
    k = jax.random.split(key, 7)
    scale = 0.1
    emb = scale * jax.random.normal(k[0], (vocab_size, embedding_dim), jnp.float32)
    w_ih = scale * jax.random.normal(k[1], (4 * hidden_dim, embedding_dim), jnp.float32)
    w_hh = scale * jax.random.normal(k[2], (4 * hidden_dim, hidden_dim), jnp.float32)
    b_ih = scale * jax.random.normal(k[3], (4 * hidden_dim,), jnp.float32)
    b_hh = scale * jax.random.normal(k[4], (4 * hidden_dim,), jnp.float32)
    w_fc = scale * jax.random.normal(k[5], (output_dim, hidden_dim), jnp.float32)
    b_fc = scale * jax.random.normal(k[6], (output_dim,), jnp.float32)
    return {
        "embedding": emb,
        "w_ih_t": w_ih.T,                    # (E, 4H)
        "w_hh_t": w_hh.T,                    # (H, 4H)
        "b_gates": (b_ih + b_hh)[None, :],   # (1, 4H)
        "w_fc_t": w_fc.T,                    # (H, O)
        "b_fc": b_fc[None, :],               # (1, O)
    }


def reference_forward(x, params, matmul_dtype=jnp.float32):
    """Pure-JAX reference replicating torch.nn.LSTM semantics (f32 state,
    optional reduced-precision matmul operands to mirror the kernel)."""
    emb = jnp.take(params["embedding"], x, axis=0)      # (B, S, E)
    B, S, _ = emb.shape
    H = params["w_hh_t"].shape[0]
    xp = (emb @ params["w_ih_t"] + params["b_gates"]).astype(matmul_dtype)
    whh = params["w_hh_t"].astype(matmul_dtype)
    h = jnp.zeros((B, H), jnp.float32)
    c = jnp.zeros((B, H), jnp.float32)
    for t in range(S):
        gates = xp[:, t, :] + jnp.dot(h.astype(matmul_dtype), whh,
                                      preferred_element_type=jnp.float32)
        i = jax.nn.sigmoid(gates[:, 0 * H:1 * H])
        f = jax.nn.sigmoid(gates[:, 1 * H:2 * H])
        g = jnp.tanh(gates[:, 2 * H:3 * H])
        o = jax.nn.sigmoid(gates[:, 3 * H:4 * H])
        c = f * c + i * g
        h = o * jnp.tanh(c)
    return h @ params["w_fc_t"] + params["b_fc"]


if __name__ == "__main__":
    # Small, lane-friendly demo shapes: H=128 -> gate slices on lane
    # boundaries; B=16, S=32.
    vocab_size, embedding_dim, hidden_dim, output_dim = 50, 64, 128, 4
    batch, seq = 16, 32

    key = jax.random.PRNGKey(0)
    k_param, k_x = jax.random.split(key)
    params = init_params(k_param, vocab_size, embedding_dim, hidden_dim, output_dim)
    x = jax.random.randint(k_x, (batch, seq), 0, vocab_size, dtype=jnp.int32)

    # 1) f32 matmul operands, default (single-tile) tiling: exact parity with
    #    the torch-style f32 reference.
    out_f32 = jax.block_until_ready(
        sentence_classifier_forward(x, params, matmul_dtype=jnp.float32))
    ref_f32 = reference_forward(x, params, matmul_dtype=jnp.float32)
    assert out_f32.shape == (batch, output_dim)
    assert jnp.allclose(out_f32, ref_f32, rtol=1e-4, atol=1e-4), "f32 mismatch"

    # 2) default perf path: bf16 matmul operands, multi-chunk grid (2 batch
    #    blocks x 4 time chunks) and the scratch-carried (fori_loop) state path.
    out_bf16 = jax.block_until_ready(
        sentence_classifier_forward(x, params, b_block=8, t_chunk=8,
                                    carry_in_regs=False))
    ref_bf16 = reference_forward(x, params, matmul_dtype=jnp.bfloat16)
    assert jnp.allclose(out_bf16, ref_bf16, rtol=2e-2, atol=2e-2), "bf16 mismatch"
    assert jnp.allclose(out_bf16, ref_f32, rtol=1e-1, atol=1e-1), "bf16 drift vs f32"

    print("KERNEL_OK")
</pallas_src>

<mosaic_0001>
module attributes {stable_mosaic.version = 11 : i64} {
  func.func @lstm_fc_kernel(%arg0: i32, %arg1: i32, %arg2: memref<32x16x512xf32, #tpu.memory_space<vmem>>, %arg3: memref<128x512xf32, #tpu.memory_space<vmem>>, %arg4: memref<128x128xf32, #tpu.memory_space<vmem>>, %arg5: memref<1x128xf32, #tpu.memory_space<vmem>>, %arg6: memref<16x128xf32, #tpu.memory_space<vmem>>, %arg7: memref<16x128xf32, #tpu.memory_space<vmem>>, %arg8: memref<16x128xf32, #tpu.memory_space<vmem>>) attributes {dimension_semantics = [#tpu.dimension_semantics<parallel>, #tpu.dimension_semantics<arbitrary>], iteration_bounds = array<i64: 1, 1>, scalar_prefetch = 0 : i64, scratch_operands = 2 : i64, tpu.core_type = #tpu.core_type<tc>, window_params = [{transform_indices = @transform_0, window_bounds = array<i64: 32, 16, 512>}, {pipeline_mode = #tpu.pipeline_mode<synchronous>, transform_indices = @transform_1, window_bounds = array<i64: 128, 512>}, {pipeline_mode = #tpu.pipeline_mode<synchronous>, transform_indices = @transform_2, window_bounds = array<i64: 128, 128>}, {pipeline_mode = #tpu.pipeline_mode<synchronous>, transform_indices = @transform_3, window_bounds = array<i64: 1, 128>}, {transform_indices = @transform_4, window_bounds = array<i64: 16, 128>}]} {
    %c0_i32 = arith.constant 0 : i32
    %0 = arith.cmpi eq, %arg1, %c0_i32 : i32
    %1 = arith.extui %0 : i1 to i32
    %c0_i32_0 = arith.constant 0 : i32
    %2 = arith.cmpi ne, %1, %c0_i32_0 : i32
    scf.if %2 {
      %cst_172 = arith.constant 0.000000e+00 : f32
      %811 = vector.broadcast %cst_172 : f32 to vector<16x128xf32>
      %c0_173 = arith.constant 0 : index
      %c0_174 = arith.constant 0 : index
      %812 = vector.load %arg7[%c0_173, %c0_174] : memref<16x128xf32, #tpu.memory_space<vmem>>, vector<16x128xf32>
      tpu.vector_store %arg7[%c0_173, %c0_174], %811 {strides = array<i32>} : memref<16x128xf32, #tpu.memory_space<vmem>>, vector<16x128xf32>,
      %cst_175 = arith.constant 0.000000e+00 : f32
      %813 = vector.broadcast %cst_175 : f32 to vector<16x128xf32>
      %c0_176 = arith.constant 0 : index
      %c0_177 = arith.constant 0 : index
      %814 = vector.load %arg8[%c0_176, %c0_177] : memref<16x128xf32, #tpu.memory_space<vmem>>, vector<16x128xf32>
      tpu.vector_store %arg8[%c0_176, %c0_177], %813 {strides = array<i32>} : memref<16x128xf32, #tpu.memory_space<vmem>>, vector<16x128xf32>,
    } else {
    }
    %c0 = arith.constant 0 : index
    %c0_1 = arith.constant 0 : index
    %3 = vector.load %arg3[%c0, %c0_1] : memref<128x512xf32, #tpu.memory_space<vmem>>, vector<128x512xf32>
    %c0_2 = arith.constant 0 : index
    %c0_3 = arith.constant 0 : index
    %4 = vector.load %arg7[%c0_2, %c0_3] : memref<16x128xf32, #tpu.memory_space<vmem>>, vector<16x128xf32>
    %c0_4 = arith.constant 0 : index
    %c0_5 = arith.constant 0 : index
    %5 = vector.load %arg8[%c0_4, %c0_5] : memref<16x128xf32, #tpu.memory_space<vmem>>, vector<16x128xf32>
    %c0_6 = arith.constant 0 : index
    %c0_7 = arith.constant 0 : index
    %c0_8 = arith.constant 0 : index
    %6 = vector.load %arg2[%c0_6, %c0_7, %c0_8] : memref<32x16x512xf32, #tpu.memory_space<vmem>>, vector<1x16x512xf32>
    %7 = vector.shape_cast %6 : vector<1x16x512xf32> to vector<16x512xf32>
    %cst = arith.constant dense<0.000000e+00> : vector<16x512xf32>
    %8 = tpu.matmul %4, %3, %cst {dimension_numbers = #tpu.dot_dimension_numbers<[1], [0], [0], [1], [0, 0, 1, 1], [], []>} : vector<16x128xf32>, vector<128x512xf32>, vector<16x512xf32> -> vector<16x512xf32>
    %9 = arith.addf %7, %8 : vector<16x512xf32>
    %10 = vector.extract_strided_slice %9 {offsets = [0, 0], sizes = [16, 256], strides = [1, 1]} : vector<16x512xf32> to vector<16x256xf32>
    %11 = arith.negf %10 : vector<16x256xf32>
    %12 = math.exp %11 : vector<16x256xf32>
    %cst_9 = arith.constant 1.000000e+00 : f32
    %13 = vector.broadcast %cst_9 : f32 to vector<16x256xf32>
    %14 = arith.addf %13, %12 : vector<16x256xf32>
    %15 = arith.divf %13, %14 : vector<16x256xf32>
    %16 = vector.extract_strided_slice %15 {offsets = [0, 0], sizes = [16, 128], strides = [1, 1]} : vector<16x256xf32> to vector<16x128xf32>
    %17 = vector.extract_strided_slice %15 {offsets = [0, 128], sizes = [16, 128], strides = [1, 1]} : vector<16x256xf32> to vector<16x128xf32>
    %18 = vector.extract_strided_slice %9 {offsets = [0, 256], sizes = [16, 128], strides = [1, 1]} : vector<16x512xf32> to vector<16x128xf32>
    %19 = math.tanh %18 : vector<16x128xf32>
    %20 = vector.extract_strided_slice %9 {offsets = [0, 384], sizes = [16, 128], strides = [1, 1]} : vector<16x512xf32> to vector<16x128xf32>
    %21 = arith.negf %20 : vector<16x128xf32>
    %22 = math.exp %21 : vector<16x128xf32>
    %cst_10 = arith.constant 1.000000e+00 : f32
    %23 = vector.broadcast %cst_10 : f32 to vector<16x128xf32>
    %24 = arith.addf %23, %22 : vector<16x128xf32>
    %25 = arith.divf %23, %24 : vector<16x128xf32>
    %26 = arith.mulf %17, %5 : vector<16x128xf32>
    %27 = arith.mulf %16, %19 : vector<16x128xf32>
    %28 = arith.addf %26, %27 : vector<16x128xf32>
    %29 = math.tanh %28 : vector<16x128xf32>
    %30 = arith.mulf %25, %29 : vector<16x128xf32>
    %c1 = arith.constant 1 : index
    %c0_11 = arith.constant 0 : index
    %c0_12 = arith.constant 0 : index
    %31 = vector.load %arg2[%c1, %c0_11, %c0_12] : memref<32x16x512xf32, #tpu.memory_space<vmem>>, vector<1x16x512xf32>
    %32 = vector.shape_cast %31 : vector<1x16x512xf32> to vector<16x512xf32>
    %cst_13 = arith.constant dense<0.000000e+00> : vector<16x512xf32>
    %33 = tpu.matmul %30, %3, %cst_13 {dimension_numbers = #tpu.dot_dimension_numbers<[1], [0], [0], [1], [0, 0, 1, 1], [], []>} : vector<16x128xf32>, vector<128x512xf32>, vector<16x512xf32> -> vector<16x512xf32>
    %34 = arith.addf %32, %33 : vector<16x512xf32>
    %35 = vector.extract_strided_slice %34 {offsets = [0, 0], sizes = [16, 256], strides = [1, 1]} : vector<16x512xf32> to vector<16x256xf32>
    %36 = arith.negf %35 : vector<16x256xf32>
    %37 = math.exp %36 : vector<16x256xf32>
    %cst_14 = arith.constant 1.000000e+00 : f32
    %38 = vector.broadcast %cst_14 : f32 to vector<16x256xf32>
    %39 = arith.addf %38, %37 : vector<16x256xf32>
    %40 = arith.divf %38, %39 : vector<16x256xf32>
    %41 = vector.extract_strided_slice %40 {offsets = [0, 0], sizes = [16, 128], strides = [1, 1]} : vector<16x256xf32> to vector<16x128xf32>
    %42 = vector.extract_strided_slice %40 {offsets = [0, 128], sizes = [16, 128], strides = [1, 1]} : vector<16x256xf32> to vector<16x128xf32>
    %43 = vector.extract_strided_slice %34 {offsets = [0, 256], sizes = [16, 128], strides = [1, 1]} : vector<16x512xf32> to vector<16x128xf32>
    %44 = math.tanh %43 : vector<16x128xf32>
    %45 = vector.extract_strided_slice %34 {offsets = [0, 384], sizes = [16, 128], strides = [1, 1]} : vector<16x512xf32> to vector<16x128xf32>
    %46 = arith.negf %45 : vector<16x128xf32>
    %47 = math.exp %46 : vector<16x128xf32>
    %cst_15 = arith.constant 1.000000e+00 : f32
    %48 = vector.broadcast %cst_15 : f32 to vector<16x128xf32>
    %49 = arith.addf %48, %47 : vector<16x128xf32>
    %50 = arith.divf %48, %49 : vector<16x128xf32>
    %51 = arith.mulf %42, %28 : vector<16x128xf32>
    %52 = arith.mulf %41, %44 : vector<16x128xf32>
    %53 = arith.addf %51, %52 : vector<16x128xf32>
    %54 = math.tanh %53 : vector<16x128xf32>
    %55 = arith.mulf %50, %54 : vector<16x128xf32>
    %c2 = arith.constant 2 : index
    %c0_16 = arith.constant 0 : index
    %c0_17 = arith.constant 0 : index
    %56 = vector.load %arg2[%c2, %c0_16, %c0_17] : memref<32x16x512xf32, #tpu.memory_space<vmem>>, vector<1x16x512xf32>
    %57 = vector.shape_cast %56 : vector<1x16x512xf32> to vector<16x512xf32>
    %cst_18 = arith.constant dense<0.000000e+00> : vector<16x512xf32>
    %58 = tpu.matmul %55, %3, %cst_18 {dimension_numbers = #tpu.dot_dimension_numbers<[1], [0], [0], [1], [0, 0, 1, 1], [], []>} : vector<16x128xf32>, vector<128x512xf32>, vector<16x512xf32> -> vector<16x512xf32>
    %59 = arith.addf %57, %58 : vector<16x512xf32>
    %60 = vector.extract_strided_slice %59 {offsets = [0, 0], sizes = [16, 256], strides = [1, 1]} : vector<16x512xf32> to vector<16x256xf32>
    %61 = arith.negf %60 : vector<16x256xf32>
    %62 = math.exp %61 : vector<16x256xf32>
    %cst_19 = arith.constant 1.000000e+00 : f32
    %63 = vector.broadcast %cst_19 : f32 to vector<16x256xf32>
    %64 = arith.addf %63, %62 : vector<16x256xf32>
    %65 = arith.divf %63, %64 : vector<16x256xf32>
    %66 = vector.extract_strided_slice %65 {offsets = [0, 0], sizes = [16, 128], strides = [1, 1]} : vector<16x256xf32> to vector<16x128xf32>
    %67 = vector.extract_strided_slice %65 {offsets = [0, 128], sizes = [16, 128], strides = [1, 1]} : vector<16x256xf32> to vector<16x128xf32>
    %68 = vector.extract_strided_slice %59 {offsets = [0, 256], sizes = [16, 128], strides = [1, 1]} : vector<16x512xf32> to vector<16x128xf32>
    %69 = math.tanh %68 : vector<16x128xf32>
    %70 = vector.extract_strided_slice %59 {offsets = [0, 384], sizes = [16, 128], strides = [1, 1]} : vector<16x512xf32> to vector<16x128xf32>
    %71 = arith.negf %70 : vector<16x128xf32>
    %72 = math.exp %71 : vector<16x128xf32>
    %cst_20 = arith.constant 1.000000e+00 : f32
    %73 = vector.broadcast %cst_20 : f32 to vector<16x128xf32>
    %74 = arith.addf %73, %72 : vector<16x128xf32>
    %75 = arith.divf %73, %74 : vector<16x128xf32>
    %76 = arith.mulf %67, %53 : vector<16x128xf32>
    %77 = arith.mulf %66, %69 : vector<16x128xf32>
    %78 = arith.addf %76, %77 : vector<16x128xf32>
    %79 = math.tanh %78 : vector<16x128xf32>
    %80 = arith.mulf %75, %79 : vector<16x128xf32>
    %c3 = arith.constant 3 : index
    %c0_21 = arith.constant 0 : index
    %c0_22 = arith.constant 0 : index
    %81 = vector.load %arg2[%c3, %c0_21, %c0_22] : memref<32x16x512xf32, #tpu.memory_space<vmem>>, vector<1x16x512xf32>
    %82 = vector.shape_cast %81 : vector<1x16x512xf32> to vector<16x512xf32>
    %cst_23 = arith.constant dense<0.000000e+00> : vector<16x512xf32>
    %83 = tpu.matmul %80, %3, %cst_23 {dimension_numbers = #tpu.dot_dimension_numbers<[1], [0], [0], [1], [0, 0, 1, 1], [], []>} : vector<16x128xf32>, vector<128x512xf32>, vector<16x512xf32> -> vector<16x512xf32>
    %84 = arith.addf %82, %83 : vector<16x512xf32>
    %85 = vector.extract_strided_slice %84 {offsets = [0, 0], sizes = [16, 256], strides = [1, 1]} : vector<16x512xf32> to vector<16x256xf32>
    %86 = arith.negf %85 : vector<16x256xf32>
    %87 = math.exp %86 : vector<16x256xf32>
    %cst_24 = arith.constant 1.000000e+00 : f32
    %88 = vector.broadcast %cst_24 : f32 to vector<16x256xf32>
    %89 = arith.addf %88, %87 : vector<16x256xf32>
    %90 = arith.divf %88, %89 : vector<16x256xf32>
    %91 = vector.extract_strided_slice %90 {offsets = [0, 0], sizes = [16, 128], strides = [1, 1]} : vector<16x256xf32> to vector<16x128xf32>
    %92 = vector.extract_strided_slice %90 {offsets = [0, 128], sizes = [16, 128], strides = [1, 1]} : vector<16x256xf32> to vector<16x128xf32>
    %93 = vector.extract_strided_slice %84 {offsets = [0, 256], sizes = [16, 128], strides = [1, 1]} : vector<16x512xf32> to vector<16x128xf32>
    %94 = math.tanh %93 : vector<16x128xf32>
    %95 = vector.extract_strided_slice %84 {offsets = [0, 384], sizes = [16, 128], strides = [1, 1]} : vector<16x512xf32> to vector<16x128xf32>
    %96 = arith.negf %95 : vector<16x128xf32>
    %97 = math.exp %96 : vector<16x128xf32>
    %cst_25 = arith.constant 1.000000e+00 : f32
    %98 = vector.broadcast %cst_25 : f32 to vector<16x128xf32>
    %99 = arith.addf %98, %97 : vector<16x128xf32>
    %100 = arith.divf %98, %99 : vector<16x128xf32>
    %101 = arith.mulf %92, %78 : vector<16x128xf32>
    %102 = arith.mulf %91, %94 : vector<16x128xf32>
    %103 = arith.addf %101, %102 : vector<16x128xf32>
    %104 = math.tanh %103 : vector<16x128xf32>
    %105 = arith.mulf %100, %104 : vector<16x128xf32>
    %c4 = arith.constant 4 : index
    %c0_26 = arith.constant 0 : index
    %c0_27 = arith.constant 0 : index
    %106 = vector.load %arg2[%c4, %c0_26, %c0_27] : memref<32x16x512xf32, #tpu.memory_space<vmem>>, vector<1x16x512xf32>
    %107 = vector.shape_cast %106 : vector<1x16x512xf32> to vector<16x512xf32>
    %cst_28 = arith.constant dense<0.000000e+00> : vector<16x512xf32>
    %108 = tpu.matmul %105, %3, %cst_28 {dimension_numbers = #tpu.dot_dimension_numbers<[1], [0], [0], [1], [0, 0, 1, 1], [], []>} : vector<16x128xf32>, vector<128x512xf32>, vector<16x512xf32> -> vector<16x512xf32>
    %109 = arith.addf %107, %108 : vector<16x512xf32>
    %110 = vector.extract_strided_slice %109 {offsets = [0, 0], sizes = [16, 256], strides = [1, 1]} : vector<16x512xf32> to vector<16x256xf32>
    %111 = arith.negf %110 : vector<16x256xf32>
    %112 = math.exp %111 : vector<16x256xf32>
    %cst_29 = arith.constant 1.000000e+00 : f32
    %113 = vector.broadcast %cst_29 : f32 to vector<16x256xf32>
    %114 = arith.addf %113, %112 : vector<16x256xf32>
    %115 = arith.divf %113, %114 : vector<16x256xf32>
    %116 = vector.extract_strided_slice %115 {offsets = [0, 0], sizes = [16, 128], strides = [1, 1]} : vector<16x256xf32> to vector<16x128xf32>
    %117 = vector.extract_strided_slice %115 {offsets = [0, 128], sizes = [16, 128], strides = [1, 1]} : vector<16x256xf32> to vector<16x128xf32>
    %118 = vector.extract_strided_slice %109 {offsets = [0, 256], sizes = [16, 128], strides = [1, 1]} : vector<16x512xf32> to vector<16x128xf32>
    %119 = math.tanh %118 : vector<16x128xf32>
    %120 = vector.extract_strided_slice %109 {offsets = [0, 384], sizes = [16, 128], strides = [1, 1]} : vector<16x512xf32> to vector<16x128xf32>
    %121 = arith.negf %120 : vector<16x128xf32>
    %122 = math.exp %121 : vector<16x128xf32>
    %cst_30 = arith.constant 1.000000e+00 : f32
    %123 = vector.broadcast %cst_30 : f32 to vector<16x128xf32>
    %124 = arith.addf %123, %122 : vector<16x128xf32>
    %125 = arith.divf %123, %124 : vector<16x128xf32>
    %126 = arith.mulf %117, %103 : vector<16x128xf32>
    %127 = arith.mulf %116, %119 : vector<16x128xf32>
    %128 = arith.addf %126, %127 : vector<16x128xf32>
    %129 = math.tanh %128 : vector<16x128xf32>
    %130 = arith.mulf %125, %129 : vector<16x128xf32>
    %c5 = arith.constant 5 : index
    %c0_31 = arith.constant 0 : index
    %c0_32 = arith.constant 0 : index
    %131 = vector.load %arg2[%c5, %c0_31, %c0_32] : memref<32x16x512xf32, #tpu.memory_space<vmem>>, vector<1x16x512xf32>
    %132 = vector.shape_cast %131 : vector<1x16x512xf32> to vector<16x512xf32>
    %cst_33 = arith.constant dense<0.000000e+00> : vector<16x512xf32>
    %133 = tpu.matmul %130, %3, %cst_33 {dimension_numbers = #tpu.dot_dimension_numbers<[1], [0], [0], [1], [0, 0, 1, 1], [], []>} : vector<16x128xf32>, vector<128x512xf32>, vector<16x512xf32> -> vector<16x512xf32>
    %134 = arith.addf %132, %133 : vector<16x512xf32>
    %135 = vector.extract_strided_slice %134 {offsets = [0, 0], sizes = [16, 256], strides = [1, 1]} : vector<16x512xf32> to vector<16x256xf32>
    %136 = arith.negf %135 : vector<16x256xf32>
    %137 = math.exp %136 : vector<16x256xf32>
    %cst_34 = arith.constant 1.000000e+00 : f32
    %138 = vector.broadcast %cst_34 : f32 to vector<16x256xf32>
    %139 = arith.addf %138, %137 : vector<16x256xf32>
    %140 = arith.divf %138, %139 : vector<16x256xf32>
    %141 = vector.extract_strided_slice %140 {offsets = [0, 0], sizes = [16, 128], strides = [1, 1]} : vector<16x256xf32> to vector<16x128xf32>
    %142 = vector.extract_strided_slice %140 {offsets = [0, 128], sizes = [16, 128], strides = [1, 1]} : vector<16x256xf32> to vector<16x128xf32>
    %143 = vector.extract_strided_slice %134 {offsets = [0, 256], sizes = [16, 128], strides = [1, 1]} : vector<16x512xf32> to vector<16x128xf32>
    %144 = math.tanh %143 : vector<16x128xf32>
    %145 = vector.extract_strided_slice %134 {offsets = [0, 384], sizes = [16, 128], strides = [1, 1]} : vector<16x512xf32> to vector<16x128xf32>
    %146 = arith.negf %145 : vector<16x128xf32>
    %147 = math.exp %146 : vector<16x128xf32>
    %cst_35 = arith.constant 1.000000e+00 : f32
    %148 = vector.broadcast %cst_35 : f32 to vector<16x128xf32>
    %149 = arith.addf %148, %147 : vector<16x128xf32>
    %150 = arith.divf %148, %149 : vector<16x128xf32>
    %151 = arith.mulf %142, %128 : vector<16x128xf32>
    %152 = arith.mulf %141, %144 : vector<16x128xf32>
    %153 = arith.addf %151, %152 : vector<16x128xf32>
    %154 = math.tanh %153 : vector<16x128xf32>
    %155 = arith.mulf %150, %154 : vector<16x128xf32>
    %c6 = arith.constant 6 : index
    %c0_36 = arith.constant 0 : index
    %c0_37 = arith.constant 0 : index
    %156 = vector.load %arg2[%c6, %c0_36, %c0_37] : memref<32x16x512xf32, #tpu.memory_space<vmem>>, vector<1x16x512xf32>
    %157 = vector.shape_cast %156 : vector<1x16x512xf32> to vector<16x512xf32>
    %cst_38 = arith.constant dense<0.000000e+00> : vector<16x512xf32>
    %158 = tpu.matmul %155, %3, %cst_38 {dimension_numbers = #tpu.dot_dimension_numbers<[1], [0], [0], [1], [0, 0, 1, 1], [], []>} : vector<16x128xf32>, vector<128x512xf32>, vector<16x512xf32> -> vector<16x512xf32>
    %159 = arith.addf %157, %158 : vector<16x512xf32>
    %160 = vector.extract_strided_slice %159 {offsets = [0, 0], sizes = [16, 256], strides = [1, 1]} : vector<16x512xf32> to vector<16x256xf32>
    %161 = arith.negf %160 : vector<16x256xf32>
    %162 = math.exp %161 : vector<16x256xf32>
    %cst_39 = arith.constant 1.000000e+00 : f32
    %163 = vector.broadcast %cst_39 : f32 to vector<16x256xf32>
    %164 = arith.addf %163, %162 : vector<16x256xf32>
    %165 = arith.divf %163, %164 : vector<16x256xf32>
    %166 = vector.extract_strided_slice %165 {offsets = [0, 0], sizes = [16, 128], strides = [1, 1]} : vector<16x256xf32> to vector<16x128xf32>
    %167 = vector.extract_strided_slice %165 {offsets = [0, 128], sizes = [16, 128], strides = [1, 1]} : vector<16x256xf32> to vector<16x128xf32>
    %168 = vector.extract_strided_slice %159 {offsets = [0, 256], sizes = [16, 128], strides = [1, 1]} : vector<16x512xf32> to vector<16x128xf32>
    %169 = math.tanh %168 : vector<16x128xf32>
    %170 = vector.extract_strided_slice %159 {offsets = [0, 384], sizes = [16, 128], strides = [1, 1]} : vector<16x512xf32> to vector<16x128xf32>
    %171 = arith.negf %170 : vector<16x128xf32>
    %172 = math.exp %171 : vector<16x128xf32>
    %cst_40 = arith.constant 1.000000e+00 : f32
    %173 = vector.broadcast %cst_40 : f32 to vector<16x128xf32>
    %174 = arith.addf %173, %172 : vector<16x128xf32>
    %175 = arith.divf %173, %174 : vector<16x128xf32>
    %176 = arith.mulf %167, %153 : vector<16x128xf32>
    %177 = arith.mulf %166, %169 : vector<16x128xf32>
    %178 = arith.addf %176, %177 : vector<16x128xf32>
    %179 = math.tanh %178 : vector<16x128xf32>
    %180 = arith.mulf %175, %179 : vector<16x128xf32>
    %c7 = arith.constant 7 : index
    %c0_41 = arith.constant 0 : index
    %c0_42 = arith.constant 0 : index
    %181 = vector.load %arg2[%c7, %c0_41, %c0_42] : memref<32x16x512xf32, #tpu.memory_space<vmem>>, vector<1x16x512xf32>
    %182 = vector.shape_cast %181 : vector<1x16x512xf32> to vector<16x512xf32>
    %cst_43 = arith.constant dense<0.000000e+00> : vector<16x512xf32>
    %183 = tpu.matmul %180, %3, %cst_43 {dimension_numbers = #tpu.dot_dimension_numbers<[1], [0], [0], [1], [0, 0, 1, 1], [], []>} : vector<16x128xf32>, vector<128x512xf32>, vector<16x512xf32> -> vector<16x512xf32>
    %184 = arith.addf %182, %183 : vector<16x512xf32>
    %185 = vector.extract_strided_slice %184 {offsets = [0, 0], sizes = [16, 256], strides = [1, 1]} : vector<16x512xf32> to vector<16x256xf32>
    %186 = arith.negf %185 : vector<16x256xf32>
    %187 = math.exp %186 : vector<16x256xf32>
    %cst_44 = arith.constant 1.000000e+00 : f32
    %188 = vector.broadcast %cst_44 : f32 to vector<16x256xf32>
    %189 = arith.addf %188, %187 : vector<16x256xf32>
    %190 = arith.divf %188, %189 : vector<16x256xf32>
    %191 = vector.extract_strided_slice %190 {offsets = [0, 0], sizes = [16, 128], strides = [1, 1]} : vector<16x256xf32> to vector<16x128xf32>
    %192 = vector.extract_strided_slice %190 {offsets = [0, 128], sizes = [16, 128], strides = [1, 1]} : vector<16x256xf32> to vector<16x128xf32>
    %193 = vector.extract_strided_slice %184 {offsets = [0, 256], sizes = [16, 128], strides = [1, 1]} : vector<16x512xf32> to vector<16x128xf32>
    %194 = math.tanh %193 : vector<16x128xf32>
    %195 = vector.extract_strided_slice %184 {offsets = [0, 384], sizes = [16, 128], strides = [1, 1]} : vector<16x512xf32> to vector<16x128xf32>
    %196 = arith.negf %195 : vector<16x128xf32>
    %197 = math.exp %196 : vector<16x128xf32>
    %cst_45 = arith.constant 1.000000e+00 : f32
    %198 = vector.broadcast %cst_45 : f32 to vector<16x128xf32>
    %199 = arith.addf %198, %197 : vector<16x128xf32>
    %200 = arith.divf %198, %199 : vector<16x128xf32>
    %201 = arith.mulf %192, %178 : vector<16x128xf32>
    %202 = arith.mulf %191, %194 : vector<16x128xf32>
    %203 = arith.addf %201, %202 : vector<16x128xf32>
    %204 = math.tanh %203 : vector<16x128xf32>
    %205 = arith.mulf %200, %204 : vector<16x128xf32>
    %c8 = arith.constant 8 : index
    %c0_46 = arith.constant 0 : index
    %c0_47 = arith.constant 0 : index
    %206 = vector.load %arg2[%c8, %c0_46, %c0_47] : memref<32x16x512xf32, #tpu.memory_space<vmem>>, vector<1x16x512xf32>
    %207 = vector.shape_cast %206 : vector<1x16x512xf32> to vector<16x512xf32>
    %cst_48 = arith.constant dense<0.000000e+00> : vector<16x512xf32>
    %208 = tpu.matmul %205, %3, %cst_48 {dimension_numbers = #tpu.dot_dimension_numbers<[1], [0], [0], [1], [0, 0, 1, 1], [], []>} : vector<16x128xf32>, vector<128x512xf32>, vector<16x512xf32> -> vector<16x512xf32>
    %209 = arith.addf %207, %208 : vector<16x512xf32>
    %210 = vector.extract_strided_slice %209 {offsets = [0, 0], sizes = [16, 256], strides = [1, 1]} : vector<16x512xf32> to vector<16x256xf32>
    %211 = arith.negf %210 : vector<16x256xf32>
    %212 = math.exp %211 : vector<16x256xf32>
    %cst_49 = arith.constant 1.000000e+00 : f32
    %213 = vector.broadcast %cst_49 : f32 to vector<16x256xf32>
    %214 = arith.addf %213, %212 : vector<16x256xf32>
    %215 = arith.divf %213, %214 : vector<16x256xf32>
    %216 = vector.extract_strided_slice %215 {offsets = [0, 0], sizes = [16, 128], strides = [1, 1]} : vector<16x256xf32> to vector<16x128xf32>
    %217 = vector.extract_strided_slice %215 {offsets = [0, 128], sizes = [16, 128], strides = [1, 1]} : vector<16x256xf32> to vector<16x128xf32>
    %218 = vector.extract_strided_slice %209 {offsets = [0, 256], sizes = [16, 128], strides = [1, 1]} : vector<16x512xf32> to vector<16x128xf32>
    %219 = math.tanh %218 : vector<16x128xf32>
    %220 = vector.extract_strided_slice %209 {offsets = [0, 384], sizes = [16, 128], strides = [1, 1]} : vector<16x512xf32> to vector<16x128xf32>
    %221 = arith.negf %220 : vector<16x128xf32>
    %222 = math.exp %221 : vector<16x128xf32>
    %cst_50 = arith.constant 1.000000e+00 : f32
    %223 = vector.broadcast %cst_50 : f32 to vector<16x128xf32>
    %224 = arith.addf %223, %222 : vector<16x128xf32>
    %225 = arith.divf %223, %224 : vector<16x128xf32>
    %226 = arith.mulf %217, %203 : vector<16x128xf32>
    %227 = arith.mulf %216, %219 : vector<16x128xf32>
    %228 = arith.addf %226, %227 : vector<16x128xf32>
    %229 = math.tanh %228 : vector<16x128xf32>
    %230 = arith.mulf %225, %229 : vector<16x128xf32>
    %c9 = arith.constant 9 : index
    %c0_51 = arith.constant 0 : index
    %c0_52 = arith.constant 0 : index
    %231 = vector.load %arg2[%c9, %c0_51, %c0_52] : memref<32x16x512xf32, #tpu.memory_space<vmem>>, vector<1x16x512xf32>
    %232 = vector.shape_cast %231 : vector<1x16x512xf32> to vector<16x512xf32>
    %cst_53 = arith.constant dense<0.000000e+00> : vector<16x512xf32>
    %233 = tpu.matmul %230, %3, %cst_53 {dimension_numbers = #tpu.dot_dimension_numbers<[1], [0], [0], [1], [0, 0, 1, 1], [], []>} : vector<16x128xf32>, vector<128x512xf32>, vector<16x512xf32> -> vector<16x512xf32>
    %234 = arith.addf %232, %233 : vector<16x512xf32>
    %235 = vector.extract_strided_slice %234 {offsets = [0, 0], sizes = [16, 256], strides = [1, 1]} : vector<16x512xf32> to vector<16x256xf32>
    %236 = arith.negf %235 : vector<16x256xf32>
    %237 = math.exp %236 : vector<16x256xf32>
    %cst_54 = arith.constant 1.000000e+00 : f32
    %238 = vector.broadcast %cst_54 : f32 to vector<16x256xf32>
    %239 = arith.addf %238, %237 : vector<16x256xf32>
    %240 = arith.divf %238, %239 : vector<16x256xf32>
    %241 = vector.extract_strided_slice %240 {offsets = [0, 0], sizes = [16, 128], strides = [1, 1]} : vector<16x256xf32> to vector<16x128xf32>
    %242 = vector.extract_strided_slice %240 {offsets = [0, 128], sizes = [16, 128], strides = [1, 1]} : vector<16x256xf32> to vector<16x128xf32>
    %243 = vector.extract_strided_slice %234 {offsets = [0, 256], sizes = [16, 128], strides = [1, 1]} : vector<16x512xf32> to vector<16x128xf32>
    %244 = math.tanh %243 : vector<16x128xf32>
    %245 = vector.extract_strided_slice %234 {offsets = [0, 384], sizes = [16, 128], strides = [1, 1]} : vector<16x512xf32> to vector<16x128xf32>
    %246 = arith.negf %245 : vector<16x128xf32>
    %247 = math.exp %246 : vector<16x128xf32>
    %cst_55 = arith.constant 1.000000e+00 : f32
    %248 = vector.broadcast %cst_55 : f32 to vector<16x128xf32>
    %249 = arith.addf %248, %247 : vector<16x128xf32>
    %250 = arith.divf %248, %249 : vector<16x128xf32>
    %251 = arith.mulf %242, %228 : vector<16x128xf32>
    %252 = arith.mulf %241, %244 : vector<16x128xf32>
    %253 = arith.addf %251, %252 : vector<16x128xf32>
    %254 = math.tanh %253 : vector<16x128xf32>
    %255 = arith.mulf %250, %254 : vector<16x128xf32>
    %c10 = arith.constant 10 : index
    %c0_56 = arith.constant 0 : index
    %c0_57 = arith.constant 0 : index
    %256 = vector.load %arg2[%c10, %c0_56, %c0_57] : memref<32x16x512xf32, #tpu.memory_space<vmem>>, vector<1x16x512xf32>
    %257 = vector.shape_cast %256 : vector<1x16x512xf32> to vector<16x512xf32>
    %cst_58 = arith.constant dense<0.000000e+00> : vector<16x512xf32>
    %258 = tpu.matmul %255, %3, %cst_58 {dimension_numbers = #tpu.dot_dimension_numbers<[1], [0], [0], [1], [0, 0, 1, 1], [], []>} : vector<16x128xf32>, vector<128x512xf32>, vector<16x512xf32> -> vector<16x512xf32>
    %259 = arith.addf %257, %258 : vector<16x512xf32>
    %260 = vector.extract_strided_slice %259 {offsets = [0, 0], sizes = [16, 256], strides = [1, 1]} : vector<16x512xf32> to vector<16x256xf32>
    %261 = arith.negf %260 : vector<16x256xf32>
    %262 = math.exp %261 : vector<16x256xf32>
    %cst_59 = arith.constant 1.000000e+00 : f32
    %263 = vector.broadcast %cst_59 : f32 to vector<16x256xf32>
    %264 = arith.addf %263, %262 : vector<16x256xf32>
    %265 = arith.divf %263, %264 : vector<16x256xf32>
    %266 = vector.extract_strided_slice %265 {offsets = [0, 0], sizes = [16, 128], strides = [1, 1]} : vector<16x256xf32> to vector<16x128xf32>
    %267 = vector.extract_strided_slice %265 {offsets = [0, 128], sizes = [16, 128], strides = [1, 1]} : vector<16x256xf32> to vector<16x128xf32>
    %268 = vector.extract_strided_slice %259 {offsets = [0, 256], sizes = [16, 128], strides = [1, 1]} : vector<16x512xf32> to vector<16x128xf32>
    %269 = math.tanh %268 : vector<16x128xf32>
    %270 = vector.extract_strided_slice %259 {offsets = [0, 384], sizes = [16, 128], strides = [1, 1]} : vector<16x512xf32> to vector<16x128xf32>
    %271 = arith.negf %270 : vector<16x128xf32>
    %272 = math.exp %271 : vector<16x128xf32>
    %cst_60 = arith.constant 1.000000e+00 : f32
    %273 = vector.broadcast %cst_60 : f32 to vector<16x128xf32>
    %274 = arith.addf %273, %272 : vector<16x128xf32>
    %275 = arith.divf %273, %274 : vector<16x128xf32>
    %276 = arith.mulf %267, %253 : vector<16x128xf32>
    %277 = arith.mulf %266, %269 : vector<16x128xf32>
    %278 = arith.addf %276, %277 : vector<16x128xf32>
    %279 = math.tanh %278 : vector<16x128xf32>
    %280 = arith.mulf %275, %279 : vector<16x128xf32>
    %c11 = arith.constant 11 : index
    %c0_61 = arith.constant 0 : index
    %c0_62 = arith.constant 0 : index
    %281 = vector.load %arg2[%c11, %c0_61, %c0_62] : memref<32x16x512xf32, #tpu.memory_space<vmem>>, vector<1x16x512xf32>
    %282 = vector.shape_cast %281 : vector<1x16x512xf32> to vector<16x512xf32>
    %cst_63 = arith.constant dense<0.000000e+00> : vector<16x512xf32>
    %283 = tpu.matmul %280, %3, %cst_63 {dimension_numbers = #tpu.dot_dimension_numbers<[1], [0], [0], [1], [0, 0, 1, 1], [], []>} : vector<16x128xf32>, vector<128x512xf32>, vector<16x512xf32> -> vector<16x512xf32>
    %284 = arith.addf %282, %283 : vector<16x512xf32>
    %285 = vector.extract_strided_slice %284 {offsets = [0, 0], sizes = [16, 256], strides = [1, 1]} : vector<16x512xf32> to vector<16x256xf32>
    %286 = arith.negf %285 : vector<16x256xf32>
    %287 = math.exp %286 : vector<16x256xf32>
    %cst_64 = arith.constant 1.000000e+00 : f32
    %288 = vector.broadcast %cst_64 : f32 to vector<16x256xf32>
    %289 = arith.addf %288, %287 : vector<16x256xf32>
    %290 = arith.divf %288, %289 : vector<16x256xf32>
    %291 = vector.extract_strided_slice %290 {offsets = [0, 0], sizes = [16, 128], strides = [1, 1]} : vector<16x256xf32> to vector<16x128xf32>
    %292 = vector.extract_strided_slice %290 {offsets = [0, 128], sizes = [16, 128], strides = [1, 1]} : vector<16x256xf32> to vector<16x128xf32>
    %293 = vector.extract_strided_slice %284 {offsets = [0, 256], sizes = [16, 128], strides = [1, 1]} : vector<16x512xf32> to vector<16x128xf32>
    %294 = math.tanh %293 : vector<16x128xf32>
    %295 = vector.extract_strided_slice %284 {offsets = [0, 384], sizes = [16, 128], strides = [1, 1]} : vector<16x512xf32> to vector<16x128xf32>
    %296 = arith.negf %295 : vector<16x128xf32>
    %297 = math.exp %296 : vector<16x128xf32>
    %cst_65 = arith.constant 1.000000e+00 : f32
    %298 = vector.broadcast %cst_65 : f32 to vector<16x128xf32>
    %299 = arith.addf %298, %297 : vector<16x128xf32>
    %300 = arith.divf %298, %299 : vector<16x128xf32>
    %301 = arith.mulf %292, %278 : vector<16x128xf32>
    %302 = arith.mulf %291, %294 : vector<16x128xf32>
    %303 = arith.addf %301, %302 : vector<16x128xf32>
    %304 = math.tanh %303 : vector<16x128xf32>
    %305 = arith.mulf %300, %304 : vector<16x128xf32>
    %c12 = arith.constant 12 : index
    %c0_66 = arith.constant 0 : index
    %c0_67 = arith.constant 0 : index
    %306 = vector.load %arg2[%c12, %c0_66, %c0_67] : memref<32x16x512xf32, #tpu.memory_space<vmem>>, vector<1x16x512xf32>
    %307 = vector.shape_cast %306 : vector<1x16x512xf32> to vector<16x512xf32>
    %cst_68 = arith.constant dense<0.000000e+00> : vector<16x512xf32>
    %308 = tpu.matmul %305, %3, %cst_68 {dimension_numbers = #tpu.dot_dimension_numbers<[1], [0], [0], [1], [0, 0, 1, 1], [], []>} : vector<16x128xf32>, vector<128x512xf32>, vector<16x512xf32> -> vector<16x512xf32>
    %309 = arith.addf %307, %308 : vector<16x512xf32>
    %310 = vector.extract_strided_slice %309 {offsets = [0, 0], sizes = [16, 256], strides = [1, 1]} : vector<16x512xf32> to vector<16x256xf32>
    %311 = arith.negf %310 : vector<16x256xf32>
    %312 = math.exp %311 : vector<16x256xf32>
    %cst_69 = arith.constant 1.000000e+00 : f32
    %313 = vector.broadcast %cst_69 : f32 to vector<16x256xf32>
    %314 = arith.addf %313, %312 : vector<16x256xf32>
    %315 = arith.divf %313, %314 : vector<16x256xf32>
    %316 = vector.extract_strided_slice %315 {offsets = [0, 0], sizes = [16, 128], strides = [1, 1]} : vector<16x256xf32> to vector<16x128xf32>
    %317 = vector.extract_strided_slice %315 {offsets = [0, 128], sizes = [16, 128], strides = [1, 1]} : vector<16x256xf32> to vector<16x128xf32>
    %318 = vector.extract_strided_slice %309 {offsets = [0, 256], sizes = [16, 128], strides = [1, 1]} : vector<16x512xf32> to vector<16x128xf32>
    %319 = math.tanh %318 : vector<16x128xf32>
    %320 = vector.extract_strided_slice %309 {offsets = [0, 384], sizes = [16, 128], strides = [1, 1]} : vector<16x512xf32> to vector<16x128xf32>
    %321 = arith.negf %320 : vector<16x128xf32>
    %322 = math.exp %321 : vector<16x128xf32>
    %cst_70 = arith.constant 1.000000e+00 : f32
    %323 = vector.broadcast %cst_70 : f32 to vector<16x128xf32>
    %324 = arith.addf %323, %322 : vector<16x128xf32>
    %325 = arith.divf %323, %324 : vector<16x128xf32>
    %326 = arith.mulf %317, %303 : vector<16x128xf32>
    %327 = arith.mulf %316, %319 : vector<16x128xf32>
    %328 = arith.addf %326, %327 : vector<16x128xf32>
    %329 = math.tanh %328 : vector<16x128xf32>
    %330 = arith.mulf %325, %329 : vector<16x128xf32>
    %c13 = arith.constant 13 : index
    %c0_71 = arith.constant 0 : index
    %c0_72 = arith.constant 0 : index
    %331 = vector.load %arg2[%c13, %c0_71, %c0_72] : memref<32x16x512xf32, #tpu.memory_space<vmem>>, vector<1x16x512xf32>
    %332 = vector.shape_cast %331 : vector<1x16x512xf32> to vector<16x512xf32>
    %cst_73 = arith.constant dense<0.000000e+00> : vector<16x512xf32>
    %333 = tpu.matmul %330, %3, %cst_73 {dimension_numbers = #tpu.dot_dimension_numbers<[1], [0], [0], [1], [0, 0, 1, 1], [], []>} : vector<16x128xf32>, vector<128x512xf32>, vector<16x512xf32> -> vector<16x512xf32>
    %334 = arith.addf %332, %333 : vector<16x512xf32>
    %335 = vector.extract_strided_slice %334 {offsets = [0, 0], sizes = [16, 256], strides = [1, 1]} : vector<16x512xf32> to vector<16x256xf32>
    %336 = arith.negf %335 : vector<16x256xf32>
    %337 = math.exp %336 : vector<16x256xf32>
    %cst_74 = arith.constant 1.000000e+00 : f32
    %338 = vector.broadcast %cst_74 : f32 to vector<16x256xf32>
    %339 = arith.addf %338, %337 : vector<16x256xf32>
    %340 = arith.divf %338, %339 : vector<16x256xf32>
    %341 = vector.extract_strided_slice %340 {offsets = [0, 0], sizes = [16, 128], strides = [1, 1]} : vector<16x256xf32> to vector<16x128xf32>
    %342 = vector.extract_strided_slice %340 {offsets = [0, 128], sizes = [16, 128], strides = [1, 1]} : vector<16x256xf32> to vector<16x128xf32>
    %343 = vector.extract_strided_slice %334 {offsets = [0, 256], sizes = [16, 128], strides = [1, 1]} : vector<16x512xf32> to vector<16x128xf32>
    %344 = math.tanh %343 : vector<16x128xf32>
    %345 = vector.extract_strided_slice %334 {offsets = [0, 384], sizes = [16, 128], strides = [1, 1]} : vector<16x512xf32> to vector<16x128xf32>
    %346 = arith.negf %345 : vector<16x128xf32>
    %347 = math.exp %346 : vector<16x128xf32>
    %cst_75 = arith.constant 1.000000e+00 : f32
    %348 = vector.broadcast %cst_75 : f32 to vector<16x128xf32>
    %349 = arith.addf %348, %347 : vector<16x128xf32>
    %350 = arith.divf %348, %349 : vector<16x128xf32>
    %351 = arith.mulf %342, %328 : vector<16x128xf32>
    %352 = arith.mulf %341, %344 : vector<16x128xf32>
    %353 = arith.addf %351, %352 : vector<16x128xf32>
    %354 = math.tanh %353 : vector<16x128xf32>
    %355 = arith.mulf %350, %354 : vector<16x128xf32>
    %c14 = arith.constant 14 : index
    %c0_76 = arith.constant 0 : index
    %c0_77 = arith.constant 0 : index
    %356 = vector.load %arg2[%c14, %c0_76, %c0_77] : memref<32x16x512xf32, #tpu.memory_space<vmem>>, vector<1x16x512xf32>
    %357 = vector.shape_cast %356 : vector<1x16x512xf32> to vector<16x512xf32>
    %cst_78 = arith.constant dense<0.000000e+00> : vector<16x512xf32>
    %358 = tpu.matmul %355, %3, %cst_78 {dimension_numbers = #tpu.dot_dimension_numbers<[1], [0], [0], [1], [0, 0, 1, 1], [], []>} : vector<16x128xf32>, vector<128x512xf32>, vector<16x512xf32> -> vector<16x512xf32>
    %359 = arith.addf %357, %358 : vector<16x512xf32>
    %360 = vector.extract_strided_slice %359 {offsets = [0, 0], sizes = [16, 256], strides = [1, 1]} : vector<16x512xf32> to vector<16x256xf32>
    %361 = arith.negf %360 : vector<16x256xf32>
    %362 = math.exp %361 : vector<16x256xf32>
    %cst_79 = arith.constant 1.000000e+00 : f32
    %363 = vector.broadcast %cst_79 : f32 to vector<16x256xf32>
    %364 = arith.addf %363, %362 : vector<16x256xf32>
    %365 = arith.divf %363, %364 : vector<16x256xf32>
    %366 = vector.extract_strided_slice %365 {offsets = [0, 0], sizes = [16, 128], strides = [1, 1]} : vector<16x256xf32> to vector<16x128xf32>
    %367 = vector.extract_strided_slice %365 {offsets = [0, 128], sizes = [16, 128], strides = [1, 1]} : vector<16x256xf32> to vector<16x128xf32>
    %368 = vector.extract_strided_slice %359 {offsets = [0, 256], sizes = [16, 128], strides = [1, 1]} : vector<16x512xf32> to vector<16x128xf32>
    %369 = math.tanh %368 : vector<16x128xf32>
    %370 = vector.extract_strided_slice %359 {offsets = [0, 384], sizes = [16, 128], strides = [1, 1]} : vector<16x512xf32> to vector<16x128xf32>
    %371 = arith.negf %370 : vector<16x128xf32>
    %372 = math.exp %371 : vector<16x128xf32>
    %cst_80 = arith.constant 1.000000e+00 : f32
    %373 = vector.broadcast %cst_80 : f32 to vector<16x128xf32>
    %374 = arith.addf %373, %372 : vector<16x128xf32>
    %375 = arith.divf %373, %374 : vector<16x128xf32>
    %376 = arith.mulf %367, %353 : vector<16x128xf32>
    %377 = arith.mulf %366, %369 : vector<16x128xf32>
    %378 = arith.addf %376, %377 : vector<16x128xf32>
    %379 = math.tanh %378 : vector<16x128xf32>
    %380 = arith.mulf %375, %379 : vector<16x128xf32>
    %c15 = arith.constant 15 : index
    %c0_81 = arith.constant 0 : index
    %c0_82 = arith.constant 0 : index
    %381 = vector.load %arg2[%c15, %c0_81, %c0_82] : memref<32x16x512xf32, #tpu.memory_space<vmem>>, vector<1x16x512xf32>
    %382 = vector.shape_cast %381 : vector<1x16x512xf32> to vector<16x512xf32>
    %cst_83 = arith.constant dense<0.000000e+00> : vector<16x512xf32>
    %383 = tpu.matmul %380, %3, %cst_83 {dimension_numbers = #tpu.dot_dimension_numbers<[1], [0], [0], [1], [0, 0, 1, 1], [], []>} : vector<16x128xf32>, vector<128x512xf32>, vector<16x512xf32> -> vector<16x512xf32>
    %384 = arith.addf %382, %383 : vector<16x512xf32>
    %385 = vector.extract_strided_slice %384 {offsets = [0, 0], sizes = [16, 256], strides = [1, 1]} : vector<16x512xf32> to vector<16x256xf32>
    %386 = arith.negf %385 : vector<16x256xf32>
    %387 = math.exp %386 : vector<16x256xf32>
    %cst_84 = arith.constant 1.000000e+00 : f32
    %388 = vector.broadcast %cst_84 : f32 to vector<16x256xf32>
    %389 = arith.addf %388, %387 : vector<16x256xf32>
    %390 = arith.divf %388, %389 : vector<16x256xf32>
    %391 = vector.extract_strided_slice %390 {offsets = [0, 0], sizes = [16, 128], strides = [1, 1]} : vector<16x256xf32> to vector<16x128xf32>
    %392 = vector.extract_strided_slice %390 {offsets = [0, 128], sizes = [16, 128], strides = [1, 1]} : vector<16x256xf32> to vector<16x128xf32>
    %393 = vector.extract_strided_slice %384 {offsets = [0, 256], sizes = [16, 128], strides = [1, 1]} : vector<16x512xf32> to vector<16x128xf32>
    %394 = math.tanh %393 : vector<16x128xf32>
    %395 = vector.extract_strided_slice %384 {offsets = [0, 384], sizes = [16, 128], strides = [1, 1]} : vector<16x512xf32> to vector<16x128xf32>
    %396 = arith.negf %395 : vector<16x128xf32>
    %397 = math.exp %396 : vector<16x128xf32>
    %cst_85 = arith.constant 1.000000e+00 : f32
    %398 = vector.broadcast %cst_85 : f32 to vector<16x128xf32>
    %399 = arith.addf %398, %397 : vector<16x128xf32>
    %400 = arith.divf %398, %399 : vector<16x128xf32>
    %401 = arith.mulf %392, %378 : vector<16x128xf32>
    %402 = arith.mulf %391, %394 : vector<16x128xf32>
    %403 = arith.addf %401, %402 : vector<16x128xf32>
    %404 = math.tanh %403 : vector<16x128xf32>
    %405 = arith.mulf %400, %404 : vector<16x128xf32>
    %c16 = arith.constant 16 : index
    %c0_86 = arith.constant 0 : index
    %c0_87 = arith.constant 0 : index
    %406 = vector.load %arg2[%c16, %c0_86, %c0_87] : memref<32x16x512xf32, #tpu.memory_space<vmem>>, vector<1x16x512xf32>
    %407 = vector.shape_cast %406 : vector<1x16x512xf32> to vector<16x512xf32>
    %cst_88 = arith.constant dense<0.000000e+00> : vector<16x512xf32>
    %408 = tpu.matmul %405, %3, %cst_88 {dimension_numbers = #tpu.dot_dimension_numbers<[1], [0], [0], [1], [0, 0, 1, 1], [], []>} : vector<16x128xf32>, vector<128x512xf32>, vector<16x512xf32> -> vector<16x512xf32>
    %409 = arith.addf %407, %408 : vector<16x512xf32>
    %410 = vector.extract_strided_slice %409 {offsets = [0, 0], sizes = [16, 256], strides = [1, 1]} : vector<16x512xf32> to vector<16x256xf32>
    %411 = arith.negf %410 : vector<16x256xf32>
    %412 = math.exp %411 : vector<16x256xf32>
    %cst_89 = arith.constant 1.000000e+00 : f32
    %413 = vector.broadcast %cst_89 : f32 to vector<16x256xf32>
    %414 = arith.addf %413, %412 : vector<16x256xf32>
    %415 = arith.divf %413, %414 : vector<16x256xf32>
    %416 = vector.extract_strided_slice %415 {offsets = [0, 0], sizes = [16, 128], strides = [1, 1]} : vector<16x256xf32> to vector<16x128xf32>
    %417 = vector.extract_strided_slice %415 {offsets = [0, 128], sizes = [16, 128], strides = [1, 1]} : vector<16x256xf32> to vector<16x128xf32>
    %418 = vector.extract_strided_slice %409 {offsets = [0, 256], sizes = [16, 128], strides = [1, 1]} : vector<16x512xf32> to vector<16x128xf32>
    %419 = math.tanh %418 : vector<16x128xf32>
    %420 = vector.extract_strided_slice %409 {offsets = [0, 384], sizes = [16, 128], strides = [1, 1]} : vector<16x512xf32> to vector<16x128xf32>
    %421 = arith.negf %420 : vector<16x128xf32>
    %422 = math.exp %421 : vector<16x128xf32>
    %cst_90 = arith.constant 1.000000e+00 : f32
    %423 = vector.broadcast %cst_90 : f32 to vector<16x128xf32>
    %424 = arith.addf %423, %422 : vector<16x128xf32>
    %425 = arith.divf %423, %424 : vector<16x128xf32>
    %426 = arith.mulf %417, %403 : vector<16x128xf32>
    %427 = arith.mulf %416, %419 : vector<16x128xf32>
    %428 = arith.addf %426, %427 : vector<16x128xf32>
    %429 = math.tanh %428 : vector<16x128xf32>
    %430 = arith.mulf %425, %429 : vector<16x128xf32>
    %c17 = arith.constant 17 : index
    %c0_91 = arith.constant 0 : index
    %c0_92 = arith.constant 0 : index
    %431 = vector.load %arg2[%c17, %c0_91, %c0_92] : memref<32x16x512xf32, #tpu.memory_space<vmem>>, vector<1x16x512xf32>
    %432 = vector.shape_cast %431 : vector<1x16x512xf32> to vector<16x512xf32>
    %cst_93 = arith.constant dense<0.000000e+00> : vector<16x512xf32>
    %433 = tpu.matmul %430, %3, %cst_93 {dimension_numbers = #tpu.dot_dimension_numbers<[1], [0], [0], [1], [0, 0, 1, 1], [], []>} : vector<16x128xf32>, vector<128x512xf32>, vector<16x512xf32> -> vector<16x512xf32>
    %434 = arith.addf %432, %433 : vector<16x512xf32>
    %435 = vector.extract_strided_slice %434 {offsets = [0, 0], sizes = [16, 256], strides = [1, 1]} : vector<16x512xf32> to vector<16x256xf32>
    %436 = arith.negf %435 : vector<16x256xf32>
    %437 = math.exp %436 : vector<16x256xf32>
    %cst_94 = arith.constant 1.000000e+00 : f32
    %438 = vector.broadcast %cst_94 : f32 to vector<16x256xf32>
    %439 = arith.addf %438, %437 : vector<16x256xf32>
    %440 = arith.divf %438, %439 : vector<16x256xf32>
    %441 = vector.extract_strided_slice %440 {offsets = [0, 0], sizes = [16, 128], strides = [1, 1]} : vector<16x256xf32> to vector<16x128xf32>
    %442 = vector.extract_strided_slice %440 {offsets = [0, 128], sizes = [16, 128], strides = [1, 1]} : vector<16x256xf32> to vector<16x128xf32>
    %443 = vector.extract_strided_slice %434 {offsets = [0, 256], sizes = [16, 128], strides = [1, 1]} : vector<16x512xf32> to vector<16x128xf32>
    %444 = math.tanh %443 : vector<16x128xf32>
    %445 = vector.extract_strided_slice %434 {offsets = [0, 384], sizes = [16, 128], strides = [1, 1]} : vector<16x512xf32> to vector<16x128xf32>
    %446 = arith.negf %445 : vector<16x128xf32>
    %447 = math.exp %446 : vector<16x128xf32>
    %cst_95 = arith.constant 1.000000e+00 : f32
    %448 = vector.broadcast %cst_95 : f32 to vector<16x128xf32>
    %449 = arith.addf %448, %447 : vector<16x128xf32>
    %450 = arith.divf %448, %449 : vector<16x128xf32>
    %451 = arith.mulf %442, %428 : vector<16x128xf32>
    %452 = arith.mulf %441, %444 : vector<16x128xf32>
    %453 = arith.addf %451, %452 : vector<16x128xf32>
    %454 = math.tanh %453 : vector<16x128xf32>
    %455 = arith.mulf %450, %454 : vector<16x128xf32>
    %c18 = arith.constant 18 : index
    %c0_96 = arith.constant 0 : index
    %c0_97 = arith.constant 0 : index
    %456 = vector.load %arg2[%c18, %c0_96, %c0_97] : memref<32x16x512xf32, #tpu.memory_space<vmem>>, vector<1x16x512xf32>
    %457 = vector.shape_cast %456 : vector<1x16x512xf32> to vector<16x512xf32>
    %cst_98 = arith.constant dense<0.000000e+00> : vector<16x512xf32>
    %458 = tpu.matmul %455, %3, %cst_98 {dimension_numbers = #tpu.dot_dimension_numbers<[1], [0], [0], [1], [0, 0, 1, 1], [], []>} : vector<16x128xf32>, vector<128x512xf32>, vector<16x512xf32> -> vector<16x512xf32>
    %459 = arith.addf %457, %458 : vector<16x512xf32>
    %460 = vector.extract_strided_slice %459 {offsets = [0, 0], sizes = [16, 256], strides = [1, 1]} : vector<16x512xf32> to vector<16x256xf32>
    %461 = arith.negf %460 : vector<16x256xf32>
    %462 = math.exp %461 : vector<16x256xf32>
    %cst_99 = arith.constant 1.000000e+00 : f32
    %463 = vector.broadcast %cst_99 : f32 to vector<16x256xf32>
    %464 = arith.addf %463, %462 : vector<16x256xf32>
    %465 = arith.divf %463, %464 : vector<16x256xf32>
    %466 = vector.extract_strided_slice %465 {offsets = [0, 0], sizes = [16, 128], strides = [1, 1]} : vector<16x256xf32> to vector<16x128xf32>
    %467 = vector.extract_strided_slice %465 {offsets = [0, 128], sizes = [16, 128], strides = [1, 1]} : vector<16x256xf32> to vector<16x128xf32>
    %468 = vector.extract_strided_slice %459 {offsets = [0, 256], sizes = [16, 128], strides = [1, 1]} : vector<16x512xf32> to vector<16x128xf32>
    %469 = math.tanh %468 : vector<16x128xf32>
    %470 = vector.extract_strided_slice %459 {offsets = [0, 384], sizes = [16, 128], strides = [1, 1]} : vector<16x512xf32> to vector<16x128xf32>
    %471 = arith.negf %470 : vector<16x128xf32>
    %472 = math.exp %471 : vector<16x128xf32>
    %cst_100 = arith.constant 1.000000e+00 : f32
    %473 = vector.broadcast %cst_100 : f32 to vector<16x128xf32>
    %474 = arith.addf %473, %472 : vector<16x128xf32>
    %475 = arith.divf %473, %474 : vector<16x128xf32>
    %476 = arith.mulf %467, %453 : vector<16x128xf32>
    %477 = arith.mulf %466, %469 : vector<16x128xf32>
    %478 = arith.addf %476, %477 : vector<16x128xf32>
    %479 = math.tanh %478 : vector<16x128xf32>
    %480 = arith.mulf %475, %479 : vector<16x128xf32>
    %c19 = arith.constant 19 : index
    %c0_101 = arith.constant 0 : index
    %c0_102 = arith.constant 0 : index
    %481 = vector.load %arg2[%c19, %c0_101, %c0_102] : memref<32x16x512xf32, #tpu.memory_space<vmem>>, vector<1x16x512xf32>
    %482 = vector.shape_cast %481 : vector<1x16x512xf32> to vector<16x512xf32>
    %cst_103 = arith.constant dense<0.000000e+00> : vector<16x512xf32>
    %483 = tpu.matmul %480, %3, %cst_103 {dimension_numbers = #tpu.dot_dimension_numbers<[1], [0], [0], [1], [0, 0, 1, 1], [], []>} : vector<16x128xf32>, vector<128x512xf32>, vector<16x512xf32> -> vector<16x512xf32>
    %484 = arith.addf %482, %483 : vector<16x512xf32>
    %485 = vector.extract_strided_slice %484 {offsets = [0, 0], sizes = [16, 256], strides = [1, 1]} : vector<16x512xf32> to vector<16x256xf32>
    %486 = arith.negf %485 : vector<16x256xf32>
    %487 = math.exp %486 : vector<16x256xf32>
    %cst_104 = arith.constant 1.000000e+00 : f32
    %488 = vector.broadcast %cst_104 : f32 to vector<16x256xf32>
    %489 = arith.addf %488, %487 : vector<16x256xf32>
    %490 = arith.divf %488, %489 : vector<16x256xf32>
    %491 = vector.extract_strided_slice %490 {offsets = [0, 0], sizes = [16, 128], strides = [1, 1]} : vector<16x256xf32> to vector<16x128xf32>
    %492 = vector.extract_strided_slice %490 {offsets = [0, 128], sizes = [16, 128], strides = [1, 1]} : vector<16x256xf32> to vector<16x128xf32>
    %493 = vector.extract_strided_slice %484 {offsets = [0, 256], sizes = [16, 128], strides = [1, 1]} : vector<16x512xf32> to vector<16x128xf32>
    %494 = math.tanh %493 : vector<16x128xf32>
    %495 = vector.extract_strided_slice %484 {offsets = [0, 384], sizes = [16, 128], strides = [1, 1]} : vector<16x512xf32> to vector<16x128xf32>
    %496 = arith.negf %495 : vector<16x128xf32>
    %497 = math.exp %496 : vector<16x128xf32>
    %cst_105 = arith.constant 1.000000e+00 : f32
    %498 = vector.broadcast %cst_105 : f32 to vector<16x128xf32>
    %499 = arith.addf %498, %497 : vector<16x128xf32>
    %500 = arith.divf %498, %499 : vector<16x128xf32>
    %501 = arith.mulf %492, %478 : vector<16x128xf32>
    %502 = arith.mulf %491, %494 : vector<16x128xf32>
    %503 = arith.addf %501, %502 : vector<16x128xf32>
    %504 = math.tanh %503 : vector<16x128xf32>
    %505 = arith.mulf %500, %504 : vector<16x128xf32>
    %c20 = arith.constant 20 : index
    %c0_106 = arith.constant 0 : index
    %c0_107 = arith.constant 0 : index
    %506 = vector.load %arg2[%c20, %c0_106, %c0_107] : memref<32x16x512xf32, #tpu.memory_space<vmem>>, vector<1x16x512xf32>
    %507 = vector.shape_cast %506 : vector<1x16x512xf32> to vector<16x512xf32>
    %cst_108 = arith.constant dense<0.000000e+00> : vector<16x512xf32>
    %508 = tpu.matmul %505, %3, %cst_108 {dimension_numbers = #tpu.dot_dimension_numbers<[1], [0], [0], [1], [0, 0, 1, 1], [], []>} : vector<16x128xf32>, vector<128x512xf32>, vector<16x512xf32> -> vector<16x512xf32>
    %509 = arith.addf %507, %508 : vector<16x512xf32>
    %510 = vector.extract_strided_slice %509 {offsets = [0, 0], sizes = [16, 256], strides = [1, 1]} : vector<16x512xf32> to vector<16x256xf32>
    %511 = arith.negf %510 : vector<16x256xf32>
    %512 = math.exp %511 : vector<16x256xf32>
    %cst_109 = arith.constant 1.000000e+00 : f32
    %513 = vector.broadcast %cst_109 : f32 to vector<16x256xf32>
    %514 = arith.addf %513, %512 : vector<16x256xf32>
    %515 = arith.divf %513, %514 : vector<16x256xf32>
    %516 = vector.extract_strided_slice %515 {offsets = [0, 0], sizes = [16, 128], strides = [1, 1]} : vector<16x256xf32> to vector<16x128xf32>
    %517 = vector.extract_strided_slice %515 {offsets = [0, 128], sizes = [16, 128], strides = [1, 1]} : vector<16x256xf32> to vector<16x128xf32>
    %518 = vector.extract_strided_slice %509 {offsets = [0, 256], sizes = [16, 128], strides = [1, 1]} : vector<16x512xf32> to vector<16x128xf32>
    %519 = math.tanh %518 : vector<16x128xf32>
    %520 = vector.extract_strided_slice %509 {offsets = [0, 384], sizes = [16, 128], strides = [1, 1]} : vector<16x512xf32> to vector<16x128xf32>
    %521 = arith.negf %520 : vector<16x128xf32>
    %522 = math.exp %521 : vector<16x128xf32>
    %cst_110 = arith.constant 1.000000e+00 : f32
    %523 = vector.broadcast %cst_110 : f32 to vector<16x128xf32>
    %524 = arith.addf %523, %522 : vector<16x128xf32>
    %525 = arith.divf %523, %524 : vector<16x128xf32>
    %526 = arith.mulf %517, %503 : vector<16x128xf32>
    %527 = arith.mulf %516, %519 : vector<16x128xf32>
    %528 = arith.addf %526, %527 : vector<16x128xf32>
    %529 = math.tanh %528 : vector<16x128xf32>
    %530 = arith.mulf %525, %529 : vector<16x128xf32>
    %c21 = arith.constant 21 : index
    %c0_111 = arith.constant 0 : index
    %c0_112 = arith.constant 0 : index
    %531 = vector.load %arg2[%c21, %c0_111, %c0_112] : memref<32x16x512xf32, #tpu.memory_space<vmem>>, vector<1x16x512xf32>
    %532 = vector.shape_cast %531 : vector<1x16x512xf32> to vector<16x512xf32>
    %cst_113 = arith.constant dense<0.000000e+00> : vector<16x512xf32>
    %533 = tpu.matmul %530, %3, %cst_113 {dimension_numbers = #tpu.dot_dimension_numbers<[1], [0], [0], [1], [0, 0, 1, 1], [], []>} : vector<16x128xf32>, vector<128x512xf32>, vector<16x512xf32> -> vector<16x512xf32>
    %534 = arith.addf %532, %533 : vector<16x512xf32>
    %535 = vector.extract_strided_slice %534 {offsets = [0, 0], sizes = [16, 256], strides = [1, 1]} : vector<16x512xf32> to vector<16x256xf32>
    %536 = arith.negf %535 : vector<16x256xf32>
    %537 = math.exp %536 : vector<16x256xf32>
    %cst_114 = arith.constant 1.000000e+00 : f32
    %538 = vector.broadcast %cst_114 : f32 to vector<16x256xf32>
    %539 = arith.addf %538, %537 : vector<16x256xf32>
    %540 = arith.divf %538, %539 : vector<16x256xf32>
    %541 = vector.extract_strided_slice %540 {offsets = [0, 0], sizes = [16, 128], strides = [1, 1]} : vector<16x256xf32> to vector<16x128xf32>
    %542 = vector.extract_strided_slice %540 {offsets = [0, 128], sizes = [16, 128], strides = [1, 1]} : vector<16x256xf32> to vector<16x128xf32>
    %543 = vector.extract_strided_slice %534 {offsets = [0, 256], sizes = [16, 128], strides = [1, 1]} : vector<16x512xf32> to vector<16x128xf32>
    %544 = math.tanh %543 : vector<16x128xf32>
    %545 = vector.extract_strided_slice %534 {offsets = [0, 384], sizes = [16, 128], strides = [1, 1]} : vector<16x512xf32> to vector<16x128xf32>
    %546 = arith.negf %545 : vector<16x128xf32>
    %547 = math.exp %546 : vector<16x128xf32>
    %cst_115 = arith.constant 1.000000e+00 : f32
    %548 = vector.broadcast %cst_115 : f32 to vector<16x128xf32>
    %549 = arith.addf %548, %547 : vector<16x128xf32>
    %550 = arith.divf %548, %549 : vector<16x128xf32>
    %551 = arith.mulf %542, %528 : vector<16x128xf32>
    %552 = arith.mulf %541, %544 : vector<16x128xf32>
    %553 = arith.addf %551, %552 : vector<16x128xf32>
    %554 = math.tanh %553 : vector<16x128xf32>
    %555 = arith.mulf %550, %554 : vector<16x128xf32>
    %c22 = arith.constant 22 : index
    %c0_116 = arith.constant 0 : index
    %c0_117 = arith.constant 0 : index
    %556 = vector.load %arg2[%c22, %c0_116, %c0_117] : memref<32x16x512xf32, #tpu.memory_space<vmem>>, vector<1x16x512xf32>
    %557 = vector.shape_cast %556 : vector<1x16x512xf32> to vector<16x512xf32>
    %cst_118 = arith.constant dense<0.000000e+00> : vector<16x512xf32>
    %558 = tpu.matmul %555, %3, %cst_118 {dimension_numbers = #tpu.dot_dimension_numbers<[1], [0], [0], [1], [0, 0, 1, 1], [], []>} : vector<16x128xf32>, vector<128x512xf32>, vector<16x512xf32> -> vector<16x512xf32>
    %559 = arith.addf %557, %558 : vector<16x512xf32>
    %560 = vector.extract_strided_slice %559 {offsets = [0, 0], sizes = [16, 256], strides = [1, 1]} : vector<16x512xf32> to vector<16x256xf32>
    %561 = arith.negf %560 : vector<16x256xf32>
    %562 = math.exp %561 : vector<16x256xf32>
    %cst_119 = arith.constant 1.000000e+00 : f32
    %563 = vector.broadcast %cst_119 : f32 to vector<16x256xf32>
    %564 = arith.addf %563, %562 : vector<16x256xf32>
    %565 = arith.divf %563, %564 : vector<16x256xf32>
    %566 = vector.extract_strided_slice %565 {offsets = [0, 0], sizes = [16, 128], strides = [1, 1]} : vector<16x256xf32> to vector<16x128xf32>
    %567 = vector.extract_strided_slice %565 {offsets = [0, 128], sizes = [16, 128], strides = [1, 1]} : vector<16x256xf32> to vector<16x128xf32>
    %568 = vector.extract_strided_slice %559 {offsets = [0, 256], sizes = [16, 128], strides = [1, 1]} : vector<16x512xf32> to vector<16x128xf32>
    %569 = math.tanh %568 : vector<16x128xf32>
    %570 = vector.extract_strided_slice %559 {offsets = [0, 384], sizes = [16, 128], strides = [1, 1]} : vector<16x512xf32> to vector<16x128xf32>
    %571 = arith.negf %570 : vector<16x128xf32>
    %572 = math.exp %571 : vector<16x128xf32>
    %cst_120 = arith.constant 1.000000e+00 : f32
    %573 = vector.broadcast %cst_120 : f32 to vector<16x128xf32>
    %574 = arith.addf %573, %572 : vector<16x128xf32>
    %575 = arith.divf %573, %574 : vector<16x128xf32>
    %576 = arith.mulf %567, %553 : vector<16x128xf32>
    %577 = arith.mulf %566, %569 : vector<16x128xf32>
    %578 = arith.addf %576, %577 : vector<16x128xf32>
    %579 = math.tanh %578 : vector<16x128xf32>
    %580 = arith.mulf %575, %579 : vector<16x128xf32>
    %c23 = arith.constant 23 : index
    %c0_121 = arith.constant 0 : index
    %c0_122 = arith.constant 0 : index
    %581 = vector.load %arg2[%c23, %c0_121, %c0_122] : memref<32x16x512xf32, #tpu.memory_space<vmem>>, vector<1x16x512xf32>
    %582 = vector.shape_cast %581 : vector<1x16x512xf32> to vector<16x512xf32>
    %cst_123 = arith.constant dense<0.000000e+00> : vector<16x512xf32>
    %583 = tpu.matmul %580, %3, %cst_123 {dimension_numbers = #tpu.dot_dimension_numbers<[1], [0], [0], [1], [0, 0, 1, 1], [], []>} : vector<16x128xf32>, vector<128x512xf32>, vector<16x512xf32> -> vector<16x512xf32>
    %584 = arith.addf %582, %583 : vector<16x512xf32>
    %585 = vector.extract_strided_slice %584 {offsets = [0, 0], sizes = [16, 256], strides = [1, 1]} : vector<16x512xf32> to vector<16x256xf32>
    %586 = arith.negf %585 : vector<16x256xf32>
    %587 = math.exp %586 : vector<16x256xf32>
    %cst_124 = arith.constant 1.000000e+00 : f32
    %588 = vector.broadcast %cst_124 : f32 to vector<16x256xf32>
    %589 = arith.addf %588, %587 : vector<16x256xf32>
    %590 = arith.divf %588, %589 : vector<16x256xf32>
    %591 = vector.extract_strided_slice %590 {offsets = [0, 0], sizes = [16, 128], strides = [1, 1]} : vector<16x256xf32> to vector<16x128xf32>
    %592 = vector.extract_strided_slice %590 {offsets = [0, 128], sizes = [16, 128], strides = [1, 1]} : vector<16x256xf32> to vector<16x128xf32>
    %593 = vector.extract_strided_slice %584 {offsets = [0, 256], sizes = [16, 128], strides = [1, 1]} : vector<16x512xf32> to vector<16x128xf32>
    %594 = math.tanh %593 : vector<16x128xf32>
    %595 = vector.extract_strided_slice %584 {offsets = [0, 384], sizes = [16, 128], strides = [1, 1]} : vector<16x512xf32> to vector<16x128xf32>
    %596 = arith.negf %595 : vector<16x128xf32>
    %597 = math.exp %596 : vector<16x128xf32>
    %cst_125 = arith.constant 1.000000e+00 : f32
    %598 = vector.broadcast %cst_125 : f32 to vector<16x128xf32>
    %599 = arith.addf %598, %597 : vector<16x128xf32>
    %600 = arith.divf %598, %599 : vector<16x128xf32>
    %601 = arith.mulf %592, %578 : vector<16x128xf32>
    %602 = arith.mulf %591, %594 : vector<16x128xf32>
    %603 = arith.addf %601, %602 : vector<16x128xf32>
    %604 = math.tanh %603 : vector<16x128xf32>
    %605 = arith.mulf %600, %604 : vector<16x128xf32>
    %c24 = arith.constant 24 : index
    %c0_126 = arith.constant 0 : index
    %c0_127 = arith.constant 0 : index
    %606 = vector.load %arg2[%c24, %c0_126, %c0_127] : memref<32x16x512xf32, #tpu.memory_space<vmem>>, vector<1x16x512xf32>
    %607 = vector.shape_cast %606 : vector<1x16x512xf32> to vector<16x512xf32>
    %cst_128 = arith.constant dense<0.000000e+00> : vector<16x512xf32>
    %608 = tpu.matmul %605, %3, %cst_128 {dimension_numbers = #tpu.dot_dimension_numbers<[1], [0], [0], [1], [0, 0, 1, 1], [], []>} : vector<16x128xf32>, vector<128x512xf32>, vector<16x512xf32> -> vector<16x512xf32>
    %609 = arith.addf %607, %608 : vector<16x512xf32>
    %610 = vector.extract_strided_slice %609 {offsets = [0, 0], sizes = [16, 256], strides = [1, 1]} : vector<16x512xf32> to vector<16x256xf32>
    %611 = arith.negf %610 : vector<16x256xf32>
    %612 = math.exp %611 : vector<16x256xf32>
    %cst_129 = arith.constant 1.000000e+00 : f32
    %613 = vector.broadcast %cst_129 : f32 to vector<16x256xf32>
    %614 = arith.addf %613, %612 : vector<16x256xf32>
    %615 = arith.divf %613, %614 : vector<16x256xf32>
    %616 = vector.extract_strided_slice %615 {offsets = [0, 0], sizes = [16, 128], strides = [1, 1]} : vector<16x256xf32> to vector<16x128xf32>
    %617 = vector.extract_strided_slice %615 {offsets = [0, 128], sizes = [16, 128], strides = [1, 1]} : vector<16x256xf32> to vector<16x128xf32>
    %618 = vector.extract_strided_slice %609 {offsets = [0, 256], sizes = [16, 128], strides = [1, 1]} : vector<16x512xf32> to vector<16x128xf32>
    %619 = math.tanh %618 : vector<16x128xf32>
    %620 = vector.extract_strided_slice %609 {offsets = [0, 384], sizes = [16, 128], strides = [1, 1]} : vector<16x512xf32> to vector<16x128xf32>
    %621 = arith.negf %620 : vector<16x128xf32>
    %622 = math.exp %621 : vector<16x128xf32>
    %cst_130 = arith.constant 1.000000e+00 : f32
    %623 = vector.broadcast %cst_130 : f32 to vector<16x128xf32>
    %624 = arith.addf %623, %622 : vector<16x128xf32>
    %625 = arith.divf %623, %624 : vector<16x128xf32>
    %626 = arith.mulf %617, %603 : vector<16x128xf32>
    %627 = arith.mulf %616, %619 : vector<16x128xf32>
    %628 = arith.addf %626, %627 : vector<16x128xf32>
    %629 = math.tanh %628 : vector<16x128xf32>
    %630 = arith.mulf %625, %629 : vector<16x128xf32>
    %c25 = arith.constant 25 : index
    %c0_131 = arith.constant 0 : index
    %c0_132 = arith.constant 0 : index
    %631 = vector.load %arg2[%c25, %c0_131, %c0_132] : memref<32x16x512xf32, #tpu.memory_space<vmem>>, vector<1x16x512xf32>
    %632 = vector.shape_cast %631 : vector<1x16x512xf32> to vector<16x512xf32>
    %cst_133 = arith.constant dense<0.000000e+00> : vector<16x512xf32>
    %633 = tpu.matmul %630, %3, %cst_133 {dimension_numbers = #tpu.dot_dimension_numbers<[1], [0], [0], [1], [0, 0, 1, 1], [], []>} : vector<16x128xf32>, vector<128x512xf32>, vector<16x512xf32> -> vector<16x512xf32>
    %634 = arith.addf %632, %633 : vector<16x512xf32>
    %635 = vector.extract_strided_slice %634 {offsets = [0, 0], sizes = [16, 256], strides = [1, 1]} : vector<16x512xf32> to vector<16x256xf32>
    %636 = arith.negf %635 : vector<16x256xf32>
    %637 = math.exp %636 : vector<16x256xf32>
    %cst_134 = arith.constant 1.000000e+00 : f32
    %638 = vector.broadcast %cst_134 : f32 to vector<16x256xf32>
    %639 = arith.addf %638, %637 : vector<16x256xf32>
    %640 = arith.divf %638, %639 : vector<16x256xf32>
    %641 = vector.extract_strided_slice %640 {offsets = [0, 0], sizes = [16, 128], strides = [1, 1]} : vector<16x256xf32> to vector<16x128xf32>
    %642 = vector.extract_strided_slice %640 {offsets = [0, 128], sizes = [16, 128], strides = [1, 1]} : vector<16x256xf32> to vector<16x128xf32>
    %643 = vector.extract_strided_slice %634 {offsets = [0, 256], sizes = [16, 128], strides = [1, 1]} : vector<16x512xf32> to vector<16x128xf32>
    %644 = math.tanh %643 : vector<16x128xf32>
    %645 = vector.extract_strided_slice %634 {offsets = [0, 384], sizes = [16, 128], strides = [1, 1]} : vector<16x512xf32> to vector<16x128xf32>
    %646 = arith.negf %645 : vector<16x128xf32>
    %647 = math.exp %646 : vector<16x128xf32>
    %cst_135 = arith.constant 1.000000e+00 : f32
    %648 = vector.broadcast %cst_135 : f32 to vector<16x128xf32>
    %649 = arith.addf %648, %647 : vector<16x128xf32>
    %650 = arith.divf %648, %649 : vector<16x128xf32>
    %651 = arith.mulf %642, %628 : vector<16x128xf32>
    %652 = arith.mulf %641, %644 : vector<16x128xf32>
    %653 = arith.addf %651, %652 : vector<16x128xf32>
    %654 = math.tanh %653 : vector<16x128xf32>
    %655 = arith.mulf %650, %654 : vector<16x128xf32>
    %c26 = arith.constant 26 : index
    %c0_136 = arith.constant 0 : index
    %c0_137 = arith.constant 0 : index
    %656 = vector.load %arg2[%c26, %c0_136, %c0_137] : memref<32x16x512xf32, #tpu.memory_space<vmem>>, vector<1x16x512xf32>
    %657 = vector.shape_cast %656 : vector<1x16x512xf32> to vector<16x512xf32>
    %cst_138 = arith.constant dense<0.000000e+00> : vector<16x512xf32>
    %658 = tpu.matmul %655, %3, %cst_138 {dimension_numbers = #tpu.dot_dimension_numbers<[1], [0], [0], [1], [0, 0, 1, 1], [], []>} : vector<16x128xf32>, vector<128x512xf32>, vector<16x512xf32> -> vector<16x512xf32>
    %659 = arith.addf %657, %658 : vector<16x512xf32>
    %660 = vector.extract_strided_slice %659 {offsets = [0, 0], sizes = [16, 256], strides = [1, 1]} : vector<16x512xf32> to vector<16x256xf32>
    %661 = arith.negf %660 : vector<16x256xf32>
    %662 = math.exp %661 : vector<16x256xf32>
    %cst_139 = arith.constant 1.000000e+00 : f32
    %663 = vector.broadcast %cst_139 : f32 to vector<16x256xf32>
    %664 = arith.addf %663, %662 : vector<16x256xf32>
    %665 = arith.divf %663, %664 : vector<16x256xf32>
    %666 = vector.extract_strided_slice %665 {offsets = [0, 0], sizes = [16, 128], strides = [1, 1]} : vector<16x256xf32> to vector<16x128xf32>
    %667 = vector.extract_strided_slice %665 {offsets = [0, 128], sizes = [16, 128], strides = [1, 1]} : vector<16x256xf32> to vector<16x128xf32>
    %668 = vector.extract_strided_slice %659 {offsets = [0, 256], sizes = [16, 128], strides = [1, 1]} : vector<16x512xf32> to vector<16x128xf32>
    %669 = math.tanh %668 : vector<16x128xf32>
    %670 = vector.extract_strided_slice %659 {offsets = [0, 384], sizes = [16, 128], strides = [1, 1]} : vector<16x512xf32> to vector<16x128xf32>
    %671 = arith.negf %670 : vector<16x128xf32>
    %672 = math.exp %671 : vector<16x128xf32>
    %cst_140 = arith.constant 1.000000e+00 : f32
    %673 = vector.broadcast %cst_140 : f32 to vector<16x128xf32>
    %674 = arith.addf %673, %672 : vector<16x128xf32>
    %675 = arith.divf %673, %674 : vector<16x128xf32>
    %676 = arith.mulf %667, %653 : vector<16x128xf32>
    %677 = arith.mulf %666, %669 : vector<16x128xf32>
    %678 = arith.addf %676, %677 : vector<16x128xf32>
    %679 = math.tanh %678 : vector<16x128xf32>
    %680 = arith.mulf %675, %679 : vector<16x128xf32>
    %c27 = arith.constant 27 : index
    %c0_141 = arith.constant 0 : index
    %c0_142 = arith.constant 0 : index
    %681 = vector.load %arg2[%c27, %c0_141, %c0_142] : memref<32x16x512xf32, #tpu.memory_space<vmem>>, vector<1x16x512xf32>
    %682 = vector.shape_cast %681 : vector<1x16x512xf32> to vector<16x512xf32>
    %cst_143 = arith.constant dense<0.000000e+00> : vector<16x512xf32>
    %683 = tpu.matmul %680, %3, %cst_143 {dimension_numbers = #tpu.dot_dimension_numbers<[1], [0], [0], [1], [0, 0, 1, 1], [], []>} : vector<16x128xf32>, vector<128x512xf32>, vector<16x512xf32> -> vector<16x512xf32>
    %684 = arith.addf %682, %683 : vector<16x512xf32>
    %685 = vector.extract_strided_slice %684 {offsets = [0, 0], sizes = [16, 256], strides = [1, 1]} : vector<16x512xf32> to vector<16x256xf32>
    %686 = arith.negf %685 : vector<16x256xf32>
    %687 = math.exp %686 : vector<16x256xf32>
    %cst_144 = arith.constant 1.000000e+00 : f32
    %688 = vector.broadcast %cst_144 : f32 to vector<16x256xf32>
    %689 = arith.addf %688, %687 : vector<16x256xf32>
    %690 = arith.divf %688, %689 : vector<16x256xf32>
    %691 = vector.extract_strided_slice %690 {offsets = [0, 0], sizes = [16, 128], strides = [1, 1]} : vector<16x256xf32> to vector<16x128xf32>
    %692 = vector.extract_strided_slice %690 {offsets = [0, 128], sizes = [16, 128], strides = [1, 1]} : vector<16x256xf32> to vector<16x128xf32>
    %693 = vector.extract_strided_slice %684 {offsets = [0, 256], sizes = [16, 128], strides = [1, 1]} : vector<16x512xf32> to vector<16x128xf32>
    %694 = math.tanh %693 : vector<16x128xf32>
    %695 = vector.extract_strided_slice %684 {offsets = [0, 384], sizes = [16, 128], strides = [1, 1]} : vector<16x512xf32> to vector<16x128xf32>
    %696 = arith.negf %695 : vector<16x128xf32>
    %697 = math.exp %696 : vector<16x128xf32>
    %cst_145 = arith.constant 1.000000e+00 : f32
    %698 = vector.broadcast %cst_145 : f32 to vector<16x128xf32>
    %699 = arith.addf %698, %697 : vector<16x128xf32>
    %700 = arith.divf %698, %699 : vector<16x128xf32>
    %701 = arith.mulf %692, %678 : vector<16x128xf32>
    %702 = arith.mulf %691, %694 : vector<16x128xf32>
    %703 = arith.addf %701, %702 : vector<16x128xf32>
    %704 = math.tanh %703 : vector<16x128xf32>
    %705 = arith.mulf %700, %704 : vector<16x128xf32>
    %c28 = arith.constant 28 : index
    %c0_146 = arith.constant 0 : index
    %c0_147 = arith.constant 0 : index
    %706 = vector.load %arg2[%c28, %c0_146, %c0_147] : memref<32x16x512xf32, #tpu.memory_space<vmem>>, vector<1x16x512xf32>
    %707 = vector.shape_cast %706 : vector<1x16x512xf32> to vector<16x512xf32>
    %cst_148 = arith.constant dense<0.000000e+00> : vector<16x512xf32>
    %708 = tpu.matmul %705, %3, %cst_148 {dimension_numbers = #tpu.dot_dimension_numbers<[1], [0], [0], [1], [0, 0, 1, 1], [], []>} : vector<16x128xf32>, vector<128x512xf32>, vector<16x512xf32> -> vector<16x512xf32>
    %709 = arith.addf %707, %708 : vector<16x512xf32>
    %710 = vector.extract_strided_slice %709 {offsets = [0, 0], sizes = [16, 256], strides = [1, 1]} : vector<16x512xf32> to vector<16x256xf32>
    %711 = arith.negf %710 : vector<16x256xf32>
    %712 = math.exp %711 : vector<16x256xf32>
    %cst_149 = arith.constant 1.000000e+00 : f32
    %713 = vector.broadcast %cst_149 : f32 to vector<16x256xf32>
    %714 = arith.addf %713, %712 : vector<16x256xf32>
    %715 = arith.divf %713, %714 : vector<16x256xf32>
    %716 = vector.extract_strided_slice %715 {offsets = [0, 0], sizes = [16, 128], strides = [1, 1]} : vector<16x256xf32> to vector<16x128xf32>
    %717 = vector.extract_strided_slice %715 {offsets = [0, 128], sizes = [16, 128], strides = [1, 1]} : vector<16x256xf32> to vector<16x128xf32>
    %718 = vector.extract_strided_slice %709 {offsets = [0, 256], sizes = [16, 128], strides = [1, 1]} : vector<16x512xf32> to vector<16x128xf32>
    %719 = math.tanh %718 : vector<16x128xf32>
    %720 = vector.extract_strided_slice %709 {offsets = [0, 384], sizes = [16, 128], strides = [1, 1]} : vector<16x512xf32> to vector<16x128xf32>
    %721 = arith.negf %720 : vector<16x128xf32>
    %722 = math.exp %721 : vector<16x128xf32>
    %cst_150 = arith.constant 1.000000e+00 : f32
    %723 = vector.broadcast %cst_150 : f32 to vector<16x128xf32>
    %724 = arith.addf %723, %722 : vector<16x128xf32>
    %725 = arith.divf %723, %724 : vector<16x128xf32>
    %726 = arith.mulf %717, %703 : vector<16x128xf32>
    %727 = arith.mulf %716, %719 : vector<16x128xf32>
    %728 = arith.addf %726, %727 : vector<16x128xf32>
    %729 = math.tanh %728 : vector<16x128xf32>
    %730 = arith.mulf %725, %729 : vector<16x128xf32>
    %c29 = arith.constant 29 : index
    %c0_151 = arith.constant 0 : index
    %c0_152 = arith.constant 0 : index
    %731 = vector.load %arg2[%c29, %c0_151, %c0_152] : memref<32x16x512xf32, #tpu.memory_space<vmem>>, vector<1x16x512xf32>
    %732 = vector.shape_cast %731 : vector<1x16x512xf32> to vector<16x512xf32>
    %cst_153 = arith.constant dense<0.000000e+00> : vector<16x512xf32>
    %733 = tpu.matmul %730, %3, %cst_153 {dimension_numbers = #tpu.dot_dimension_numbers<[1], [0], [0], [1], [0, 0, 1, 1], [], []>} : vector<16x128xf32>, vector<128x512xf32>, vector<16x512xf32> -> vector<16x512xf32>
    %734 = arith.addf %732, %733 : vector<16x512xf32>
    %735 = vector.extract_strided_slice %734 {offsets = [0, 0], sizes = [16, 256], strides = [1, 1]} : vector<16x512xf32> to vector<16x256xf32>
    %736 = arith.negf %735 : vector<16x256xf32>
    %737 = math.exp %736 : vector<16x256xf32>
    %cst_154 = arith.constant 1.000000e+00 : f32
    %738 = vector.broadcast %cst_154 : f32 to vector<16x256xf32>
    %739 = arith.addf %738, %737 : vector<16x256xf32>
    %740 = arith.divf %738, %739 : vector<16x256xf32>
    %741 = vector.extract_strided_slice %740 {offsets = [0, 0], sizes = [16, 128], strides = [1, 1]} : vector<16x256xf32> to vector<16x128xf32>
    %742 = vector.extract_strided_slice %740 {offsets = [0, 128], sizes = [16, 128], strides = [1, 1]} : vector<16x256xf32> to vector<16x128xf32>
    %743 = vector.extract_strided_slice %734 {offsets = [0, 256], sizes = [16, 128], strides = [1, 1]} : vector<16x512xf32> to vector<16x128xf32>
    %744 = math.tanh %743 : vector<16x128xf32>
    %745 = vector.extract_strided_slice %734 {offsets = [0, 384], sizes = [16, 128], strides = [1, 1]} : vector<16x512xf32> to vector<16x128xf32>
    %746 = arith.negf %745 : vector<16x128xf32>
    %747 = math.exp %746 : vector<16x128xf32>
    %cst_155 = arith.constant 1.000000e+00 : f32
    %748 = vector.broadcast %cst_155 : f32 to vector<16x128xf32>
    %749 = arith.addf %748, %747 : vector<16x128xf32>
    %750 = arith.divf %748, %749 : vector<16x128xf32>
    %751 = arith.mulf %742, %728 : vector<16x128xf32>
    %752 = arith.mulf %741, %744 : vector<16x128xf32>
    %753 = arith.addf %751, %752 : vector<16x128xf32>
    %754 = math.tanh %753 : vector<16x128xf32>
    %755 = arith.mulf %750, %754 : vector<16x128xf32>
    %c30 = arith.constant 30 : index
    %c0_156 = arith.constant 0 : index
    %c0_157 = arith.constant 0 : index
    %756 = vector.load %arg2[%c30, %c0_156, %c0_157] : memref<32x16x512xf32, #tpu.memory_space<vmem>>, vector<1x16x512xf32>
    %757 = vector.shape_cast %756 : vector<1x16x512xf32> to vector<16x512xf32>
    %cst_158 = arith.constant dense<0.000000e+00> : vector<16x512xf32>
    %758 = tpu.matmul %755, %3, %cst_158 {dimension_numbers = #tpu.dot_dimension_numbers<[1], [0], [0], [1], [0, 0, 1, 1], [], []>} : vector<16x128xf32>, vector<128x512xf32>, vector<16x512xf32> -> vector<16x512xf32>
    %759 = arith.addf %757, %758 : vector<16x512xf32>
    %760 = vector.extract_strided_slice %759 {offsets = [0, 0], sizes = [16, 256], strides = [1, 1]} : vector<16x512xf32> to vector<16x256xf32>
    %761 = arith.negf %760 : vector<16x256xf32>
    %762 = math.exp %761 : vector<16x256xf32>
    %cst_159 = arith.constant 1.000000e+00 : f32
    %763 = vector.broadcast %cst_159 : f32 to vector<16x256xf32>
    %764 = arith.addf %763, %762 : vector<16x256xf32>
    %765 = arith.divf %763, %764 : vector<16x256xf32>
    %766 = vector.extract_strided_slice %765 {offsets = [0, 0], sizes = [16, 128], strides = [1, 1]} : vector<16x256xf32> to vector<16x128xf32>
    %767 = vector.extract_strided_slice %765 {offsets = [0, 128], sizes = [16, 128], strides = [1, 1]} : vector<16x256xf32> to vector<16x128xf32>
    %768 = vector.extract_strided_slice %759 {offsets = [0, 256], sizes = [16, 128], strides = [1, 1]} : vector<16x512xf32> to vector<16x128xf32>
    %769 = math.tanh %768 : vector<16x128xf32>
    %770 = vector.extract_strided_slice %759 {offsets = [0, 384], sizes = [16, 128], strides = [1, 1]} : vector<16x512xf32> to vector<16x128xf32>
    %771 = arith.negf %770 : vector<16x128xf32>
    %772 = math.exp %771 : vector<16x128xf32>
    %cst_160 = arith.constant 1.000000e+00 : f32
    %773 = vector.broadcast %cst_160 : f32 to vector<16x128xf32>
    %774 = arith.addf %773, %772 : vector<16x128xf32>
    %775 = arith.divf %773, %774 : vector<16x128xf32>
    %776 = arith.mulf %767, %753 : vector<16x128xf32>
    %777 = arith.mulf %766, %769 : vector<16x128xf32>
    %778 = arith.addf %776, %777 : vector<16x128xf32>
    %779 = math.tanh %778 : vector<16x128xf32>
    %780 = arith.mulf %775, %779 : vector<16x128xf32>
    %c31 = arith.constant 31 : index
    %c0_161 = arith.constant 0 : index
    %c0_162 = arith.constant 0 : index
    %781 = vector.load %arg2[%c31, %c0_161, %c0_162] : memref<32x16x512xf32, #tpu.memory_space<vmem>>, vector<1x16x512xf32>
    %782 = vector.shape_cast %781 : vector<1x16x512xf32> to vector<16x512xf32>
    %cst_163 = arith.constant dense<0.000000e+00> : vector<16x512xf32>
    %783 = tpu.matmul %780, %3, %cst_163 {dimension_numbers = #tpu.dot_dimension_numbers<[1], [0], [0], [1], [0, 0, 1, 1], [], []>} : vector<16x128xf32>, vector<128x512xf32>, vector<16x512xf32> -> vector<16x512xf32>
    %784 = arith.addf %782, %783 : vector<16x512xf32>
    %785 = vector.extract_strided_slice %784 {offsets = [0, 0], sizes = [16, 256], strides = [1, 1]} : vector<16x512xf32> to vector<16x256xf32>
    %786 = arith.negf %785 : vector<16x256xf32>
    %787 = math.exp %786 : vector<16x256xf32>
    %cst_164 = arith.constant 1.000000e+00 : f32
    %788 = vector.broadcast %cst_164 : f32 to vector<16x256xf32>
    %789 = arith.addf %788, %787 : vector<16x256xf32>
    %790 = arith.divf %788, %789 : vector<16x256xf32>
    %791 = vector.extract_strided_slice %790 {offsets = [0, 0], sizes = [16, 128], strides = [1, 1]} : vector<16x256xf32> to vector<16x128xf32>
    %792 = vector.extract_strided_slice %790 {offsets = [0, 128], sizes = [16, 128], strides = [1, 1]} : vector<16x256xf32> to vector<16x128xf32>
    %793 = vector.extract_strided_slice %784 {offsets = [0, 256], sizes = [16, 128], strides = [1, 1]} : vector<16x512xf32> to vector<16x128xf32>
    %794 = math.tanh %793 : vector<16x128xf32>
    %795 = vector.extract_strided_slice %784 {offsets = [0, 384], sizes = [16, 128], strides = [1, 1]} : vector<16x512xf32> to vector<16x128xf32>
    %796 = arith.negf %795 : vector<16x128xf32>
    %797 = math.exp %796 : vector<16x128xf32>
    %cst_165 = arith.constant 1.000000e+00 : f32
    %798 = vector.broadcast %cst_165 : f32 to vector<16x128xf32>
    %799 = arith.addf %798, %797 : vector<16x128xf32>
    %800 = arith.divf %798, %799 : vector<16x128xf32>
    %801 = arith.mulf %792, %778 : vector<16x128xf32>
    %802 = arith.mulf %791, %794 : vector<16x128xf32>
    %803 = arith.addf %801, %802 : vector<16x128xf32>
    %804 = math.tanh %803 : vector<16x128xf32>
    %805 = arith.mulf %800, %804 : vector<16x128xf32>
    %c0_166 = arith.constant 0 : index
    %c0_167 = arith.constant 0 : index
    %806 = vector.load %arg7[%c0_166, %c0_167] : memref<16x128xf32, #tpu.memory_space<vmem>>, vector<16x128xf32>
    tpu.vector_store %arg7[%c0_166, %c0_167], %805 {strides = array<i32>} : memref<16x128xf32, #tpu.memory_space<vmem>>, vector<16x128xf32>,
    %c0_168 = arith.constant 0 : index
    %c0_169 = arith.constant 0 : index
    %807 = vector.load %arg8[%c0_168, %c0_169] : memref<16x128xf32, #tpu.memory_space<vmem>>, vector<16x128xf32>
    tpu.vector_store %arg8[%c0_168, %c0_169], %803 {strides = array<i32>} : memref<16x128xf32, #tpu.memory_space<vmem>>, vector<16x128xf32>,
    %c0_i32_170 = arith.constant 0 : i32
    %808 = arith.cmpi eq, %arg1, %c0_i32_170 : i32
    %809 = arith.extui %808 : i1 to i32
    %c0_i32_171 = arith.constant 0 : i32
    %810 = arith.cmpi ne, %809, %c0_i32_171 : i32
    scf.if %810 {
      %c0_172 = arith.constant 0 : index
      %c0_173 = arith.constant 0 : index
      %811 = vector.load %arg7[%c0_172, %c0_173] : memref<16x128xf32, #tpu.memory_space<vmem>>, vector<16x128xf32>
      %c0_174 = arith.constant 0 : index
      %c0_175 = arith.constant 0 : index
      %812 = vector.load %arg4[%c0_174, %c0_175] : memref<128x128xf32, #tpu.memory_space<vmem>>, vector<128x128xf32>
      %cst_176 = arith.constant dense<0.000000e+00> : vector<16x128xf32>
      %813 = tpu.matmul %811, %812, %cst_176 {dimension_numbers = #tpu.dot_dimension_numbers<[1], [0], [0], [1], [0, 0, 1, 1], [], []>} : vector<16x128xf32>, vector<128x128xf32>, vector<16x128xf32> -> vector<16x128xf32>
      %c0_177 = arith.constant 0 : index
      %c0_178 = arith.constant 0 : index
      %814 = vector.load %arg5[%c0_177, %c0_178] : memref<1x128xf32, #tpu.memory_space<vmem>>, vector<1x128xf32>
      %815 = vector.broadcast %814 : vector<1x128xf32> to vector<16x128xf32>
      %816 = arith.addf %813, %815 : vector<16x128xf32>
      %c0_179 = arith.constant 0 : index
      %c0_180 = arith.constant 0 : index
      %817 = vector.load %arg6[%c0_179, %c0_180] : memref<16x128xf32, #tpu.memory_space<vmem>>, vector<16x128xf32>
      tpu.vector_store %arg6[%c0_179, %c0_180], %816 {strides = array<i32>} : memref<16x128xf32, #tpu.memory_space<vmem>>, vector<16x128xf32>,
    } else {
    }
    return
  }
  func.func @transform_0(%arg0: i32, %arg1: i32) -> (i32, i32, i32) {
    %c0_i32 = arith.constant 0 : i32
    %c0_i32_0 = arith.constant 0 : i32
    return %arg1, %arg0, %c0_i32 : i32, i32, i32
  }
  func.func @transform_1(%arg0: i32, %arg1: i32) -> (i32, i32) {
    %c0_i32 = arith.constant 0 : i32
    %c0_i32_0 = arith.constant 0 : i32
    %c0_i32_1 = arith.constant 0 : i32
    return %c0_i32, %c0_i32_0 : i32, i32
  }
  func.func @transform_2(%arg0: i32, %arg1: i32) -> (i32, i32) {
    %c0_i32 = arith.constant 0 : i32
    %c0_i32_0 = arith.constant 0 : i32
    %c0_i32_1 = arith.constant 0 : i32
    return %c0_i32, %c0_i32_0 : i32, i32
  }
  func.func @transform_3(%arg0: i32, %arg1: i32) -> (i32, i32) {
    %c0_i32 = arith.constant 0 : i32
    %c0_i32_0 = arith.constant 0 : i32
    %c0_i32_1 = arith.constant 0 : i32
    return %c0_i32, %c0_i32_0 : i32, i32
  }
  func.func @transform_4(%arg0: i32, %arg1: i32) -> (i32, i32) {
    %c0_i32 = arith.constant 0 : i32
    %c0_i32_0 = arith.constant 0 : i32
    return %arg0, %c0_i32 : i32, i32
  }
}

</mosaic_0001>

<llo_original>
// kernel: sentence_classifier_forward.1
$region0: #{sentence_classifier_forward.1}
  #allocation0 [shape = 'u32[]', space=smem, size = 0x4, offset = 0x4, fixed_abs, tag = 'smem constant byte address 0x4 - core index']
  #allocation1 [shape = 'u32[144,128]{1,0:T(1,128)}', space=vmem, size = 0x12000, scoped, tag = 'internal scratch']
  #allocation2 [shape = 'f32[16,128]{1,0:T(8,128)}', space=vmem, size = 0x2000, scoped, tag = 'scratch operand']
  #allocation3 [shape = 'f32[16,128]{1,0:T(8,128)}', space=vmem, size = 0x2000, scoped, tag = 'scratch operand']
  %s0 = inlined_call_operand.vmem [shape: f32[32,16,512], index: 0, kind: input, shape index: {}]
  %s1 = inlined_call_operand.vmem [shape: f32[128,512], index: 1, kind: input, shape index: {}]
  %s2 = inlined_call_operand.vmem [shape: f32[128,128], index: 2, kind: input, shape index: {}]
  %s3 = inlined_call_operand.vmem [shape: f32[1,128], index: 3, kind: input, shape index: {}]
  %s4 = inlined_call_operand.vmem [shape: f32[16,128], index: 4, kind: output, shape index: {}]
  %s5 = sld [smem:[#allocation0]]
  $region34: #{sentence_classifier_forward.1} parent=0
    _
  %s7 = ssub.s32 1, %s5
  %s8 = scalar_select 0, %s7, %s5
  // Predicated region
  $region2: #{sentence_classifier_forward.1} parent=0 // pred_check
    _
  $region3: #{sentence_classifier_forward.1} parent=0 // pred_check_branch
    %10 = sbr.rel (0) target = $region5
  $region4: #{sentence_classifier_forward.1} parent=0 // pred_region
    _
  $region5: #{sentence_classifier_forward.1} parent=0 // pred_fallthru
    _
  // Predicated region
  $region6: #{sentence_classifier_forward.1} parent=0 // pred_check
    _
  $region7: #{sentence_classifier_forward.1} parent=0 // pred_check_branch
    %12 = sbr.rel (0) target = $region9
  $region8: #{sentence_classifier_forward.1} parent=0 // pred_region
    _
  $region9: #{sentence_classifier_forward.1} parent=0 // pred_fallthru
    _
  // Predicated region
  $region10: #{sentence_classifier_forward.1} parent=0 // pred_check
    _
  $region11: #{sentence_classifier_forward.1} parent=0 // pred_check_branch
    %14 = sbr.rel (0) target = $region13
  $region12: #{sentence_classifier_forward.1} parent=0 // pred_region
    _
  $region13: #{sentence_classifier_forward.1} parent=0 // pred_fallthru
    _
  // Predicated region
  $region14: #{sentence_classifier_forward.1} parent=0 // pred_check
    _
  $region15: #{sentence_classifier_forward.1} parent=0 // pred_check_branch
    %16 = sbr.rel (0) target = $region17
  $region16: #{sentence_classifier_forward.1} parent=0 // pred_region
    _
  $region17: #{sentence_classifier_forward.1} parent=0 // pred_fallthru
    _
  %p17 = scmp.eq.s32.totalorder 0, 0
  // Predicated region
  $region18: #{sentence_classifier_forward.1} parent=0 // pred_check
    %p18 = pneg %p17
  $region19: #{sentence_classifier_forward.1} parent=0 // pred_check_branch
    %20 = sbr.rel (%p18) target = $region21
  $region20: #{sentence_classifier_forward.1} parent=0 // pred_region
    %21 = vst [vmem:[#allocation2] sm:$0xff] 0.0
    %22 = vst [vmem:[#allocation2 + $0x8] sm:$0xff] 0.0
    %23 = vst [vmem:[#allocation3] sm:$0xff] 0.0
    %24 = vst [vmem:[#allocation3 + $0x8] sm:$0xff] 0.0
  $region21: #{sentence_classifier_forward.1} parent=0 // pred_fallthru
    _
  %v25 = vld [vmem:[%s1] sm:$0xff]
  %v26 = vld [vmem:[%s1 + $0x8] sm:$0xff]
  %v27 = vld [vmem:[%s1 + $0x10] sm:$0xff]
  %v28 = vld [vmem:[%s1 + $0x18] sm:$0xff]
  %v29 = vld [vmem:[%s1 + $0x20] sm:$0xff]
  %v30 = vld [vmem:[%s1 + $0x28] sm:$0xff]
  %v31 = vld [vmem:[%s1 + $0x30] sm:$0xff]
  %v32 = vld [vmem:[%s1 + $0x38] sm:$0xff]
  %v33 = vld [vmem:[%s1 + $0x40] sm:$0xff]
  %v34 = vld [vmem:[%s1 + $0x48] sm:$0xff]
  %v35 = vld [vmem:[%s1 + $0x50] sm:$0xff]
  %v36 = vld [vmem:[%s1 + $0x58] sm:$0xff]
  %v37 = vld [vmem:[%s1 + $0x60] sm:$0xff]
  %v38 = vld [vmem:[%s1 + $0x68] sm:$0xff]
  %v39 = vld [vmem:[%s1 + $0x70] sm:$0xff]
  %v40 = vld [vmem:[%s1 + $0x78] sm:$0xff]
  %v41 = vld [vmem:[%s1 + $0x80] sm:$0xff]
  %v42 = vld [vmem:[%s1 + $0x88] sm:$0xff]
  %v43 = vld [vmem:[%s1 + $0x90] sm:$0xff]
  %v44 = vld [vmem:[%s1 + $0x98] sm:$0xff]
  %v45 = vld [vmem:[%s1 + $0xa0] sm:$0xff]
  %v46 = vld [vmem:[%s1 + $0xa8] sm:$0xff]
  %v47 = vld [vmem:[%s1 + $0xb0] sm:$0xff]
  %v48 = vld [vmem:[%s1 + $0xb8] sm:$0xff]
  %v49 = vld [vmem:[%s1 + $0xc0] sm:$0xff]
  %v50 = vld [vmem:[%s1 + $0xc8] sm:$0xff]
  %v51 = vld [vmem:[%s1 + $0xd0] sm:$0xff]
  %v52 = vld [vmem:[%s1 + $0xd8] sm:$0xff]
  %v53 = vld [vmem:[%s1 + $0xe0] sm:$0xff]
  %v54 = vld [vmem:[%s1 + $0xe8] sm:$0xff]
  %v55 = vld [vmem:[%s1 + $0xf0] sm:$0xff]
  %v56 = vld [vmem:[%s1 + $0xf8] sm:$0xff]
  %v57 = vld [vmem:[%s1 + $0x100] sm:$0xff]
  %v58 = vld [vmem:[%s1 + $0x108] sm:$0xff]
  %v59 = vld [vmem:[%s1 + $0x110] sm:$0xff]
  %v60 = vld [vmem:[%s1 + $0x118] sm:$0xff]
  %v61 = vld [vmem:[%s1 + $0x120] sm:$0xff]
  %v62 = vld [vmem:[%s1 + $0x128] sm:$0xff]
  %v63 = vld [vmem:[%s1 + $0x130] sm:$0xff]
  %v64 = vld [vmem:[%s1 + $0x138] sm:$0xff]
  %v65 = vld [vmem:[%s1 + $0x140] sm:$0xff]
  %v66 = vld [vmem:[%s1 + $0x148] sm:$0xff]
  %v67 = vld [vmem:[%s1 + $0x150] sm:$0xff]
  %v68 = vld [vmem:[%s1 + $0x158] sm:$0xff]
  %v69 = vld [vmem:[%s1 + $0x160] sm:$0xff]
  %v70 = vld [vmem:[%s1 + $0x168] sm:$0xff]
  %v71 = vld [vmem:[%s1 + $0x170] sm:$0xff]
  %v72 = vld [vmem:[%s1 + $0x178] sm:$0xff]
  %v73 = vld [vmem:[%s1 + $0x180] sm:$0xff]
  %v74 = vld [vmem:[%s1 + $0x188] sm:$0xff]
  %v75 = vld [vmem:[%s1 + $0x190] sm:$0xff]
  %v76 = vld [vmem:[%s1 + $0x198] sm:$0xff]
  %v77 = vld [vmem:[%s1 + $0x1a0] sm:$0xff]
  %v78 = vld [vmem:[%s1 + $0x1a8] sm:$0xff]
  %v79 = vld [vmem:[%s1 + $0x1b0] sm:$0xff]
  %v80 = vld [vmem:[%s1 + $0x1b8] sm:$0xff]
  %v81 = vld [vmem:[%s1 + $0x1c0] sm:$0xff]
  %v82 = vld [vmem:[%s1 + $0x1c8] sm:$0xff]
  %v83 = vld [vmem:[%s1 + $0x1d0] sm:$0xff]
  %v84 = vld [vmem:[%s1 + $0x1d8] sm:$0xff]
  %v85 = vld [vmem:[%s1 + $0x1e0] sm:$0xff]
  %v86 = vld [vmem:[%s1 + $0x1e8] sm:$0xff]
  %v87 = vld [vmem:[%s1 + $0x1f0] sm:$0xff]
  %v88 = vld [vmem:[%s1 + $0x1f8] sm:$0xff]
  %v89 = vld [vmem:[#allocation2] sm:$0xff]
  %v90 = vld [vmem:[#allocation2 + $0x8] sm:$0xff]
  %v91 = vld [vmem:[#allocation3] sm:$0xff]
  %v92 = vld [vmem:[#allocation3 + $0x8] sm:$0xff]
  %v93 = vld [vmem:[%s0] sm:$0xff]
  %v94 = vld [vmem:[%s0 + $0x8] sm:$0xff]
  %v95 = vld [vmem:[%s0 + $0x10] sm:$0xff]
  %v96 = vld [vmem:[%s0 + $0x18] sm:$0xff]
  %v97 = vld [vmem:[%s0 + $0x20] sm:$0xff]
  %v98 = vld [vmem:[%s0 + $0x28] sm:$0xff]
  %v99 = vld [vmem:[%s0 + $0x30] sm:$0xff]
  %v100 = vld [vmem:[%s0 + $0x38] sm:$0xff]
  %101 = vmatprep.subr.mxu0 %v26
  %102 = vmatpush1.msra.mxu0 %v25
  %103 = vmatprep.subr.mxu0 %v30
  %104 = vmatpush1.msra.mxu0 %v29
  %105 = vmatprep.subr.mxu0 %v34
  %106 = vmatpush1.msra.mxu0 %v33
  %107 = vmatprep.subr.mxu0 %v38
  %108 = vmatpush1.msra.mxu0 %v37
  %109 = vmatprep.subr.mxu0 %v42
  %110 = vmatpush1.msra.mxu0 %v41
  %111 = vmatprep.subr.mxu0 %v46
  %112 = vmatpush1.msra.mxu0 %v45
  %113 = vmatprep.subr.mxu0 %v50
  %114 = vmatpush1.msra.mxu0 %v49
  %115 = vmatprep.subr.mxu0 %v54
  %116 = vmatpush1.msra.mxu0 %v53
  %117 = vmatprep.subr.mxu0 %v58
  %118 = vmatpush1.msra.mxu0 %v57
  %119 = vmatprep.subr.mxu0 %v62
  %120 = vmatpush1.msra.mxu0 %v61
  %121 = vmatprep.subr.mxu0 %v66
  %122 = vmatpush1.msra.mxu0 %v65
  %123 = vmatprep.subr.mxu0 %v70
  %124 = vmatpush1.msra.mxu0 %v69
  %125 = vmatprep.subr.mxu0 %v74
  %126 = vmatpush1.msra.mxu0 %v73
  %127 = vmatprep.subr.mxu0 %v78
  %128 = vmatpush1.msra.mxu0 %v77
  %129 = vmatprep.subr.mxu0 %v82
  %130 = vmatpush1.msra.mxu0 %v81
  %131 = vmatprep.subr.mxu0 %v86
  %132 = vmatpush1.msra.mxu0 %v85
  %133 = vmatprep.subr.mxu0 0.0
  %134 = vmatpush1.msra.mxu0 0.0
  %135 = vmatprep.subr.mxu0 0.0
  %136 = vmatpush1.msra.mxu0 0.0
  %137 = vmatprep.subr.mxu0 0.0
  %138 = vmatpush1.msra.mxu0 0.0
  %139 = vmatprep.subr.mxu0 0.0
  %140 = vmatpush1.msra.mxu0 0.0
  %141 = vmatprep.subr.mxu0 0.0
  %142 = vmatpush1.msra.mxu0 0.0
  %143 = vmatprep.subr.mxu0 0.0
  %144 = vmatpush1.msra.mxu0 0.0
  %145 = vmatprep.subr.mxu0 0.0
  %146 = vmatpush1.msra.mxu0 0.0
  %147 = vmatprep.subr.mxu0 0.0
  %148 = vmatpush1.msra.mxu0 0.0
  %149 = vmatprep.subr.mxu0 0.0
  %150 = vmatpush1.msra.mxu0 0.0
  %151 = vmatprep.subr.mxu0 0.0
  %152 = vmatpush1.msra.mxu0 0.0
  %153 = vmatprep.subr.mxu0 0.0
  %154 = vmatpush1.msra.mxu0 0.0
  %155 = vmatprep.subr.mxu0 0.0
  %156 = vmatpush1.msra.mxu0 0.0
  %157 = vmatprep.subr.mxu0 0.0
  %158 = vmatpush1.msra.mxu0 0.0
  %159 = vmatprep.subr.mxu0 0.0
  %160 = vmatpush1.msra.mxu0 0.0
  %161 = vmatprep.subr.mxu0 0.0
  %162 = vmatpush1.msra.mxu0 0.0
  %163 = vmatprep.subr.mxu0 0.0
  %164 = vmatpush1.msra.mxu0 0.0
  %165 = vmatprep.mubr.f32.mxu0 0.0
  %166 = vmatmul.mubr.f32.gmra.mrb[0].mxu0 %v89
  %v167 = vpop.f32.mrb[0].mxu0
  %v168 = vadd.f32 0.0, %v167
  %v169 = vpop.f32.mrb[0].mxu0
  %v170 = vadd.f32 0.0, %v169
  %171 = vmatprep.mubr.f32.mxu0 0.0
  %172 = vmatmul.mubr.f32.gmra.mrb[0].mxu0 %v90
  %v173 = vpop.f32.mrb[0].mxu0
  %v174 = vadd.f32 0.0, %v173
  %v175 = vpop.f32.mrb[0].mxu0
  %v176 = vadd.f32 0.0, %v175
  %177 = vdwg.mxu0
  %178 = vmatprep.subr.mxu0 %v28
  %179 = vmatpush1.msra.mxu0 %v27
  %180 = vmatprep.subr.mxu0 %v32
  %181 = vmatpush1.msra.mxu0 %v31
  %182 = vmatprep.subr.mxu0 %v36
  %183 = vmatpush1.msra.mxu0 %v35
  %184 = vmatprep.subr.mxu0 %v40
  %185 = vmatpush1.msra.mxu0 %v39
  %186 = vmatprep.subr.mxu0 %v44
  %187 = vmatpush1.msra.mxu0 %v43
  %188 = vmatprep.subr.mxu0 %v48
  %189 = vmatpush1.msra.mxu0 %v47
  %190 = vmatprep.subr.mxu0 %v52
  %191 = vmatpush1.msra.mxu0 %v51
  %192 = vmatprep.subr.mxu0 %v56
  %193 = vmatpush1.msra.mxu0 %v55
  %194 = vmatprep.subr.mxu0 %v60
  %195 = vmatpush1.msra.mxu0 %v59
  %196 = vmatprep.subr.mxu0 %v64
  %197 = vmatpush1.msra.mxu0 %v63
  %198 = vmatprep.subr.mxu0 %v68
  %199 = vmatpush1.msra.mxu0 %v67
  %200 = vmatprep.subr.mxu0 %v72
  %201 = vmatpush1.msra.mxu0 %v71
  %202 = vmatprep.subr.mxu0 %v76
  %203 = vmatpush1.msra.mxu0 %v75
  %204 = vmatprep.subr.mxu0 %v80
  %205 = vmatpush1.msra.mxu0 %v79
  %206 = vmatprep.subr.mxu0 %v84
  %207 = vmatpush1.msra.mxu0 %v83
  %208 = vmatprep.subr.mxu0 %v88
  %209 = vmatpush1.msra.mxu0 %v87
  %210 = vmatprep.subr.mxu0 0.0
  %211 = vmatpush1.msra.mxu0 0.0
  %212 = vmatprep.subr.mxu0 0.0
  %213 = vmatpush1.msra.mxu0 0.0
  %214 = vmatprep.subr.mxu0 0.0
  %215 = vmatpush1.msra.mxu0 0.0
  %216 = vmatprep.subr.mxu0 0.0
  %217 = vmatpush1.msra.mxu0 0.0
  %218 = vmatprep.subr.mxu0 0.0
  %219 = vmatpush1.msra.mxu0 0.0
  %220 = vmatprep.subr.mxu0 0.0
  %221 = vmatpush1.msra.mxu0 0.0
  %222 = vmatprep.subr.mxu0 0.0
  %223 = vmatpush1.msra.mxu0 0.0
  %224 = vmatprep.subr.mxu0 0.0
  %225 = vmatpush1.msra.mxu0 0.0
  %226 = vmatprep.subr.mxu0 0.0
  %227 = vmatpush1.msra.mxu0 0.0
  %228 = vmatprep.subr.mxu0 0.0
  %229 = vmatpush1.msra.mxu0 0.0
  %230 = vmatprep.subr.mxu0 0.0
  %231 = vmatpush1.msra.mxu0 0.0
  %232 = vmatprep.subr.mxu0 0.0
  %233 = vmatpush1.msra.mxu0 0.0
  %234 = vmatprep.subr.mxu0 0.0
  %235 = vmatpush1.msra.mxu0 0.0
  %236 = vmatprep.subr.mxu0 0.0
  %237 = vmatpush1.msra.mxu0 0.0
  %238 = vmatprep.subr.mxu0 0.0
  %239 = vmatpush1.msra.mxu0 0.0
  %240 = vmatprep.subr.mxu0 0.0
  %241 = vmatpush1.msra.mxu0 0.0
  %242 = vmatprep.mubr.f32.mxu0 0.0
  %243 = vmatmul.mubr.f32.gmra.mrb[0].mxu0 %v89
  %v244 = vpop.f32.mrb[0].mxu0
  %v245 = vadd.f32 0.0, %v244
  %v246 = vpop.f32.mrb[0].mxu0
  %v247 = vadd.f32 0.0, %v246
  %248 = vmatprep.mubr.f32.mxu0 0.0
  %249 = vmatmul.mubr.f32.gmra.mrb[0].mxu0 %v90
  %v250 = vpop.f32.mrb[0].mxu0
  %v251 = vadd.f32 0.0, %v250
  %v252 = vpop.f32.mrb[0].mxu0
  %v253 = vadd.f32 0.0, %v252
  %254 = vdwg.mxu0
  %v255 = vadd.f32 %v93, %v168
  %v256 = vadd.f32 %v94, %v170
  %v257 = vadd.f32 %v95, %v245
  %v258 = vadd.f32 %v96, %v247
  %v259 = vadd.f32 %v97, %v174
  %v260 = vadd.f32 %v98, %v176
  %v261 = vadd.f32 %v99, %v251
  %v262 = vadd.f32 %v100, %v253
  %v263 = vxor.u32 %v255, 2147483648
  %v264 = vxor.u32 %v256, 2147483648
  %v265 = vxor.u32 %v259, 2147483648
  %v266 = vxor.u32 %v260, 2147483648
  %v267 = vmul.f32 %v263, 1.442695
  %v268 = vpow.pop %v267
  %v269 = vmul.f32 %v264, 1.442695
  %v270 = vpow.pop %v269
  %v271 = vmul.f32 %v265, 1.442695
  %v272 = vpow.pop %v271
  %v273 = vmul.f32 %v266, 1.442695
  %v274 = vpow.pop %v273
  %v275 = vadd.f32 %v268, 1.0
  %v276 = vadd.f32 %v270, 1.0
  %v277 = vadd.f32 %v272, 1.0
  %v278 = vadd.f32 %v274, 1.0
  %v279 = vrcp.pop %v275
  %v280 = vmul.f32 1.0, %v279
  %v281 = vrcp.pop %v276
  %v282 = vmul.f32 1.0, %v281
  %v283 = vrcp.pop %v277
  %v284 = vmul.f32 1.0, %v283
  %v285 = vrcp.pop %v278
  %v286 = vmul.f32 1.0, %v285
  %v287 = vtanh.pop %v257
  %v288 = vtanh.pop %v261
  %v289 = vxor.u32 %v258, 2147483648
  %v290 = vxor.u32 %v262, 2147483648
  %v291 = vmul.f32 %v289, 1.442695
  %v292 = vpow.pop %v291
  %v293 = vmul.f32 %v290, 1.442695
  %v294 = vpow.pop %v293
  %v295 = vadd.f32 %v292, 1.0
  %v296 = vadd.f32 %v294, 1.0
  %v297 = vrcp.pop %v295
  %v298 = vmul.f32 1.0, %v297
  %v299 = vrcp.pop %v296
  %v300 = vmul.f32 1.0, %v299
  %v301 = vmul.f32 %v282, %v91
  %v302 = vmul.f32 %v286, %v92
  %v303 = vmul.f32 %v280, %v287
  %v304 = vmul.f32 %v284, %v288
  %v305 = vadd.f32 %v301, %v303
  %v306 = vadd.f32 %v302, %v304
  %v307 = vtanh.pop %v305
  %v308 = vtanh.pop %v306
  %v309 = vmul.f32 %v298, %v307
  %v310 = vmul.f32 %v300, %v308
  %s311 = scalar_lea.vmem %s0, 64
  %v312 = vld [vmem:[%s311] sm:$0xff]
  %v313 = vld [vmem:[%s311 + $0x8] sm:$0xff]
  %v314 = vld [vmem:[%s311 + $0x10] sm:$0xff]
  %v315 = vld [vmem:[%s311 + $0x18] sm:$0xff]
  %v316 = vld [vmem:[%s311 + $0x20] sm:$0xff]
  %v317 = vld [vmem:[%s311 + $0x28] sm:$0xff]
  %v318 = vld [vmem:[%s311 + $0x30] sm:$0xff]
  %v319 = vld [vmem:[%s311 + $0x38] sm:$0xff]
  %320 = vmatprep.subr.mxu0 %v26
  %321 = vmatpush1.msra.mxu0 %v25
  %322 = vmatprep.subr.mxu0 %v30
  %323 = vmatpush1.msra.mxu0 %v29
  %324 = vmatprep.subr.mxu0 %v34
  %325 = vmatpush1.msra.mxu0 %v33
  %326 = vmatprep.subr.mxu0 %v38
  %327 = vmatpush1.msra.mxu0 %v37
  %328 = vmatprep.subr.mxu0 %v42
  %329 = vmatpush1.msra.mxu0 %v41
  %330 = vmatprep.subr.mxu0 %v46
  %331 = vmatpush1.msra.mxu0 %v45
  %332 = vmatprep.subr.mxu0 %v50
  %333 = vmatpush1.msra.mxu0 %v49
  %334 = vmatprep.subr.mxu0 %v54
  %335 = vmatpush1.msra.mxu0 %v53
  %336 = vmatprep.subr.mxu0 %v58
  %337 = vmatpush1.msra.mxu0 %v57
  %338 = vmatprep.subr.mxu0 %v62
  %339 = vmatpush1.msra.mxu0 %v61
  %340 = vmatprep.subr.mxu0 %v66
  %341 = vmatpush1.msra.mxu0 %v65
  %342 = vmatprep.subr.mxu0 %v70
  %343 = vmatpush1.msra.mxu0 %v69
  %344 = vmatprep.subr.mxu0 %v74
  %345 = vmatpush1.msra.mxu0 %v73
  %346 = vmatprep.subr.mxu0 %v78
  %347 = vmatpush1.msra.mxu0 %v77
  %348 = vmatprep.subr.mxu0 %v82
  %349 = vmatpush1.msra.mxu0 %v81
  %350 = vmatprep.subr.mxu0 %v86
  %351 = vmatpush1.msra.mxu0 %v85
  %352 = vmatprep.subr.mxu0 0.0
  %353 = vmatpush1.msra.mxu0 0.0
  %354 = vmatprep.subr.mxu0 0.0
  %355 = vmatpush1.msra.mxu0 0.0
  %356 = vmatprep.subr.mxu0 0.0
  %357 = vmatpush1.msra.mxu0 0.0
  %358 = vmatprep.subr.mxu0 0.0
  %359 = vmatpush1.msra.mxu0 0.0
  %360 = vmatprep.subr.mxu0 0.0
  %361 = vmatpush1.msra.mxu0 0.0
  %362 = vmatprep.subr.mxu0 0.0
  %363 = vmatpush1.msra.mxu0 0.0
  %364 = vmatprep.subr.mxu0 0.0
  %365 = vmatpush1.msra.mxu0 0.0
  %366 = vmatprep.subr.mxu0 0.0
  %367 = vmatpush1.msra.mxu0 0.0
  %368 = vmatprep.subr.mxu0 0.0
  %369 = vmatpush1.msra.mxu0 0.0
  %370 = vmatprep.subr.mxu0 0.0
  %371 = vmatpush1.msra.mxu0 0.0
  %372 = vmatprep.subr.mxu0 0.0
  %373 = vmatpush1.msra.mxu0 0.0
  %374 = vmatprep.subr.mxu0 0.0
  %375 = vmatpush1.msra.mxu0 0.0
  %376 = vmatprep.subr.mxu0 0.0
  %377 = vmatpush1.msra.mxu0 0.0
  %378 = vmatprep.subr.mxu0 0.0
  %379 = vmatpush1.msra.mxu0 0.0
  %380 = vmatprep.subr.mxu0 0.0
  %381 = vmatpush1.msra.mxu0 0.0
  %382 = vmatprep.subr.mxu0 0.0
  %383 = vmatpush1.msra.mxu0 0.0
  %384 = vmatprep.mubr.f32.mxu0 0.0
  %385 = vmatmul.mubr.f32.gmra.mrb[0].mxu0 %v309
  %v386 = vpop.f32.mrb[0].mxu0
  %v387 = vadd.f32 0.0, %v386
  %v388 = vpop.f32.mrb[0].mxu0
  %v389 = vadd.f32 0.0, %v388
  %390 = vmatprep.mubr.f32.mxu0 0.0
  %391 = vmatmul.mubr.f32.gmra.mrb[0].mxu0 %v310
  %v392 = vpop.f32.mrb[0].mxu0
  %v393 = vadd.f32 0.0, %v392
  %v394 = vpop.f32.mrb[0].mxu0
  %v395 = vadd.f32 0.0, %v394
  %396 = vdwg.mxu0
  %397 = vmatprep.subr.mxu0 %v28
  %398 = vmatpush1.msra.mxu0 %v27
  %399 = vmatprep.subr.mxu0 %v32
  %400 = vmatpush1.msra.mxu0 %v31
  %401 = vmatprep.subr.mxu0 %v36
  %402 = vmatpush1.msra.mxu0 %v35
  %403 = vmatprep.subr.mxu0 %v40
  %404 = vmatpush1.msra.mxu0 %v39
  %405 = vmatprep.subr.mxu0 %v44
  %406 = vmatpush1.msra.mxu0 %v43
  %407 = vmatprep.subr.mxu0 %v48
  %408 = vmatpush1.msra.mxu0 %v47
  %409 = vmatprep.subr.mxu0 %v52
  %410 = vmatpush1.msra.mxu0 %v51
  %411 = vmatprep.subr.mxu0 %v56
  %412 = vmatpush1.msra.mxu0 %v55
  %413 = vmatprep.subr.mxu0 %v60
  %414 = vmatpush1.msra.mxu0 %v59
  %415 = vmatprep.subr.mxu0 %v64
  %416 = vmatpush1.msra.mxu0 %v63
  %417 = vmatprep.subr.mxu0 %v68
  %418 = vmatpush1.msra.mxu0 %v67
  %419 = vmatprep.subr.mxu0 %v72
  %420 = vmatpush1.msra.mxu0 %v71
  %421 = vmatprep.subr.mxu0 %v76
  %422 = vmatpush1.msra.mxu0 %v75
  %423 = vmatprep.subr.mxu0 %v80
  %424 = vmatpush1.msra.mxu0 %v79
  %425 = vmatprep.subr.mxu0 %v84
  %426 = vmatpush1.msra.mxu0 %v83
  %427 = vmatprep.subr.mxu0 %v88
  %428 = vmatpush1.msra.mxu0 %v87
  %429 = vmatprep.subr.mxu0 0.0
  %430 = vmatpush1.msra.mxu0 0.0
  %431 = vmatprep.subr.mxu0 0.0
  %432 = vmatpush1.msra.mxu0 0.0
  %433 = vmatprep.subr.mxu0 0.0
  %434 = vmatpush1.msra.mxu0 0.0
  %435 = vmatprep.subr.mxu0 0.0
  %436 = vmatpush1.msra.mxu0 0.0
  %437 = vmatprep.subr.mxu0 0.0
  %438 = vmatpush1.msra.mxu0 0.0
  %439 = vmatprep.subr.mxu0 0.0
  %440 = vmatpush1.msra.mxu0 0.0
  %441 = vmatprep.subr.mxu0 0.0
  %442 = vmatpush1.msra.mxu0 0.0
  %443 = vmatprep.subr.mxu0 0.0
  %444 = vmatpush1.msra.mxu0 0.0
  %445 = vmatprep.subr.mxu0 0.0
  %446 = vmatpush1.msra.mxu0 0.0
  %447 = vmatprep.subr.mxu0 0.0
  %448 = vmatpush1.msra.mxu0 0.0
  %449 = vmatprep.subr.mxu0 0.0
  %450 = vmatpush1.msra.mxu0 0.0
  %451 = vmatprep.subr.mxu0 0.0
  %452 = vmatpush1.msra.mxu0 0.0
  %453 = vmatprep.subr.mxu0 0.0
  %454 = vmatpush1.msra.mxu0 0.0
  %455 = vmatprep.subr.mxu0 0.0
  %456 = vmatpush1.msra.mxu0 0.0
  %457 = vmatprep.subr.mxu0 0.0
  %458 = vmatpush1.msra.mxu0 0.0
  %459 = vmatprep.subr.mxu0 0.0
  %460 = vmatpush1.msra.mxu0 0.0
  %461 = vmatprep.mubr.f32.mxu0 0.0
  %462 = vmatmul.mubr.f32.gmra.mrb[0].mxu0 %v309
  %v463 = vpop.f32.mrb[0].mxu0
  %v464 = vadd.f32 0.0, %v463
  %v465 = vpop.f32.mrb[0].mxu0
  %v466 = vadd.f32 0.0, %v465
  %467 = vmatprep.mubr.f32.mxu0 0.0
  %468 = vmatmul.mubr.f32.gmra.mrb[0].mxu0 %v310
  %v469 = vpop.f32.mrb[0].mxu0
  %v470 = vadd.f32 0.0, %v469
  %v471 = vpop.f32.mrb[0].mxu0
  %v472 = vadd.f32 0.0, %v471
  %473 = vdwg.mxu0
  %v474 = vadd.f32 %v312, %v387
  %v475 = vadd.f32 %v313, %v389
  %v476 = vadd.f32 %v314, %v464
  %v477 = vadd.f32 %v315, %v466
  %v478 = vadd.f32 %v316, %v393
  %v479 = vadd.f32 %v317, %v395
  %v480 = vadd.f32 %v318, %v470
  %v481 = vadd.f32 %v319, %v472
  %v482 = vxor.u32 %v474, 2147483648
  %v483 = vxor.u32 %v475, 2147483648
  %v484 = vxor.u32 %v478, 2147483648
  %v485 = vxor.u32 %v479, 2147483648
  %v486 = vmul.f32 %v482, 1.442695
  %v487 = vpow.pop %v486
  %v488 = vmul.f32 %v483, 1.442695
  %v489 = vpow.pop %v488
  %v490 = vmul.f32 %v484, 1.442695
  %v491 = vpow.pop %v490
  %v492 = vmul.f32 %v485, 1.442695
  %v493 = vpow.pop %v492
  %v494 = vadd.f32 %v487, 1.0
  %v495 = vadd.f32 %v489, 1.0
  %v496 = vadd.f32 %v491, 1.0
  %v497 = vadd.f32 %v493, 1.0
  %v498 = vrcp.pop %v494
  %v499 = vmul.f32 1.0, %v498
  %v500 = vrcp.pop %v495
  %v501 = vmul.f32 1.0, %v500
  %v502 = vrcp.pop %v496
  %v503 = vmul.f32 1.0, %v502
  %v504 = vrcp.pop %v497
  %v505 = vmul.f32 1.0, %v504
  %v506 = vtanh.pop %v476
  %v507 = vtanh.pop %v480
  %v508 = vxor.u32 %v477, 2147483648
  %v509 = vxor.u32 %v481, 2147483648
  %v510 = vmul.f32 %v508, 1.442695
  %v511 = vpow.pop %v510
  %v512 = vmul.f32 %v509, 1.442695
  %v513 = vpow.pop %v512
  %v514 = vadd.f32 %v511, 1.0
  %v515 = vadd.f32 %v513, 1.0
  %v516 = vrcp.pop %v514
  %v517 = vmul.f32 1.0, %v516
  %v518 = vrcp.pop %v515
  %v519 = vmul.f32 1.0, %v518
  %v520 = vmul.f32 %v501, %v305
  %v521 = vmul.f32 %v505, %v306
  %v522 = vmul.f32 %v499, %v506
  %v523 = vmul.f32 %v503, %v507
  %v524 = vadd.f32 %v520, %v522
  %v525 = vadd.f32 %v521, %v523
  %v526 = vtanh.pop %v524
  %v527 = vtanh.pop %v525
  %v528 = vmul.f32 %v517, %v526
  %v529 = vmul.f32 %v519, %v527
  %s530 = scalar_lea.vmem %s0, 128
  %v531 = vld [vmem:[%s530] sm:$0xff]
  %v532 = vld [vmem:[%s530 + $0x8] sm:$0xff]
  %v533 = vld [vmem:[%s530 + $0x10] sm:$0xff]
  %v534 = vld [vmem:[%s530 + $0x18] sm:$0xff]
  %v535 = vld [vmem:[%s530 + $0x20] sm:$0xff]
  %v536 = vld [vmem:[%s530 + $0x28] sm:$0xff]
  %v537 = vld [vmem:[%s530 + $0x30] sm:$0xff]
  %v538 = vld [vmem:[%s530 + $0x38] sm:$0xff]
  %539 = vmatprep.subr.mxu0 %v26
  %540 = vmatpush1.msra.mxu0 %v25
  %541 = vmatprep.subr.mxu0 %v30
  %542 = vmatpush1.msra.mxu0 %v29
  %543 = vmatprep.subr.mxu0 %v34
  %544 = vmatpush1.msra.mxu0 %v33
  %545 = vmatprep.subr.mxu0 %v38
  %546 = vmatpush1.msra.mxu0 %v37
  %547 = vmatprep.subr.mxu0 %v42
  %548 = vmatpush1.msra.mxu0 %v41
  %549 = vmatprep.subr.mxu0 %v46
  %550 = vmatpush1.msra.mxu0 %v45
  %551 = vmatprep.subr.mxu0 %v50
  %552 = vmatpush1.msra.mxu0 %v49
  %553 = vmatprep.subr.mxu0 %v54
  %554 = vmatpush1.msra.mxu0 %v53
  %555 = vmatprep.subr.mxu0 %v58
  %556 = vmatpush1.msra.mxu0 %v57
  %557 = vmatprep.subr.mxu0 %v62
  %558 = vmatpush1.msra.mxu0 %v61
  %559 = vmatprep.subr.mxu0 %v66
  %560 = vmatpush1.msra.mxu0 %v65
  %561 = vmatprep.subr.mxu0 %v70
  %562 = vmatpush1.msra.mxu0 %v69
  %563 = vmatprep.subr.mxu0 %v74
  %564 = vmatpush1.msra.mxu0 %v73
  %565 = vmatprep.subr.mxu0 %v78
  %566 = vmatpush1.msra.mxu0 %v77
  %567 = vmatprep.subr.mxu0 %v82
  %568 = vmatpush1.msra.mxu0 %v81
  %569 = vmatprep.subr.mxu0 %v86
  %570 = vmatpush1.msra.mxu0 %v85
  %571 = vmatprep.subr.mxu0 0.0
  %572 = vmatpush1.msra.mxu0 0.0
  %573 = vmatprep.subr.mxu0 0.0
  %574 = vmatpush1.msra.mxu0 0.0
  %575 = vmatprep.subr.mxu0 0.0
  %576 = vmatpush1.msra.mxu0 0.0
  %577 = vmatprep.subr.mxu0 0.0
  %578 = vmatpush1.msra.mxu0 0.0
  %579 = vmatprep.subr.mxu0 0.0
  %580 = vmatpush1.msra.mxu0 0.0
  %581 = vmatprep.subr.mxu0 0.0
  %582 = vmatpush1.msra.mxu0 0.0
  %583 = vmatprep.subr.mxu0 0.0
  %584 = vmatpush1.msra.mxu0 0.0
  %585 = vmatprep.subr.mxu0 0.0
  %586 = vmatpush1.msra.mxu0 0.0
  %587 = vmatprep.subr.mxu0 0.0
  %588 = vmatpush1.msra.mxu0 0.0
  %589 = vmatprep.subr.mxu0 0.0
  %590 = vmatpush1.msra.mxu0 0.0
  %591 = vmatprep.subr.mxu0 0.0
  %592 = vmatpush1.msra.mxu0 0.0
  %593 = vmatprep.subr.mxu0 0.0
  %594 = vmatpush1.msra.mxu0 0.0
  %595 = vmatprep.subr.mxu0 0.0
  %596 = vmatpush1.msra.mxu0 0.0
  %597 = vmatprep.subr.mxu0 0.0
  %598 = vmatpush1.msra.mxu0 0.0
  %599 = vmatprep.subr.mxu0 0.0
  %600 = vmatpush1.msra.mxu0 0.0
  %601 = vmatprep.subr.mxu0 0.0
  %602 = vmatpush1.msra.mxu0 0.0
  %603 = vmatprep.mubr.f32.mxu0 0.0
  %604 = vmatmul.mubr.f32.gmra.mrb[0].mxu0 %v528
  %v605 = vpop.f32.mrb[0].mxu0
  %v606 = vadd.f32 0.0, %v605
  %v607 = vpop.f32.mrb[0].mxu0
  %v608 = vadd.f32 0.0, %v607
  %609 = vmatprep.mubr.f32.mxu0 0.0
  %610 = vmatmul.mubr.f32.gmra.mrb[0].mxu0 %v529
  %v611 = vpop.f32.mrb[0].mxu0
  %v612 = vadd.f32 0.0, %v611
  %v613 = vpop.f32.mrb[0].mxu0
  %v614 = vadd.f32 0.0, %v613
  %615 = vdwg.mxu0
  %616 = vmatprep.subr.mxu0 %v28
  %617 = vmatpush1.msra.mxu0 %v27
  %618 = vmatprep.subr.mxu0 %v32
  %619 = vmatpush1.msra.mxu0 %v31
  %620 = vmatprep.subr.mxu0 %v36
  %621 = vmatpush1.msra.mxu0 %v35
  %622 = vmatprep.subr.mxu0 %v40
  %623 = vmatpush1.msra.mxu0 %v39
  %624 = vmatprep.subr.mxu0 %v44
  %625 = vmatpush1.msra.mxu0 %v43
  %626 = vmatprep.subr.mxu0 %v48
  %627 = vmatpush1.msra.mxu0 %v47
  %628 = vmatprep.subr.mxu0 %v52
  %629 = vmatpush1.msra.mxu0 %v51
  %630 = vmatprep.subr.mxu0 %v56
  %631 = vmatpush1.msra.mxu0 %v55
  %632 = vmatprep.subr.mxu0 %v60
  %633 = vmatpush1.msra.mxu0 %v59
  %634 = vmatprep.subr.mxu0 %v64
  %635 = vmatpush1.msra.mxu0 %v63
  %636 = vmatprep.subr.mxu0 %v68
  %637 = vmatpush1.msra.mxu0 %v67
  %638 = vmatprep.subr.mxu0 %v72
  %639 = vmatpush1.msra.mxu0 %v71
  %640 = vmatprep.subr.mxu0 %v76
  %641 = vmatpush1.msra.mxu0 %v75
  %642 = vmatprep.subr.mxu0 %v80
  %643 = vmatpush1.msra.mxu0 %v79
  %644 = vmatprep.subr.mxu0 %v84
  %645 = vmatpush1.msra.mxu0 %v83
  %646 = vmatprep.subr.mxu0 %v88
  %647 = vmatpush1.msra.mxu0 %v87
  %648 = vmatprep.subr.mxu0 0.0
  %649 = vmatpush1.msra.mxu0 0.0
  %650 = vmatprep.subr.mxu0 0.0
  %651 = vmatpush1.msra.mxu0 0.0
  %652 = vmatprep.subr.mxu0 0.0
  %653 = vmatpush1.msra.mxu0 0.0
  %654 = vmatprep.subr.mxu0 0.0
  %655 = vmatpush1.msra.mxu0 0.0
  %656 = vmatprep.subr.mxu0 0.0
  %657 = vmatpush1.msra.mxu0 0.0
  %658 = vmatprep.subr.mxu0 0.0
  %659 = vmatpush1.msra.mxu0 0.0
  %660 = vmatprep.subr.mxu0 0.0
  %661 = vmatpush1.msra.mxu0 0.0
  %662 = vmatprep.subr.mxu0 0.0
  %663 = vmatpush1.msra.mxu0 0.0
  %664 = vmatprep.subr.mxu0 0.0
  %665 = vmatpush1.msra.mxu0 0.0
  %666 = vmatprep.subr.mxu0 0.0
  %667 = vmatpush1.msra.mxu0 0.0
  %668 = vmatprep.subr.mxu0 0.0
  %669 = vmatpush1.msra.mxu0 0.0
  %670 = vmatprep.subr.mxu0 0.0
  %671 = vmatpush1.msra.mxu0 0.0
  %672 = vmatprep.subr.mxu0 0.0
  %673 = vmatpush1.msra.mxu0 0.0
  %674 = vmatprep.subr.mxu0 0.0
  %675 = vmatpush1.msra.mxu0 0.0
  %676 = vmatprep.subr.mxu0 0.0
  %677 = vmatpush1.msra.mxu0 0.0
  %678 = vmatprep.subr.mxu0 0.0
  %679 = vmatpush1.msra.mxu0 0.0
  %680 = vmatprep.mubr.f32.mxu0 0.0
  %681 = vmatmul.mubr.f32.gmra.mrb[0].mxu0 %v528
  %v682 = vpop.f32.mrb[0].mxu0
  %v683 = vadd.f32 0.0, %v682
  %v684 = vpop.f32.mrb[0].mxu0
  %v685 = vadd.f32 0.0, %v684
  %686 = vmatprep.mubr.f32.mxu0 0.0
  %687 = vmatmul.mubr.f32.gmra.mrb[0].mxu0 %v529
  %v688 = vpop.f32.mrb[0].mxu0
  %v689 = vadd.f32 0.0, %v688
  %v690 = vpop.f32.mrb[0].mxu0
  %v691 = vadd.f32 0.0, %v690
  %692 = vdwg.mxu0
  %v693 = vadd.f32 %v531, %v606
  %v694 = vadd.f32 %v532, %v608
  %v695 = vadd.f32 %v533, %v683
  %v696 = vadd.f32 %v534, %v685
  %v697 = vadd.f32 %v535, %v612
  %v698 = vadd.f32 %v536, %v614
  %v699 = vadd.f32 %v537, %v689
  %v700 = vadd.f32 %v538, %v691
  %v701 = vxor.u32 %v693, 2147483648
  %v702 = vxor.u32 %v694, 2147483648
  %v703 = vxor.u32 %v697, 2147483648
  %v704 = vxor.u32 %v698, 2147483648
  %v705 = vmul.f32 %v701, 1.442695
  %v706 = vpow.pop %v705
  %v707 = vmul.f32 %v702, 1.442695
  %v708 = vpow.pop %v707
  %v709 = vmul.f32 %v703, 1.442695
  %v710 = vpow.pop %v709
  %v711 = vmul.f32 %v704, 1.442695
  %v712 = vpow.pop %v711
  %v713 = vadd.f32 %v706, 1.0
  %v714 = vadd.f32 %v708, 1.0
  %v715 = vadd.f32 %v710, 1.0
  %v716 = vadd.f32 %v712, 1.0
  %v717 = vrcp.pop %v713
  %v718 = vmul.f32 1.0, %v717
  %v719 = vrcp.pop %v714
  %v720 = vmul.f32 1.0, %v719
  %v721 = vrcp.pop %v715
  %v722 = vmul.f32 1.0, %v721
  %v723 = vrcp.pop %v716
  %v724 = vmul.f32 1.0, %v723
  %v725 = vtanh.pop %v695
  %v726 = vtanh.pop %v699
  %v727 = vxor.u32 %v696, 2147483648
  %v728 = vxor.u32 %v700, 2147483648
  %v729 = vmul.f32 %v727, 1.442695
  %v730 = vpow.pop %v729
  %v731 = vmul.f32 %v728, 1.442695
  %v732 = vpow.pop %v731
  %v733 = vadd.f32 %v730, 1.0
  %v734 = vadd.f32 %v732, 1.0
  %v735 = vrcp.pop %v733
  %v736 = vmul.f32 1.0, %v735
  %v737 = vrcp.pop %v734
  %v738 = vmul.f32 1.0, %v737
  %v739 = vmul.f32 %v720, %v524
  %v740 = vmul.f32 %v724, %v525
  %v741 = vmul.f32 %v718, %v725
  %v742 = vmul.f32 %v722, %v726
  %v743 = vadd.f32 %v739, %v741
  %v744 = vadd.f32 %v740, %v742
  %v745 = vtanh.pop %v743
  %v746 = vtanh.pop %v744
  %v747 = vmul.f32 %v736, %v745
  %v748 = vmul.f32 %v738, %v746
  %s749 = scalar_lea.vmem %s0, 192
  %v750 = vld [vmem:[%s749] sm:$0xff]
  %v751 = vld [vmem:[%s749 + $0x8] sm:$0xff]
  %v752 = vld [vmem:[%s749 + $0x10] sm:$0xff]
  %v753 = vld [vmem:[%s749 + $0x18] sm:$0xff]
  %v754 = vld [vmem:[%s749 + $0x20] sm:$0xff]
  %v755 = vld [vmem:[%s749 + $0x28] sm:$0xff]
  %v756 = vld [vmem:[%s749 + $0x30] sm:$0xff]
  %v757 = vld [vmem:[%s749 + $0x38] sm:$0xff]
  %758 = vmatprep.subr.mxu0 %v26
  %759 = vmatpush1.msra.mxu0 %v25
  %760 = vmatprep.subr.mxu0 %v30
  %761 = vmatpush1.msra.mxu0 %v29
  %762 = vmatprep.subr.mxu0 %v34
  %763 = vmatpush1.msra.mxu0 %v33
  %764 = vmatprep.subr.mxu0 %v38
  %765 = vmatpush1.msra.mxu0 %v37
  %766 = vmatprep.subr.mxu0 %v42
  %767 = vmatpush1.msra.mxu0 %v41
  %768 = vmatprep.subr.mxu0 %v46
  %769 = vmatpush1.msra.mxu0 %v45
  %770 = vmatprep.subr.mxu0 %v50
  %771 = vmatpush1.msra.mxu0 %v49
  %772 = vmatprep.subr.mxu0 %v54
  %773 = vmatpush1.msra.mxu0 %v53
  %774 = vmatprep.subr.mxu0 %v58
  %775 = vmatpush1.msra.mxu0 %v57
  %776 = vmatprep.subr.mxu0 %v62
  %777 = vmatpush1.msra.mxu0 %v61
  %778 = vmatprep.subr.mxu0 %v66
  %779 = vmatpush1.msra.mxu0 %v65
  %780 = vmatprep.subr.mxu0 %v70
  %781 = vmatpush1.msra.mxu0 %v69
  %782 = vmatprep.subr.mxu0 %v74
  %783 = vmatpush1.msra.mxu0 %v73
  %784 = vmatprep.subr.mxu0 %v78
  %785 = vmatpush1.msra.mxu0 %v77
  %786 = vmatprep.subr.mxu0 %v82
  %787 = vmatpush1.msra.mxu0 %v81
  %788 = vmatprep.subr.mxu0 %v86
  %789 = vmatpush1.msra.mxu0 %v85
  %790 = vmatprep.subr.mxu0 0.0
  %791 = vmatpush1.msra.mxu0 0.0
  %792 = vmatprep.subr.mxu0 0.0
  %793 = vmatpush1.msra.mxu0 0.0
  %794 = vmatprep.subr.mxu0 0.0
  %795 = vmatpush1.msra.mxu0 0.0
  %796 = vmatprep.subr.mxu0 0.0
  %797 = vmatpush1.msra.mxu0 0.0
  %798 = vmatprep.subr.mxu0 0.0
  %799 = vmatpush1.msra.mxu0 0.0
  %800 = vmatprep.subr.mxu0 0.0
  %801 = vmatpush1.msra.mxu0 0.0
  %802 = vmatprep.subr.mxu0 0.0
  %803 = vmatpush1.msra.mxu0 0.0
  %804 = vmatprep.subr.mxu0 0.0
  %805 = vmatpush1.msra.mxu0 0.0
  %806 = vmatprep.subr.mxu0 0.0
  %807 = vmatpush1.msra.mxu0 0.0
  %808 = vmatprep.subr.mxu0 0.0
  %809 = vmatpush1.msra.mxu0 0.0
  %810 = vmatprep.subr.mxu0 0.0
  %811 = vmatpush1.msra.mxu0 0.0
  %812 = vmatprep.subr.mxu0 0.0
  %813 = vmatpush1.msra.mxu0 0.0
  %814 = vmatprep.subr.mxu0 0.0
  %815 = vmatpush1.msra.mxu0 0.0
  %816 = vmatprep.subr.mxu0 0.0
  %817 = vmatpush1.msra.mxu0 0.0
  %818 = vmatprep.subr.mxu0 0.0
  %819 = vmatpush1.msra.mxu0 0.0
  %820 = vmatprep.subr.mxu0 0.0
  %821 = vmatpush1.msra.mxu0 0.0
  %822 = vmatprep.mubr.f32.mxu0 0.0
  %823 = vmatmul.mubr.f32.gmra.mrb[0].mxu0 %v747
  %v824 = vpop.f32.mrb[0].mxu0
  %v825 = vadd.f32 0.0, %v824
  %v826 = vpop.f32.mrb[0].mxu0
  %v827 = vadd.f32 0.0, %v826
  %828 = vmatprep.mubr.f32.mxu0 0.0
  %829 = vmatmul.mubr.f32.gmra.mrb[0].mxu0 %v748
  %v830 = vpop.f32.mrb[0].mxu0
  %v831 = vadd.f32 0.0, %v830
  %v832 = vpop.f32.mrb[0].mxu0
  %v833 = vadd.f32 0.0, %v832
  %834 = vdwg.mxu0
  %835 = vmatprep.subr.mxu0 %v28
  %836 = vmatpush1.msra.mxu0 %v27
  %837 = vmatprep.subr.mxu0 %v32
  %838 = vmatpush1.msra.mxu0 %v31
  %839 = vmatprep.subr.mxu0 %v36
  %840 = vmatpush1.msra.mxu0 %v35
  %841 = vmatprep.subr.mxu0 %v40
  %842 = vmatpush1.msra.mxu0 %v39
  %843 = vmatprep.subr.mxu0 %v44
  %844 = vmatpush1.msra.mxu0 %v43
  %845 = vmatprep.subr.mxu0 %v48
  %846 = vmatpush1.msra.mxu0 %v47
  %847 = vmatprep.subr.mxu0 %v52
  %848 = vmatpush1.msra.mxu0 %v51
  %849 = vmatprep.subr.mxu0 %v56
  %850 = vmatpush1.msra.mxu0 %v55
  %851 = vmatprep.subr.mxu0 %v60
  %852 = vmatpush1.msra.mxu0 %v59
  %853 = vmatprep.subr.mxu0 %v64
  %854 = vmatpush1.msra.mxu0 %v63
  %855 = vmatprep.subr.mxu0 %v68
  %856 = vmatpush1.msra.mxu0 %v67
  %857 = vmatprep.subr.mxu0 %v72
  %858 = vmatpush1.msra.mxu0 %v71
  %859 = vmatprep.subr.mxu0 %v76
  %860 = vmatpush1.msra.mxu0 %v75
  %861 = vmatprep.subr.mxu0 %v80
  %862 = vmatpush1.msra.mxu0 %v79
  %863 = vmatprep.subr.mxu0 %v84
  %864 = vmatpush1.msra.mxu0 %v83
  %865 = vmatprep.subr.mxu0 %v88
  %866 = vmatpush1.msra.mxu0 %v87
  %867 = vmatprep.subr.mxu0 0.0
  %868 = vmatpush1.msra.mxu0 0.0
  %869 = vmatprep.subr.mxu0 0.0
  %870 = vmatpush1.msra.mxu0 0.0
  %871 = vmatprep.subr.mxu0 0.0
  %872 = vmatpush1.msra.mxu0 0.0
  %873 = vmatprep.subr.mxu0 0.0
  %874 = vmatpush1.msra.mxu0 0.0
  %875 = vmatprep.subr.mxu0 0.0
  %876 = vmatpush1.msra.mxu0 0.0
  %877 = vmatprep.subr.mxu0 0.0
  %878 = vmatpush1.msra.mxu0 0.0
  %879 = vmatprep.subr.mxu0 0.0
  %880 = vmatpush1.msra.mxu0 0.0
  %881 = vmatprep.subr.mxu0 0.0
  %882 = vmatpush1.msra.mxu0 0.0
  %883 = vmatprep.subr.mxu0 0.0
  %884 = vmatpush1.msra.mxu0 0.0
  %885 = vmatprep.subr.mxu0 0.0
  %886 = vmatpush1.msra.mxu0 0.0
  %887 = vmatprep.subr.mxu0 0.0
  %888 = vmatpush1.msra.mxu0 0.0
  %889 = vmatprep.subr.mxu0 0.0
  %890 = vmatpush1.msra.mxu0 0.0
  %891 = vmatprep.subr.mxu0 0.0
  %892 = vmatpush1.msra.mxu0 0.0
  %893 = vmatprep.subr.mxu0 0.0
  %894 = vmatpush1.msra.mxu0 0.0
  %895 = vmatprep.subr.mxu0 0.0
  %896 = vmatpush1.msra.mxu0 0.0
  %897 = vmatprep.subr.mxu0 0.0
  %898 = vmatpush1.msra.mxu0 0.0
  %899 = vmatprep.mubr.f32.mxu0 0.0
  %900 = vmatmul.mubr.f32.gmra.mrb[0].mxu0 %v747
  %v901 = vpop.f32.mrb[0].mxu0
  %v902 = vadd.f32 0.0, %v901
  %v903 = vpop.f32.mrb[0].mxu0
  %v904 = vadd.f32 0.0, %v903
  %905 = vmatprep.mubr.f32.mxu0 0.0
  %906 = vmatmul.mubr.f32.gmra.mrb[0].mxu0 %v748
  %v907 = vpop.f32.mrb[0].mxu0
  %v908 = vadd.f32 0.0, %v907
  %v909 = vpop.f32.mrb[0].mxu0
  %v910 = vadd.f32 0.0, %v909
  %911 = vdwg.mxu0
  %v912 = vadd.f32 %v750, %v825
  %v913 = vadd.f32 %v751, %v827
  %v914 = vadd.f32 %v752, %v902
  %v915 = vadd.f32 %v753, %v904
  %v916 = vadd.f32 %v754, %v831
  %v917 = vadd.f32 %v755, %v833
  %v918 = vadd.f32 %v756, %v908
  %v919 = vadd.f32 %v757, %v910
  %v920 = vxor.u32 %v912, 2147483648
  %v921 = vxor.u32 %v913, 2147483648
  %v922 = vxor.u32 %v916, 2147483648
  %v923 = vxor.u32 %v917, 2147483648
  %v924 = vmul.f32 %v920, 1.442695
  %v925 = vpow.pop %v924
  %v926 = vmul.f32 %v921, 1.442695
  %v927 = vpow.pop %v926
  %v928 = vmul.f32 %v922, 1.442695
  %v929 = vpow.pop %v928
  %v930 = vmul.f32 %v923, 1.442695
  %v931 = vpow.pop %v930
  %v932 = vadd.f32 %v925, 1.0
  %v933 = vadd.f32 %v927, 1.0
  %v934 = vadd.f32 %v929, 1.0
  %v935 = vadd.f32 %v931, 1.0
  %v936 = vrcp.pop %v932
  %v937 = vmul.f32 1.0, %v936
  %v938 = vrcp.pop %v933
  %v939 = vmul.f32 1.0, %v938
  %v940 = vrcp.pop %v934
  %v941 = vmul.f32 1.0, %v940
  %v942 = vrcp.pop %v935
  %v943 = vmul.f32 1.0, %v942
  %v944 = vtanh.pop %v914
  %v945 = vtanh.pop %v918
  %v946 = vxor.u32 %v915, 2147483648
  %v947 = vxor.u32 %v919, 2147483648
  %v948 = vmul.f32 %v946, 1.442695
  %v949 = vpow.pop %v948
  %v950 = vmul.f32 %v947, 1.442695
  %v951 = vpow.pop %v950
  %v952 = vadd.f32 %v949, 1.0
  %v953 = vadd.f32 %v951, 1.0
  %v954 = vrcp.pop %v952
  %v955 = vmul.f32 1.0, %v954
  %v956 = vrcp.pop %v953
  %v957 = vmul.f32 1.0, %v956
  %v958 = vmul.f32 %v939, %v743
  %v959 = vmul.f32 %v943, %v744
  %v960 = vmul.f32 %v937, %v944
  %v961 = vmul.f32 %v941, %v945
  %v962 = vadd.f32 %v958, %v960
  %v963 = vadd.f32 %v959, %v961
  %v964 = vtanh.pop %v962
  %v965 = vtanh.pop %v963
  %v966 = vmul.f32 %v955, %v964
  %v967 = vmul.f32 %v957, %v965
  %s968 = scalar_lea.vmem %s0, 256
  %v969 = vld [vmem:[%s968] sm:$0xff]
  %v970 = vld [vmem:[%s968 + $0x8] sm:$0xff]
  %v971 = vld [vmem:[%s968 + $0x10] sm:$0xff]
  %v972 = vld [vmem:[%s968 + $0x18] sm:$0xff]
  %v973 = vld [vmem:[%s968 + $0x20] sm:$0xff]
  %v974 = vld [vmem:[%s968 + $0x28] sm:$0xff]
  %v975 = vld [vmem:[%s968 + $0x30] sm:$0xff]
  %v976 = vld [vmem:[%s968 + $0x38] sm:$0xff]
  %977 = vmatprep.subr.mxu0 %v26
  %978 = vmatpush1.msra.mxu0 %v25
  %979 = vmatprep.subr.mxu0 %v30
  %980 = vmatpush1.msra.mxu0 %v29
  %981 = vmatprep.subr.mxu0 %v34
  %982 = vmatpush1.msra.mxu0 %v33
  %983 = vmatprep.subr.mxu0 %v38
  %984 = vmatpush1.msra.mxu0 %v37
  %985 = vmatprep.subr.mxu0 %v42
  %986 = vmatpush1.msra.mxu0 %v41
  %987 = vmatprep.subr.mxu0 %v46
  %988 = vmatpush1.msra.mxu0 %v45
  %989 = vmatprep.subr.mxu0 %v50
  %990 = vmatpush1.msra.mxu0 %v49
  %991 = vmatprep.subr.mxu0 %v54
  %992 = vmatpush1.msra.mxu0 %v53
  %993 = vmatprep.subr.mxu0 %v58
  %994 = vmatpush1.msra.mxu0 %v57
  %995 = vmatprep.subr.mxu0 %v62
  %996 = vmatpush1.msra.mxu0 %v61
  %997 = vmatprep.subr.mxu0 %v66
  %998 = vmatpush1.msra.mxu0 %v65
  %999 = vmatprep.subr.mxu0 %v70
  %1000 = vmatpush1.msra.mxu0 %v69
  %1001 = vmatprep.subr.mxu0 %v74
  %1002 = vmatpush1.msra.mxu0 %v73
  %1003 = vmatprep.subr.mxu0 %v78
  %1004 = vmatpush1.msra.mxu0 %v77
  %1005 = vmatprep.subr.mxu0 %v82
  %1006 = vmatpush1.msra.mxu0 %v81
  %1007 = vmatprep.subr.mxu0 %v86
  %1008 = vmatpush1.msra.mxu0 %v85
  %1009 = vmatprep.subr.mxu0 0.0
  %1010 = vmatpush1.msra.mxu0 0.0
  %1011 = vmatprep.subr.mxu0 0.0
  %1012 = vmatpush1.msra.mxu0 0.0
  %1013 = vmatprep.subr.mxu0 0.0
  %1014 = vmatpush1.msra.mxu0 0.0
  %1015 = vmatprep.subr.mxu0 0.0
  %1016 = vmatpush1.msra.mxu0 0.0
  %1017 = vmatprep.subr.mxu0 0.0
  %1018 = vmatpush1.msra.mxu0 0.0
  %1019 = vmatprep.subr.mxu0 0.0
  %1020 = vmatpush1.msra.mxu0 0.0
  %1021 = vmatprep.subr.mxu0 0.0
  %1022 = vmatpush1.msra.mxu0 0.0
  %1023 = vmatprep.subr.mxu0 0.0
  %1024 = vmatpush1.msra.mxu0 0.0
  %1025 = vmatprep.subr.mxu0 0.0
  %1026 = vmatpush1.msra.mxu0 0.0
  %1027 = vmatprep.subr.mxu0 0.0
  %1028 = vmatpush1.msra.mxu0 0.0
  %1029 = vmatprep.subr.mxu0 0.0
  %1030 = vmatpush1.msra.mxu0 0.0
  %1031 = vmatprep.subr.mxu0 0.0
  %1032 = vmatpush1.msra.mxu0 0.0
  %1033 = vmatprep.subr.mxu0 0.0
  %1034 = vmatpush1.msra.mxu0 0.0
  %1035 = vmatprep.subr.mxu0 0.0
  %1036 = vmatpush1.msra.mxu0 0.0
  %1037 = vmatprep.subr.mxu0 0.0
  %1038 = vmatpush1.msra.mxu0 0.0
  %1039 = vmatprep.subr.mxu0 0.0
  %1040 = vmatpush1.msra.mxu0 0.0
  %1041 = vmatprep.mubr.f32.mxu0 0.0
  %1042 = vmatmul.mubr.f32.gmra.mrb[0].mxu0 %v966
  %v1043 = vpop.f32.mrb[0].mxu0
  %v1044 = vadd.f32 0.0, %v1043
  %v1045 = vpop.f32.mrb[0].mxu0
  %v1046 = vadd.f32 0.0, %v1045
  %1047 = vmatprep.mubr.f32.mxu0 0.0
  %1048 = vmatmul.mubr.f32.gmra.mrb[0].mxu0 %v967
  %v1049 = vpop.f32.mrb[0].mxu0
  %v1050 = vadd.f32 0.0, %v1049
  %v1051 = vpop.f32.mrb[0].mxu0
  %v1052 = vadd.f32 0.0, %v1051
  %1053 = vdwg.mxu0
  %1054 = vmatprep.subr.mxu0 %v28
  %1055 = vmatpush1.msra.mxu0 %v27
  %1056 = vmatprep.subr.mxu0 %v32
  %1057 = vmatpush1.msra.mxu0 %v31
  %1058 = vmatprep.subr.mxu0 %v36
  %1059 = vmatpush1.msra.mxu0 %v35
  %1060 = vmatprep.subr.mxu0 %v40
  %1061 = vmatpush1.msra.mxu0 %v39
  %1062 = vmatprep.subr.mxu0 %v44
  %1063 = vmatpush1.msra.mxu0 %v43
  %1064 = vmatprep.subr.mxu0 %v48
  %1065 = vmatpush1.msra.mxu0 %v47
  %1066 = vmatprep.subr.mxu0 %v52
  %1067 = vmatpush1.msra.mxu0 %v51
  %1068 = vmatprep.subr.mxu0 %v56
  %1069 = vmatpush1.msra.mxu0 %v55
  %1070 = vmatprep.subr.mxu0 %v60
  %1071 = vmatpush1.msra.mxu0 %v59
  %1072 = vmatprep.subr.mxu0 %v64
  %1073 = vmatpush1.msra.mxu0 %v63
  %1074 = vmatprep.subr.mxu0 %v68
  %1075 = vmatpush1.msra.mxu0 %v67
  %1076 = vmatprep.subr.mxu0 %v72
  %1077 = vmatpush1.msra.mxu0 %v71
  %1078 = vmatprep.subr.mxu0 %v76
  %1079 = vmatpush1.msra.mxu0 %v75
  %1080 = vmatprep.subr.mxu0 %v80
  %1081 = vmatpush1.msra.mxu0 %v79
  %1082 = vmatprep.subr.mxu0 %v84
  %1083 = vmatpush1.msra.mxu0 %v83
  %1084 = vmatprep.subr.mxu0 %v88
  %1085 = vmatpush1.msra.mxu0 %v87
  %1086 = vmatprep.subr.mxu0 0.0
  %1087 = vmatpush1.msra.mxu0 0.0
  %1088 = vmatprep.subr.mxu0 0.0
  %1089 = vmatpush1.msra.mxu0 0.0
  %1090 = vmatprep.subr.mxu0 0.0
  %1091 = vmatpush1.msra.mxu0 0.0
  %1092 = vmatprep.subr.mxu0 0.0
  %1093 = vmatpush1.msra.mxu0 0.0
  %1094 = vmatprep.subr.mxu0 0.0
  %1095 = vmatpush1.msra.mxu0 0.0
  %1096 = vmatprep.subr.mxu0 0.0
  %1097 = vmatpush1.msra.mxu0 0.0
  %1098 = vmatprep.subr.mxu0 0.0
  %1099 = vmatpush1.msra.mxu0 0.0
  %1100 = vmatprep.subr.mxu0 0.0
  %1101 = vmatpush1.msra.mxu0 0.0
  %1102 = vmatprep.subr.mxu0 0.0
  %1103 = vmatpush1.msra.mxu0 0.0
  %1104 = vmatprep.subr.mxu0 0.0
  %1105 = vmatpush1.msra.mxu0 0.0
  %1106 = vmatprep.subr.mxu0 0.0
  %1107 = vmatpush1.msra.mxu0 0.0
  %1108 = vmatprep.subr.mxu0 0.0
  %1109 = vmatpush1.msra.mxu0 0.0
  %1110 = vmatprep.subr.mxu0 0.0
  %1111 = vmatpush1.msra.mxu0 0.0
  %1112 = vmatprep.subr.mxu0 0.0
  %1113 = vmatpush1.msra.mxu0 0.0
  %1114 = vmatprep.subr.mxu0 0.0
  %1115 = vmatpush1.msra.mxu0 0.0
  %1116 = vmatprep.subr.mxu0 0.0
  %1117 = vmatpush1.msra.mxu0 0.0
  %1118 = vmatprep.mubr.f32.mxu0 0.0
  %1119 = vmatmul.mubr.f32.gmra.mrb[0].mxu0 %v966
  %v1120 = vpop.f32.mrb[0].mxu0
  %v1121 = vadd.f32 0.0, %v1120
  %v1122 = vpop.f32.mrb[0].mxu0
  %v1123 = vadd.f32 0.0, %v1122
  %1124 = vmatprep.mubr.f32.mxu0 0.0
  %1125 = vmatmul.mubr.f32.gmra.mrb[0].mxu0 %v967
  %v1126 = vpop.f32.mrb[0].mxu0
  %v1127 = vadd.f32 0.0, %v1126
  %v1128 = vpop.f32.mrb[0].mxu0
  %v1129 = vadd.f32 0.0, %v1128
  %1130 = vdwg.mxu0
  %v1131 = vadd.f32 %v969, %v1044
  %v1132 = vadd.f32 %v970, %v1046
  %v1133 = vadd.f32 %v971, %v1121
  %v1134 = vadd.f32 %v972, %v1123
  %v1135 = vadd.f32 %v973, %v1050
  %v1136 = vadd.f32 %v974, %v1052
  %v1137 = vadd.f32 %v975, %v1127
  %v1138 = vadd.f32 %v976, %v1129
  %v1139 = vxor.u32 %v1131, 2147483648
  %v1140 = vxor.u32 %v1132, 2147483648
  %v1141 = vxor.u32 %v1135, 2147483648
  %v1142 = vxor.u32 %v1136, 2147483648
  %v1143 = vmul.f32 %v1139, 1.442695
  %v1144 = vpow.pop %v1143
  %v1145 = vmul.f32 %v1140, 1.442695
  %v1146 = vpow.pop %v1145
  %v1147 = vmul.f32 %v1141, 1.442695
  %v1148 = vpow.pop %v1147
  %v1149 = vmul.f32 %v1142, 1.442695
  %v1150 = vpow.pop %v1149
  %v1151 = vadd.f32 %v1144, 1.0
  %v1152 = vadd.f32 %v1146, 1.0
  %v1153 = vadd.f32 %v1148, 1.0
  %v1154 = vadd.f32 %v1150, 1.0
  %v1155 = vrcp.pop %v1151
  %v1156 = vmul.f32 1.0, %v1155
  %v1157 = vrcp.pop %v1152
  %v1158 = vmul.f32 1.0, %v1157
  %v1159 = vrcp.pop %v1153
  %v1160 = vmul.f32 1.0, %v1159
  %v1161 = vrcp.pop %v1154
  %v1162 = vmul.f32 1.0, %v1161
  %v1163 = vtanh.pop %v1133
  %v1164 = vtanh.pop %v1137
  %v1165 = vxor.u32 %v1134, 2147483648
  %v1166 = vxor.u32 %v1138, 2147483648
  %v1167 = vmul.f32 %v1165, 1.442695
  %v1168 = vpow.pop %v1167
  %v1169 = vmul.f32 %v1166, 1.442695
  %v1170 = vpow.pop %v1169
  %v1171 = vadd.f32 %v1168, 1.0
  %v1172 = vadd.f32 %v1170, 1.0
  %v1173 = vrcp.pop %v1171
  %v1174 = vmul.f32 1.0, %v1173
  %v1175 = vrcp.pop %v1172
  %v1176 = vmul.f32 1.0, %v1175
  %v1177 = vmul.f32 %v1158, %v962
  %v1178 = vmul.f32 %v1162, %v963
  %v1179 = vmul.f32 %v1156, %v1163
  %v1180 = vmul.f32 %v1160, %v1164
  %v1181 = vadd.f32 %v1177, %v1179
  %v1182 = vadd.f32 %v1178, %v1180
  %v1183 = vtanh.pop %v1181
  %v1184 = vtanh.pop %v1182
  %v1185 = vmul.f32 %v1174, %v1183
  %v1186 = vmul.f32 %v1176, %v1184
  %s1187 = scalar_lea.vmem %s0, 320
  %v1188 = vld [vmem:[%s1187] sm:$0xff]
  %v1189 = vld [vmem:[%s1187 + $0x8] sm:$0xff]
  %v1190 = vld [vmem:[%s1187 + $0x10] sm:$0xff]
  %v1191 = vld [vmem:[%s1187 + $0x18] sm:$0xff]
  %v1192 = vld [vmem:[%s1187 + $0x20] sm:$0xff]
  %v1193 = vld [vmem:[%s1187 + $0x28] sm:$0xff]
  %v1194 = vld [vmem:[%s1187 + $0x30] sm:$0xff]
  %v1195 = vld [vmem:[%s1187 + $0x38] sm:$0xff]
  %1196 = vmatprep.subr.mxu0 %v26
  %1197 = vmatpush1.msra.mxu0 %v25
  %1198 = vmatprep.subr.mxu0 %v30
  %1199 = vmatpush1.msra.mxu0 %v29
  %1200 = vmatprep.subr.mxu0 %v34
  %1201 = vmatpush1.msra.mxu0 %v33
  %1202 = vmatprep.subr.mxu0 %v38
  %1203 = vmatpush1.msra.mxu0 %v37
  %1204 = vmatprep.subr.mxu0 %v42
  %1205 = vmatpush1.msra.mxu0 %v41
  %1206 = vmatprep.subr.mxu0 %v46
  %1207 = vmatpush1.msra.mxu0 %v45
  %1208 = vmatprep.subr.mxu0 %v50
  %1209 = vmatpush1.msra.mxu0 %v49
  %1210 = vmatprep.subr.mxu0 %v54
  %1211 = vmatpush1.msra.mxu0 %v53
  %1212 = vmatprep.subr.mxu0 %v58
  %1213 = vmatpush1.msra.mxu0 %v57
  %1214 = vmatprep.subr.mxu0 %v62
  %1215 = vmatpush1.msra.mxu0 %v61
  %1216 = vmatprep.subr.mxu0 %v66
  %1217 = vmatpush1.msra.mxu0 %v65
  %1218 = vmatprep.subr.mxu0 %v70
  %1219 = vmatpush1.msra.mxu0 %v69
  %1220 = vmatprep.subr.mxu0 %v74
  %1221 = vmatpush1.msra.mxu0 %v73
  %1222 = vmatprep.subr.mxu0 %v78
  %1223 = vmatpush1.msra.mxu0 %v77
  %1224 = vmatprep.subr.mxu0 %v82
  %1225 = vmatpush1.msra.mxu0 %v81
  %1226 = vmatprep.subr.mxu0 %v86
  %1227 = vmatpush1.msra.mxu0 %v85
  %1228 = vmatprep.subr.mxu0 0.0
  %1229 = vmatpush1.msra.mxu0 0.0
  %1230 = vmatprep.subr.mxu0 0.0
  %1231 = vmatpush1.msra.mxu0 0.0
  %1232 = vmatprep.subr.mxu0 0.0
  %1233 = vmatpush1.msra.mxu0 0.0
  %1234 = vmatprep.subr.mxu0 0.0
  %1235 = vmatpush1.msra.mxu0 0.0
  %1236 = vmatprep.subr.mxu0 0.0
  %1237 = vmatpush1.msra.mxu0 0.0
  %1238 = vmatprep.subr.mxu0 0.0
  %1239 = vmatpush1.msra.mxu0 0.0
  %1240 = vmatprep.subr.mxu0 0.0
  %1241 = vmatpush1.msra.mxu0 0.0
  %1242 = vmatprep.subr.mxu0 0.0
  %1243 = vmatpush1.msra.mxu0 0.0
  %1244 = vmatprep.subr.mxu0 0.0
  %1245 = vmatpush1.msra.mxu0 0.0
  %1246 = vmatprep.subr.mxu0 0.0
  %1247 = vmatpush1.msra.mxu0 0.0
  %1248 = vmatprep.subr.mxu0 0.0
  %1249 = vmatpush1.msra.mxu0 0.0
  %1250 = vmatprep.subr.mxu0 0.0
  %1251 = vmatpush1.msra.mxu0 0.0
  %1252 = vmatprep.subr.mxu0 0.0
  %1253 = vmatpush1.msra.mxu0 0.0
  %1254 = vmatprep.subr.mxu0 0.0
  %1255 = vmatpush1.msra.mxu0 0.0
  %1256 = vmatprep.subr.mxu0 0.0
  %1257 = vmatpush1.msra.mxu0 0.0
  %1258 = vmatprep.subr.mxu0 0.0
  %1259 = vmatpush1.msra.mxu0 0.0
  %1260 = vmatprep.mubr.f32.mxu0 0.0
  %1261 = vmatmul.mubr.f32.gmra.mrb[0].mxu0 %v1185
  %v1262 = vpop.f32.mrb[0].mxu0
  %v1263 = vadd.f32 0.0, %v1262
  %v1264 = vpop.f32.mrb[0].mxu0
  %v1265 = vadd.f32 0.0, %v1264
  %1266 = vmatprep.mubr.f32.mxu0 0.0
  %1267 = vmatmul.mubr.f32.gmra.mrb[0].mxu0 %v1186
  %v1268 = vpop.f32.mrb[0].mxu0
  %v1269 = vadd.f32 0.0, %v1268
  %v1270 = vpop.f32.mrb[0].mxu0
  %v1271 = vadd.f32 0.0, %v1270
  %1272 = vdwg.mxu0
  %1273 = vmatprep.subr.mxu0 %v28
  %1274 = vmatpush1.msra.mxu0 %v27
  %1275 = vmatprep.subr.mxu0 %v32
  %1276 = vmatpush1.msra.mxu0 %v31
  %1277 = vmatprep.subr.mxu0 %v36
  %1278 = vmatpush1.msra.mxu0 %v35
  %1279 = vmatprep.subr.mxu0 %v40
  %1280 = vmatpush1.msra.mxu0 %v39
  %1281 = vmatprep.subr.mxu0 %v44
  %1282 = vmatpush1.msra.mxu0 %v43
  %1283 = vmatprep.subr.mxu0 %v48
  %1284 = vmatpush1.msra.mxu0 %v47
  %1285 = vmatprep.subr.mxu0 %v52
  %1286 = vmatpush1.msra.mxu0 %v51
  %1287 = vmatprep.subr.mxu0 %v56
  %1288 = vmatpush1.msra.mxu0 %v55
  %1289 = vmatprep.subr.mxu0 %v60
  %1290 = vmatpush1.msra.mxu0 %v59
  %1291 = vmatprep.subr.mxu0 %v64
  %1292 = vmatpush1.msra.mxu0 %v63
  %1293 = vmatprep.subr.mxu0 %v68
  %1294 = vmatpush1.msra.mxu0 %v67
  %1295 = vmatprep.subr.mxu0 %v72
  %1296 = vmatpush1.msra.mxu0 %v71
  %1297 = vmatprep.subr.mxu0 %v76
  %1298 = vmatpush1.msra.mxu0 %v75
  %1299 = vmatprep.subr.mxu0 %v80
  %1300 = vmatpush1.msra.mxu0 %v79
  %1301 = vmatprep.subr.mxu0 %v84
  %1302 = vmatpush1.msra.mxu0 %v83
  %1303 = vmatprep.subr.mxu0 %v88
  %1304 = vmatpush1.msra.mxu0 %v87
  %1305 = vmatprep.subr.mxu0 0.0
  %1306 = vmatpush1.msra.mxu0 0.0
  %1307 = vmatprep.subr.mxu0 0.0
  %1308 = vmatpush1.msra.mxu0 0.0
  %1309 = vmatprep.subr.mxu0 0.0
  %1310 = vmatpush1.msra.mxu0 0.0
  %1311 = vmatprep.subr.mxu0 0.0
  %1312 = vmatpush1.msra.mxu0 0.0
  %1313 = vmatprep.subr.mxu0 0.0
  %1314 = vmatpush1.msra.mxu0 0.0
  %1315 = vmatprep.subr.mxu0 0.0
  %1316 = vmatpush1.msra.mxu0 0.0
  %1317 = vmatprep.subr.mxu0 0.0
  %1318 = vmatpush1.msra.mxu0 0.0
  %1319 = vmatprep.subr.mxu0 0.0
  %1320 = vmatpush1.msra.mxu0 0.0
  %1321 = vmatprep.subr.mxu0 0.0
  %1322 = vmatpush1.msra.mxu0 0.0
  %1323 = vmatprep.subr.mxu0 0.0
  %1324 = vmatpush1.msra.mxu0 0.0
  %1325 = vmatprep.subr.mxu0 0.0
  %1326 = vmatpush1.msra.mxu0 0.0
  %1327 = vmatprep.subr.mxu0 0.0
  %1328 = vmatpush1.msra.mxu0 0.0
  %1329 = vmatprep.subr.mxu0 0.0
  %1330 = vmatpush1.msra.mxu0 0.0
  %1331 = vmatprep.subr.mxu0 0.0
  %1332 = vmatpush1.msra.mxu0 0.0
  %1333 = vmatprep.subr.mxu0 0.0
  %1334 = vmatpush1.msra.mxu0 0.0
  %1335 = vmatprep.subr.mxu0 0.0
  %1336 = vmatpush1.msra.mxu0 0.0
  %1337 = vmatprep.mubr.f32.mxu0 0.0
  %1338 = vmatmul.mubr.f32.gmra.mrb[0].mxu0 %v1185
  %v1339 = vpop.f32.mrb[0].mxu0
  %v1340 = vadd.f32 0.0, %v1339
  %v1341 = vpop.f32.mrb[0].mxu0
  %v1342 = vadd.f32 0.0, %v1341
  %1343 = vmatprep.mubr.f32.mxu0 0.0
  %1344 = vmatmul.mubr.f32.gmra.mrb[0].mxu0 %v1186
  %v1345 = vpop.f32.mrb[0].mxu0
  %v1346 = vadd.f32 0.0, %v1345
  %v1347 = vpop.f32.mrb[0].mxu0
  %v1348 = vadd.f32 0.0, %v1347
  %1349 = vdwg.mxu0
  %v1350 = vadd.f32 %v1188, %v1263
  %v1351 = vadd.f32 %v1189, %v1265
  %v1352 = vadd.f32 %v1190, %v1340
  %v1353 = vadd.f32 %v1191, %v1342
  %v1354 = vadd.f32 %v1192, %v1269
  %v1355 = vadd.f32 %v1193, %v1271
  %v1356 = vadd.f32 %v1194, %v1346
  %v1357 = vadd.f32 %v1195, %v1348
  %v1358 = vxor.u32 %v1350, 2147483648
  %v1359 = vxor.u32 %v1351, 2147483648
  %v1360 = vxor.u32 %v1354, 2147483648
  %v1361 = vxor.u32 %v1355, 2147483648
  %v1362 = vmul.f32 %v1358, 1.442695
  %v1363 = vpow.pop %v1362
  %v1364 = vmul.f32 %v1359, 1.442695
  %v1365 = vpow.pop %v1364
  %v1366 = vmul.f32 %v1360, 1.442695
  %v1367 = vpow.pop %v1366
  %v1368 = vmul.f32 %v1361, 1.442695
  %v1369 = vpow.pop %v1368
  %v1370 = vadd.f32 %v1363, 1.0
  %v1371 = vadd.f32 %v1365, 1.0
  %v1372 = vadd.f32 %v1367, 1.0
  %v1373 = vadd.f32 %v1369, 1.0
  %v1374 = vrcp.pop %v1370
  %v1375 = vmul.f32 1.0, %v1374
  %v1376 = vrcp.pop %v1371
  %v1377 = vmul.f32 1.0, %v1376
  %v1378 = vrcp.pop %v1372
  %v1379 = vmul.f32 1.0, %v1378
  %v1380 = vrcp.pop %v1373
  %v1381 = vmul.f32 1.0, %v1380
  %v1382 = vtanh.pop %v1352
  %v1383 = vtanh.pop %v1356
  %v1384 = vxor.u32 %v1353, 2147483648
  %v1385 = vxor.u32 %v1357, 2147483648
  %v1386 = vmul.f32 %v1384, 1.442695
  %v1387 = vpow.pop %v1386
  %v1388 = vmul.f32 %v1385, 1.442695
  %v1389 = vpow.pop %v1388
  %v1390 = vadd.f32 %v1387, 1.0
  %v1391 = vadd.f32 %v1389, 1.0
  %v1392 = vrcp.pop %v1390
  %v1393 = vmul.f32 1.0, %v1392
  %v1394 = vrcp.pop %v1391
  %v1395 = vmul.f32 1.0, %v1394
  %v1396 = vmul.f32 %v1377, %v1181
  %v1397 = vmul.f32 %v1381, %v1182
  %v1398 = vmul.f32 %v1375, %v1382
  %v1399 = vmul.f32 %v1379, %v1383
  %v1400 = vadd.f32 %v1396, %v1398
  %v1401 = vadd.f32 %v1397, %v1399
  %v1402 = vtanh.pop %v1400
  %v1403 = vtanh.pop %v1401
  %v1404 = vmul.f32 %v1393, %v1402
  %v1405 = vmul.f32 %v1395, %v1403
  %s1406 = scalar_lea.vmem %s0, 384
  %v1407 = vld [vmem:[%s1406] sm:$0xff]
  %v1408 = vld [vmem:[%s1406 + $0x8] sm:$0xff]
  %v1409 = vld [vmem:[%s1406 + $0x10] sm:$0xff]
  %v1410 = vld [vmem:[%s1406 + $0x18] sm:$0xff]
  %v1411 = vld [vmem:[%s1406 + $0x20] sm:$0xff]
  %v1412 = vld [vmem:[%s1406 + $0x28] sm:$0xff]
  %v1413 = vld [vmem:[%s1406 + $0x30] sm:$0xff]
  %v1414 = vld [vmem:[%s1406 + $0x38] sm:$0xff]
  %1415 = vmatprep.subr.mxu0 %v26
  %1416 = vmatpush1.msra.mxu0 %v25
  %1417 = vmatprep.subr.mxu0 %v30
  %1418 = vmatpush1.msra.mxu0 %v29
  %1419 = vmatprep.subr.mxu0 %v34
  %1420 = vmatpush1.msra.mxu0 %v33
  %1421 = vmatprep.subr.mxu0 %v38
  %1422 = vmatpush1.msra.mxu0 %v37
  %1423 = vmatprep.subr.mxu0 %v42
  %1424 = vmatpush1.msra.mxu0 %v41
  %1425 = vmatprep.subr.mxu0 %v46
  %1426 = vmatpush1.msra.mxu0 %v45
  %1427 = vmatprep.subr.mxu0 %v50
  %1428 = vmatpush1.msra.mxu0 %v49
  %1429 = vmatprep.subr.mxu0 %v54
  %1430 = vmatpush1.msra.mxu0 %v53
  %1431 = vmatprep.subr.mxu0 %v58
  %1432 = vmatpush1.msra.mxu0 %v57
  %1433 = vmatprep.subr.mxu0 %v62
  %1434 = vmatpush1.msra.mxu0 %v61
  %1435 = vmatprep.subr.mxu0 %v66
  %1436 = vmatpush1.msra.mxu0 %v65
  %1437 = vmatprep.subr.mxu0 %v70
  %1438 = vmatpush1.msra.mxu0 %v69
  %1439 = vmatprep.subr.mxu0 %v74
  %1440 = vmatpush1.msra.mxu0 %v73
  %1441 = vmatprep.subr.mxu0 %v78
  %1442 = vmatpush1.msra.mxu0 %v77
  %1443 = vmatprep.subr.mxu0 %v82
  %1444 = vmatpush1.msra.mxu0 %v81
  %1445 = vmatprep.subr.mxu0 %v86
  %1446 = vmatpush1.msra.mxu0 %v85
  %1447 = vmatprep.subr.mxu0 0.0
  %1448 = vmatpush1.msra.mxu0 0.0
  %1449 = vmatprep.subr.mxu0 0.0
  %1450 = vmatpush1.msra.mxu0 0.0
  %1451 = vmatprep.subr.mxu0 0.0
  %1452 = vmatpush1.msra.mxu0 0.0
  %1453 = vmatprep.subr.mxu0 0.0
  %1454 = vmatpush1.msra.mxu0 0.0
  %1455 = vmatprep.subr.mxu0 0.0
  %1456 = vmatpush1.msra.mxu0 0.0
  %1457 = vmatprep.subr.mxu0 0.0
  %1458 = vmatpush1.msra.mxu0 0.0
  %1459 = vmatprep.subr.mxu0 0.0
  %1460 = vmatpush1.msra.mxu0 0.0
  %1461 = vmatprep.subr.mxu0 0.0
  %1462 = vmatpush1.msra.mxu0 0.0
  %1463 = vmatprep.subr.mxu0 0.0
  %1464 = vmatpush1.msra.mxu0 0.0
  %1465 = vmatprep.subr.mxu0 0.0
  %1466 = vmatpush1.msra.mxu0 0.0
  %1467 = vmatprep.subr.mxu0 0.0
  %1468 = vmatpush1.msra.mxu0 0.0
  %1469 = vmatprep.subr.mxu0 0.0
  %1470 = vmatpush1.msra.mxu0 0.0
  %1471 = vmatprep.subr.mxu0 0.0
  %1472 = vmatpush1.msra.mxu0 0.0
  %1473 = vmatprep.subr.mxu0 0.0
  %1474 = vmatpush1.msra.mxu0 0.0
  %1475 = vmatprep.subr.mxu0 0.0
  %1476 = vmatpush1.msra.mxu0 0.0
  %1477 = vmatprep.subr.mxu0 0.0
  %1478 = vmatpush1.msra.mxu0 0.0
  %1479 = vmatprep.mubr.f32.mxu0 0.0
  %1480 = vmatmul.mubr.f32.gmra.mrb[0].mxu0 %v1404
  %v1481 = vpop.f32.mrb[0].mxu0
  %v1482 = vadd.f32 0.0, %v1481
  %v1483 = vpop.f32.mrb[0].mxu0
  %v1484 = vadd.f32 0.0, %v1483
  %1485 = vmatprep.mubr.f32.mxu0 0.0
  %1486 = vmatmul.mubr.f32.gmra.mrb[0].mxu0 %v1405
  %v1487 = vpop.f32.mrb[0].mxu0
  %v1488 = vadd.f32 0.0, %v1487
  %v1489 = vpop.f32.mrb[0].mxu0
  %v1490 = vadd.f32 0.0, %v1489
  %1491 = vdwg.mxu0
  %1492 = vmatprep.subr.mxu0 %v28
  %1493 = vmatpush1.msra.mxu0 %v27
  %1494 = vmatprep.subr.mxu0 %v32
  %1495 = vmatpush1.msra.mxu0 %v31
  %1496 = vmatprep.subr.mxu0 %v36
  %1497 = vmatpush1.msra.mxu0 %v35
  %1498 = vmatprep.subr.mxu0 %v40
  %1499 = vmatpush1.msra.mxu0 %v39
  %1500 = vmatprep.subr.mxu0 %v44
  %1501 = vmatpush1.msra.mxu0 %v43
  %1502 = vmatprep.subr.mxu0 %v48
  %1503 = vmatpush1.msra.mxu0 %v47
  %1504 = vmatprep.subr.mxu0 %v52
  %1505 = vmatpush1.msra.mxu0 %v51
  %1506 = vmatprep.subr.mxu0 %v56
  %1507 = vmatpush1.msra.mxu0 %v55
  %1508 = vmatprep.subr.mxu0 %v60
  %1509 = vmatpush1.msra.mxu0 %v59
  %1510 = vmatprep.subr.mxu0 %v64
  %1511 = vmatpush1.msra.mxu0 %v63
  %1512 = vmatprep.subr.mxu0 %v68
  %1513 = vmatpush1.msra.mxu0 %v67
  %1514 = vmatprep.subr.mxu0 %v72
  %1515 = vmatpush1.msra.mxu0 %v71
  %1516 = vmatprep.subr.mxu0 %v76
  %1517 = vmatpush1.msra.mxu0 %v75
  %1518 = vmatprep.subr.mxu0 %v80
  %1519 = vmatpush1.msra.mxu0 %v79
  %1520 = vmatprep.subr.mxu0 %v84
  %1521 = vmatpush1.msra.mxu0 %v83
  %1522 = vmatprep.subr.mxu0 %v88
  %1523 = vmatpush1.msra.mxu0 %v87
  %1524 = vmatprep.subr.mxu0 0.0
  %1525 = vmatpush1.msra.mxu0 0.0
  %1526 = vmatprep.subr.mxu0 0.0
  %1527 = vmatpush1.msra.mxu0 0.0
  %1528 = vmatprep.subr.mxu0 0.0
  %1529 = vmatpush1.msra.mxu0 0.0
  %1530 = vmatprep.subr.mxu0 0.0
  %1531 = vmatpush1.msra.mxu0 0.0
  %1532 = vmatprep.subr.mxu0 0.0
  %1533 = vmatpush1.msra.mxu0 0.0
  %1534 = vmatprep.subr.mxu0 0.0
  %1535 = vmatpush1.msra.mxu0 0.0
  %1536 = vmatprep.subr.mxu0 0.0
  %1537 = vmatpush1.msra.mxu0 0.0
  %1538 = vmatprep.subr.mxu0 0.0
  %1539 = vmatpush1.msra.mxu0 0.0
  %1540 = vmatprep.subr.mxu0 0.0
  %1541 = vmatpush1.msra.mxu0 0.0
  %1542 = vmatprep.subr.mxu0 0.0
  %1543 = vmatpush1.msra.mxu0 0.0
  %1544 = vmatprep.subr.mxu0 0.0
  %1545 = vmatpush1.msra.mxu0 0.0
  %1546 = vmatprep.subr.mxu0 0.0
  %1547 = vmatpush1.msra.mxu0 0.0
  %1548 = vmatprep.subr.mxu0 0.0
  %1549 = vmatpush1.msra.mxu0 0.0
  %1550 = vmatprep.subr.mxu0 0.0
  %1551 = vmatpush1.msra.mxu0 0.0
  %1552 = vmatprep.subr.mxu0 0.0
  %1553 = vmatpush1.msra.mxu0 0.0
  %1554 = vmatprep.subr.mxu0 0.0
  %1555 = vmatpush1.msra.mxu0 0.0
  %1556 = vmatprep.mubr.f32.mxu0 0.0
  %1557 = vmatmul.mubr.f32.gmra.mrb[0].mxu0 %v1404
  %v1558 = vpop.f32.mrb[0].mxu0
  %v1559 = vadd.f32 0.0, %v1558
  %v1560 = vpop.f32.mrb[0].mxu0
  %v1561 = vadd.f32 0.0, %v1560
  %1562 = vmatprep.mubr.f32.mxu0 0.0
  %1563 = vmatmul.mubr.f32.gmra.mrb[0].mxu0 %v1405
  %v1564 = vpop.f32.mrb[0].mxu0
  %v1565 = vadd.f32 0.0, %v1564
  %v1566 = vpop.f32.mrb[0].mxu0
  %v1567 = vadd.f32 0.0, %v1566
  %1568 = vdwg.mxu0
  %v1569 = vadd.f32 %v1407, %v1482
  %v1570 = vadd.f32 %v1408, %v1484
  %v1571 = vadd.f32 %v1409, %v1559
  %v1572 = vadd.f32 %v1410, %v1561
  %v1573 = vadd.f32 %v1411, %v1488
  %v1574 = vadd.f32 %v1412, %v1490
  %v1575 = vadd.f32 %v1413, %v1565
  %v1576 = vadd.f32 %v1414, %v1567
  %v1577 = vxor.u32 %v1569, 2147483648
  %v1578 = vxor.u32 %v1570, 2147483648
  %v1579 = vxor.u32 %v1573, 2147483648
  %v1580 = vxor.u32 %v1574, 2147483648
  %v1581 = vmul.f32 %v1577, 1.442695
  %v1582 = vpow.pop %v1581
  %v1583 = vmul.f32 %v1578, 1.442695
  %v1584 = vpow.pop %v1583
  %v1585 = vmul.f32 %v1579, 1.442695
  %v1586 = vpow.pop %v1585
  %v1587 = vmul.f32 %v1580, 1.442695
  %v1588 = vpow.pop %v1587
  %v1589 = vadd.f32 %v1582, 1.0
  %v1590 = vadd.f32 %v1584, 1.0
  %v1591 = vadd.f32 %v1586, 1.0
  %v1592 = vadd.f32 %v1588, 1.0
  %v1593 = vrcp.pop %v1589
  %v1594 = vmul.f32 1.0, %v1593
  %v1595 = vrcp.pop %v1590
  %v1596 = vmul.f32 1.0, %v1595
  %v1597 = vrcp.pop %v1591
  %v1598 = vmul.f32 1.0, %v1597
  %v1599 = vrcp.pop %v1592
  %v1600 = vmul.f32 1.0, %v1599
  %v1601 = vtanh.pop %v1571
  %v1602 = vtanh.pop %v1575
  %v1603 = vxor.u32 %v1572, 2147483648
  %v1604 = vxor.u32 %v1576, 2147483648
  %v1605 = vmul.f32 %v1603, 1.442695
  %v1606 = vpow.pop %v1605
  %v1607 = vmul.f32 %v1604, 1.442695
  %v1608 = vpow.pop %v1607
  %v1609 = vadd.f32 %v1606, 1.0
  %v1610 = vadd.f32 %v1608, 1.0
  %v1611 = vrcp.pop %v1609
  %v1612 = vmul.f32 1.0, %v1611
  %v1613 = vrcp.pop %v1610
  %v1614 = vmul.f32 1.0, %v1613
  %v1615 = vmul.f32 %v1596, %v1400
  %v1616 = vmul.f32 %v1600, %v1401
  %v1617 = vmul.f32 %v1594, %v1601
  %v1618 = vmul.f32 %v1598, %v1602
  %v1619 = vadd.f32 %v1615, %v1617
  %v1620 = vadd.f32 %v1616, %v1618
  %v1621 = vtanh.pop %v1619
  %v1622 = vtanh.pop %v1620
  %v1623 = vmul.f32 %v1612, %v1621
  %v1624 = vmul.f32 %v1614, %v1622
  %s1625 = scalar_lea.vmem %s0, 448
  %v1626 = vld [vmem:[%s1625] sm:$0xff]
  %v1627 = vld [vmem:[%s1625 + $0x8] sm:$0xff]
  %v1628 = vld [vmem:[%s1625 + $0x10] sm:$0xff]
  %v1629 = vld [vmem:[%s1625 + $0x18] sm:$0xff]
  %v1630 = vld [vmem:[%s1625 + $0x20] sm:$0xff]
  %v1631 = vld [vmem:[%s1625 + $0x28] sm:$0xff]
  %v1632 = vld [vmem:[%s1625 + $0x30] sm:$0xff]
  %v1633 = vld [vmem:[%s1625 + $0x38] sm:$0xff]
  %1634 = vmatprep.subr.mxu0 %v26
  %1635 = vmatpush1.msra.mxu0 %v25
  %1636 = vmatprep.subr.mxu0 %v30
  %1637 = vmatpush1.msra.mxu0 %v29
  %1638 = vmatprep.subr.mxu0 %v34
  %1639 = vmatpush1.msra.mxu0 %v33
  %1640 = vmatprep.subr.mxu0 %v38
  %1641 = vmatpush1.msra.mxu0 %v37
  %1642 = vmatprep.subr.mxu0 %v42
  %1643 = vmatpush1.msra.mxu0 %v41
  %1644 = vmatprep.subr.mxu0 %v46
  %1645 = vmatpush1.msra.mxu0 %v45
  %1646 = vmatprep.subr.mxu0 %v50
  %1647 = vmatpush1.msra.mxu0 %v49
  %1648 = vmatprep.subr.mxu0 %v54
  %1649 = vmatpush1.msra.mxu0 %v53
  %1650 = vmatprep.subr.mxu0 %v58
  %1651 = vmatpush1.msra.mxu0 %v57
  %1652 = vmatprep.subr.mxu0 %v62
  %1653 = vmatpush1.msra.mxu0 %v61
  %1654 = vmatprep.subr.mxu0 %v66
  %1655 = vmatpush1.msra.mxu0 %v65
  %1656 = vmatprep.subr.mxu0 %v70
  %1657 = vmatpush1.msra.mxu0 %v69
  %1658 = vmatprep.subr.mxu0 %v74
  %1659 = vmatpush1.msra.mxu0 %v73
  %1660 = vmatprep.subr.mxu0 %v78
  %1661 = vmatpush1.msra.mxu0 %v77
  %1662 = vmatprep.subr.mxu0 %v82
  %1663 = vmatpush1.msra.mxu0 %v81
  %1664 = vmatprep.subr.mxu0 %v86
  %1665 = vmatpush1.msra.mxu0 %v85
  %1666 = vmatprep.subr.mxu0 0.0
  %1667 = vmatpush1.msra.mxu0 0.0
  %1668 = vmatprep.subr.mxu0 0.0
  %1669 = vmatpush1.msra.mxu0 0.0
  %1670 = vmatprep.subr.mxu0 0.0
  %1671 = vmatpush1.msra.mxu0 0.0
  %1672 = vmatprep.subr.mxu0 0.0
  %1673 = vmatpush1.msra.mxu0 0.0
  %1674 = vmatprep.subr.mxu0 0.0
  %1675 = vmatpush1.msra.mxu0 0.0
  %1676 = vmatprep.subr.mxu0 0.0
  %1677 = vmatpush1.msra.mxu0 0.0
  %1678 = vmatprep.subr.mxu0 0.0
  %1679 = vmatpush1.msra.mxu0 0.0
  %1680 = vmatprep.subr.mxu0 0.0
  %1681 = vmatpush1.msra.mxu0 0.0
  %1682 = vmatprep.subr.mxu0 0.0
  %1683 = vmatpush1.msra.mxu0 0.0
  %1684 = vmatprep.subr.mxu0 0.0
  %1685 = vmatpush1.msra.mxu0 0.0
  %1686 = vmatprep.subr.mxu0 0.0
  %1687 = vmatpush1.msra.mxu0 0.0
  %1688 = vmatprep.subr.mxu0 0.0
  %1689 = vmatpush1.msra.mxu0 0.0
  %1690 = vmatprep.subr.mxu0 0.0
  %1691 = vmatpush1.msra.mxu0 0.0
  %1692 = vmatprep.subr.mxu0 0.0
  %1693 = vmatpush1.msra.mxu0 0.0
  %1694 = vmatprep.subr.mxu0 0.0
  %1695 = vmatpush1.msra.mxu0 0.0
  %1696 = vmatprep.subr.mxu0 0.0
  %1697 = vmatpush1.msra.mxu0 0.0
  %1698 = vmatprep.mubr.f32.mxu0 0.0
  %1699 = vmatmul.mubr.f32.gmra.mrb[0].mxu0 %v1623
  %v1700 = vpop.f32.mrb[0].mxu0
  %v1701 = vadd.f32 0.0, %v1700
  %v1702 = vpop.f32.mrb[0].mxu0
  %v1703 = vadd.f32 0.0, %v1702
  %1704 = vmatprep.mubr.f32.mxu0 0.0
  %1705 = vmatmul.mubr.f32.gmra.mrb[0].mxu0 %v1624
  %v1706 = vpop.f32.mrb[0].mxu0
  %v1707 = vadd.f32 0.0, %v1706
  %v1708 = vpop.f32.mrb[0].mxu0
  %v1709 = vadd.f32 0.0, %v1708
  %1710 = vdwg.mxu0
  %1711 = vmatprep.subr.mxu0 %v28
  %1712 = vmatpush1.msra.mxu0 %v27
  %1713 = vmatprep.subr.mxu0 %v32
  %1714 = vmatpush1.msra.mxu0 %v31
  %1715 = vmatprep.subr.mxu0 %v36
  %1716 = vmatpush1.msra.mxu0 %v35
  %1717 = vmatprep.subr.mxu0 %v40
  %1718 = vmatpush1.msra.mxu0 %v39
  %1719 = vmatprep.subr.mxu0 %v44
  %1720 = vmatpush1.msra.mxu0 %v43
  %1721 = vmatprep.subr.mxu0 %v48
  %1722 = vmatpush1.msra.mxu0 %v47
  %1723 = vmatprep.subr.mxu0 %v52
  %1724 = vmatpush1.msra.mxu0 %v51
  %1725 = vmatprep.subr.mxu0 %v56
  %1726 = vmatpush1.msra.mxu0 %v55
  %1727 = vmatprep.subr.mxu0 %v60
  %1728 = vmatpush1.msra.mxu0 %v59
  %1729 = vmatprep.subr.mxu0 %v64
  %1730 = vmatpush1.msra.mxu0 %v63
  %1731 = vmatprep.subr.mxu0 %v68
  %1732 = vmatpush1.msra.mxu0 %v67
  %1733 = vmatprep.subr.mxu0 %v72
  %1734 = vmatpush1.msra.mxu0 %v71
  %1735 = vmatprep.subr.mxu0 %v76
  %1736 = vmatpush1.msra.mxu0 %v75
  %1737 = vmatprep.subr.mxu0 %v80
  %1738 = vmatpush1.msra.mxu0 %v79
  %1739 = vmatprep.subr.mxu0 %v84
  %1740 = vmatpush1.msra.mxu0 %v83
  %1741 = vmatprep.subr.mxu0 %v88
  %1742 = vmatpush1.msra.mxu0 %v87
  %1743 = vmatprep.subr.mxu0 0.0
  %1744 = vmatpush1.msra.mxu0 0.0
  %1745 = vmatprep.subr.mxu0 0.0
  %1746 = vmatpush1.msra.mxu0 0.0
  %1747 = vmatprep.subr.mxu0 0.0
  %1748 = vmatpush1.msra.mxu0 0.0
  %1749 = vmatprep.subr.mxu0 0.0
  %1750 = vmatpush1.msra.mxu0 0.0
  %1751 = vmatprep.subr.mxu0 0.0
  %1752 = vmatpush1.msra.mxu0 0.0
  %1753 = vmatprep.subr.mxu0 0.0
  %1754 = vmatpush1.msra.mxu0 0.0
  %1755 = vmatprep.subr.mxu0 0.0
  %1756 = vmatpush1.msra.mxu0 0.0
  %1757 = vmatprep.subr.mxu0 0.0
  %1758 = vmatpush1.msra.mxu0 0.0
  %1759 = vmatprep.subr.mxu0 0.0
  %1760 = vmatpush1.msra.mxu0 0.0
  %1761 = vmatprep.subr.mxu0 0.0
  %1762 = vmatpush1.msra.mxu0 0.0
  %1763 = vmatprep.subr.mxu0 0.0
  %1764 = vmatpush1.msra.mxu0 0.0
  %1765 = vmatprep.subr.mxu0 0.0
  %1766 = vmatpush1.msra.mxu0 0.0
  %1767 = vmatprep.subr.mxu0 0.0
  %1768 = vmatpush1.msra.mxu0 0.0
  %1769 = vmatprep.subr.mxu0 0.0
  %1770 = vmatpush1.msra.mxu0 0.0
  %1771 = vmatprep.subr.mxu0 0.0
  %1772 = vmatpush1.msra.mxu0 0.0
  %1773 = vmatprep.subr.mxu0 0.0
  %1774 = vmatpush1.msra.mxu0 0.0
  %1775 = vmatprep.mubr.f32.mxu0 0.0
  %1776 = vmatmul.mubr.f32.gmra.mrb[0].mxu0 %v1623
  %v1777 = vpop.f32.mrb[0].mxu0
  %v1778 = vadd.f32 0.0, %v1777
  %v1779 = vpop.f32.mrb[0].mxu0
  %v1780 = vadd.f32 0.0, %v1779
  %1781 = vmatprep.mubr.f32.mxu0 0.0
  %1782 = vmatmul.mubr.f32.gmra.mrb[0].mxu0 %v1624
  %v1783 = vpop.f32.mrb[0].mxu0
  %v1784 = vadd.f32 0.0, %v1783
  %v1785 = vpop.f32.mrb[0].mxu0
  %v1786 = vadd.f32 0.0, %v1785
  %1787 = vdwg.mxu0
  %v1788 = vadd.f32 %v1626, %v1701
  %v1789 = vadd.f32 %v1627, %v1703
  %v1790 = vadd.f32 %v1628, %v1778
  %v1791 = vadd.f32 %v1629, %v1780
  %v1792 = vadd.f32 %v1630, %v1707
  %v1793 = vadd.f32 %v1631, %v1709
  %v1794 = vadd.f32 %v1632, %v1784
  %v1795 = vadd.f32 %v1633, %v1786
  %v1796 = vxor.u32 %v1788, 2147483648
  %v1797 = vxor.u32 %v1789, 2147483648
  %v1798 = vxor.u32 %v1792, 2147483648
  %v1799 = vxor.u32 %v1793, 2147483648
  %v1800 = vmul.f32 %v1796, 1.442695
  %v1801 = vpow.pop %v1800
  %v1802 = vmul.f32 %v1797, 1.442695
  %v1803 = vpow.pop %v1802
  %v1804 = vmul.f32 %v1798, 1.442695
  %v1805 = vpow.pop %v1804
  %v1806 = vmul.f32 %v1799, 1.442695
  %v1807 = vpow.pop %v1806
  %v1808 = vadd.f32 %v1801, 1.0
  %v1809 = vadd.f32 %v1803, 1.0
  %v1810 = vadd.f32 %v1805, 1.0
  %v1811 = vadd.f32 %v1807, 1.0
  %v1812 = vrcp.pop %v1808
  %v1813 = vmul.f32 1.0, %v1812
  %v1814 = vrcp.pop %v1809
  %v1815 = vmul.f32 1.0, %v1814
  %v1816 = vrcp.pop %v1810
  %v1817 = vmul.f32 1.0, %v1816
  %v1818 = vrcp.pop %v1811
  %v1819 = vmul.f32 1.0, %v1818
  %v1820 = vtanh.pop %v1790
  %v1821 = vtanh.pop %v1794
  %v1822 = vxor.u32 %v1791, 2147483648
  %v1823 = vxor.u32 %v1795, 2147483648
  %v1824 = vmul.f32 %v1822, 1.442695
  %v1825 = vpow.pop %v1824
  %v1826 = vmul.f32 %v1823, 1.442695
  %v1827 = vpow.pop %v1826
  %v1828 = vadd.f32 %v1825, 1.0
  %v1829 = vadd.f32 %v1827, 1.0
  %v1830 = vrcp.pop %v1828
  %v1831 = vmul.f32 1.0, %v1830
  %v1832 = vrcp.pop %v1829
  %v1833 = vmul.f32 1.0, %v1832
  %v1834 = vmul.f32 %v1815, %v1619
  %v1835 = vmul.f32 %v1819, %v1620
  %v1836 = vmul.f32 %v1813, %v1820
  %v1837 = vmul.f32 %v1817, %v1821
  %v1838 = vadd.f32 %v1834, %v1836
  %v1839 = vadd.f32 %v1835, %v1837
  %v1840 = vtanh.pop %v1838
  %v1841 = vtanh.pop %v1839
  %v1842 = vmul.f32 %v1831, %v1840
  %v1843 = vmul.f32 %v1833, %v1841
  %s1844 = scalar_lea.vmem %s0, 512
  %v1845 = vld [vmem:[%s1844] sm:$0xff]
  %v1846 = vld [vmem:[%s1844 + $0x8] sm:$0xff]
  %v1847 = vld [vmem:[%s1844 + $0x10] sm:$0xff]
  %v1848 = vld [vmem:[%s1844 + $0x18] sm:$0xff]
  %v1849 = vld [vmem:[%s1844 + $0x20] sm:$0xff]
  %v1850 = vld [vmem:[%s1844 + $0x28] sm:$0xff]
  %v1851 = vld [vmem:[%s1844 + $0x30] sm:$0xff]
  %v1852 = vld [vmem:[%s1844 + $0x38] sm:$0xff]
  %1853 = vmatprep.subr.mxu0 %v26
  %1854 = vmatpush1.msra.mxu0 %v25
  %1855 = vmatprep.subr.mxu0 %v30
  %1856 = vmatpush1.msra.mxu0 %v29
  %1857 = vmatprep.subr.mxu0 %v34
  %1858 = vmatpush1.msra.mxu0 %v33
  %1859 = vmatprep.subr.mxu0 %v38
  %1860 = vmatpush1.msra.mxu0 %v37
  %1861 = vmatprep.subr.mxu0 %v42
  %1862 = vmatpush1.msra.mxu0 %v41
  %1863 = vmatprep.subr.mxu0 %v46
  %1864 = vmatpush1.msra.mxu0 %v45
  %1865 = vmatprep.subr.mxu0 %v50
  %1866 = vmatpush1.msra.mxu0 %v49
  %1867 = vmatprep.subr.mxu0 %v54
  %1868 = vmatpush1.msra.mxu0 %v53
  %1869 = vmatprep.subr.mxu0 %v58
  %1870 = vmatpush1.msra.mxu0 %v57
  %1871 = vmatprep.subr.mxu0 %v62
  %1872 = vmatpush1.msra.mxu0 %v61
  %1873 = vmatprep.subr.mxu0 %v66
  %1874 = vmatpush1.msra.mxu0 %v65
  %1875 = vmatprep.subr.mxu0 %v70
  %1876 = vmatpush1.msra.mxu0 %v69
  %1877 = vmatprep.subr.mxu0 %v74
  %1878 = vmatpush1.msra.mxu0 %v73
  %1879 = vmatprep.subr.mxu0 %v78
  %1880 = vmatpush1.msra.mxu0 %v77
  %1881 = vmatprep.subr.mxu0 %v82
  %1882 = vmatpush1.msra.mxu0 %v81
  %1883 = vmatprep.subr.mxu0 %v86
  %1884 = vmatpush1.msra.mxu0 %v85
  %1885 = vmatprep.subr.mxu0 0.0
  %1886 = vmatpush1.msra.mxu0 0.0
  %1887 = vmatprep.subr.mxu0 0.0
  %1888 = vmatpush1.msra.mxu0 0.0
  %1889 = vmatprep.subr.mxu0 0.0
  %1890 = vmatpush1.msra.mxu0 0.0
  %1891 = vmatprep.subr.mxu0 0.0
  %1892 = vmatpush1.msra.mxu0 0.0
  %1893 = vmatprep.subr.mxu0 0.0
  %1894 = vmatpush1.msra.mxu0 0.0
  %1895 = vmatprep.subr.mxu0 0.0
  %1896 = vmatpush1.msra.mxu0 0.0
  %1897 = vmatprep.subr.mxu0 0.0
  %1898 = vmatpush1.msra.mxu0 0.0
  %1899 = vmatprep.subr.mxu0 0.0
  %1900 = vmatpush1.msra.mxu0 0.0
  %1901 = vmatprep.subr.mxu0 0.0
  %1902 = vmatpush1.msra.mxu0 0.0
  %1903 = vmatprep.subr.mxu0 0.0
  %1904 = vmatpush1.msra.mxu0 0.0
  %1905 = vmatprep.subr.mxu0 0.0
  %1906 = vmatpush1.msra.mxu0 0.0
  %1907 = vmatprep.subr.mxu0 0.0
  %1908 = vmatpush1.msra.mxu0 0.0
  %1909 = vmatprep.subr.mxu0 0.0
  %1910 = vmatpush1.msra.mxu0 0.0
  %1911 = vmatprep.subr.mxu0 0.0
  %1912 = vmatpush1.msra.mxu0 0.0
  %1913 = vmatprep.subr.mxu0 0.0
  %1914 = vmatpush1.msra.mxu0 0.0
  %1915 = vmatprep.subr.mxu0 0.0
  %1916 = vmatpush1.msra.mxu0 0.0
  %1917 = vmatprep.mubr.f32.mxu0 0.0
  %1918 = vmatmul.mubr.f32.gmra.mrb[0].mxu0 %v1842
  %v1919 = vpop.f32.mrb[0].mxu0
  %v1920 = vadd.f32 0.0, %v1919
  %v1921 = vpop.f32.mrb[0].mxu0
  %v1922 = vadd.f32 0.0, %v1921
  %1923 = vmatprep.mubr.f32.mxu0 0.0
  %1924 = vmatmul.mubr.f32.gmra.mrb[0].mxu0 %v1843
  %v1925 = vpop.f32.mrb[0].mxu0
  %v1926 = vadd.f32 0.0, %v1925
  %v1927 = vpop.f32.mrb[0].mxu0
  %v1928 = vadd.f32 0.0, %v1927
  %1929 = vdwg.mxu0
  %1930 = vmatprep.subr.mxu0 %v28
  %1931 = vmatpush1.msra.mxu0 %v27
  %1932 = vmatprep.subr.mxu0 %v32
  %1933 = vmatpush1.msra.mxu0 %v31
  %1934 = vmatprep.subr.mxu0 %v36
  %1935 = vmatpush1.msra.mxu0 %v35
  %1936 = vmatprep.subr.mxu0 %v40
  %1937 = vmatpush1.msra.mxu0 %v39
  %1938 = vmatprep.subr.mxu0 %v44
  %1939 = vmatpush1.msra.mxu0 %v43
  %1940 = vmatprep.subr.mxu0 %v48
  %1941 = vmatpush1.msra.mxu0 %v47
  %1942 = vmatprep.subr.mxu0 %v52
  %1943 = vmatpush1.msra.mxu0 %v51
  %1944 = vmatprep.subr.mxu0 %v56
  %1945 = vmatpush1.msra.mxu0 %v55
  %1946 = vmatprep.subr.mxu0 %v60
  %1947 = vmatpush1.msra.mxu0 %v59
  %1948 = vmatprep.subr.mxu0 %v64
  %1949 = vmatpush1.msra.mxu0 %v63
  %1950 = vmatprep.subr.mxu0 %v68
  %1951 = vmatpush1.msra.mxu0 %v67
  %1952 = vmatprep.subr.mxu0 %v72
  %1953 = vmatpush1.msra.mxu0 %v71
  %1954 = vmatprep.subr.mxu0 %v76
  %1955 = vmatpush1.msra.mxu0 %v75
  %1956 = vmatprep.subr.mxu0 %v80
  %1957 = vmatpush1.msra.mxu0 %v79
  %1958 = vmatprep.subr.mxu0 %v84
  %1959 = vmatpush1.msra.mxu0 %v83
  %1960 = vmatprep.subr.mxu0 %v88
  %1961 = vmatpush1.msra.mxu0 %v87
  %1962 = vmatprep.subr.mxu0 0.0
  %1963 = vmatpush1.msra.mxu0 0.0
  %1964 = vmatprep.subr.mxu0 0.0
  %1965 = vmatpush1.msra.mxu0 0.0
  %1966 = vmatprep.subr.mxu0 0.0
  %1967 = vmatpush1.msra.mxu0 0.0
  %1968 = vmatprep.subr.mxu0 0.0
  %1969 = vmatpush1.msra.mxu0 0.0
  %1970 = vmatprep.subr.mxu0 0.0
  %1971 = vmatpush1.msra.mxu0 0.0
  %1972 = vmatprep.subr.mxu0 0.0
  %1973 = vmatpush1.msra.mxu0 0.0
  %1974 = vmatprep.subr.mxu0 0.0
  %1975 = vmatpush1.msra.mxu0 0.0
  %1976 = vmatprep.subr.mxu0 0.0
  %1977 = vmatpush1.msra.mxu0 0.0
  %1978 = vmatprep.subr.mxu0 0.0
  %1979 = vmatpush1.msra.mxu0 0.0
  %1980 = vmatprep.subr.mxu0 0.0
  %1981 = vmatpush1.msra.mxu0 0.0
  %1982 = vmatprep.subr.mxu0 0.0
  %1983 = vmatpush1.msra.mxu0 0.0
  %1984 = vmatprep.subr.mxu0 0.0
  %1985 = vmatpush1.msra.mxu0 0.0
  %1986 = vmatprep.subr.mxu0 0.0
  %1987 = vmatpush1.msra.mxu0 0.0
  %1988 = vmatprep.subr.mxu0 0.0
  %1989 = vmatpush1.msra.mxu0 0.0
  %1990 = vmatprep.subr.mxu0 0.0
  %1991 = vmatpush1.msra.mxu0 0.0
  %1992 = vmatprep.subr.mxu0 0.0
  %1993 = vmatpush1.msra.mxu0 0.0
  %1994 = vmatprep.mubr.f32.mxu0 0.0
  %1995 = vmatmul.mubr.f32.gmra.mrb[0].mxu0 %v1842
  %v1996 = vpop.f32.mrb[0].mxu0
  %v1997 = vadd.f32 0.0, %v1996
  %v1998 = vpop.f32.mrb[0].mxu0
  %v1999 = vadd.f32 0.0, %v1998
  %2000 = vmatprep.mubr.f32.mxu0 0.0
  %2001 = vmatmul.mubr.f32.gmra.mrb[0].mxu0 %v1843
  %v2002 = vpop.f32.mrb[0].mxu0
  %v2003 = vadd.f32 0.0, %v2002
  %v2004 = vpop.f32.mrb[0].mxu0
  %v2005 = vadd.f32 0.0, %v2004
  %2006 = vdwg.mxu0
  %v2007 = vadd.f32 %v1845, %v1920
  %v2008 = vadd.f32 %v1846, %v1922
  %v2009 = vadd.f32 %v1847, %v1997
  %v2010 = vadd.f32 %v1848, %v1999
  %v2011 = vadd.f32 %v1849, %v1926
  %v2012 = vadd.f32 %v1850, %v1928
  %v2013 = vadd.f32 %v1851, %v2003
  %v2014 = vadd.f32 %v1852, %v2005
  %v2015 = vxor.u32 %v2007, 2147483648
  %v2016 = vxor.u32 %v2008, 2147483648
  %v2017 = vxor.u32 %v2011, 2147483648
  %v2018 = vxor.u32 %v2012, 2147483648
  %v2019 = vmul.f32 %v2015, 1.442695
  %v2020 = vpow.pop %v2019
  %v2021 = vmul.f32 %v2016, 1.442695
  %v2022 = vpow.pop %v2021
  %v2023 = vmul.f32 %v2017, 1.442695
  %v2024 = vpow.pop %v2023
  %v2025 = vmul.f32 %v2018, 1.442695
  %v2026 = vpow.pop %v2025
  %v2027 = vadd.f32 %v2020, 1.0
  %v2028 = vadd.f32 %v2022, 1.0
  %v2029 = vadd.f32 %v2024, 1.0
  %v2030 = vadd.f32 %v2026, 1.0
  %v2031 = vrcp.pop %v2027
  %v2032 = vmul.f32 1.0, %v2031
  %v2033 = vrcp.pop %v2028
  %v2034 = vmul.f32 1.0, %v2033
  %v2035 = vrcp.pop %v2029
  %v2036 = vmul.f32 1.0, %v2035
  %v2037 = vrcp.pop %v2030
  %v2038 = vmul.f32 1.0, %v2037
  %v2039 = vtanh.pop %v2009
  %v2040 = vtanh.pop %v2013
  %v2041 = vxor.u32 %v2010, 2147483648
  %v2042 = vxor.u32 %v2014, 2147483648
  %v2043 = vmul.f32 %v2041, 1.442695
  %v2044 = vpow.pop %v2043
  %v2045 = vmul.f32 %v2042, 1.442695
  %v2046 = vpow.pop %v2045
  %v2047 = vadd.f32 %v2044, 1.0
  %v2048 = vadd.f32 %v2046, 1.0
  %v2049 = vrcp.pop %v2047
  %v2050 = vmul.f32 1.0, %v2049
  %v2051 = vrcp.pop %v2048
  %v2052 = vmul.f32 1.0, %v2051
  %v2053 = vmul.f32 %v2034, %v1838
  %v2054 = vmul.f32 %v2038, %v1839
  %v2055 = vmul.f32 %v2032, %v2039
  %v2056 = vmul.f32 %v2036, %v2040
  %v2057 = vadd.f32 %v2053, %v2055
  %v2058 = vadd.f32 %v2054, %v2056
  %v2059 = vtanh.pop %v2057
  %v2060 = vtanh.pop %v2058
  %v2061 = vmul.f32 %v2050, %v2059
  %v2062 = vmul.f32 %v2052, %v2060
  %s2063 = scalar_lea.vmem %s0, 576
  %v2064 = vld [vmem:[%s2063] sm:$0xff]
  %v2065 = vld [vmem:[%s2063 + $0x8] sm:$0xff]
  %v2066 = vld [vmem:[%s2063 + $0x10] sm:$0xff]
  %v2067 = vld [vmem:[%s2063 + $0x18] sm:$0xff]
  %v2068 = vld [vmem:[%s2063 + $0x20] sm:$0xff]
  %v2069 = vld [vmem:[%s2063 + $0x28] sm:$0xff]
  %v2070 = vld [vmem:[%s2063 + $0x30] sm:$0xff]
  %v2071 = vld [vmem:[%s2063 + $0x38] sm:$0xff]
  %2072 = vmatprep.subr.mxu0 %v26
  %2073 = vmatpush1.msra.mxu0 %v25
  %2074 = vmatprep.subr.mxu0 %v30
  %2075 = vmatpush1.msra.mxu0 %v29
  %2076 = vmatprep.subr.mxu0 %v34
  %2077 = vmatpush1.msra.mxu0 %v33
  %2078 = vmatprep.subr.mxu0 %v38
  %2079 = vmatpush1.msra.mxu0 %v37
  %2080 = vmatprep.subr.mxu0 %v42
  %2081 = vmatpush1.msra.mxu0 %v41
  %2082 = vmatprep.subr.mxu0 %v46
  %2083 = vmatpush1.msra.mxu0 %v45
  %2084 = vmatprep.subr.mxu0 %v50
  %2085 = vmatpush1.msra.mxu0 %v49
  %2086 = vmatprep.subr.mxu0 %v54
  %2087 = vmatpush1.msra.mxu0 %v53
  %2088 = vmatprep.subr.mxu0 %v58
  %2089 = vmatpush1.msra.mxu0 %v57
  %2090 = vmatprep.subr.mxu0 %v62
  %2091 = vmatpush1.msra.mxu0 %v61
  %2092 = vmatprep.subr.mxu0 %v66
  %2093 = vmatpush1.msra.mxu0 %v65
  %2094 = vmatprep.subr.mxu0 %v70
  %2095 = vmatpush1.msra.mxu0 %v69
  %2096 = vmatprep.subr.mxu0 %v74
  %2097 = vmatpush1.msra.mxu0 %v73
  %2098 = vmatprep.subr.mxu0 %v78
  %2099 = vmatpush1.msra.mxu0 %v77
  %2100 = vmatprep.subr.mxu0 %v82
  %2101 = vmatpush1.msra.mxu0 %v81
  %2102 = vmatprep.subr.mxu0 %v86
  %2103 = vmatpush1.msra.mxu0 %v85
  %2104 = vmatprep.subr.mxu0 0.0
  %2105 = vmatpush1.msra.mxu0 0.0
  %2106 = vmatprep.subr.mxu0 0.0
  %2107 = vmatpush1.msra.mxu0 0.0
  %2108 = vmatprep.subr.mxu0 0.0
  %2109 = vmatpush1.msra.mxu0 0.0
  %2110 = vmatprep.subr.mxu0 0.0
  %2111 = vmatpush1.msra.mxu0 0.0
  %2112 = vmatprep.subr.mxu0 0.0
  %2113 = vmatpush1.msra.mxu0 0.0
  %2114 = vmatprep.subr.mxu0 0.0
  %2115 = vmatpush1.msra.mxu0 0.0
  %2116 = vmatprep.subr.mxu0 0.0
  %2117 = vmatpush1.msra.mxu0 0.0
  %2118 = vmatprep.subr.mxu0 0.0
  %2119 = vmatpush1.msra.mxu0 0.0
  %2120 = vmatprep.subr.mxu0 0.0
  %2121 = vmatpush1.msra.mxu0 0.0
  %2122 = vmatprep.subr.mxu0 0.0
  %2123 = vmatpush1.msra.mxu0 0.0
  %2124 = vmatprep.subr.mxu0 0.0
  %2125 = vmatpush1.msra.mxu0 0.0
  %2126 = vmatprep.subr.mxu0 0.0
  %2127 = vmatpush1.msra.mxu0 0.0
  %2128 = vmatprep.subr.mxu0 0.0
  %2129 = vmatpush1.msra.mxu0 0.0
  %2130 = vmatprep.subr.mxu0 0.0
  %2131 = vmatpush1.msra.mxu0 0.0
  %2132 = vmatprep.subr.mxu0 0.0
  %2133 = vmatpush1.msra.mxu0 0.0
  %2134 = vmatprep.subr.mxu0 0.0
  %2135 = vmatpush1.msra.mxu0 0.0
  %2136 = vmatprep.mubr.f32.mxu0 0.0
  %2137 = vmatmul.mubr.f32.gmra.mrb[0].mxu0 %v2061
  %v2138 = vpop.f32.mrb[0].mxu0
  %v2139 = vadd.f32 0.0, %v2138
  %v2140 = vpop.f32.mrb[0].mxu0
  %v2141 = vadd.f32 0.0, %v2140
  %2142 = vmatprep.mubr.f32.mxu0 0.0
  %2143 = vmatmul.mubr.f32.gmra.mrb[0].mxu0 %v2062
  %v2144 = vpop.f32.mrb[0].mxu0
  %v2145 = vadd.f32 0.0, %v2144
  %v2146 = vpop.f32.mrb[0].mxu0
  %v2147 = vadd.f32 0.0, %v2146
  %2148 = vdwg.mxu0
  %2149 = vmatprep.subr.mxu0 %v28
  %2150 = vmatpush1.msra.mxu0 %v27
  %2151 = vmatprep.subr.mxu0 %v32
  %2152 = vmatpush1.msra.mxu0 %v31
  %2153 = vmatprep.subr.mxu0 %v36
  %2154 = vmatpush1.msra.mxu0 %v35
  %2155 = vmatprep.subr.mxu0 %v40
  %2156 = vmatpush1.msra.mxu0 %v39
  %2157 = vmatprep.subr.mxu0 %v44
  %2158 = vmatpush1.msra.mxu0 %v43
  %2159 = vmatprep.subr.mxu0 %v48
  %2160 = vmatpush1.msra.mxu0 %v47
  %2161 = vmatprep.subr.mxu0 %v52
  %2162 = vmatpush1.msra.mxu0 %v51
  %2163 = vmatprep.subr.mxu0 %v56
  %2164 = vmatpush1.msra.mxu0 %v55
  %2165 = vmatprep.subr.mxu0 %v60
  %2166 = vmatpush1.msra.mxu0 %v59
  %2167 = vmatprep.subr.mxu0 %v64
  %2168 = vmatpush1.msra.mxu0 %v63
  %2169 = vmatprep.subr.mxu0 %v68
  %2170 = vmatpush1.msra.mxu0 %v67
  %2171 = vmatprep.subr.mxu0 %v72
  %2172 = vmatpush1.msra.mxu0 %v71
  %2173 = vmatprep.subr.mxu0 %v76
  %2174 = vmatpush1.msra.mxu0 %v75
  %2175 = vmatprep.subr.mxu0 %v80
  %2176 = vmatpush1.msra.mxu0 %v79
  %2177 = vmatprep.subr.mxu0 %v84
  %2178 = vmatpush1.msra.mxu0 %v83
  %2179 = vmatprep.subr.mxu0 %v88
  %2180 = vmatpush1.msra.mxu0 %v87
  %2181 = vmatprep.subr.mxu0 0.0
  %2182 = vmatpush1.msra.mxu0 0.0
  %2183 = vmatprep.subr.mxu0 0.0
  %2184 = vmatpush1.msra.mxu0 0.0
  %2185 = vmatprep.subr.mxu0 0.0
  %2186 = vmatpush1.msra.mxu0 0.0
  %2187 = vmatprep.subr.mxu0 0.0
  %2188 = vmatpush1.msra.mxu0 0.0
  %2189 = vmatprep.subr.mxu0 0.0
  %2190 = vmatpush1.msra.mxu0 0.0
  %2191 = vmatprep.subr.mxu0 0.0
  %2192 = vmatpush1.msra.mxu0 0.0
  %2193 = vmatprep.subr.mxu0 0.0
  %2194 = vmatpush1.msra.mxu0 0.0
  %2195 = vmatprep.subr.mxu0 0.0
  %2196 = vmatpush1.msra.mxu0 0.0
  %2197 = vmatprep.subr.mxu0 0.0
  %2198 = vmatpush1.msra.mxu0 0.0
  %2199 = vmatprep.subr.mxu0 0.0
  %2200 = vmatpush1.msra.mxu0 0.0
  %2201 = vmatprep.subr.mxu0 0.0
  %2202 = vmatpush1.msra.mxu0 0.0
  %2203 = vmatprep.subr.mxu0 0.0
  %2204 = vmatpush1.msra.mxu0 0.0
  %2205 = vmatprep.subr.mxu0 0.0
  %2206 = vmatpush1.msra.mxu0 0.0
  %2207 = vmatprep.subr.mxu0 0.0
  %2208 = vmatpush1.msra.mxu0 0.0
  %2209 = vmatprep.subr.mxu0 0.0
  %2210 = vmatpush1.msra.mxu0 0.0
  %2211 = vmatprep.subr.mxu0 0.0
  %2212 = vmatpush1.msra.mxu0 0.0
  %2213 = vmatprep.mubr.f32.mxu0 0.0
  %2214 = vmatmul.mubr.f32.gmra.mrb[0].mxu0 %v2061
  %v2215 = vpop.f32.mrb[0].mxu0
  %v2216 = vadd.f32 0.0, %v2215
  %v2217 = vpop.f32.mrb[0].mxu0
  %v2218 = vadd.f32 0.0, %v2217
  %2219 = vmatprep.mubr.f32.mxu0 0.0
  %2220 = vmatmul.mubr.f32.gmra.mrb[0].mxu0 %v2062
  %v2221 = vpop.f32.mrb[0].mxu0
  %v2222 = vadd.f32 0.0, %v2221
  %v2223 = vpop.f32.mrb[0].mxu0
  %v2224 = vadd.f32 0.0, %v2223
  %2225 = vdwg.mxu0
  %v2226 = vadd.f32 %v2064, %v2139
  %v2227 = vadd.f32 %v2065, %v2141
  %v2228 = vadd.f32 %v2066, %v2216
  %v2229 = vadd.f32 %v2067, %v2218
  %v2230 = vadd.f32 %v2068, %v2145
  %v2231 = vadd.f32 %v2069, %v2147
  %v2232 = vadd.f32 %v2070, %v2222
  %v2233 = vadd.f32 %v2071, %v2224
  %v2234 = vxor.u32 %v2226, 2147483648
  %v2235 = vxor.u32 %v2227, 2147483648
  %v2236 = vxor.u32 %v2230, 2147483648
  %v2237 = vxor.u32 %v2231, 2147483648
  %v2238 = vmul.f32 %v2234, 1.442695
  %v2239 = vpow.pop %v2238
  %v2240 = vmul.f32 %v2235, 1.442695
  %v2241 = vpow.pop %v2240
  %v2242 = vmul.f32 %v2236, 1.442695
  %v2243 = vpow.pop %v2242
  %v2244 = vmul.f32 %v2237, 1.442695
  %v2245 = vpow.pop %v2244
  %v2246 = vadd.f32 %v2239, 1.0
  %v2247 = vadd.f32 %v2241, 1.0
  %v2248 = vadd.f32 %v2243, 1.0
  %v2249 = vadd.f32 %v2245, 1.0
  %v2250 = vrcp.pop %v2246
  %v2251 = vmul.f32 1.0, %v2250
  %v2252 = vrcp.pop %v2247
  %v2253 = vmul.f32 1.0, %v2252
  %v2254 = vrcp.pop %v2248
  %v2255 = vmul.f32 1.0, %v2254
  %v2256 = vrcp.pop %v2249
  %v2257 = vmul.f32 1.0, %v2256
  %v2258 = vtanh.pop %v2228
  %v2259 = vtanh.pop %v2232
  %v2260 = vxor.u32 %v2229, 2147483648
  %v2261 = vxor.u32 %v2233, 2147483648
  %v2262 = vmul.f32 %v2260, 1.442695
  %v2263 = vpow.pop %v2262
  %v2264 = vmul.f32 %v2261, 1.442695
  %v2265 = vpow.pop %v2264
  %v2266 = vadd.f32 %v2263, 1.0
  %v2267 = vadd.f32 %v2265, 1.0
  %v2268 = vrcp.pop %v2266
  %v2269 = vmul.f32 1.0, %v2268
  %v2270 = vrcp.pop %v2267
  %v2271 = vmul.f32 1.0, %v2270
  %v2272 = vmul.f32 %v2253, %v2057
  %v2273 = vmul.f32 %v2257, %v2058
  %v2274 = vmul.f32 %v2251, %v2258
  %v2275 = vmul.f32 %v2255, %v2259
  %v2276 = vadd.f32 %v2272, %v2274
  %v2277 = vadd.f32 %v2273, %v2275
  %v2278 = vtanh.pop %v2276
  %v2279 = vtanh.pop %v2277
  %v2280 = vmul.f32 %v2269, %v2278
  %v2281 = vmul.f32 %v2271, %v2279
  %s2282 = scalar_lea.vmem %s0, 640
  %v2283 = vld [vmem:[%s2282] sm:$0xff]
  %v2284 = vld [vmem:[%s2282 + $0x8] sm:$0xff]
  %v2285 = vld [vmem:[%s2282 + $0x10] sm:$0xff]
  %v2286 = vld [vmem:[%s2282 + $0x18] sm:$0xff]
  %v2287 = vld [vmem:[%s2282 + $0x20] sm:$0xff]
  %v2288 = vld [vmem:[%s2282 + $0x28] sm:$0xff]
  %v2289 = vld [vmem:[%s2282 + $0x30] sm:$0xff]
  %v2290 = vld [vmem:[%s2282 + $0x38] sm:$0xff]
  %2291 = vmatprep.subr.mxu0 %v26
  %2292 = vmatpush1.msra.mxu0 %v25
  %2293 = vmatprep.subr.mxu0 %v30
  %2294 = vmatpush1.msra.mxu0 %v29
  %2295 = vmatprep.subr.mxu0 %v34
  %2296 = vmatpush1.msra.mxu0 %v33
  %2297 = vmatprep.subr.mxu0 %v38
  %2298 = vmatpush1.msra.mxu0 %v37
  %2299 = vmatprep.subr.mxu0 %v42
  %2300 = vmatpush1.msra.mxu0 %v41
  %2301 = vmatprep.subr.mxu0 %v46
  %2302 = vmatpush1.msra.mxu0 %v45
  %2303 = vmatprep.subr.mxu0 %v50
  %2304 = vmatpush1.msra.mxu0 %v49
  %2305 = vmatprep.subr.mxu0 %v54
  %2306 = vmatpush1.msra.mxu0 %v53
  %2307 = vmatprep.subr.mxu0 %v58
  %2308 = vmatpush1.msra.mxu0 %v57
  %2309 = vmatprep.subr.mxu0 %v62
  %2310 = vmatpush1.msra.mxu0 %v61
  %2311 = vmatprep.subr.mxu0 %v66
  %2312 = vmatpush1.msra.mxu0 %v65
  %2313 = vmatprep.subr.mxu0 %v70
  %2314 = vmatpush1.msra.mxu0 %v69
  %2315 = vmatprep.subr.mxu0 %v74
  %2316 = vmatpush1.msra.mxu0 %v73
  %2317 = vmatprep.subr.mxu0 %v78
  %2318 = vmatpush1.msra.mxu0 %v77
  %2319 = vmatprep.subr.mxu0 %v82
  %2320 = vmatpush1.msra.mxu0 %v81
  %2321 = vmatprep.subr.mxu0 %v86
  %2322 = vmatpush1.msra.mxu0 %v85
  %2323 = vmatprep.subr.mxu0 0.0
  %2324 = vmatpush1.msra.mxu0 0.0
  %2325 = vmatprep.subr.mxu0 0.0
  %2326 = vmatpush1.msra.mxu0 0.0
  %2327 = vmatprep.subr.mxu0 0.0
  %2328 = vmatpush1.msra.mxu0 0.0
  %2329 = vmatprep.subr.mxu0 0.0
  %2330 = vmatpush1.msra.mxu0 0.0
  %2331 = vmatprep.subr.mxu0 0.0
  %2332 = vmatpush1.msra.mxu0 0.0
  %2333 = vmatprep.subr.mxu0 0.0
  %2334 = vmatpush1.msra.mxu0 0.0
  %2335 = vmatprep.subr.mxu0 0.0
  %2336 = vmatpush1.msra.mxu0 0.0
  %2337 = vmatprep.subr.mxu0 0.0
  %2338 = vmatpush1.msra.mxu0 0.0
  %2339 = vmatprep.subr.mxu0 0.0
  %2340 = vmatpush1.msra.mxu0 0.0
  %2341 = vmatprep.subr.mxu0 0.0
  %2342 = vmatpush1.msra.mxu0 0.0
  %2343 = vmatprep.subr.mxu0 0.0
  %2344 = vmatpush1.msra.mxu0 0.0
  %2345 = vmatprep.subr.mxu0 0.0
  %2346 = vmatpush1.msra.mxu0 0.0
  %2347 = vmatprep.subr.mxu0 0.0
  %2348 = vmatpush1.msra.mxu0 0.0
  %2349 = vmatprep.subr.mxu0 0.0
  %2350 = vmatpush1.msra.mxu0 0.0
  %2351 = vmatprep.subr.mxu0 0.0
  %2352 = vmatpush1.msra.mxu0 0.0
  %2353 = vmatprep.subr.mxu0 0.0
  %2354 = vmatpush1.msra.mxu0 0.0
  %2355 = vmatprep.mubr.f32.mxu0 0.0
  %2356 = vmatmul.mubr.f32.gmra.mrb[0].mxu0 %v2280
  %v2357 = vpop.f32.mrb[0].mxu0
  %v2358 = vadd.f32 0.0, %v2357
  %v2359 = vpop.f32.mrb[0].mxu0
  %v2360 = vadd.f32 0.0, %v2359
  %2361 = vmatprep.mubr.f32.mxu0 0.0
  %2362 = vmatmul.mubr.f32.gmra.mrb[0].mxu0 %v2281
  %v2363 = vpop.f32.mrb[0].mxu0
  %v2364 = vadd.f32 0.0, %v2363
  %v2365 = vpop.f32.mrb[0].mxu0
  %v2366 = vadd.f32 0.0, %v2365
  %2367 = vdwg.mxu0
  %2368 = vmatprep.subr.mxu0 %v28
  %2369 = vmatpush1.msra.mxu0 %v27
  %2370 = vmatprep.subr.mxu0 %v32
  %2371 = vmatpush1.msra.mxu0 %v31
  %2372 = vmatprep.subr.mxu0 %v36
  %2373 = vmatpush1.msra.mxu0 %v35
  %2374 = vmatprep.subr.mxu0 %v40
  %2375 = vmatpush1.msra.mxu0 %v39
  %2376 = vmatprep.subr.mxu0 %v44
  %2377 = vmatpush1.msra.mxu0 %v43
  %2378 = vmatprep.subr.mxu0 %v48
  %2379 = vmatpush1.msra.mxu0 %v47
  %2380 = vmatprep.subr.mxu0 %v52
  %2381 = vmatpush1.msra.mxu0 %v51
  %2382 = vmatprep.subr.mxu0 %v56
  %2383 = vmatpush1.msra.mxu0 %v55
  %2384 = vmatprep.subr.mxu0 %v60
  %2385 = vmatpush1.msra.mxu0 %v59
  %2386 = vmatprep.subr.mxu0 %v64
  %2387 = vmatpush1.msra.mxu0 %v63
  %2388 = vmatprep.subr.mxu0 %v68
  %2389 = vmatpush1.msra.mxu0 %v67
  %2390 = vmatprep.subr.mxu0 %v72
  %2391 = vmatpush1.msra.mxu0 %v71
  %2392 = vmatprep.subr.mxu0 %v76
  %2393 = vmatpush1.msra.mxu0 %v75
  %2394 = vmatprep.subr.mxu0 %v80
  %2395 = vmatpush1.msra.mxu0 %v79
  %2396 = vmatprep.subr.mxu0 %v84
  %2397 = vmatpush1.msra.mxu0 %v83
  %2398 = vmatprep.subr.mxu0 %v88
  %2399 = vmatpush1.msra.mxu0 %v87
  %2400 = vmatprep.subr.mxu0 0.0
  %2401 = vmatpush1.msra.mxu0 0.0
  %2402 = vmatprep.subr.mxu0 0.0
  %2403 = vmatpush1.msra.mxu0 0.0
  %2404 = vmatprep.subr.mxu0 0.0
  %2405 = vmatpush1.msra.mxu0 0.0
  %2406 = vmatprep.subr.mxu0 0.0
  %2407 = vmatpush1.msra.mxu0 0.0
  %2408 = vmatprep.subr.mxu0 0.0
  %2409 = vmatpush1.msra.mxu0 0.0
  %2410 = vmatprep.subr.mxu0 0.0
  %2411 = vmatpush1.msra.mxu0 0.0
  %2412 = vmatprep.subr.mxu0 0.0
  %2413 = vmatpush1.msra.mxu0 0.0
  %2414 = vmatprep.subr.mxu0 0.0
  %2415 = vmatpush1.msra.mxu0 0.0
  %2416 = vmatprep.subr.mxu0 0.0
  %2417 = vmatpush1.msra.mxu0 0.0
  %2418 = vmatprep.subr.mxu0 0.0
  %2419 = vmatpush1.msra.mxu0 0.0
  %2420 = vmatprep.subr.mxu0 0.0
  %2421 = vmatpush1.msra.mxu0 0.0
  %2422 = vmatprep.subr.mxu0 0.0
  %2423 = vmatpush1.msra.mxu0 0.0
  %2424 = vmatprep.subr.mxu0 0.0
  %2425 = vmatpush1.msra.mxu0 0.0
  %2426 = vmatprep.subr.mxu0 0.0
  %2427 = vmatpush1.msra.mxu0 0.0
  %2428 = vmatprep.subr.mxu0 0.0
  %2429 = vmatpush1.msra.mxu0 0.0
  %2430 = vmatprep.subr.mxu0 0.0
  %2431 = vmatpush1.msra.mxu0 0.0
  %2432 = vmatprep.mubr.f32.mxu0 0.0
  %2433 = vmatmul.mubr.f32.gmra.mrb[0].mxu0 %v2280
  %v2434 = vpop.f32.mrb[0].mxu0
  %v2435 = vadd.f32 0.0, %v2434
  %v2436 = vpop.f32.mrb[0].mxu0
  %v2437 = vadd.f32 0.0, %v2436
  %2438 = vmatprep.mubr.f32.mxu0 0.0
  %2439 = vmatmul.mubr.f32.gmra.mrb[0].mxu0 %v2281
  %v2440 = vpop.f32.mrb[0].mxu0
  %v2441 = vadd.f32 0.0, %v2440
  %v2442 = vpop.f32.mrb[0].mxu0
  %v2443 = vadd.f32 0.0, %v2442
  %2444 = vdwg.mxu0
  %v2445 = vadd.f32 %v2283, %v2358
  %v2446 = vadd.f32 %v2284, %v2360
  %v2447 = vadd.f32 %v2285, %v2435
  %v2448 = vadd.f32 %v2286, %v2437
  %v2449 = vadd.f32 %v2287, %v2364
  %v2450 = vadd.f32 %v2288, %v2366
  %v2451 = vadd.f32 %v2289, %v2441
  %v2452 = vadd.f32 %v2290, %v2443
  %v2453 = vxor.u32 %v2445, 2147483648
  %v2454 = vxor.u32 %v2446, 2147483648
  %v2455 = vxor.u32 %v2449, 2147483648
  %v2456 = vxor.u32 %v2450, 2147483648
  %v2457 = vmul.f32 %v2453, 1.442695
  %v2458 = vpow.pop %v2457
  %v2459 = vmul.f32 %v2454, 1.442695
  %v2460 = vpow.pop %v2459
  %v2461 = vmul.f32 %v2455, 1.442695
  %v2462 = vpow.pop %v2461
  %v2463 = vmul.f32 %v2456, 1.442695
  %v2464 = vpow.pop %v2463
  %v2465 = vadd.f32 %v2458, 1.0
  %v2466 = vadd.f32 %v2460, 1.0
  %v2467 = vadd.f32 %v2462, 1.0
  %v2468 = vadd.f32 %v2464, 1.0
  %v2469 = vrcp.pop %v2465
  %v2470 = vmul.f32 1.0, %v2469
  %v2471 = vrcp.pop %v2466
  %v2472 = vmul.f32 1.0, %v2471
  %v2473 = vrcp.pop %v2467
  %v2474 = vmul.f32 1.0, %v2473
  %v2475 = vrcp.pop %v2468
  %v2476 = vmul.f32 1.0, %v2475
  %v2477 = vtanh.pop %v2447
  %v2478 = vtanh.pop %v2451
  %v2479 = vxor.u32 %v2448, 2147483648
  %v2480 = vxor.u32 %v2452, 2147483648
  %v2481 = vmul.f32 %v2479, 1.442695
  %v2482 = vpow.pop %v2481
  %v2483 = vmul.f32 %v2480, 1.442695
  %v2484 = vpow.pop %v2483
  %v2485 = vadd.f32 %v2482, 1.0
  %v2486 = vadd.f32 %v2484, 1.0
  %v2487 = vrcp.pop %v2485
  %v2488 = vmul.f32 1.0, %v2487
  %v2489 = vrcp.pop %v2486
  %v2490 = vmul.f32 1.0, %v2489
  %v2491 = vmul.f32 %v2472, %v2276
  %v2492 = vmul.f32 %v2476, %v2277
  %v2493 = vmul.f32 %v2470, %v2477
  %v2494 = vmul.f32 %v2474, %v2478
  %v2495 = vadd.f32 %v2491, %v2493
  %v2496 = vadd.f32 %v2492, %v2494
  %v2497 = vtanh.pop %v2495
  %v2498 = vtanh.pop %v2496
  %v2499 = vmul.f32 %v2488, %v2497
  %v2500 = vmul.f32 %v2490, %v2498
  %s2501 = scalar_lea.vmem %s0, 704
  %v2502 = vld [vmem:[%s2501] sm:$0xff]
  %v2503 = vld [vmem:[%s2501 + $0x8] sm:$0xff]
  %v2504 = vld [vmem:[%s2501 + $0x10] sm:$0xff]
  %v2505 = vld [vmem:[%s2501 + $0x18] sm:$0xff]
  %v2506 = vld [vmem:[%s2501 + $0x20] sm:$0xff]
  %v2507 = vld [vmem:[%s2501 + $0x28] sm:$0xff]
  %v2508 = vld [vmem:[%s2501 + $0x30] sm:$0xff]
  %v2509 = vld [vmem:[%s2501 + $0x38] sm:$0xff]
  %2510 = vmatprep.subr.mxu0 %v26
  %2511 = vmatpush1.msra.mxu0 %v25
  %2512 = vmatprep.subr.mxu0 %v30
  %2513 = vmatpush1.msra.mxu0 %v29
  %2514 = vmatprep.subr.mxu0 %v34
  %2515 = vmatpush1.msra.mxu0 %v33
  %2516 = vmatprep.subr.mxu0 %v38
  %2517 = vmatpush1.msra.mxu0 %v37
  %2518 = vmatprep.subr.mxu0 %v42
  %2519 = vmatpush1.msra.mxu0 %v41
  %2520 = vmatprep.subr.mxu0 %v46
  %2521 = vmatpush1.msra.mxu0 %v45
  %2522 = vmatprep.subr.mxu0 %v50
  %2523 = vmatpush1.msra.mxu0 %v49
  %2524 = vmatprep.subr.mxu0 %v54
  %2525 = vmatpush1.msra.mxu0 %v53
  %2526 = vmatprep.subr.mxu0 %v58
  %2527 = vmatpush1.msra.mxu0 %v57
  %2528 = vmatprep.subr.mxu0 %v62
  %2529 = vmatpush1.msra.mxu0 %v61
  %2530 = vmatprep.subr.mxu0 %v66
  %2531 = vmatpush1.msra.mxu0 %v65
  %2532 = vmatprep.subr.mxu0 %v70
  %2533 = vmatpush1.msra.mxu0 %v69
  %2534 = vmatprep.subr.mxu0 %v74
  %2535 = vmatpush1.msra.mxu0 %v73
  %2536 = vmatprep.subr.mxu0 %v78
  %2537 = vmatpush1.msra.mxu0 %v77
  %2538 = vmatprep.subr.mxu0 %v82
  %2539 = vmatpush1.msra.mxu0 %v81
  %2540 = vmatprep.subr.mxu0 %v86
  %2541 = vmatpush1.msra.mxu0 %v85
  %2542 = vmatprep.subr.mxu0 0.0
  %2543 = vmatpush1.msra.mxu0 0.0
  %2544 = vmatprep.subr.mxu0 0.0
  %2545 = vmatpush1.msra.mxu0 0.0
  %2546 = vmatprep.subr.mxu0 0.0
  %2547 = vmatpush1.msra.mxu0 0.0
  %2548 = vmatprep.subr.mxu0 0.0
  %2549 = vmatpush1.msra.mxu0 0.0
  %2550 = vmatprep.subr.mxu0 0.0
  %2551 = vmatpush1.msra.mxu0 0.0
  %2552 = vmatprep.subr.mxu0 0.0
  %2553 = vmatpush1.msra.mxu0 0.0
  %2554 = vmatprep.subr.mxu0 0.0
  %2555 = vmatpush1.msra.mxu0 0.0
  %2556 = vmatprep.subr.mxu0 0.0
  %2557 = vmatpush1.msra.mxu0 0.0
  %2558 = vmatprep.subr.mxu0 0.0
  %2559 = vmatpush1.msra.mxu0 0.0
  %2560 = vmatprep.subr.mxu0 0.0
  %2561 = vmatpush1.msra.mxu0 0.0
  %2562 = vmatprep.subr.mxu0 0.0
  %2563 = vmatpush1.msra.mxu0 0.0
  %2564 = vmatprep.subr.mxu0 0.0
  %2565 = vmatpush1.msra.mxu0 0.0
  %2566 = vmatprep.subr.mxu0 0.0
  %2567 = vmatpush1.msra.mxu0 0.0
  %2568 = vmatprep.subr.mxu0 0.0
  %2569 = vmatpush1.msra.mxu0 0.0
  %2570 = vmatprep.subr.mxu0 0.0
  %2571 = vmatpush1.msra.mxu0 0.0
  %2572 = vmatprep.subr.mxu0 0.0
  %2573 = vmatpush1.msra.mxu0 0.0
  %2574 = vmatprep.mubr.f32.mxu0 0.0
  %2575 = vmatmul.mubr.f32.gmra.mrb[0].mxu0 %v2499
  %v2576 = vpop.f32.mrb[0].mxu0
  %v2577 = vadd.f32 0.0, %v2576
  %v2578 = vpop.f32.mrb[0].mxu0
  %v2579 = vadd.f32 0.0, %v2578
  %2580 = vmatprep.mubr.f32.mxu0 0.0
  %2581 = vmatmul.mubr.f32.gmra.mrb[0].mxu0 %v2500
  %v2582 = vpop.f32.mrb[0].mxu0
  %v2583 = vadd.f32 0.0, %v2582
  %v2584 = vpop.f32.mrb[0].mxu0
  %v2585 = vadd.f32 0.0, %v2584
  %2586 = vdwg.mxu0
  %2587 = vmatprep.subr.mxu0 %v28
  %2588 = vmatpush1.msra.mxu0 %v27
  %2589 = vmatprep.subr.mxu0 %v32
  %2590 = vmatpush1.msra.mxu0 %v31
  %2591 = vmatprep.subr.mxu0 %v36
  %2592 = vmatpush1.msra.mxu0 %v35
  %2593 = vmatprep.subr.mxu0 %v40
  %2594 = vmatpush1.msra.mxu0 %v39
  %2595 = vmatprep.subr.mxu0 %v44
  %2596 = vmatpush1.msra.mxu0 %v43
  %2597 = vmatprep.subr.mxu0 %v48
  %2598 = vmatpush1.msra.mxu0 %v47
  %2599 = vmatprep.subr.mxu0 %v52
  %2600 = vmatpush1.msra.mxu0 %v51
  %2601 = vmatprep.subr.mxu0 %v56
  %2602 = vmatpush1.msra.mxu0 %v55
  %2603 = vmatprep.subr.mxu0 %v60
  %2604 = vmatpush1.msra.mxu0 %v59
  %2605 = vmatprep.subr.mxu0 %v64
  %2606 = vmatpush1.msra.mxu0 %v63
  %2607 = vmatprep.subr.mxu0 %v68
  %2608 = vmatpush1.msra.mxu0 %v67
  %2609 = vmatprep.subr.mxu0 %v72
  %2610 = vmatpush1.msra.mxu0 %v71
  %2611 = vmatprep.subr.mxu0 %v76
  %2612 = vmatpush1.msra.mxu0 %v75
  %2613 = vmatprep.subr.mxu0 %v80
  %2614 = vmatpush1.msra.mxu0 %v79
  %2615 = vmatprep.subr.mxu0 %v84
  %2616 = vmatpush1.msra.mxu0 %v83
  %2617 = vmatprep.subr.mxu0 %v88
  %2618 = vmatpush1.msra.mxu0 %v87
  %2619 = vmatprep.subr.mxu0 0.0
  %2620 = vmatpush1.msra.mxu0 0.0
  %2621 = vmatprep.subr.mxu0 0.0
  %2622 = vmatpush1.msra.mxu0 0.0
  %2623 = vmatprep.subr.mxu0 0.0
  %2624 = vmatpush1.msra.mxu0 0.0
  %2625 = vmatprep.subr.mxu0 0.0
  %2626 = vmatpush1.msra.mxu0 0.0
  %2627 = vmatprep.subr.mxu0 0.0
  %2628 = vmatpush1.msra.mxu0 0.0
  %2629 = vmatprep.subr.mxu0 0.0
  %2630 = vmatpush1.msra.mxu0 0.0
  %2631 = vmatprep.subr.mxu0 0.0
  %2632 = vmatpush1.msra.mxu0 0.0
  %2633 = vmatprep.subr.mxu0 0.0
  %2634 = vmatpush1.msra.mxu0 0.0
  %2635 = vmatprep.subr.mxu0 0.0
  %2636 = vmatpush1.msra.mxu0 0.0
  %2637 = vmatprep.subr.mxu0 0.0
  %2638 = vmatpush1.msra.mxu0 0.0
  %2639 = vmatprep.subr.mxu0 0.0
  %2640 = vmatpush1.msra.mxu0 0.0
  %2641 = vmatprep.subr.mxu0 0.0
  %2642 = vmatpush1.msra.mxu0 0.0
  %2643 = vmatprep.subr.mxu0 0.0
  %2644 = vmatpush1.msra.mxu0 0.0
  %2645 = vmatprep.subr.mxu0 0.0
  %2646 = vmatpush1.msra.mxu0 0.0
  %2647 = vmatprep.subr.mxu0 0.0
  %2648 = vmatpush1.msra.mxu0 0.0
  %2649 = vmatprep.subr.mxu0 0.0
  %2650 = vmatpush1.msra.mxu0 0.0
  %2651 = vmatprep.mubr.f32.mxu0 0.0
  %2652 = vmatmul.mubr.f32.gmra.mrb[0].mxu0 %v2499
  %v2653 = vpop.f32.mrb[0].mxu0
  %v2654 = vadd.f32 0.0, %v2653
  %v2655 = vpop.f32.mrb[0].mxu0
  %v2656 = vadd.f32 0.0, %v2655
  %2657 = vmatprep.mubr.f32.mxu0 0.0
  %2658 = vmatmul.mubr.f32.gmra.mrb[0].mxu0 %v2500
  %v2659 = vpop.f32.mrb[0].mxu0
  %v2660 = vadd.f32 0.0, %v2659
  %v2661 = vpop.f32.mrb[0].mxu0
  %v2662 = vadd.f32 0.0, %v2661
  %2663 = vdwg.mxu0
  %v2664 = vadd.f32 %v2502, %v2577
  %v2665 = vadd.f32 %v2503, %v2579
  %v2666 = vadd.f32 %v2504, %v2654
  %v2667 = vadd.f32 %v2505, %v2656
  %v2668 = vadd.f32 %v2506, %v2583
  %v2669 = vadd.f32 %v2507, %v2585
  %v2670 = vadd.f32 %v2508, %v2660
  %v2671 = vadd.f32 %v2509, %v2662
  %v2672 = vxor.u32 %v2664, 2147483648
  %v2673 = vxor.u32 %v2665, 2147483648
  %v2674 = vxor.u32 %v2668, 2147483648
  %v2675 = vxor.u32 %v2669, 2147483648
  %v2676 = vmul.f32 %v2672, 1.442695
  %v2677 = vpow.pop %v2676
  %v2678 = vmul.f32 %v2673, 1.442695
  %v2679 = vpow.pop %v2678
  %v2680 = vmul.f32 %v2674, 1.442695
  %v2681 = vpow.pop %v2680
  %v2682 = vmul.f32 %v2675, 1.442695
  %v2683 = vpow.pop %v2682
  %v2684 = vadd.f32 %v2677, 1.0
  %v2685 = vadd.f32 %v2679, 1.0
  %v2686 = vadd.f32 %v2681, 1.0
  %v2687 = vadd.f32 %v2683, 1.0
  %v2688 = vrcp.pop %v2684
  %v2689 = vmul.f32 1.0, %v2688
  %v2690 = vrcp.pop %v2685
  %v2691 = vmul.f32 1.0, %v2690
  %v2692 = vrcp.pop %v2686
  %v2693 = vmul.f32 1.0, %v2692
  %v2694 = vrcp.pop %v2687
  %v2695 = vmul.f32 1.0, %v2694
  %v2696 = vtanh.pop %v2666
  %v2697 = vtanh.pop %v2670
  %v2698 = vxor.u32 %v2667, 2147483648
  %v2699 = vxor.u32 %v2671, 2147483648
  %v2700 = vmul.f32 %v2698, 1.442695
  %v2701 = vpow.pop %v2700
  %v2702 = vmul.f32 %v2699, 1.442695
  %v2703 = vpow.pop %v2702
  %v2704 = vadd.f32 %v2701, 1.0
  %v2705 = vadd.f32 %v2703, 1.0
  %v2706 = vrcp.pop %v2704
  %v2707 = vmul.f32 1.0, %v2706
  %v2708 = vrcp.pop %v2705
  %v2709 = vmul.f32 1.0, %v2708
  %v2710 = vmul.f32 %v2691, %v2495
  %v2711 = vmul.f32 %v2695, %v2496
  %v2712 = vmul.f32 %v2689, %v2696
  %v2713 = vmul.f32 %v2693, %v2697
  %v2714 = vadd.f32 %v2710, %v2712
  %v2715 = vadd.f32 %v2711, %v2713
  %v2716 = vtanh.pop %v2714
  %v2717 = vtanh.pop %v2715
  %v2718 = vmul.f32 %v2707, %v2716
  %v2719 = vmul.f32 %v2709, %v2717
  %s2720 = scalar_lea.vmem %s0, 768
  %v2721 = vld [vmem:[%s2720] sm:$0xff]
  %v2722 = vld [vmem:[%s2720 + $0x8] sm:$0xff]
  %v2723 = vld [vmem:[%s2720 + $0x10] sm:$0xff]
  %v2724 = vld [vmem:[%s2720 + $0x18] sm:$0xff]
  %v2725 = vld [vmem:[%s2720 + $0x20] sm:$0xff]
  %v2726 = vld [vmem:[%s2720 + $0x28] sm:$0xff]
  %v2727 = vld [vmem:[%s2720 + $0x30] sm:$0xff]
  %v2728 = vld [vmem:[%s2720 + $0x38] sm:$0xff]
  %2729 = vmatprep.subr.mxu0 %v26
  %2730 = vmatpush1.msra.mxu0 %v25
  %2731 = vmatprep.subr.mxu0 %v30
  %2732 = vmatpush1.msra.mxu0 %v29
  %2733 = vmatprep.subr.mxu0 %v34
  %2734 = vmatpush1.msra.mxu0 %v33
  %2735 = vmatprep.subr.mxu0 %v38
  %2736 = vmatpush1.msra.mxu0 %v37
  %2737 = vmatprep.subr.mxu0 %v42
  %2738 = vmatpush1.msra.mxu0 %v41
  %2739 = vmatprep.subr.mxu0 %v46
  %2740 = vmatpush1.msra.mxu0 %v45
  %2741 = vmatprep.subr.mxu0 %v50
  %2742 = vmatpush1.msra.mxu0 %v49
  %2743 = vmatprep.subr.mxu0 %v54
  %2744 = vmatpush1.msra.mxu0 %v53
  %2745 = vmatprep.subr.mxu0 %v58
  %2746 = vmatpush1.msra.mxu0 %v57
  %2747 = vmatprep.subr.mxu0 %v62
  %2748 = vmatpush1.msra.mxu0 %v61
  %2749 = vmatprep.subr.mxu0 %v66
  %2750 = vmatpush1.msra.mxu0 %v65
  %2751 = vmatprep.subr.mxu0 %v70
  %2752 = vmatpush1.msra.mxu0 %v69
  %2753 = vmatprep.subr.mxu0 %v74
  %2754 = vmatpush1.msra.mxu0 %v73
  %2755 = vmatprep.subr.mxu0 %v78
  %2756 = vmatpush1.msra.mxu0 %v77
  %2757 = vmatprep.subr.mxu0 %v82
  %2758 = vmatpush1.msra.mxu0 %v81
  %2759 = vmatprep.subr.mxu0 %v86
  %2760 = vmatpush1.msra.mxu0 %v85
  %2761 = vmatprep.subr.mxu0 0.0
  %2762 = vmatpush1.msra.mxu0 0.0
  %2763 = vmatprep.subr.mxu0 0.0
  %2764 = vmatpush1.msra.mxu0 0.0
  %2765 = vmatprep.subr.mxu0 0.0
  %2766 = vmatpush1.msra.mxu0 0.0
  %2767 = vmatprep.subr.mxu0 0.0
  %2768 = vmatpush1.msra.mxu0 0.0
  %2769 = vmatprep.subr.mxu0 0.0
  %2770 = vmatpush1.msra.mxu0 0.0
  %2771 = vmatprep.subr.mxu0 0.0
  %2772 = vmatpush1.msra.mxu0 0.0
  %2773 = vmatprep.subr.mxu0 0.0
  %2774 = vmatpush1.msra.mxu0 0.0
  %2775 = vmatprep.subr.mxu0 0.0
  %2776 = vmatpush1.msra.mxu0 0.0
  %2777 = vmatprep.subr.mxu0 0.0
  %2778 = vmatpush1.msra.mxu0 0.0
  %2779 = vmatprep.subr.mxu0 0.0
  %2780 = vmatpush1.msra.mxu0 0.0
  %2781 = vmatprep.subr.mxu0 0.0
  %2782 = vmatpush1.msra.mxu0 0.0
  %2783 = vmatprep.subr.mxu0 0.0
  %2784 = vmatpush1.msra.mxu0 0.0
  %2785 = vmatprep.subr.mxu0 0.0
  %2786 = vmatpush1.msra.mxu0 0.0
  %2787 = vmatprep.subr.mxu0 0.0
  %2788 = vmatpush1.msra.mxu0 0.0
  %2789 = vmatprep.subr.mxu0 0.0
  %2790 = vmatpush1.msra.mxu0 0.0
  %2791 = vmatprep.subr.mxu0 0.0
  %2792 = vmatpush1.msra.mxu0 0.0
  %2793 = vmatprep.mubr.f32.mxu0 0.0
  %2794 = vmatmul.mubr.f32.gmra.mrb[0].mxu0 %v2718
  %v2795 = vpop.f32.mrb[0].mxu0
  %v2796 = vadd.f32 0.0, %v2795
  %v2797 = vpop.f32.mrb[0].mxu0
  %v2798 = vadd.f32 0.0, %v2797
  %2799 = vmatprep.mubr.f32.mxu0 0.0
  %2800 = vmatmul.mubr.f32.gmra.mrb[0].mxu0 %v2719
  %v2801 = vpop.f32.mrb[0].mxu0
  %v2802 = vadd.f32 0.0, %v2801
  %v2803 = vpop.f32.mrb[0].mxu0
  %v2804 = vadd.f32 0.0, %v2803
  %2805 = vdwg.mxu0
  %2806 = vmatprep.subr.mxu0 %v28
  %2807 = vmatpush1.msra.mxu0 %v27
  %2808 = vmatprep.subr.mxu0 %v32
  %2809 = vmatpush1.msra.mxu0 %v31
  %2810 = vmatprep.subr.mxu0 %v36
  %2811 = vmatpush1.msra.mxu0 %v35
  %2812 = vmatprep.subr.mxu0 %v40
  %2813 = vmatpush1.msra.mxu0 %v39
  %2814 = vmatprep.subr.mxu0 %v44
  %2815 = vmatpush1.msra.mxu0 %v43
  %2816 = vmatprep.subr.mxu0 %v48
  %2817 = vmatpush1.msra.mxu0 %v47
  %2818 = vmatprep.subr.mxu0 %v52
  %2819 = vmatpush1.msra.mxu0 %v51
  %2820 = vmatprep.subr.mxu0 %v56
  %2821 = vmatpush1.msra.mxu0 %v55
  %2822 = vmatprep.subr.mxu0 %v60
  %2823 = vmatpush1.msra.mxu0 %v59
  %2824 = vmatprep.subr.mxu0 %v64
  %2825 = vmatpush1.msra.mxu0 %v63
  %2826 = vmatprep.subr.mxu0 %v68
  %2827 = vmatpush1.msra.mxu0 %v67
  %2828 = vmatprep.subr.mxu0 %v72
  %2829 = vmatpush1.msra.mxu0 %v71
  %2830 = vmatprep.subr.mxu0 %v76
  %2831 = vmatpush1.msra.mxu0 %v75
  %2832 = vmatprep.subr.mxu0 %v80
  %2833 = vmatpush1.msra.mxu0 %v79
  %2834 = vmatprep.subr.mxu0 %v84
  %2835 = vmatpush1.msra.mxu0 %v83
  %2836 = vmatprep.subr.mxu0 %v88
  %2837 = vmatpush1.msra.mxu0 %v87
  %2838 = vmatprep.subr.mxu0 0.0
  %2839 = vmatpush1.msra.mxu0 0.0
  %2840 = vmatprep.subr.mxu0 0.0
  %2841 = vmatpush1.msra.mxu0 0.0
  %2842 = vmatprep.subr.mxu0 0.0
  %2843 = vmatpush1.msra.mxu0 0.0
  %2844 = vmatprep.subr.mxu0 0.0
  %2845 = vmatpush1.msra.mxu0 0.0
  %2846 = vmatprep.subr.mxu0 0.0
  %2847 = vmatpush1.msra.mxu0 0.0
  %2848 = vmatprep.subr.mxu0 0.0
  %2849 = vmatpush1.msra.mxu0 0.0
  %2850 = vmatprep.subr.mxu0 0.0
  %2851 = vmatpush1.msra.mxu0 0.0
  %2852 = vmatprep.subr.mxu0 0.0
  %2853 = vmatpush1.msra.mxu0 0.0
  %2854 = vmatprep.subr.mxu0 0.0
  %2855 = vmatpush1.msra.mxu0 0.0
  %2856 = vmatprep.subr.mxu0 0.0
  %2857 = vmatpush1.msra.mxu0 0.0
  %2858 = vmatprep.subr.mxu0 0.0
  %2859 = vmatpush1.msra.mxu0 0.0
  %2860 = vmatprep.subr.mxu0 0.0
  %2861 = vmatpush1.msra.mxu0 0.0
  %2862 = vmatprep.subr.mxu0 0.0
  %2863 = vmatpush1.msra.mxu0 0.0
  %2864 = vmatprep.subr.mxu0 0.0
  %2865 = vmatpush1.msra.mxu0 0.0
  %2866 = vmatprep.subr.mxu0 0.0
  %2867 = vmatpush1.msra.mxu0 0.0
  %2868 = vmatprep.subr.mxu0 0.0
  %2869 = vmatpush1.msra.mxu0 0.0
  %2870 = vmatprep.mubr.f32.mxu0 0.0
  %2871 = vmatmul.mubr.f32.gmra.mrb[0].mxu0 %v2718
  %v2872 = vpop.f32.mrb[0].mxu0
  %v2873 = vadd.f32 0.0, %v2872
  %v2874 = vpop.f32.mrb[0].mxu0
  %v2875 = vadd.f32 0.0, %v2874
  %2876 = vmatprep.mubr.f32.mxu0 0.0
  %2877 = vmatmul.mubr.f32.gmra.mrb[0].mxu0 %v2719
  %v2878 = vpop.f32.mrb[0].mxu0
  %v2879 = vadd.f32 0.0, %v2878
  %v2880 = vpop.f32.mrb[0].mxu0
  %v2881 = vadd.f32 0.0, %v2880
  %2882 = vdwg.mxu0
  %v2883 = vadd.f32 %v2721, %v2796
  %v2884 = vadd.f32 %v2722, %v2798
  %v2885 = vadd.f32 %v2723, %v2873
  %v2886 = vadd.f32 %v2724, %v2875
  %v2887 = vadd.f32 %v2725, %v2802
  %v2888 = vadd.f32 %v2726, %v2804
  %v2889 = vadd.f32 %v2727, %v2879
  %v2890 = vadd.f32 %v2728, %v2881
  %v2891 = vxor.u32 %v2883, 2147483648
  %v2892 = vxor.u32 %v2884, 2147483648
  %v2893 = vxor.u32 %v2887, 2147483648
  %v2894 = vxor.u32 %v2888, 2147483648
  %v2895 = vmul.f32 %v2891, 1.442695
  %v2896 = vpow.pop %v2895
  %v2897 = vmul.f32 %v2892, 1.442695
  %v2898 = vpow.pop %v2897
  %v2899 = vmul.f32 %v2893, 1.442695
  %v2900 = vpow.pop %v2899
  %v2901 = vmul.f32 %v2894, 1.442695
  %v2902 = vpow.pop %v2901
  %v2903 = vadd.f32 %v2896, 1.0
  %v2904 = vadd.f32 %v2898, 1.0
  %v2905 = vadd.f32 %v2900, 1.0
  %v2906 = vadd.f32 %v2902, 1.0
  %v2907 = vrcp.pop %v2903
  %v2908 = vmul.f32 1.0, %v2907
  %v2909 = vrcp.pop %v2904
  %v2910 = vmul.f32 1.0, %v2909
  %v2911 = vrcp.pop %v2905
  %v2912 = vmul.f32 1.0, %v2911
  %v2913 = vrcp.pop %v2906
  %v2914 = vmul.f32 1.0, %v2913
  %v2915 = vtanh.pop %v2885
  %v2916 = vtanh.pop %v2889
  %v2917 = vxor.u32 %v2886, 2147483648
  %v2918 = vxor.u32 %v2890, 2147483648
  %v2919 = vmul.f32 %v2917, 1.442695
  %v2920 = vpow.pop %v2919
  %v2921 = vmul.f32 %v2918, 1.442695
  %v2922 = vpow.pop %v2921
  %v2923 = vadd.f32 %v2920, 1.0
  %v2924 = vadd.f32 %v2922, 1.0
  %v2925 = vrcp.pop %v2923
  %v2926 = vmul.f32 1.0, %v2925
  %v2927 = vrcp.pop %v2924
  %v2928 = vmul.f32 1.0, %v2927
  %v2929 = vmul.f32 %v2910, %v2714
  %v2930 = vmul.f32 %v2914, %v2715
  %v2931 = vmul.f32 %v2908, %v2915
  %v2932 = vmul.f32 %v2912, %v2916
  %v2933 = vadd.f32 %v2929, %v2931
  %v2934 = vadd.f32 %v2930, %v2932
  %v2935 = vtanh.pop %v2933
  %v2936 = vtanh.pop %v2934
  %v2937 = vmul.f32 %v2926, %v2935
  %v2938 = vmul.f32 %v2928, %v2936
  %s2939 = scalar_lea.vmem %s0, 832
  %v2940 = vld [vmem:[%s2939] sm:$0xff]
  %v2941 = vld [vmem:[%s2939 + $0x8] sm:$0xff]
  %v2942 = vld [vmem:[%s2939 + $0x10] sm:$0xff]
  %v2943 = vld [vmem:[%s2939 + $0x18] sm:$0xff]
  %v2944 = vld [vmem:[%s2939 + $0x20] sm:$0xff]
  %v2945 = vld [vmem:[%s2939 + $0x28] sm:$0xff]
  %v2946 = vld [vmem:[%s2939 + $0x30] sm:$0xff]
  %v2947 = vld [vmem:[%s2939 + $0x38] sm:$0xff]
  %2948 = vmatprep.subr.mxu0 %v26
  %2949 = vmatpush1.msra.mxu0 %v25
  %2950 = vmatprep.subr.mxu0 %v30
  %2951 = vmatpush1.msra.mxu0 %v29
  %2952 = vmatprep.subr.mxu0 %v34
  %2953 = vmatpush1.msra.mxu0 %v33
  %2954 = vmatprep.subr.mxu0 %v38
  %2955 = vmatpush1.msra.mxu0 %v37
  %2956 = vmatprep.subr.mxu0 %v42
  %2957 = vmatpush1.msra.mxu0 %v41
  %2958 = vmatprep.subr.mxu0 %v46
  %2959 = vmatpush1.msra.mxu0 %v45
  %2960 = vmatprep.subr.mxu0 %v50
  %2961 = vmatpush1.msra.mxu0 %v49
  %2962 = vmatprep.subr.mxu0 %v54
  %2963 = vmatpush1.msra.mxu0 %v53
  %2964 = vmatprep.subr.mxu0 %v58
  %2965 = vmatpush1.msra.mxu0 %v57
  %2966 = vmatprep.subr.mxu0 %v62
  %2967 = vmatpush1.msra.mxu0 %v61
  %2968 = vmatprep.subr.mxu0 %v66
  %2969 = vmatpush1.msra.mxu0 %v65
  %2970 = vmatprep.subr.mxu0 %v70
  %2971 = vmatpush1.msra.mxu0 %v69
  %2972 = vmatprep.subr.mxu0 %v74
  %2973 = vmatpush1.msra.mxu0 %v73
  %2974 = vmatprep.subr.mxu0 %v78
  %2975 = vmatpush1.msra.mxu0 %v77
  %2976 = vmatprep.subr.mxu0 %v82
  %2977 = vmatpush1.msra.mxu0 %v81
  %2978 = vmatprep.subr.mxu0 %v86
  %2979 = vmatpush1.msra.mxu0 %v85
  %2980 = vmatprep.subr.mxu0 0.0
  %2981 = vmatpush1.msra.mxu0 0.0
  %2982 = vmatprep.subr.mxu0 0.0
  %2983 = vmatpush1.msra.mxu0 0.0
  %2984 = vmatprep.subr.mxu0 0.0
  %2985 = vmatpush1.msra.mxu0 0.0
  %2986 = vmatprep.subr.mxu0 0.0
  %2987 = vmatpush1.msra.mxu0 0.0
  %2988 = vmatprep.subr.mxu0 0.0
  %2989 = vmatpush1.msra.mxu0 0.0
  %2990 = vmatprep.subr.mxu0 0.0
  %2991 = vmatpush1.msra.mxu0 0.0
  %2992 = vmatprep.subr.mxu0 0.0
  %2993 = vmatpush1.msra.mxu0 0.0
  %2994 = vmatprep.subr.mxu0 0.0
  %2995 = vmatpush1.msra.mxu0 0.0
  %2996 = vmatprep.subr.mxu0 0.0
  %2997 = vmatpush1.msra.mxu0 0.0
  %2998 = vmatprep.subr.mxu0 0.0
  %2999 = vmatpush1.msra.mxu0 0.0
  %3000 = vmatprep.subr.mxu0 0.0
  %3001 = vmatpush1.msra.mxu0 0.0
  %3002 = vmatprep.subr.mxu0 0.0
  %3003 = vmatpush1.msra.mxu0 0.0
  %3004 = vmatprep.subr.mxu0 0.0
  %3005 = vmatpush1.msra.mxu0 0.0
  %3006 = vmatprep.subr.mxu0 0.0
  %3007 = vmatpush1.msra.mxu0 0.0
  %3008 = vmatprep.subr.mxu0 0.0
  %3009 = vmatpush1.msra.mxu0 0.0
  %3010 = vmatprep.subr.mxu0 0.0
  %3011 = vmatpush1.msra.mxu0 0.0
  %3012 = vmatprep.mubr.f32.mxu0 0.0
  %3013 = vmatmul.mubr.f32.gmra.mrb[0].mxu0 %v2937
  %v3014 = vpop.f32.mrb[0].mxu0
  %v3015 = vadd.f32 0.0, %v3014
  %v3016 = vpop.f32.mrb[0].mxu0
  %v3017 = vadd.f32 0.0, %v3016
  %3018 = vmatprep.mubr.f32.mxu0 0.0
  %3019 = vmatmul.mubr.f32.gmra.mrb[0].mxu0 %v2938
  %v3020 = vpop.f32.mrb[0].mxu0
  %v3021 = vadd.f32 0.0, %v3020
  %v3022 = vpop.f32.mrb[0].mxu0
  %v3023 = vadd.f32 0.0, %v3022
  %3024 = vdwg.mxu0
  %3025 = vmatprep.subr.mxu0 %v28
  %3026 = vmatpush1.msra.mxu0 %v27
  %3027 = vmatprep.subr.mxu0 %v32
  %3028 = vmatpush1.msra.mxu0 %v31
  %3029 = vmatprep.subr.mxu0 %v36
  %3030 = vmatpush1.msra.mxu0 %v35
  %3031 = vmatprep.subr.mxu0 %v40
  %3032 = vmatpush1.msra.mxu0 %v39
  %3033 = vmatprep.subr.mxu0 %v44
  %3034 = vmatpush1.msra.mxu0 %v43
  %3035 = vmatprep.subr.mxu0 %v48
  %3036 = vmatpush1.msra.mxu0 %v47
  %3037 = vmatprep.subr.mxu0 %v52
  %3038 = vmatpush1.msra.mxu0 %v51
  %3039 = vmatprep.subr.mxu0 %v56
  %3040 = vmatpush1.msra.mxu0 %v55
  %3041 = vmatprep.subr.mxu0 %v60
  %3042 = vmatpush1.msra.mxu0 %v59
  %3043 = vmatprep.subr.mxu0 %v64
  %3044 = vmatpush1.msra.mxu0 %v63
  %3045 = vmatprep.subr.mxu0 %v68
  %3046 = vmatpush1.msra.mxu0 %v67
  %3047 = vmatprep.subr.mxu0 %v72
  %3048 = vmatpush1.msra.mxu0 %v71
  %3049 = vmatprep.subr.mxu0 %v76
  %3050 = vmatpush1.msra.mxu0 %v75
  %3051 = vmatprep.subr.mxu0 %v80
  %3052 = vmatpush1.msra.mxu0 %v79
  %3053 = vmatprep.subr.mxu0 %v84
  %3054 = vmatpush1.msra.mxu0 %v83
  %3055 = vmatprep.subr.mxu0 %v88
  %3056 = vmatpush1.msra.mxu0 %v87
  %3057 = vmatprep.subr.mxu0 0.0
  %3058 = vmatpush1.msra.mxu0 0.0
  %3059 = vmatprep.subr.mxu0 0.0
  %3060 = vmatpush1.msra.mxu0 0.0
  %3061 = vmatprep.subr.mxu0 0.0
  %3062 = vmatpush1.msra.mxu0 0.0
  %3063 = vmatprep.subr.mxu0 0.0
  %3064 = vmatpush1.msra.mxu0 0.0
  %3065 = vmatprep.subr.mxu0 0.0
  %3066 = vmatpush1.msra.mxu0 0.0
  %3067 = vmatprep.subr.mxu0 0.0
  %3068 = vmatpush1.msra.mxu0 0.0
  %3069 = vmatprep.subr.mxu0 0.0
  %3070 = vmatpush1.msra.mxu0 0.0
  %3071 = vmatprep.subr.mxu0 0.0
  %3072 = vmatpush1.msra.mxu0 0.0
  %3073 = vmatprep.subr.mxu0 0.0
  %3074 = vmatpush1.msra.mxu0 0.0
  %3075 = vmatprep.subr.mxu0 0.0
  %3076 = vmatpush1.msra.mxu0 0.0
  %3077 = vmatprep.subr.mxu0 0.0
  %3078 = vmatpush1.msra.mxu0 0.0
  %3079 = vmatprep.subr.mxu0 0.0
  %3080 = vmatpush1.msra.mxu0 0.0
  %3081 = vmatprep.subr.mxu0 0.0
  %3082 = vmatpush1.msra.mxu0 0.0
  %3083 = vmatprep.subr.mxu0 0.0
  %3084 = vmatpush1.msra.mxu0 0.0
  %3085 = vmatprep.subr.mxu0 0.0
  %3086 = vmatpush1.msra.mxu0 0.0
  %3087 = vmatprep.subr.mxu0 0.0
  %3088 = vmatpush1.msra.mxu0 0.0
  %3089 = vmatprep.mubr.f32.mxu0 0.0
  %3090 = vmatmul.mubr.f32.gmra.mrb[0].mxu0 %v2937
  %v3091 = vpop.f32.mrb[0].mxu0
  %v3092 = vadd.f32 0.0, %v3091
  %v3093 = vpop.f32.mrb[0].mxu0
  %v3094 = vadd.f32 0.0, %v3093
  %3095 = vmatprep.mubr.f32.mxu0 0.0
  %3096 = vmatmul.mubr.f32.gmra.mrb[0].mxu0 %v2938
  %v3097 = vpop.f32.mrb[0].mxu0
  %v3098 = vadd.f32 0.0, %v3097
  %v3099 = vpop.f32.mrb[0].mxu0
  %v3100 = vadd.f32 0.0, %v3099
  %3101 = vdwg.mxu0
  %v3102 = vadd.f32 %v2940, %v3015
  %v3103 = vadd.f32 %v2941, %v3017
  %v3104 = vadd.f32 %v2942, %v3092
  %v3105 = vadd.f32 %v2943, %v3094
  %v3106 = vadd.f32 %v2944, %v3021
  %v3107 = vadd.f32 %v2945, %v3023
  %v3108 = vadd.f32 %v2946, %v3098
  %v3109 = vadd.f32 %v2947, %v3100
  %v3110 = vxor.u32 %v3102, 2147483648
  %v3111 = vxor.u32 %v3103, 2147483648
  %v3112 = vxor.u32 %v3106, 2147483648
  %v3113 = vxor.u32 %v3107, 2147483648
  %v3114 = vmul.f32 %v3110, 1.442695
  %v3115 = vpow.pop %v3114
  %v3116 = vmul.f32 %v3111, 1.442695
  %v3117 = vpow.pop %v3116
  %v3118 = vmul.f32 %v3112, 1.442695
  %v3119 = vpow.pop %v3118
  %v3120 = vmul.f32 %v3113, 1.442695
  %v3121 = vpow.pop %v3120
  %v3122 = vadd.f32 %v3115, 1.0
  %v3123 = vadd.f32 %v3117, 1.0
  %v3124 = vadd.f32 %v3119, 1.0
  %v3125 = vadd.f32 %v3121, 1.0
  %v3126 = vrcp.pop %v3122
  %v3127 = vmul.f32 1.0, %v3126
  %v3128 = vrcp.pop %v3123
  %v3129 = vmul.f32 1.0, %v3128
  %v3130 = vrcp.pop %v3124
  %v3131 = vmul.f32 1.0, %v3130
  %v3132 = vrcp.pop %v3125
  %v3133 = vmul.f32 1.0, %v3132
  %v3134 = vtanh.pop %v3104
  %v3135 = vtanh.pop %v3108
  %v3136 = vxor.u32 %v3105, 2147483648
  %v3137 = vxor.u32 %v3109, 2147483648
  %v3138 = vmul.f32 %v3136, 1.442695
  %v3139 = vpow.pop %v3138
  %v3140 = vmul.f32 %v3137, 1.442695
  %v3141 = vpow.pop %v3140
  %v3142 = vadd.f32 %v3139, 1.0
  %v3143 = vadd.f32 %v3141, 1.0
  %v3144 = vrcp.pop %v3142
  %v3145 = vmul.f32 1.0, %v3144
  %v3146 = vrcp.pop %v3143
  %v3147 = vmul.f32 1.0, %v3146
  %v3148 = vmul.f32 %v3129, %v2933
  %v3149 = vmul.f32 %v3133, %v2934
  %v3150 = vmul.f32 %v3127, %v3134
  %v3151 = vmul.f32 %v3131, %v3135
  %v3152 = vadd.f32 %v3148, %v3150
  %v3153 = vadd.f32 %v3149, %v3151
  %v3154 = vtanh.pop %v3152
  %v3155 = vtanh.pop %v3153
  %v3156 = vmul.f32 %v3145, %v3154
  %v3157 = vmul.f32 %v3147, %v3155
  %s3158 = scalar_lea.vmem %s0, 896
  %v3159 = vld [vmem:[%s3158] sm:$0xff]
  %v3160 = vld [vmem:[%s3158 + $0x8] sm:$0xff]
  %v3161 = vld [vmem:[%s3158 + $0x10] sm:$0xff]
  %v3162 = vld [vmem:[%s3158 + $0x18] sm:$0xff]
  %v3163 = vld [vmem:[%s3158 + $0x20] sm:$0xff]
  %v3164 = vld [vmem:[%s3158 + $0x28] sm:$0xff]
  %v3165 = vld [vmem:[%s3158 + $0x30] sm:$0xff]
  %v3166 = vld [vmem:[%s3158 + $0x38] sm:$0xff]
  %3167 = vmatprep.subr.mxu0 %v26
  %3168 = vmatpush1.msra.mxu0 %v25
  %3169 = vmatprep.subr.mxu0 %v30
  %3170 = vmatpush1.msra.mxu0 %v29
  %3171 = vmatprep.subr.mxu0 %v34
  %3172 = vmatpush1.msra.mxu0 %v33
  %3173 = vmatprep.subr.mxu0 %v38
  %3174 = vmatpush1.msra.mxu0 %v37
  %3175 = vmatprep.subr.mxu0 %v42
  %3176 = vmatpush1.msra.mxu0 %v41
  %3177 = vmatprep.subr.mxu0 %v46
  %3178 = vmatpush1.msra.mxu0 %v45
  %3179 = vmatprep.subr.mxu0 %v50
  %3180 = vmatpush1.msra.mxu0 %v49
  %3181 = vmatprep.subr.mxu0 %v54
  %3182 = vmatpush1.msra.mxu0 %v53
  %3183 = vmatprep.subr.mxu0 %v58
  %3184 = vmatpush1.msra.mxu0 %v57
  %3185 = vmatprep.subr.mxu0 %v62
  %3186 = vmatpush1.msra.mxu0 %v61
  %3187 = vmatprep.subr.mxu0 %v66
  %3188 = vmatpush1.msra.mxu0 %v65
  %3189 = vmatprep.subr.mxu0 %v70
  %3190 = vmatpush1.msra.mxu0 %v69
  %3191 = vmatprep.subr.mxu0 %v74
  %3192 = vmatpush1.msra.mxu0 %v73
  %3193 = vmatprep.subr.mxu0 %v78
  %3194 = vmatpush1.msra.mxu0 %v77
  %3195 = vmatprep.subr.mxu0 %v82
  %3196 = vmatpush1.msra.mxu0 %v81
  %3197 = vmatprep.subr.mxu0 %v86
  %3198 = vmatpush1.msra.mxu0 %v85
  %3199 = vmatprep.subr.mxu0 0.0
  %3200 = vmatpush1.msra.mxu0 0.0
  %3201 = vmatprep.subr.mxu0 0.0
  %3202 = vmatpush1.msra.mxu0 0.0
  %3203 = vmatprep.subr.mxu0 0.0
  %3204 = vmatpush1.msra.mxu0 0.0
  %3205 = vmatprep.subr.mxu0 0.0
  %3206 = vmatpush1.msra.mxu0 0.0
  %3207 = vmatprep.subr.mxu0 0.0
  %3208 = vmatpush1.msra.mxu0 0.0
  %3209 = vmatprep.subr.mxu0 0.0
  %3210 = vmatpush1.msra.mxu0 0.0
  %3211 = vmatprep.subr.mxu0 0.0
  %3212 = vmatpush1.msra.mxu0 0.0
  %3213 = vmatprep.subr.mxu0 0.0
  %3214 = vmatpush1.msra.mxu0 0.0
  %3215 = vmatprep.subr.mxu0 0.0
  %3216 = vmatpush1.msra.mxu0 0.0
  %3217 = vmatprep.subr.mxu0 0.0
  %3218 = vmatpush1.msra.mxu0 0.0
  %3219 = vmatprep.subr.mxu0 0.0
  %3220 = vmatpush1.msra.mxu0 0.0
  %3221 = vmatprep.subr.mxu0 0.0
  %3222 = vmatpush1.msra.mxu0 0.0
  %3223 = vmatprep.subr.mxu0 0.0
  %3224 = vmatpush1.msra.mxu0 0.0
  %3225 = vmatprep.subr.mxu0 0.0
  %3226 = vmatpush1.msra.mxu0 0.0
  %3227 = vmatprep.subr.mxu0 0.0
  %3228 = vmatpush1.msra.mxu0 0.0
  %3229 = vmatprep.subr.mxu0 0.0
  %3230 = vmatpush1.msra.mxu0 0.0
  %3231 = vmatprep.mubr.f32.mxu0 0.0
  %3232 = vmatmul.mubr.f32.gmra.mrb[0].mxu0 %v3156
  %v3233 = vpop.f32.mrb[0].mxu0
  %v3234 = vadd.f32 0.0, %v3233
  %v3235 = vpop.f32.mrb[0].mxu0
  %v3236 = vadd.f32 0.0, %v3235
  %3237 = vmatprep.mubr.f32.mxu0 0.0
  %3238 = vmatmul.mubr.f32.gmra.mrb[0].mxu0 %v3157
  %v3239 = vpop.f32.mrb[0].mxu0
  %v3240 = vadd.f32 0.0, %v3239
  %v3241 = vpop.f32.mrb[0].mxu0
  %v3242 = vadd.f32 0.0, %v3241
  %3243 = vdwg.mxu0
  %3244 = vmatprep.subr.mxu0 %v28
  %3245 = vmatpush1.msra.mxu0 %v27
  %3246 = vmatprep.subr.mxu0 %v32
  %3247 = vmatpush1.msra.mxu0 %v31
  %3248 = vmatprep.subr.mxu0 %v36
  %3249 = vmatpush1.msra.mxu0 %v35
  %3250 = vmatprep.subr.mxu0 %v40
  %3251 = vmatpush1.msra.mxu0 %v39
  %3252 = vmatprep.subr.mxu0 %v44
  %3253 = vmatpush1.msra.mxu0 %v43
  %3254 = vmatprep.subr.mxu0 %v48
  %3255 = vmatpush1.msra.mxu0 %v47
  %3256 = vmatprep.subr.mxu0 %v52
  %3257 = vmatpush1.msra.mxu0 %v51
  %3258 = vmatprep.subr.mxu0 %v56
  %3259 = vmatpush1.msra.mxu0 %v55
  %3260 = vmatprep.subr.mxu0 %v60
  %3261 = vmatpush1.msra.mxu0 %v59
  %3262 = vmatprep.subr.mxu0 %v64
  %3263 = vmatpush1.msra.mxu0 %v63
  %3264 = vmatprep.subr.mxu0 %v68
  %3265 = vmatpush1.msra.mxu0 %v67
  %3266 = vmatprep.subr.mxu0 %v72
  %3267 = vmatpush1.msra.mxu0 %v71
  %3268 = vmatprep.subr.mxu0 %v76
  %3269 = vmatpush1.msra.mxu0 %v75
  %3270 = vmatprep.subr.mxu0 %v80
  %3271 = vmatpush1.msra.mxu0 %v79
  %3272 = vmatprep.subr.mxu0 %v84
  %3273 = vmatpush1.msra.mxu0 %v83
  %3274 = vmatprep.subr.mxu0 %v88
  %3275 = vmatpush1.msra.mxu0 %v87
  %3276 = vmatprep.subr.mxu0 0.0
  %3277 = vmatpush1.msra.mxu0 0.0
  %3278 = vmatprep.subr.mxu0 0.0
  %3279 = vmatpush1.msra.mxu0 0.0
  %3280 = vmatprep.subr.mxu0 0.0
  %3281 = vmatpush1.msra.mxu0 0.0
  %3282 = vmatprep.subr.mxu0 0.0
  %3283 = vmatpush1.msra.mxu0 0.0
  %3284 = vmatprep.subr.mxu0 0.0
  %3285 = vmatpush1.msra.mxu0 0.0
  %3286 = vmatprep.subr.mxu0 0.0
  %3287 = vmatpush1.msra.mxu0 0.0
  %3288 = vmatprep.subr.mxu0 0.0
  %3289 = vmatpush1.msra.mxu0 0.0
  %3290 = vmatprep.subr.mxu0 0.0
  %3291 = vmatpush1.msra.mxu0 0.0
  %3292 = vmatprep.subr.mxu0 0.0
  %3293 = vmatpush1.msra.mxu0 0.0
  %3294 = vmatprep.subr.mxu0 0.0
  %3295 = vmatpush1.msra.mxu0 0.0
  %3296 = vmatprep.subr.mxu0 0.0
  %3297 = vmatpush1.msra.mxu0 0.0
  %3298 = vmatprep.subr.mxu0 0.0
  %3299 = vmatpush1.msra.mxu0 0.0
  %3300 = vmatprep.subr.mxu0 0.0
  %3301 = vmatpush1.msra.mxu0 0.0
  %3302 = vmatprep.subr.mxu0 0.0
  %3303 = vmatpush1.msra.mxu0 0.0
  %3304 = vmatprep.subr.mxu0 0.0
  %3305 = vmatpush1.msra.mxu0 0.0
  %3306 = vmatprep.subr.mxu0 0.0
  %3307 = vmatpush1.msra.mxu0 0.0
  %3308 = vmatprep.mubr.f32.mxu0 0.0
  %3309 = vmatmul.mubr.f32.gmra.mrb[0].mxu0 %v3156
  %v3310 = vpop.f32.mrb[0].mxu0
  %v3311 = vadd.f32 0.0, %v3310
  %v3312 = vpop.f32.mrb[0].mxu0
  %v3313 = vadd.f32 0.0, %v3312
  %3314 = vmatprep.mubr.f32.mxu0 0.0
  %3315 = vmatmul.mubr.f32.gmra.mrb[0].mxu0 %v3157
  %v3316 = vpop.f32.mrb[0].mxu0
  %v3317 = vadd.f32 0.0, %v3316
  %v3318 = vpop.f32.mrb[0].mxu0
  %v3319 = vadd.f32 0.0, %v3318
  %3320 = vdwg.mxu0
  %v3321 = vadd.f32 %v3159, %v3234
  %v3322 = vadd.f32 %v3160, %v3236
  %v3323 = vadd.f32 %v3161, %v3311
  %v3324 = vadd.f32 %v3162, %v3313
  %v3325 = vadd.f32 %v3163, %v3240
  %v3326 = vadd.f32 %v3164, %v3242
  %v3327 = vadd.f32 %v3165, %v3317
  %v3328 = vadd.f32 %v3166, %v3319
  %v3329 = vxor.u32 %v3321, 2147483648
  %v3330 = vxor.u32 %v3322, 2147483648
  %v3331 = vxor.u32 %v3325, 2147483648
  %v3332 = vxor.u32 %v3326, 2147483648
  %v3333 = vmul.f32 %v3329, 1.442695
  %v3334 = vpow.pop %v3333
  %v3335 = vmul.f32 %v3330, 1.442695
  %v3336 = vpow.pop %v3335
  %v3337 = vmul.f32 %v3331, 1.442695
  %v3338 = vpow.pop %v3337
  %v3339 = vmul.f32 %v3332, 1.442695
  %v3340 = vpow.pop %v3339
  %v3341 = vadd.f32 %v3334, 1.0
  %v3342 = vadd.f32 %v3336, 1.0
  %v3343 = vadd.f32 %v3338, 1.0
  %v3344 = vadd.f32 %v3340, 1.0
  %v3345 = vrcp.pop %v3341
  %v3346 = vmul.f32 1.0, %v3345
  %v3347 = vrcp.pop %v3342
  %v3348 = vmul.f32 1.0, %v3347
  %v3349 = vrcp.pop %v3343
  %v3350 = vmul.f32 1.0, %v3349
  %v3351 = vrcp.pop %v3344
  %v3352 = vmul.f32 1.0, %v3351
  %v3353 = vtanh.pop %v3323
  %v3354 = vtanh.pop %v3327
  %v3355 = vxor.u32 %v3324, 2147483648
  %v3356 = vxor.u32 %v3328, 2147483648
  %v3357 = vmul.f32 %v3355, 1.442695
  %v3358 = vpow.pop %v3357
  %v3359 = vmul.f32 %v3356, 1.442695
  %v3360 = vpow.pop %v3359
  %v3361 = vadd.f32 %v3358, 1.0
  %v3362 = vadd.f32 %v3360, 1.0
  %v3363 = vrcp.pop %v3361
  %v3364 = vmul.f32 1.0, %v3363
  %v3365 = vrcp.pop %v3362
  %v3366 = vmul.f32 1.0, %v3365
  %v3367 = vmul.f32 %v3348, %v3152
  %v3368 = vmul.f32 %v3352, %v3153
  %v3369 = vmul.f32 %v3346, %v3353
  %v3370 = vmul.f32 %v3350, %v3354
  %v3371 = vadd.f32 %v3367, %v3369
  %v3372 = vadd.f32 %v3368, %v3370
  %v3373 = vtanh.pop %v3371
  %v3374 = vtanh.pop %v3372
  %v3375 = vmul.f32 %v3364, %v3373
  %v3376 = vmul.f32 %v3366, %v3374
  %s3377 = scalar_lea.vmem %s0, 960
  %v3378 = vld [vmem:[%s3377] sm:$0xff]
  %v3379 = vld [vmem:[%s3377 + $0x8] sm:$0xff]
  %v3380 = vld [vmem:[%s3377 + $0x10] sm:$0xff]
  %v3381 = vld [vmem:[%s3377 + $0x18] sm:$0xff]
  %v3382 = vld [vmem:[%s3377 + $0x20] sm:$0xff]
  %v3383 = vld [vmem:[%s3377 + $0x28] sm:$0xff]
  %v3384 = vld [vmem:[%s3377 + $0x30] sm:$0xff]
  %v3385 = vld [vmem:[%s3377 + $0x38] sm:$0xff]
  %3386 = vmatprep.subr.mxu0 %v26
  %3387 = vmatpush1.msra.mxu0 %v25
  %3388 = vmatprep.subr.mxu0 %v30
  %3389 = vmatpush1.msra.mxu0 %v29
  %3390 = vmatprep.subr.mxu0 %v34
  %3391 = vmatpush1.msra.mxu0 %v33
  %3392 = vmatprep.subr.mxu0 %v38
  %3393 = vmatpush1.msra.mxu0 %v37
  %3394 = vmatprep.subr.mxu0 %v42
  %3395 = vmatpush1.msra.mxu0 %v41
  %3396 = vmatprep.subr.mxu0 %v46
  %3397 = vmatpush1.msra.mxu0 %v45
  %3398 = vmatprep.subr.mxu0 %v50
  %3399 = vmatpush1.msra.mxu0 %v49
  %3400 = vmatprep.subr.mxu0 %v54
  %3401 = vmatpush1.msra.mxu0 %v53
  %3402 = vmatprep.subr.mxu0 %v58
  %3403 = vmatpush1.msra.mxu0 %v57
  %3404 = vmatprep.subr.mxu0 %v62
  %3405 = vmatpush1.msra.mxu0 %v61
  %3406 = vmatprep.subr.mxu0 %v66
  %3407 = vmatpush1.msra.mxu0 %v65
  %3408 = vmatprep.subr.mxu0 %v70
  %3409 = vmatpush1.msra.mxu0 %v69
  %3410 = vmatprep.subr.mxu0 %v74
  %3411 = vmatpush1.msra.mxu0 %v73
  %3412 = vmatprep.subr.mxu0 %v78
  %3413 = vmatpush1.msra.mxu0 %v77
  %3414 = vmatprep.subr.mxu0 %v82
  %3415 = vmatpush1.msra.mxu0 %v81
  %3416 = vmatprep.subr.mxu0 %v86
  %3417 = vmatpush1.msra.mxu0 %v85
  %3418 = vmatprep.subr.mxu0 0.0
  %3419 = vmatpush1.msra.mxu0 0.0
  %3420 = vmatprep.subr.mxu0 0.0
  %3421 = vmatpush1.msra.mxu0 0.0
  %3422 = vmatprep.subr.mxu0 0.0
  %3423 = vmatpush1.msra.mxu0 0.0
  %3424 = vmatprep.subr.mxu0 0.0
  %3425 = vmatpush1.msra.mxu0 0.0
  %3426 = vmatprep.subr.mxu0 0.0
  %3427 = vmatpush1.msra.mxu0 0.0
  %3428 = vmatprep.subr.mxu0 0.0
  %3429 = vmatpush1.msra.mxu0 0.0
  %3430 = vmatprep.subr.mxu0 0.0
  %3431 = vmatpush1.msra.mxu0 0.0
  %3432 = vmatprep.subr.mxu0 0.0
  %3433 = vmatpush1.msra.mxu0 0.0
  %3434 = vmatprep.subr.mxu0 0.0
  %3435 = vmatpush1.msra.mxu0 0.0
  %3436 = vmatprep.subr.mxu0 0.0
  %3437 = vmatpush1.msra.mxu0 0.0
  %3438 = vmatprep.subr.mxu0 0.0
  %3439 = vmatpush1.msra.mxu0 0.0
  %3440 = vmatprep.subr.mxu0 0.0
  %3441 = vmatpush1.msra.mxu0 0.0
  %3442 = vmatprep.subr.mxu0 0.0
  %3443 = vmatpush1.msra.mxu0 0.0
  %3444 = vmatprep.subr.mxu0 0.0
  %3445 = vmatpush1.msra.mxu0 0.0
  %3446 = vmatprep.subr.mxu0 0.0
  %3447 = vmatpush1.msra.mxu0 0.0
  %3448 = vmatprep.subr.mxu0 0.0
  %3449 = vmatpush1.msra.mxu0 0.0
  %3450 = vmatprep.mubr.f32.mxu0 0.0
  %3451 = vmatmul.mubr.f32.gmra.mrb[0].mxu0 %v3375
  %v3452 = vpop.f32.mrb[0].mxu0
  %v3453 = vadd.f32 0.0, %v3452
  %v3454 = vpop.f32.mrb[0].mxu0
  %v3455 = vadd.f32 0.0, %v3454
  %3456 = vmatprep.mubr.f32.mxu0 0.0
  %3457 = vmatmul.mubr.f32.gmra.mrb[0].mxu0 %v3376
  %v3458 = vpop.f32.mrb[0].mxu0
  %v3459 = vadd.f32 0.0, %v3458
  %v3460 = vpop.f32.mrb[0].mxu0
  %v3461 = vadd.f32 0.0, %v3460
  %3462 = vdwg.mxu0
  %3463 = vmatprep.subr.mxu0 %v28
  %3464 = vmatpush1.msra.mxu0 %v27
  %3465 = vmatprep.subr.mxu0 %v32
  %3466 = vmatpush1.msra.mxu0 %v31
  %3467 = vmatprep.subr.mxu0 %v36
  %3468 = vmatpush1.msra.mxu0 %v35
  %3469 = vmatprep.subr.mxu0 %v40
  %3470 = vmatpush1.msra.mxu0 %v39
  %3471 = vmatprep.subr.mxu0 %v44
  %3472 = vmatpush1.msra.mxu0 %v43
  %3473 = vmatprep.subr.mxu0 %v48
  %3474 = vmatpush1.msra.mxu0 %v47
  %3475 = vmatprep.subr.mxu0 %v52
  %3476 = vmatpush1.msra.mxu0 %v51
  %3477 = vmatprep.subr.mxu0 %v56
  %3478 = vmatpush1.msra.mxu0 %v55
  %3479 = vmatprep.subr.mxu0 %v60
  %3480 = vmatpush1.msra.mxu0 %v59
  %3481 = vmatprep.subr.mxu0 %v64
  %3482 = vmatpush1.msra.mxu0 %v63
  %3483 = vmatprep.subr.mxu0 %v68
  %3484 = vmatpush1.msra.mxu0 %v67
  %3485 = vmatprep.subr.mxu0 %v72
  %3486 = vmatpush1.msra.mxu0 %v71
  %3487 = vmatprep.subr.mxu0 %v76
  %3488 = vmatpush1.msra.mxu0 %v75
  %3489 = vmatprep.subr.mxu0 %v80
  %3490 = vmatpush1.msra.mxu0 %v79
  %3491 = vmatprep.subr.mxu0 %v84
  %3492 = vmatpush1.msra.mxu0 %v83
  %3493 = vmatprep.subr.mxu0 %v88
  %3494 = vmatpush1.msra.mxu0 %v87
  %3495 = vmatprep.subr.mxu0 0.0
  %3496 = vmatpush1.msra.mxu0 0.0
  %3497 = vmatprep.subr.mxu0 0.0
  %3498 = vmatpush1.msra.mxu0 0.0
  %3499 = vmatprep.subr.mxu0 0.0
  %3500 = vmatpush1.msra.mxu0 0.0
  %3501 = vmatprep.subr.mxu0 0.0
  %3502 = vmatpush1.msra.mxu0 0.0
  %3503 = vmatprep.subr.mxu0 0.0
  %3504 = vmatpush1.msra.mxu0 0.0
  %3505 = vmatprep.subr.mxu0 0.0
  %3506 = vmatpush1.msra.mxu0 0.0
  %3507 = vmatprep.subr.mxu0 0.0
  %3508 = vmatpush1.msra.mxu0 0.0
  %3509 = vmatprep.subr.mxu0 0.0
  %3510 = vmatpush1.msra.mxu0 0.0
  %3511 = vmatprep.subr.mxu0 0.0
  %3512 = vmatpush1.msra.mxu0 0.0
  %3513 = vmatprep.subr.mxu0 0.0
  %3514 = vmatpush1.msra.mxu0 0.0
  %3515 = vmatprep.subr.mxu0 0.0
  %3516 = vmatpush1.msra.mxu0 0.0
  %3517 = vmatprep.subr.mxu0 0.0
  %3518 = vmatpush1.msra.mxu0 0.0
  %3519 = vmatprep.subr.mxu0 0.0
  %3520 = vmatpush1.msra.mxu0 0.0
  %3521 = vmatprep.subr.mxu0 0.0
  %3522 = vmatpush1.msra.mxu0 0.0
  %3523 = vmatprep.subr.mxu0 0.0
  %3524 = vmatpush1.msra.mxu0 0.0
  %3525 = vmatprep.subr.mxu0 0.0
  %3526 = vmatpush1.msra.mxu0 0.0
  %3527 = vmatprep.mubr.f32.mxu0 0.0
  %3528 = vmatmul.mubr.f32.gmra.mrb[0].mxu0 %v3375
  %v3529 = vpop.f32.mrb[0].mxu0
  %v3530 = vadd.f32 0.0, %v3529
  %v3531 = vpop.f32.mrb[0].mxu0
  %v3532 = vadd.f32 0.0, %v3531
  %3533 = vmatprep.mubr.f32.mxu0 0.0
  %3534 = vmatmul.mubr.f32.gmra.mrb[0].mxu0 %v3376
  %v3535 = vpop.f32.mrb[0].mxu0
  %v3536 = vadd.f32 0.0, %v3535
  %v3537 = vpop.f32.mrb[0].mxu0
  %v3538 = vadd.f32 0.0, %v3537
  %3539 = vdwg.mxu0
  %v3540 = vadd.f32 %v3378, %v3453
  %v3541 = vadd.f32 %v3379, %v3455
  %v3542 = vadd.f32 %v3380, %v3530
  %v3543 = vadd.f32 %v3381, %v3532
  %v3544 = vadd.f32 %v3382, %v3459
  %v3545 = vadd.f32 %v3383, %v3461
  %v3546 = vadd.f32 %v3384, %v3536
  %v3547 = vadd.f32 %v3385, %v3538
  %v3548 = vxor.u32 %v3540, 2147483648
  %v3549 = vxor.u32 %v3541, 2147483648
  %v3550 = vxor.u32 %v3544, 2147483648
  %v3551 = vxor.u32 %v3545, 2147483648
  %v3552 = vmul.f32 %v3548, 1.442695
  %v3553 = vpow.pop %v3552
  %v3554 = vmul.f32 %v3549, 1.442695
  %v3555 = vpow.pop %v3554
  %v3556 = vmul.f32 %v3550, 1.442695
  %v3557 = vpow.pop %v3556
  %v3558 = vmul.f32 %v3551, 1.442695
  %v3559 = vpow.pop %v3558
  %v3560 = vadd.f32 %v3553, 1.0
  %v3561 = vadd.f32 %v3555, 1.0
  %v3562 = vadd.f32 %v3557, 1.0
  %v3563 = vadd.f32 %v3559, 1.0
  %v3564 = vrcp.pop %v3560
  %v3565 = vmul.f32 1.0, %v3564
  %v3566 = vrcp.pop %v3561
  %v3567 = vmul.f32 1.0, %v3566
  %v3568 = vrcp.pop %v3562
  %v3569 = vmul.f32 1.0, %v3568
  %v3570 = vrcp.pop %v3563
  %v3571 = vmul.f32 1.0, %v3570
  %v3572 = vtanh.pop %v3542
  %v3573 = vtanh.pop %v3546
  %v3574 = vxor.u32 %v3543, 2147483648
  %v3575 = vxor.u32 %v3547, 2147483648
  %v3576 = vmul.f32 %v3574, 1.442695
  %v3577 = vpow.pop %v3576
  %v3578 = vmul.f32 %v3575, 1.442695
  %v3579 = vpow.pop %v3578
  %v3580 = vadd.f32 %v3577, 1.0
  %v3581 = vadd.f32 %v3579, 1.0
  %v3582 = vrcp.pop %v3580
  %v3583 = vmul.f32 1.0, %v3582
  %v3584 = vrcp.pop %v3581
  %v3585 = vmul.f32 1.0, %v3584
  %v3586 = vmul.f32 %v3567, %v3371
  %v3587 = vmul.f32 %v3571, %v3372
  %v3588 = vmul.f32 %v3565, %v3572
  %v3589 = vmul.f32 %v3569, %v3573
  %v3590 = vadd.f32 %v3586, %v3588
  %v3591 = vadd.f32 %v3587, %v3589
  %v3592 = vtanh.pop %v3590
  %v3593 = vtanh.pop %v3591
  %v3594 = vmul.f32 %v3583, %v3592
  %v3595 = vmul.f32 %v3585, %v3593
  %s3596 = scalar_lea.vmem %s0, 1024
  %v3597 = vld [vmem:[%s3596] sm:$0xff]
  %v3598 = vld [vmem:[%s3596 + $0x8] sm:$0xff]
  %v3599 = vld [vmem:[%s3596 + $0x10] sm:$0xff]
  %v3600 = vld [vmem:[%s3596 + $0x18] sm:$0xff]
  %v3601 = vld [vmem:[%s3596 + $0x20] sm:$0xff]
  %v3602 = vld [vmem:[%s3596 + $0x28] sm:$0xff]
  %v3603 = vld [vmem:[%s3596 + $0x30] sm:$0xff]
  %v3604 = vld [vmem:[%s3596 + $0x38] sm:$0xff]
  %3605 = vmatprep.subr.mxu0 %v26
  %3606 = vmatpush1.msra.mxu0 %v25
  %3607 = vmatprep.subr.mxu0 %v30
  %3608 = vmatpush1.msra.mxu0 %v29
  %3609 = vmatprep.subr.mxu0 %v34
  %3610 = vmatpush1.msra.mxu0 %v33
  %3611 = vmatprep.subr.mxu0 %v38
  %3612 = vmatpush1.msra.mxu0 %v37
  %3613 = vmatprep.subr.mxu0 %v42
  %3614 = vmatpush1.msra.mxu0 %v41
  %3615 = vmatprep.subr.mxu0 %v46
  %3616 = vmatpush1.msra.mxu0 %v45
  %3617 = vmatprep.subr.mxu0 %v50
  %3618 = vmatpush1.msra.mxu0 %v49
  %3619 = vmatprep.subr.mxu0 %v54
  %3620 = vmatpush1.msra.mxu0 %v53
  %3621 = vmatprep.subr.mxu0 %v58
  %3622 = vmatpush1.msra.mxu0 %v57
  %3623 = vmatprep.subr.mxu0 %v62
  %3624 = vmatpush1.msra.mxu0 %v61
  %3625 = vmatprep.subr.mxu0 %v66
  %3626 = vmatpush1.msra.mxu0 %v65
  %3627 = vmatprep.subr.mxu0 %v70
  %3628 = vmatpush1.msra.mxu0 %v69
  %3629 = vmatprep.subr.mxu0 %v74
  %3630 = vmatpush1.msra.mxu0 %v73
  %3631 = vmatprep.subr.mxu0 %v78
  %3632 = vmatpush1.msra.mxu0 %v77
  %3633 = vmatprep.subr.mxu0 %v82
  %3634 = vmatpush1.msra.mxu0 %v81
  %3635 = vmatprep.subr.mxu0 %v86
  %3636 = vmatpush1.msra.mxu0 %v85
  %3637 = vmatprep.subr.mxu0 0.0
  %3638 = vmatpush1.msra.mxu0 0.0
  %3639 = vmatprep.subr.mxu0 0.0
  %3640 = vmatpush1.msra.mxu0 0.0
  %3641 = vmatprep.subr.mxu0 0.0
  %3642 = vmatpush1.msra.mxu0 0.0
  %3643 = vmatprep.subr.mxu0 0.0
  %3644 = vmatpush1.msra.mxu0 0.0
  %3645 = vmatprep.subr.mxu0 0.0
  %3646 = vmatpush1.msra.mxu0 0.0
  %3647 = vmatprep.subr.mxu0 0.0
  %3648 = vmatpush1.msra.mxu0 0.0
  %3649 = vmatprep.subr.mxu0 0.0
  %3650 = vmatpush1.msra.mxu0 0.0
  %3651 = vmatprep.subr.mxu0 0.0
  %3652 = vmatpush1.msra.mxu0 0.0
  %3653 = vmatprep.subr.mxu0 0.0
  %3654 = vmatpush1.msra.mxu0 0.0
  %3655 = vmatprep.subr.mxu0 0.0
  %3656 = vmatpush1.msra.mxu0 0.0
  %3657 = vmatprep.subr.mxu0 0.0
  %3658 = vmatpush1.msra.mxu0 0.0
  %3659 = vmatprep.subr.mxu0 0.0
  %3660 = vmatpush1.msra.mxu0 0.0
  %3661 = vmatprep.subr.mxu0 0.0
  %3662 = vmatpush1.msra.mxu0 0.0
  %3663 = vmatprep.subr.mxu0 0.0
  %3664 = vmatpush1.msra.mxu0 0.0
  %3665 = vmatprep.subr.mxu0 0.0
  %3666 = vmatpush1.msra.mxu0 0.0
  %3667 = vmatprep.subr.mxu0 0.0
  %3668 = vmatpush1.msra.mxu0 0.0
  %3669 = vmatprep.mubr.f32.mxu0 0.0
  %3670 = vmatmul.mubr.f32.gmra.mrb[0].mxu0 %v3594
  %v3671 = vpop.f32.mrb[0].mxu0
  %v3672 = vadd.f32 0.0, %v3671
  %v3673 = vpop.f32.mrb[0].mxu0
  %v3674 = vadd.f32 0.0, %v3673
  %3675 = vmatprep.mubr.f32.mxu0 0.0
  %3676 = vmatmul.mubr.f32.gmra.mrb[0].mxu0 %v3595
  %v3677 = vpop.f32.mrb[0].mxu0
  %v3678 = vadd.f32 0.0, %v3677
  %v3679 = vpop.f32.mrb[0].mxu0
  %v3680 = vadd.f32 0.0, %v3679
  %3681 = vdwg.mxu0
  %3682 = vmatprep.subr.mxu0 %v28
  %3683 = vmatpush1.msra.mxu0 %v27
  %3684 = vmatprep.subr.mxu0 %v32
  %3685 = vmatpush1.msra.mxu0 %v31
  %3686 = vmatprep.subr.mxu0 %v36
  %3687 = vmatpush1.msra.mxu0 %v35
  %3688 = vmatprep.subr.mxu0 %v40
  %3689 = vmatpush1.msra.mxu0 %v39
  %3690 = vmatprep.subr.mxu0 %v44
  %3691 = vmatpush1.msra.mxu0 %v43
  %3692 = vmatprep.subr.mxu0 %v48
  %3693 = vmatpush1.msra.mxu0 %v47
  %3694 = vmatprep.subr.mxu0 %v52
  %3695 = vmatpush1.msra.mxu0 %v51
  %3696 = vmatprep.subr.mxu0 %v56
  %3697 = vmatpush1.msra.mxu0 %v55
  %3698 = vmatprep.subr.mxu0 %v60
  %3699 = vmatpush1.msra.mxu0 %v59
  %3700 = vmatprep.subr.mxu0 %v64
  %3701 = vmatpush1.msra.mxu0 %v63
  %3702 = vmatprep.subr.mxu0 %v68
  %3703 = vmatpush1.msra.mxu0 %v67
  %3704 = vmatprep.subr.mxu0 %v72
  %3705 = vmatpush1.msra.mxu0 %v71
  %3706 = vmatprep.subr.mxu0 %v76
  %3707 = vmatpush1.msra.mxu0 %v75
  %3708 = vmatprep.subr.mxu0 %v80
  %3709 = vmatpush1.msra.mxu0 %v79
  %3710 = vmatprep.subr.mxu0 %v84
  %3711 = vmatpush1.msra.mxu0 %v83
  %3712 = vmatprep.subr.mxu0 %v88
  %3713 = vmatpush1.msra.mxu0 %v87
  %3714 = vmatprep.subr.mxu0 0.0
  %3715 = vmatpush1.msra.mxu0 0.0
  %3716 = vmatprep.subr.mxu0 0.0
  %3717 = vmatpush1.msra.mxu0 0.0
  %3718 = vmatprep.subr.mxu0 0.0
  %3719 = vmatpush1.msra.mxu0 0.0
  %3720 = vmatprep.subr.mxu0 0.0
  %3721 = vmatpush1.msra.mxu0 0.0
  %3722 = vmatprep.subr.mxu0 0.0
  %3723 = vmatpush1.msra.mxu0 0.0
  %3724 = vmatprep.subr.mxu0 0.0
  %3725 = vmatpush1.msra.mxu0 0.0
  %3726 = vmatprep.subr.mxu0 0.0
  %3727 = vmatpush1.msra.mxu0 0.0
  %3728 = vmatprep.subr.mxu0 0.0
  %3729 = vmatpush1.msra.mxu0 0.0
  %3730 = vmatprep.subr.mxu0 0.0
  %3731 = vmatpush1.msra.mxu0 0.0
  %3732 = vmatprep.subr.mxu0 0.0
  %3733 = vmatpush1.msra.mxu0 0.0
  %3734 = vmatprep.subr.mxu0 0.0
  %3735 = vmatpush1.msra.mxu0 0.0
  %3736 = vmatprep.subr.mxu0 0.0
  %3737 = vmatpush1.msra.mxu0 0.0
  %3738 = vmatprep.subr.mxu0 0.0
  %3739 = vmatpush1.msra.mxu0 0.0
  %3740 = vmatprep.subr.mxu0 0.0
  %3741 = vmatpush1.msra.mxu0 0.0
  %3742 = vmatprep.subr.mxu0 0.0
  %3743 = vmatpush1.msra.mxu0 0.0
  %3744 = vmatprep.subr.mxu0 0.0
  %3745 = vmatpush1.msra.mxu0 0.0
  %3746 = vmatprep.mubr.f32.mxu0 0.0
  %3747 = vmatmul.mubr.f32.gmra.mrb[0].mxu0 %v3594
  %v3748 = vpop.f32.mrb[0].mxu0
  %v3749 = vadd.f32 0.0, %v3748
  %v3750 = vpop.f32.mrb[0].mxu0
  %v3751 = vadd.f32 0.0, %v3750
  %3752 = vmatprep.mubr.f32.mxu0 0.0
  %3753 = vmatmul.mubr.f32.gmra.mrb[0].mxu0 %v3595
  %v3754 = vpop.f32.mrb[0].mxu0
  %v3755 = vadd.f32 0.0, %v3754
  %v3756 = vpop.f32.mrb[0].mxu0
  %v3757 = vadd.f32 0.0, %v3756
  %3758 = vdwg.mxu0
  %v3759 = vadd.f32 %v3597, %v3672
  %v3760 = vadd.f32 %v3598, %v3674
  %v3761 = vadd.f32 %v3599, %v3749
  %v3762 = vadd.f32 %v3600, %v3751
  %v3763 = vadd.f32 %v3601, %v3678
  %v3764 = vadd.f32 %v3602, %v3680
  %v3765 = vadd.f32 %v3603, %v3755
  %v3766 = vadd.f32 %v3604, %v3757
  %v3767 = vxor.u32 %v3759, 2147483648
  %v3768 = vxor.u32 %v3760, 2147483648
  %v3769 = vxor.u32 %v3763, 2147483648
  %v3770 = vxor.u32 %v3764, 2147483648
  %v3771 = vmul.f32 %v3767, 1.442695
  %v3772 = vpow.pop %v3771
  %v3773 = vmul.f32 %v3768, 1.442695
  %v3774 = vpow.pop %v3773
  %v3775 = vmul.f32 %v3769, 1.442695
  %v3776 = vpow.pop %v3775
  %v3777 = vmul.f32 %v3770, 1.442695
  %v3778 = vpow.pop %v3777
  %v3779 = vadd.f32 %v3772, 1.0
  %v3780 = vadd.f32 %v3774, 1.0
  %v3781 = vadd.f32 %v3776, 1.0
  %v3782 = vadd.f32 %v3778, 1.0
  %v3783 = vrcp.pop %v3779
  %v3784 = vmul.f32 1.0, %v3783
  %v3785 = vrcp.pop %v3780
  %v3786 = vmul.f32 1.0, %v3785
  %v3787 = vrcp.pop %v3781
  %v3788 = vmul.f32 1.0, %v3787
  %v3789 = vrcp.pop %v3782
  %v3790 = vmul.f32 1.0, %v3789
  %v3791 = vtanh.pop %v3761
  %v3792 = vtanh.pop %v3765
  %v3793 = vxor.u32 %v3762, 2147483648
  %v3794 = vxor.u32 %v3766, 2147483648
  %v3795 = vmul.f32 %v3793, 1.442695
  %v3796 = vpow.pop %v3795
  %v3797 = vmul.f32 %v3794, 1.442695
  %v3798 = vpow.pop %v3797
  %v3799 = vadd.f32 %v3796, 1.0
  %v3800 = vadd.f32 %v3798, 1.0
  %v3801 = vrcp.pop %v3799
  %v3802 = vmul.f32 1.0, %v3801
  %v3803 = vrcp.pop %v3800
  %v3804 = vmul.f32 1.0, %v3803
  %v3805 = vmul.f32 %v3786, %v3590
  %v3806 = vmul.f32 %v3790, %v3591
  %v3807 = vmul.f32 %v3784, %v3791
  %v3808 = vmul.f32 %v3788, %v3792
  %v3809 = vadd.f32 %v3805, %v3807
  %v3810 = vadd.f32 %v3806, %v3808
  %v3811 = vtanh.pop %v3809
  %v3812 = vtanh.pop %v3810
  %v3813 = vmul.f32 %v3802, %v3811
  %v3814 = vmul.f32 %v3804, %v3812
  %s3815 = scalar_lea.vmem %s0, 1088
  %v3816 = vld [vmem:[%s3815] sm:$0xff]
  %v3817 = vld [vmem:[%s3815 + $0x8] sm:$0xff]
  %v3818 = vld [vmem:[%s3815 + $0x10] sm:$0xff]
  %v3819 = vld [vmem:[%s3815 + $0x18] sm:$0xff]
  %v3820 = vld [vmem:[%s3815 + $0x20] sm:$0xff]
  %v3821 = vld [vmem:[%s3815 + $0x28] sm:$0xff]
  %v3822 = vld [vmem:[%s3815 + $0x30] sm:$0xff]
  %v3823 = vld [vmem:[%s3815 + $0x38] sm:$0xff]
  %3824 = vmatprep.subr.mxu0 %v26
  %3825 = vmatpush1.msra.mxu0 %v25
  %3826 = vmatprep.subr.mxu0 %v30
  %3827 = vmatpush1.msra.mxu0 %v29
  %3828 = vmatprep.subr.mxu0 %v34
  %3829 = vmatpush1.msra.mxu0 %v33
  %3830 = vmatprep.subr.mxu0 %v38
  %3831 = vmatpush1.msra.mxu0 %v37
  %3832 = vmatprep.subr.mxu0 %v42
  %3833 = vmatpush1.msra.mxu0 %v41
  %3834 = vmatprep.subr.mxu0 %v46
  %3835 = vmatpush1.msra.mxu0 %v45
  %3836 = vmatprep.subr.mxu0 %v50
  %3837 = vmatpush1.msra.mxu0 %v49
  %3838 = vmatprep.subr.mxu0 %v54
  %3839 = vmatpush1.msra.mxu0 %v53
  %3840 = vmatprep.subr.mxu0 %v58
  %3841 = vmatpush1.msra.mxu0 %v57
  %3842 = vmatprep.subr.mxu0 %v62
  %3843 = vmatpush1.msra.mxu0 %v61
  %3844 = vmatprep.subr.mxu0 %v66
  %3845 = vmatpush1.msra.mxu0 %v65
  %3846 = vmatprep.subr.mxu0 %v70
  %3847 = vmatpush1.msra.mxu0 %v69
  %3848 = vmatprep.subr.mxu0 %v74
  %3849 = vmatpush1.msra.mxu0 %v73
  %3850 = vmatprep.subr.mxu0 %v78
  %3851 = vmatpush1.msra.mxu0 %v77
  %3852 = vmatprep.subr.mxu0 %v82
  %3853 = vmatpush1.msra.mxu0 %v81
  %3854 = vmatprep.subr.mxu0 %v86
  %3855 = vmatpush1.msra.mxu0 %v85
  %3856 = vmatprep.subr.mxu0 0.0
  %3857 = vmatpush1.msra.mxu0 0.0
  %3858 = vmatprep.subr.mxu0 0.0
  %3859 = vmatpush1.msra.mxu0 0.0
  %3860 = vmatprep.subr.mxu0 0.0
  %3861 = vmatpush1.msra.mxu0 0.0
  %3862 = vmatprep.subr.mxu0 0.0
  %3863 = vmatpush1.msra.mxu0 0.0
  %3864 = vmatprep.subr.mxu0 0.0
  %3865 = vmatpush1.msra.mxu0 0.0
  %3866 = vmatprep.subr.mxu0 0.0
  %3867 = vmatpush1.msra.mxu0 0.0
  %3868 = vmatprep.subr.mxu0 0.0
  %3869 = vmatpush1.msra.mxu0 0.0
  %3870 = vmatprep.subr.mxu0 0.0
  %3871 = vmatpush1.msra.mxu0 0.0
  %3872 = vmatprep.subr.mxu0 0.0
  %3873 = vmatpush1.msra.mxu0 0.0
  %3874 = vmatprep.subr.mxu0 0.0
  %3875 = vmatpush1.msra.mxu0 0.0
  %3876 = vmatprep.subr.mxu0 0.0
  %3877 = vmatpush1.msra.mxu0 0.0
  %3878 = vmatprep.subr.mxu0 0.0
  %3879 = vmatpush1.msra.mxu0 0.0
  %3880 = vmatprep.subr.mxu0 0.0
  %3881 = vmatpush1.msra.mxu0 0.0
  %3882 = vmatprep.subr.mxu0 0.0
  %3883 = vmatpush1.msra.mxu0 0.0
  %3884 = vmatprep.subr.mxu0 0.0
  %3885 = vmatpush1.msra.mxu0 0.0
  %3886 = vmatprep.subr.mxu0 0.0
  %3887 = vmatpush1.msra.mxu0 0.0
  %3888 = vmatprep.mubr.f32.mxu0 0.0
  %3889 = vmatmul.mubr.f32.gmra.mrb[0].mxu0 %v3813
  %v3890 = vpop.f32.mrb[0].mxu0
  %v3891 = vadd.f32 0.0, %v3890
  %v3892 = vpop.f32.mrb[0].mxu0
  %v3893 = vadd.f32 0.0, %v3892
  %3894 = vmatprep.mubr.f32.mxu0 0.0
  %3895 = vmatmul.mubr.f32.gmra.mrb[0].mxu0 %v3814
  %v3896 = vpop.f32.mrb[0].mxu0
  %v3897 = vadd.f32 0.0, %v3896
  %v3898 = vpop.f32.mrb[0].mxu0
  %v3899 = vadd.f32 0.0, %v3898
  %3900 = vdwg.mxu0
  %3901 = vmatprep.subr.mxu0 %v28
  %3902 = vmatpush1.msra.mxu0 %v27
  %3903 = vmatprep.subr.mxu0 %v32
  %3904 = vmatpush1.msra.mxu0 %v31
  %3905 = vmatprep.subr.mxu0 %v36
  %3906 = vmatpush1.msra.mxu0 %v35
  %3907 = vmatprep.subr.mxu0 %v40
  %3908 = vmatpush1.msra.mxu0 %v39
  %3909 = vmatprep.subr.mxu0 %v44
  %3910 = vmatpush1.msra.mxu0 %v43
  %3911 = vmatprep.subr.mxu0 %v48
  %3912 = vmatpush1.msra.mxu0 %v47
  %3913 = vmatprep.subr.mxu0 %v52
  %3914 = vmatpush1.msra.mxu0 %v51
  %3915 = vmatprep.subr.mxu0 %v56
  %3916 = vmatpush1.msra.mxu0 %v55
  %3917 = vmatprep.subr.mxu0 %v60
  %3918 = vmatpush1.msra.mxu0 %v59
  %3919 = vmatprep.subr.mxu0 %v64
  %3920 = vmatpush1.msra.mxu0 %v63
  %3921 = vmatprep.subr.mxu0 %v68
  %3922 = vmatpush1.msra.mxu0 %v67
  %3923 = vmatprep.subr.mxu0 %v72
  %3924 = vmatpush1.msra.mxu0 %v71
  %3925 = vmatprep.subr.mxu0 %v76
  %3926 = vmatpush1.msra.mxu0 %v75
  %3927 = vmatprep.subr.mxu0 %v80
  %3928 = vmatpush1.msra.mxu0 %v79
  %3929 = vmatprep.subr.mxu0 %v84
  %3930 = vmatpush1.msra.mxu0 %v83
  %3931 = vmatprep.subr.mxu0 %v88
  %3932 = vmatpush1.msra.mxu0 %v87
  %3933 = vmatprep.subr.mxu0 0.0
  %3934 = vmatpush1.msra.mxu0 0.0
  %3935 = vmatprep.subr.mxu0 0.0
  %3936 = vmatpush1.msra.mxu0 0.0
  %3937 = vmatprep.subr.mxu0 0.0
  %3938 = vmatpush1.msra.mxu0 0.0
  %3939 = vmatprep.subr.mxu0 0.0
  %3940 = vmatpush1.msra.mxu0 0.0
  %3941 = vmatprep.subr.mxu0 0.0
  %3942 = vmatpush1.msra.mxu0 0.0
  %3943 = vmatprep.subr.mxu0 0.0
  %3944 = vmatpush1.msra.mxu0 0.0
  %3945 = vmatprep.subr.mxu0 0.0
  %3946 = vmatpush1.msra.mxu0 0.0
  %3947 = vmatprep.subr.mxu0 0.0
  %3948 = vmatpush1.msra.mxu0 0.0
  %3949 = vmatprep.subr.mxu0 0.0
  %3950 = vmatpush1.msra.mxu0 0.0
  %3951 = vmatprep.subr.mxu0 0.0
  %3952 = vmatpush1.msra.mxu0 0.0
  %3953 = vmatprep.subr.mxu0 0.0
  %3954 = vmatpush1.msra.mxu0 0.0
  %3955 = vmatprep.subr.mxu0 0.0
  %3956 = vmatpush1.msra.mxu0 0.0
  %3957 = vmatprep.subr.mxu0 0.0
  %3958 = vmatpush1.msra.mxu0 0.0
  %3959 = vmatprep.subr.mxu0 0.0
  %3960 = vmatpush1.msra.mxu0 0.0
  %3961 = vmatprep.subr.mxu0 0.0
  %3962 = vmatpush1.msra.mxu0 0.0
  %3963 = vmatprep.subr.mxu0 0.0
  %3964 = vmatpush1.msra.mxu0 0.0
  %3965 = vmatprep.mubr.f32.mxu0 0.0
  %3966 = vmatmul.mubr.f32.gmra.mrb[0].mxu0 %v3813
  %v3967 = vpop.f32.mrb[0].mxu0
  %v3968 = vadd.f32 0.0, %v3967
  %v3969 = vpop.f32.mrb[0].mxu0
  %v3970 = vadd.f32 0.0, %v3969
  %3971 = vmatprep.mubr.f32.mxu0 0.0
  %3972 = vmatmul.mubr.f32.gmra.mrb[0].mxu0 %v3814
  %v3973 = vpop.f32.mrb[0].mxu0
  %v3974 = vadd.f32 0.0, %v3973
  %v3975 = vpop.f32.mrb[0].mxu0
  %v3976 = vadd.f32 0.0, %v3975
  %3977 = vdwg.mxu0
  %v3978 = vadd.f32 %v3816, %v3891
  %v3979 = vadd.f32 %v3817, %v3893
  %v3980 = vadd.f32 %v3818, %v3968
  %v3981 = vadd.f32 %v3819, %v3970
  %v3982 = vadd.f32 %v3820, %v3897
  %v3983 = vadd.f32 %v3821, %v3899
  %v3984 = vadd.f32 %v3822, %v3974
  %v3985 = vadd.f32 %v3823, %v3976
  %v3986 = vxor.u32 %v3978, 2147483648
  %v3987 = vxor.u32 %v3979, 2147483648
  %v3988 = vxor.u32 %v3982, 2147483648
  %v3989 = vxor.u32 %v3983, 2147483648
  %v3990 = vmul.f32 %v3986, 1.442695
  %v3991 = vpow.pop %v3990
  %v3992 = vmul.f32 %v3987, 1.442695
  %v3993 = vpow.pop %v3992
  %v3994 = vmul.f32 %v3988, 1.442695
  %v3995 = vpow.pop %v3994
  %v3996 = vmul.f32 %v3989, 1.442695
  %v3997 = vpow.pop %v3996
  %v3998 = vadd.f32 %v3991, 1.0
  %v3999 = vadd.f32 %v3993, 1.0
  %v4000 = vadd.f32 %v3995, 1.0
  %v4001 = vadd.f32 %v3997, 1.0
  %v4002 = vrcp.pop %v3998
  %v4003 = vmul.f32 1.0, %v4002
  %v4004 = vrcp.pop %v3999
  %v4005 = vmul.f32 1.0, %v4004
  %v4006 = vrcp.pop %v4000
  %v4007 = vmul.f32 1.0, %v4006
  %v4008 = vrcp.pop %v4001
  %v4009 = vmul.f32 1.0, %v4008
  %v4010 = vtanh.pop %v3980
  %v4011 = vtanh.pop %v3984
  %v4012 = vxor.u32 %v3981, 2147483648
  %v4013 = vxor.u32 %v3985, 2147483648
  %v4014 = vmul.f32 %v4012, 1.442695
  %v4015 = vpow.pop %v4014
  %v4016 = vmul.f32 %v4013, 1.442695
  %v4017 = vpow.pop %v4016
  %v4018 = vadd.f32 %v4015, 1.0
  %v4019 = vadd.f32 %v4017, 1.0
  %v4020 = vrcp.pop %v4018
  %v4021 = vmul.f32 1.0, %v4020
  %v4022 = vrcp.pop %v4019
  %v4023 = vmul.f32 1.0, %v4022
  %v4024 = vmul.f32 %v4005, %v3809
  %v4025 = vmul.f32 %v4009, %v3810
  %v4026 = vmul.f32 %v4003, %v4010
  %v4027 = vmul.f32 %v4007, %v4011
  %v4028 = vadd.f32 %v4024, %v4026
  %v4029 = vadd.f32 %v4025, %v4027
  %v4030 = vtanh.pop %v4028
  %v4031 = vtanh.pop %v4029
  %v4032 = vmul.f32 %v4021, %v4030
  %v4033 = vmul.f32 %v4023, %v4031
  %s4034 = scalar_lea.vmem %s0, 1152
  %v4035 = vld [vmem:[%s4034] sm:$0xff]
  %v4036 = vld [vmem:[%s4034 + $0x8] sm:$0xff]
  %v4037 = vld [vmem:[%s4034 + $0x10] sm:$0xff]
  %v4038 = vld [vmem:[%s4034 + $0x18] sm:$0xff]
  %v4039 = vld [vmem:[%s4034 + $0x20] sm:$0xff]
  %v4040 = vld [vmem:[%s4034 + $0x28] sm:$0xff]
  %v4041 = vld [vmem:[%s4034 + $0x30] sm:$0xff]
  %v4042 = vld [vmem:[%s4034 + $0x38] sm:$0xff]
  %4043 = vmatprep.subr.mxu0 %v26
  %4044 = vmatpush1.msra.mxu0 %v25
  %4045 = vmatprep.subr.mxu0 %v30
  %4046 = vmatpush1.msra.mxu0 %v29
  %4047 = vmatprep.subr.mxu0 %v34
  %4048 = vmatpush1.msra.mxu0 %v33
  %4049 = vmatprep.subr.mxu0 %v38
  %4050 = vmatpush1.msra.mxu0 %v37
  %4051 = vmatprep.subr.mxu0 %v42
  %4052 = vmatpush1.msra.mxu0 %v41
  %4053 = vmatprep.subr.mxu0 %v46
  %4054 = vmatpush1.msra.mxu0 %v45
  %4055 = vmatprep.subr.mxu0 %v50
  %4056 = vmatpush1.msra.mxu0 %v49
  %4057 = vmatprep.subr.mxu0 %v54
  %4058 = vmatpush1.msra.mxu0 %v53
  %4059 = vmatprep.subr.mxu0 %v58
  %4060 = vmatpush1.msra.mxu0 %v57
  %4061 = vmatprep.subr.mxu0 %v62
  %4062 = vmatpush1.msra.mxu0 %v61
  %4063 = vmatprep.subr.mxu0 %v66
  %4064 = vmatpush1.msra.mxu0 %v65
  %4065 = vmatprep.subr.mxu0 %v70
  %4066 = vmatpush1.msra.mxu0 %v69
  %4067 = vmatprep.subr.mxu0 %v74
  %4068 = vmatpush1.msra.mxu0 %v73
  %4069 = vmatprep.subr.mxu0 %v78
  %4070 = vmatpush1.msra.mxu0 %v77
  %4071 = vmatprep.subr.mxu0 %v82
  %4072 = vmatpush1.msra.mxu0 %v81
  %4073 = vmatprep.subr.mxu0 %v86
  %4074 = vmatpush1.msra.mxu0 %v85
  %4075 = vmatprep.subr.mxu0 0.0
  %4076 = vmatpush1.msra.mxu0 0.0
  %4077 = vmatprep.subr.mxu0 0.0
  %4078 = vmatpush1.msra.mxu0 0.0
  %4079 = vmatprep.subr.mxu0 0.0
  %4080 = vmatpush1.msra.mxu0 0.0
  %4081 = vmatprep.subr.mxu0 0.0
  %4082 = vmatpush1.msra.mxu0 0.0
  %4083 = vmatprep.subr.mxu0 0.0
  %4084 = vmatpush1.msra.mxu0 0.0
  %4085 = vmatprep.subr.mxu0 0.0
  %4086 = vmatpush1.msra.mxu0 0.0
  %4087 = vmatprep.subr.mxu0 0.0
  %4088 = vmatpush1.msra.mxu0 0.0
  %4089 = vmatprep.subr.mxu0 0.0
  %4090 = vmatpush1.msra.mxu0 0.0
  %4091 = vmatprep.subr.mxu0 0.0
  %4092 = vmatpush1.msra.mxu0 0.0
  %4093 = vmatprep.subr.mxu0 0.0
  %4094 = vmatpush1.msra.mxu0 0.0
  %4095 = vmatprep.subr.mxu0 0.0
  %4096 = vmatpush1.msra.mxu0 0.0
  %4097 = vmatprep.subr.mxu0 0.0
  %4098 = vmatpush1.msra.mxu0 0.0
  %4099 = vmatprep.subr.mxu0 0.0
  %4100 = vmatpush1.msra.mxu0 0.0
  %4101 = vmatprep.subr.mxu0 0.0
  %4102 = vmatpush1.msra.mxu0 0.0
  %4103 = vmatprep.subr.mxu0 0.0
  %4104 = vmatpush1.msra.mxu0 0.0
  %4105 = vmatprep.subr.mxu0 0.0
  %4106 = vmatpush1.msra.mxu0 0.0
  %4107 = vmatprep.mubr.f32.mxu0 0.0
  %4108 = vmatmul.mubr.f32.gmra.mrb[0].mxu0 %v4032
  %v4109 = vpop.f32.mrb[0].mxu0
  %v4110 = vadd.f32 0.0, %v4109
  %v4111 = vpop.f32.mrb[0].mxu0
  %v4112 = vadd.f32 0.0, %v4111
  %4113 = vmatprep.mubr.f32.mxu0 0.0
  %4114 = vmatmul.mubr.f32.gmra.mrb[0].mxu0 %v4033
  %v4115 = vpop.f32.mrb[0].mxu0
  %v4116 = vadd.f32 0.0, %v4115
  %v4117 = vpop.f32.mrb[0].mxu0
  %v4118 = vadd.f32 0.0, %v4117
  %4119 = vdwg.mxu0
  %4120 = vmatprep.subr.mxu0 %v28
  %4121 = vmatpush1.msra.mxu0 %v27
  %4122 = vmatprep.subr.mxu0 %v32
  %4123 = vmatpush1.msra.mxu0 %v31
  %4124 = vmatprep.subr.mxu0 %v36
  %4125 = vmatpush1.msra.mxu0 %v35
  %4126 = vmatprep.subr.mxu0 %v40
  %4127 = vmatpush1.msra.mxu0 %v39
  %4128 = vmatprep.subr.mxu0 %v44
  %4129 = vmatpush1.msra.mxu0 %v43
  %4130 = vmatprep.subr.mxu0 %v48
  %4131 = vmatpush1.msra.mxu0 %v47
  %4132 = vmatprep.subr.mxu0 %v52
  %4133 = vmatpush1.msra.mxu0 %v51
  %4134 = vmatprep.subr.mxu0 %v56
  %4135 = vmatpush1.msra.mxu0 %v55
  %4136 = vmatprep.subr.mxu0 %v60
  %4137 = vmatpush1.msra.mxu0 %v59
  %4138 = vmatprep.subr.mxu0 %v64
  %4139 = vmatpush1.msra.mxu0 %v63
  %4140 = vmatprep.subr.mxu0 %v68
  %4141 = vmatpush1.msra.mxu0 %v67
  %4142 = vmatprep.subr.mxu0 %v72
  %4143 = vmatpush1.msra.mxu0 %v71
  %4144 = vmatprep.subr.mxu0 %v76
  %4145 = vmatpush1.msra.mxu0 %v75
  %4146 = vmatprep.subr.mxu0 %v80
  %4147 = vmatpush1.msra.mxu0 %v79
  %4148 = vmatprep.subr.mxu0 %v84
  %4149 = vmatpush1.msra.mxu0 %v83
  %4150 = vmatprep.subr.mxu0 %v88
  %4151 = vmatpush1.msra.mxu0 %v87
  %4152 = vmatprep.subr.mxu0 0.0
  %4153 = vmatpush1.msra.mxu0 0.0
  %4154 = vmatprep.subr.mxu0 0.0
  %4155 = vmatpush1.msra.mxu0 0.0
  %4156 = vmatprep.subr.mxu0 0.0
  %4157 = vmatpush1.msra.mxu0 0.0
  %4158 = vmatprep.subr.mxu0 0.0
  %4159 = vmatpush1.msra.mxu0 0.0
  %4160 = vmatprep.subr.mxu0 0.0
  %4161 = vmatpush1.msra.mxu0 0.0
  %4162 = vmatprep.subr.mxu0 0.0
  %4163 = vmatpush1.msra.mxu0 0.0
  %4164 = vmatprep.subr.mxu0 0.0
  %4165 = vmatpush1.msra.mxu0 0.0
  %4166 = vmatprep.subr.mxu0 0.0
  %4167 = vmatpush1.msra.mxu0 0.0
  %4168 = vmatprep.subr.mxu0 0.0
  %4169 = vmatpush1.msra.mxu0 0.0
  %4170 = vmatprep.subr.mxu0 0.0
  %4171 = vmatpush1.msra.mxu0 0.0
  %4172 = vmatprep.subr.mxu0 0.0
  %4173 = vmatpush1.msra.mxu0 0.0
  %4174 = vmatprep.subr.mxu0 0.0
  %4175 = vmatpush1.msra.mxu0 0.0
  %4176 = vmatprep.subr.mxu0 0.0
  %4177 = vmatpush1.msra.mxu0 0.0
  %4178 = vmatprep.subr.mxu0 0.0
  %4179 = vmatpush1.msra.mxu0 0.0
  %4180 = vmatprep.subr.mxu0 0.0
  %4181 = vmatpush1.msra.mxu0 0.0
  %4182 = vmatprep.subr.mxu0 0.0
  %4183 = vmatpush1.msra.mxu0 0.0
  %4184 = vmatprep.mubr.f32.mxu0 0.0
  %4185 = vmatmul.mubr.f32.gmra.mrb[0].mxu0 %v4032
  %v4186 = vpop.f32.mrb[0].mxu0
  %v4187 = vadd.f32 0.0, %v4186
  %v4188 = vpop.f32.mrb[0].mxu0
  %v4189 = vadd.f32 0.0, %v4188
  %4190 = vmatprep.mubr.f32.mxu0 0.0
  %4191 = vmatmul.mubr.f32.gmra.mrb[0].mxu0 %v4033
  %v4192 = vpop.f32.mrb[0].mxu0
  %v4193 = vadd.f32 0.0, %v4192
  %v4194 = vpop.f32.mrb[0].mxu0
  %v4195 = vadd.f32 0.0, %v4194
  %4196 = vdwg.mxu0
  %v4197 = vadd.f32 %v4035, %v4110
  %v4198 = vadd.f32 %v4036, %v4112
  %v4199 = vadd.f32 %v4037, %v4187
  %v4200 = vadd.f32 %v4038, %v4189
  %v4201 = vadd.f32 %v4039, %v4116
  %v4202 = vadd.f32 %v4040, %v4118
  %v4203 = vadd.f32 %v4041, %v4193
  %v4204 = vadd.f32 %v4042, %v4195
  %v4205 = vxor.u32 %v4197, 2147483648
  %v4206 = vxor.u32 %v4198, 2147483648
  %v4207 = vxor.u32 %v4201, 2147483648
  %v4208 = vxor.u32 %v4202, 2147483648
  %v4209 = vmul.f32 %v4205, 1.442695
  %v4210 = vpow.pop %v4209
  %v4211 = vmul.f32 %v4206, 1.442695
  %v4212 = vpow.pop %v4211
  %v4213 = vmul.f32 %v4207, 1.442695
  %v4214 = vpow.pop %v4213
  %v4215 = vmul.f32 %v4208, 1.442695
  %v4216 = vpow.pop %v4215
  %v4217 = vadd.f32 %v4210, 1.0
  %v4218 = vadd.f32 %v4212, 1.0
  %v4219 = vadd.f32 %v4214, 1.0
  %v4220 = vadd.f32 %v4216, 1.0
  %v4221 = vrcp.pop %v4217
  %v4222 = vmul.f32 1.0, %v4221
  %v4223 = vrcp.pop %v4218
  %v4224 = vmul.f32 1.0, %v4223
  %v4225 = vrcp.pop %v4219
  %v4226 = vmul.f32 1.0, %v4225
  %v4227 = vrcp.pop %v4220
  %v4228 = vmul.f32 1.0, %v4227
  %v4229 = vtanh.pop %v4199
  %v4230 = vtanh.pop %v4203
  %v4231 = vxor.u32 %v4200, 2147483648
  %v4232 = vxor.u32 %v4204, 2147483648
  %v4233 = vmul.f32 %v4231, 1.442695
  %v4234 = vpow.pop %v4233
  %v4235 = vmul.f32 %v4232, 1.442695
  %v4236 = vpow.pop %v4235
  %v4237 = vadd.f32 %v4234, 1.0
  %v4238 = vadd.f32 %v4236, 1.0
  %v4239 = vrcp.pop %v4237
  %v4240 = vmul.f32 1.0, %v4239
  %v4241 = vrcp.pop %v4238
  %v4242 = vmul.f32 1.0, %v4241
  %v4243 = vmul.f32 %v4224, %v4028
  %v4244 = vmul.f32 %v4228, %v4029
  %v4245 = vmul.f32 %v4222, %v4229
  %v4246 = vmul.f32 %v4226, %v4230
  %v4247 = vadd.f32 %v4243, %v4245
  %v4248 = vadd.f32 %v4244, %v4246
  %v4249 = vtanh.pop %v4247
  %v4250 = vtanh.pop %v4248
  %v4251 = vmul.f32 %v4240, %v4249
  %v4252 = vmul.f32 %v4242, %v4250
  %s4253 = scalar_lea.vmem %s0, 1216
  %v4254 = vld [vmem:[%s4253] sm:$0xff]
  %v4255 = vld [vmem:[%s4253 + $0x8] sm:$0xff]
  %v4256 = vld [vmem:[%s4253 + $0x10] sm:$0xff]
  %v4257 = vld [vmem:[%s4253 + $0x18] sm:$0xff]
  %v4258 = vld [vmem:[%s4253 + $0x20] sm:$0xff]
  %v4259 = vld [vmem:[%s4253 + $0x28] sm:$0xff]
  %v4260 = vld [vmem:[%s4253 + $0x30] sm:$0xff]
  %v4261 = vld [vmem:[%s4253 + $0x38] sm:$0xff]
  %4262 = vmatprep.subr.mxu0 %v26
  %4263 = vmatpush1.msra.mxu0 %v25
  %4264 = vmatprep.subr.mxu0 %v30
  %4265 = vmatpush1.msra.mxu0 %v29
  %4266 = vmatprep.subr.mxu0 %v34
  %4267 = vmatpush1.msra.mxu0 %v33
  %4268 = vmatprep.subr.mxu0 %v38
  %4269 = vmatpush1.msra.mxu0 %v37
  %4270 = vmatprep.subr.mxu0 %v42
  %4271 = vmatpush1.msra.mxu0 %v41
  %4272 = vmatprep.subr.mxu0 %v46
  %4273 = vmatpush1.msra.mxu0 %v45
  %4274 = vmatprep.subr.mxu0 %v50
  %4275 = vmatpush1.msra.mxu0 %v49
  %4276 = vmatprep.subr.mxu0 %v54
  %4277 = vmatpush1.msra.mxu0 %v53
  %4278 = vmatprep.subr.mxu0 %v58
  %4279 = vmatpush1.msra.mxu0 %v57
  %4280 = vmatprep.subr.mxu0 %v62
  %4281 = vmatpush1.msra.mxu0 %v61
  %4282 = vmatprep.subr.mxu0 %v66
  %4283 = vmatpush1.msra.mxu0 %v65
  %4284 = vmatprep.subr.mxu0 %v70
  %4285 = vmatpush1.msra.mxu0 %v69
  %4286 = vmatprep.subr.mxu0 %v74
  %4287 = vmatpush1.msra.mxu0 %v73
  %4288 = vmatprep.subr.mxu0 %v78
  %4289 = vmatpush1.msra.mxu0 %v77
  %4290 = vmatprep.subr.mxu0 %v82
  %4291 = vmatpush1.msra.mxu0 %v81
  %4292 = vmatprep.subr.mxu0 %v86
  %4293 = vmatpush1.msra.mxu0 %v85
  %4294 = vmatprep.subr.mxu0 0.0
  %4295 = vmatpush1.msra.mxu0 0.0
  %4296 = vmatprep.subr.mxu0 0.0
  %4297 = vmatpush1.msra.mxu0 0.0
  %4298 = vmatprep.subr.mxu0 0.0
  %4299 = vmatpush1.msra.mxu0 0.0
  %4300 = vmatprep.subr.mxu0 0.0
  %4301 = vmatpush1.msra.mxu0 0.0
  %4302 = vmatprep.subr.mxu0 0.0
  %4303 = vmatpush1.msra.mxu0 0.0
  %4304 = vmatprep.subr.mxu0 0.0
  %4305 = vmatpush1.msra.mxu0 0.0
  %4306 = vmatprep.subr.mxu0 0.0
  %4307 = vmatpush1.msra.mxu0 0.0
  %4308 = vmatprep.subr.mxu0 0.0
  %4309 = vmatpush1.msra.mxu0 0.0
  %4310 = vmatprep.subr.mxu0 0.0
  %4311 = vmatpush1.msra.mxu0 0.0
  %4312 = vmatprep.subr.mxu0 0.0
  %4313 = vmatpush1.msra.mxu0 0.0
  %4314 = vmatprep.subr.mxu0 0.0
  %4315 = vmatpush1.msra.mxu0 0.0
  %4316 = vmatprep.subr.mxu0 0.0
  %4317 = vmatpush1.msra.mxu0 0.0
  %4318 = vmatprep.subr.mxu0 0.0
  %4319 = vmatpush1.msra.mxu0 0.0
  %4320 = vmatprep.subr.mxu0 0.0
  %4321 = vmatpush1.msra.mxu0 0.0
  %4322 = vmatprep.subr.mxu0 0.0
  %4323 = vmatpush1.msra.mxu0 0.0
  %4324 = vmatprep.subr.mxu0 0.0
  %4325 = vmatpush1.msra.mxu0 0.0
  %4326 = vmatprep.mubr.f32.mxu0 0.0
  %4327 = vmatmul.mubr.f32.gmra.mrb[0].mxu0 %v4251
  %v4328 = vpop.f32.mrb[0].mxu0
  %v4329 = vadd.f32 0.0, %v4328
  %v4330 = vpop.f32.mrb[0].mxu0
  %v4331 = vadd.f32 0.0, %v4330
  %4332 = vmatprep.mubr.f32.mxu0 0.0
  %4333 = vmatmul.mubr.f32.gmra.mrb[0].mxu0 %v4252
  %v4334 = vpop.f32.mrb[0].mxu0
  %v4335 = vadd.f32 0.0, %v4334
  %v4336 = vpop.f32.mrb[0].mxu0
  %v4337 = vadd.f32 0.0, %v4336
  %4338 = vdwg.mxu0
  %4339 = vmatprep.subr.mxu0 %v28
  %4340 = vmatpush1.msra.mxu0 %v27
  %4341 = vmatprep.subr.mxu0 %v32
  %4342 = vmatpush1.msra.mxu0 %v31
  %4343 = vmatprep.subr.mxu0 %v36
  %4344 = vmatpush1.msra.mxu0 %v35
  %4345 = vmatprep.subr.mxu0 %v40
  %4346 = vmatpush1.msra.mxu0 %v39
  %4347 = vmatprep.subr.mxu0 %v44
  %4348 = vmatpush1.msra.mxu0 %v43
  %4349 = vmatprep.subr.mxu0 %v48
  %4350 = vmatpush1.msra.mxu0 %v47
  %4351 = vmatprep.subr.mxu0 %v52
  %4352 = vmatpush1.msra.mxu0 %v51
  %4353 = vmatprep.subr.mxu0 %v56
  %4354 = vmatpush1.msra.mxu0 %v55
  %4355 = vmatprep.subr.mxu0 %v60
  %4356 = vmatpush1.msra.mxu0 %v59
  %4357 = vmatprep.subr.mxu0 %v64
  %4358 = vmatpush1.msra.mxu0 %v63
  %4359 = vmatprep.subr.mxu0 %v68
  %4360 = vmatpush1.msra.mxu0 %v67
  %4361 = vmatprep.subr.mxu0 %v72
  %4362 = vmatpush1.msra.mxu0 %v71
  %4363 = vmatprep.subr.mxu0 %v76
  %4364 = vmatpush1.msra.mxu0 %v75
  %4365 = vmatprep.subr.mxu0 %v80
  %4366 = vmatpush1.msra.mxu0 %v79
  %4367 = vmatprep.subr.mxu0 %v84
  %4368 = vmatpush1.msra.mxu0 %v83
  %4369 = vmatprep.subr.mxu0 %v88
  %4370 = vmatpush1.msra.mxu0 %v87
  %4371 = vmatprep.subr.mxu0 0.0
  %4372 = vmatpush1.msra.mxu0 0.0
  %4373 = vmatprep.subr.mxu0 0.0
  %4374 = vmatpush1.msra.mxu0 0.0
  %4375 = vmatprep.subr.mxu0 0.0
  %4376 = vmatpush1.msra.mxu0 0.0
  %4377 = vmatprep.subr.mxu0 0.0
  %4378 = vmatpush1.msra.mxu0 0.0
  %4379 = vmatprep.subr.mxu0 0.0
  %4380 = vmatpush1.msra.mxu0 0.0
  %4381 = vmatprep.subr.mxu0 0.0
  %4382 = vmatpush1.msra.mxu0 0.0
  %4383 = vmatprep.subr.mxu0 0.0
  %4384 = vmatpush1.msra.mxu0 0.0
  %4385 = vmatprep.subr.mxu0 0.0
  %4386 = vmatpush1.msra.mxu0 0.0
  %4387 = vmatprep.subr.mxu0 0.0
  %4388 = vmatpush1.msra.mxu0 0.0
  %4389 = vmatprep.subr.mxu0 0.0
  %4390 = vmatpush1.msra.mxu0 0.0
  %4391 = vmatprep.subr.mxu0 0.0
  %4392 = vmatpush1.msra.mxu0 0.0
  %4393 = vmatprep.subr.mxu0 0.0
  %4394 = vmatpush1.msra.mxu0 0.0
  %4395 = vmatprep.subr.mxu0 0.0
  %4396 = vmatpush1.msra.mxu0 0.0
  %4397 = vmatprep.subr.mxu0 0.0
  %4398 = vmatpush1.msra.mxu0 0.0
  %4399 = vmatprep.subr.mxu0 0.0
  %4400 = vmatpush1.msra.mxu0 0.0
  %4401 = vmatprep.subr.mxu0 0.0
  %4402 = vmatpush1.msra.mxu0 0.0
  %4403 = vmatprep.mubr.f32.mxu0 0.0
  %4404 = vmatmul.mubr.f32.gmra.mrb[0].mxu0 %v4251
  %v4405 = vpop.f32.mrb[0].mxu0
  %v4406 = vadd.f32 0.0, %v4405
  %v4407 = vpop.f32.mrb[0].mxu0
  %v4408 = vadd.f32 0.0, %v4407
  %4409 = vmatprep.mubr.f32.mxu0 0.0
  %4410 = vmatmul.mubr.f32.gmra.mrb[0].mxu0 %v4252
  %v4411 = vpop.f32.mrb[0].mxu0
  %v4412 = vadd.f32 0.0, %v4411
  %v4413 = vpop.f32.mrb[0].mxu0
  %v4414 = vadd.f32 0.0, %v4413
  %4415 = vdwg.mxu0
  %v4416 = vadd.f32 %v4254, %v4329
  %v4417 = vadd.f32 %v4255, %v4331
  %v4418 = vadd.f32 %v4256, %v4406
  %v4419 = vadd.f32 %v4257, %v4408
  %v4420 = vadd.f32 %v4258, %v4335
  %v4421 = vadd.f32 %v4259, %v4337
  %v4422 = vadd.f32 %v4260, %v4412
  %v4423 = vadd.f32 %v4261, %v4414
  %v4424 = vxor.u32 %v4416, 2147483648
  %v4425 = vxor.u32 %v4417, 2147483648
  %v4426 = vxor.u32 %v4420, 2147483648
  %v4427 = vxor.u32 %v4421, 2147483648
  %v4428 = vmul.f32 %v4424, 1.442695
  %v4429 = vpow.pop %v4428
  %v4430 = vmul.f32 %v4425, 1.442695
  %v4431 = vpow.pop %v4430
  %v4432 = vmul.f32 %v4426, 1.442695
  %v4433 = vpow.pop %v4432
  %v4434 = vmul.f32 %v4427, 1.442695
  %v4435 = vpow.pop %v4434
  %v4436 = vadd.f32 %v4429, 1.0
  %v4437 = vadd.f32 %v4431, 1.0
  %v4438 = vadd.f32 %v4433, 1.0
  %v4439 = vadd.f32 %v4435, 1.0
  %v4440 = vrcp.pop %v4436
  %v4441 = vmul.f32 1.0, %v4440
  %v4442 = vrcp.pop %v4437
  %v4443 = vmul.f32 1.0, %v4442
  %v4444 = vrcp.pop %v4438
  %v4445 = vmul.f32 1.0, %v4444
  %v4446 = vrcp.pop %v4439
  %v4447 = vmul.f32 1.0, %v4446
  %v4448 = vtanh.pop %v4418
  %v4449 = vtanh.pop %v4422
  %v4450 = vxor.u32 %v4419, 2147483648
  %v4451 = vxor.u32 %v4423, 2147483648
  %v4452 = vmul.f32 %v4450, 1.442695
  %v4453 = vpow.pop %v4452
  %v4454 = vmul.f32 %v4451, 1.442695
  %v4455 = vpow.pop %v4454
  %v4456 = vadd.f32 %v4453, 1.0
  %v4457 = vadd.f32 %v4455, 1.0
  %v4458 = vrcp.pop %v4456
  %v4459 = vmul.f32 1.0, %v4458
  %v4460 = vrcp.pop %v4457
  %v4461 = vmul.f32 1.0, %v4460
  %v4462 = vmul.f32 %v4443, %v4247
  %v4463 = vmul.f32 %v4447, %v4248
  %v4464 = vmul.f32 %v4441, %v4448
  %v4465 = vmul.f32 %v4445, %v4449
  %v4466 = vadd.f32 %v4462, %v4464
  %v4467 = vadd.f32 %v4463, %v4465
  %v4468 = vtanh.pop %v4466
  %v4469 = vtanh.pop %v4467
  %v4470 = vmul.f32 %v4459, %v4468
  %v4471 = vmul.f32 %v4461, %v4469
  %s4472 = scalar_lea.vmem %s0, 1280
  %v4473 = vld [vmem:[%s4472] sm:$0xff]
  %v4474 = vld [vmem:[%s4472 + $0x8] sm:$0xff]
  %v4475 = vld [vmem:[%s4472 + $0x10] sm:$0xff]
  %v4476 = vld [vmem:[%s4472 + $0x18] sm:$0xff]
  %v4477 = vld [vmem:[%s4472 + $0x20] sm:$0xff]
  %v4478 = vld [vmem:[%s4472 + $0x28] sm:$0xff]
  %v4479 = vld [vmem:[%s4472 + $0x30] sm:$0xff]
  %v4480 = vld [vmem:[%s4472 + $0x38] sm:$0xff]
  %4481 = vmatprep.subr.mxu0 %v26
  %4482 = vmatpush1.msra.mxu0 %v25
  %4483 = vmatprep.subr.mxu0 %v30
  %4484 = vmatpush1.msra.mxu0 %v29
  %4485 = vmatprep.subr.mxu0 %v34
  %4486 = vmatpush1.msra.mxu0 %v33
  %4487 = vmatprep.subr.mxu0 %v38
  %4488 = vmatpush1.msra.mxu0 %v37
  %4489 = vmatprep.subr.mxu0 %v42
  %4490 = vmatpush1.msra.mxu0 %v41
  %4491 = vmatprep.subr.mxu0 %v46
  %4492 = vmatpush1.msra.mxu0 %v45
  %4493 = vmatprep.subr.mxu0 %v50
  %4494 = vmatpush1.msra.mxu0 %v49
  %4495 = vmatprep.subr.mxu0 %v54
  %4496 = vmatpush1.msra.mxu0 %v53
  %4497 = vmatprep.subr.mxu0 %v58
  %4498 = vmatpush1.msra.mxu0 %v57
  %4499 = vmatprep.subr.mxu0 %v62
  %4500 = vmatpush1.msra.mxu0 %v61
  %4501 = vmatprep.subr.mxu0 %v66
  %4502 = vmatpush1.msra.mxu0 %v65
  %4503 = vmatprep.subr.mxu0 %v70
  %4504 = vmatpush1.msra.mxu0 %v69
  %4505 = vmatprep.subr.mxu0 %v74
  %4506 = vmatpush1.msra.mxu0 %v73
  %4507 = vmatprep.subr.mxu0 %v78
  %4508 = vmatpush1.msra.mxu0 %v77
  %4509 = vmatprep.subr.mxu0 %v82
  %4510 = vmatpush1.msra.mxu0 %v81
  %4511 = vmatprep.subr.mxu0 %v86
  %4512 = vmatpush1.msra.mxu0 %v85
  %4513 = vmatprep.subr.mxu0 0.0
  %4514 = vmatpush1.msra.mxu0 0.0
  %4515 = vmatprep.subr.mxu0 0.0
  %4516 = vmatpush1.msra.mxu0 0.0
  %4517 = vmatprep.subr.mxu0 0.0
  %4518 = vmatpush1.msra.mxu0 0.0
  %4519 = vmatprep.subr.mxu0 0.0
  %4520 = vmatpush1.msra.mxu0 0.0
  %4521 = vmatprep.subr.mxu0 0.0
  %4522 = vmatpush1.msra.mxu0 0.0
  %4523 = vmatprep.subr.mxu0 0.0
  %4524 = vmatpush1.msra.mxu0 0.0
  %4525 = vmatprep.subr.mxu0 0.0
  %4526 = vmatpush1.msra.mxu0 0.0
  %4527 = vmatprep.subr.mxu0 0.0
  %4528 = vmatpush1.msra.mxu0 0.0
  %4529 = vmatprep.subr.mxu0 0.0
  %4530 = vmatpush1.msra.mxu0 0.0
  %4531 = vmatprep.subr.mxu0 0.0
  %4532 = vmatpush1.msra.mxu0 0.0
  %4533 = vmatprep.subr.mxu0 0.0
  %4534 = vmatpush1.msra.mxu0 0.0
  %4535 = vmatprep.subr.mxu0 0.0
  %4536 = vmatpush1.msra.mxu0 0.0
  %4537 = vmatprep.subr.mxu0 0.0
  %4538 = vmatpush1.msra.mxu0 0.0
  %4539 = vmatprep.subr.mxu0 0.0
  %4540 = vmatpush1.msra.mxu0 0.0
  %4541 = vmatprep.subr.mxu0 0.0
  %4542 = vmatpush1.msra.mxu0 0.0
  %4543 = vmatprep.subr.mxu0 0.0
  %4544 = vmatpush1.msra.mxu0 0.0
  %4545 = vmatprep.mubr.f32.mxu0 0.0
  %4546 = vmatmul.mubr.f32.gmra.mrb[0].mxu0 %v4470
  %v4547 = vpop.f32.mrb[0].mxu0
  %v4548 = vadd.f32 0.0, %v4547
  %v4549 = vpop.f32.mrb[0].mxu0
  %v4550 = vadd.f32 0.0, %v4549
  %4551 = vmatprep.mubr.f32.mxu0 0.0
  %4552 = vmatmul.mubr.f32.gmra.mrb[0].mxu0 %v4471
  %v4553 = vpop.f32.mrb[0].mxu0
  %v4554 = vadd.f32 0.0, %v4553
  %v4555 = vpop.f32.mrb[0].mxu0
  %v4556 = vadd.f32 0.0, %v4555
  %4557 = vdwg.mxu0
  %4558 = vmatprep.subr.mxu0 %v28
  %4559 = vmatpush1.msra.mxu0 %v27
  %4560 = vmatprep.subr.mxu0 %v32
  %4561 = vmatpush1.msra.mxu0 %v31
  %4562 = vmatprep.subr.mxu0 %v36
  %4563 = vmatpush1.msra.mxu0 %v35
  %4564 = vmatprep.subr.mxu0 %v40
  %4565 = vmatpush1.msra.mxu0 %v39
  %4566 = vmatprep.subr.mxu0 %v44
  %4567 = vmatpush1.msra.mxu0 %v43
  %4568 = vmatprep.subr.mxu0 %v48
  %4569 = vmatpush1.msra.mxu0 %v47
  %4570 = vmatprep.subr.mxu0 %v52
  %4571 = vmatpush1.msra.mxu0 %v51
  %4572 = vmatprep.subr.mxu0 %v56
  %4573 = vmatpush1.msra.mxu0 %v55
  %4574 = vmatprep.subr.mxu0 %v60
  %4575 = vmatpush1.msra.mxu0 %v59
  %4576 = vmatprep.subr.mxu0 %v64
  %4577 = vmatpush1.msra.mxu0 %v63
  %4578 = vmatprep.subr.mxu0 %v68
  %4579 = vmatpush1.msra.mxu0 %v67
  %4580 = vmatprep.subr.mxu0 %v72
  %4581 = vmatpush1.msra.mxu0 %v71
  %4582 = vmatprep.subr.mxu0 %v76
  %4583 = vmatpush1.msra.mxu0 %v75
  %4584 = vmatprep.subr.mxu0 %v80
  %4585 = vmatpush1.msra.mxu0 %v79
  %4586 = vmatprep.subr.mxu0 %v84
  %4587 = vmatpush1.msra.mxu0 %v83
  %4588 = vmatprep.subr.mxu0 %v88
  %4589 = vmatpush1.msra.mxu0 %v87
  %4590 = vmatprep.subr.mxu0 0.0
  %4591 = vmatpush1.msra.mxu0 0.0
  %4592 = vmatprep.subr.mxu0 0.0
  %4593 = vmatpush1.msra.mxu0 0.0
  %4594 = vmatprep.subr.mxu0 0.0
  %4595 = vmatpush1.msra.mxu0 0.0
  %4596 = vmatprep.subr.mxu0 0.0
  %4597 = vmatpush1.msra.mxu0 0.0
  %4598 = vmatprep.subr.mxu0 0.0
  %4599 = vmatpush1.msra.mxu0 0.0
  %4600 = vmatprep.subr.mxu0 0.0
  %4601 = vmatpush1.msra.mxu0 0.0
  %4602 = vmatprep.subr.mxu0 0.0
  %4603 = vmatpush1.msra.mxu0 0.0
  %4604 = vmatprep.subr.mxu0 0.0
  %4605 = vmatpush1.msra.mxu0 0.0
  %4606 = vmatprep.subr.mxu0 0.0
  %4607 = vmatpush1.msra.mxu0 0.0
  %4608 = vmatprep.subr.mxu0 0.0
  %4609 = vmatpush1.msra.mxu0 0.0
  %4610 = vmatprep.subr.mxu0 0.0
  %4611 = vmatpush1.msra.mxu0 0.0
  %4612 = vmatprep.subr.mxu0 0.0
  %4613 = vmatpush1.msra.mxu0 0.0
  %4614 = vmatprep.subr.mxu0 0.0
  %4615 = vmatpush1.msra.mxu0 0.0
  %4616 = vmatprep.subr.mxu0 0.0
  %4617 = vmatpush1.msra.mxu0 0.0
  %4618 = vmatprep.subr.mxu0 0.0
  %4619 = vmatpush1.msra.mxu0 0.0
  %4620 = vmatprep.subr.mxu0 0.0
  %4621 = vmatpush1.msra.mxu0 0.0
  %4622 = vmatprep.mubr.f32.mxu0 0.0
  %4623 = vmatmul.mubr.f32.gmra.mrb[0].mxu0 %v4470
  %v4624 = vpop.f32.mrb[0].mxu0
  %v4625 = vadd.f32 0.0, %v4624
  %v4626 = vpop.f32.mrb[0].mxu0
  %v4627 = vadd.f32 0.0, %v4626
  %4628 = vmatprep.mubr.f32.mxu0 0.0
  %4629 = vmatmul.mubr.f32.gmra.mrb[0].mxu0 %v4471
  %v4630 = vpop.f32.mrb[0].mxu0
  %v4631 = vadd.f32 0.0, %v4630
  %v4632 = vpop.f32.mrb[0].mxu0
  %v4633 = vadd.f32 0.0, %v4632
  %4634 = vdwg.mxu0
  %v4635 = vadd.f32 %v4473, %v4548
  %v4636 = vadd.f32 %v4474, %v4550
  %v4637 = vadd.f32 %v4475, %v4625
  %v4638 = vadd.f32 %v4476, %v4627
  %v4639 = vadd.f32 %v4477, %v4554
  %v4640 = vadd.f32 %v4478, %v4556
  %v4641 = vadd.f32 %v4479, %v4631
  %v4642 = vadd.f32 %v4480, %v4633
  %v4643 = vxor.u32 %v4635, 2147483648
  %v4644 = vxor.u32 %v4636, 2147483648
  %v4645 = vxor.u32 %v4639, 2147483648
  %v4646 = vxor.u32 %v4640, 2147483648
  %v4647 = vmul.f32 %v4643, 1.442695
  %v4648 = vpow.pop %v4647
  %v4649 = vmul.f32 %v4644, 1.442695
  %v4650 = vpow.pop %v4649
  %v4651 = vmul.f32 %v4645, 1.442695
  %v4652 = vpow.pop %v4651
  %v4653 = vmul.f32 %v4646, 1.442695
  %v4654 = vpow.pop %v4653
  %v4655 = vadd.f32 %v4648, 1.0
  %v4656 = vadd.f32 %v4650, 1.0
  %v4657 = vadd.f32 %v4652, 1.0
  %v4658 = vadd.f32 %v4654, 1.0
  %v4659 = vrcp.pop %v4655
  %v4660 = vmul.f32 1.0, %v4659
  %v4661 = vrcp.pop %v4656
  %v4662 = vmul.f32 1.0, %v4661
  %v4663 = vrcp.pop %v4657
  %v4664 = vmul.f32 1.0, %v4663
  %v4665 = vrcp.pop %v4658
  %v4666 = vmul.f32 1.0, %v4665
  %v4667 = vtanh.pop %v4637
  %v4668 = vtanh.pop %v4641
  %v4669 = vxor.u32 %v4638, 2147483648
  %v4670 = vxor.u32 %v4642, 2147483648
  %v4671 = vmul.f32 %v4669, 1.442695
  %v4672 = vpow.pop %v4671
  %v4673 = vmul.f32 %v4670, 1.442695
  %v4674 = vpow.pop %v4673
  %v4675 = vadd.f32 %v4672, 1.0
  %v4676 = vadd.f32 %v4674, 1.0
  %v4677 = vrcp.pop %v4675
  %v4678 = vmul.f32 1.0, %v4677
  %v4679 = vrcp.pop %v4676
  %v4680 = vmul.f32 1.0, %v4679
  %v4681 = vmul.f32 %v4662, %v4466
  %v4682 = vmul.f32 %v4666, %v4467
  %v4683 = vmul.f32 %v4660, %v4667
  %v4684 = vmul.f32 %v4664, %v4668
  %v4685 = vadd.f32 %v4681, %v4683
  %v4686 = vadd.f32 %v4682, %v4684
  %v4687 = vtanh.pop %v4685
  %v4688 = vtanh.pop %v4686
  %v4689 = vmul.f32 %v4678, %v4687
  %v4690 = vmul.f32 %v4680, %v4688
  %s4691 = scalar_lea.vmem %s0, 1344
  %v4692 = vld [vmem:[%s4691] sm:$0xff]
  %v4693 = vld [vmem:[%s4691 + $0x8] sm:$0xff]
  %v4694 = vld [vmem:[%s4691 + $0x10] sm:$0xff]
  %v4695 = vld [vmem:[%s4691 + $0x18] sm:$0xff]
  %v4696 = vld [vmem:[%s4691 + $0x20] sm:$0xff]
  %v4697 = vld [vmem:[%s4691 + $0x28] sm:$0xff]
  %v4698 = vld [vmem:[%s4691 + $0x30] sm:$0xff]
  %v4699 = vld [vmem:[%s4691 + $0x38] sm:$0xff]
  %4700 = vmatprep.subr.mxu0 %v26
  %4701 = vmatpush1.msra.mxu0 %v25
  %4702 = vmatprep.subr.mxu0 %v30
  %4703 = vmatpush1.msra.mxu0 %v29
  %4704 = vmatprep.subr.mxu0 %v34
  %4705 = vmatpush1.msra.mxu0 %v33
  %4706 = vmatprep.subr.mxu0 %v38
  %4707 = vmatpush1.msra.mxu0 %v37
  %4708 = vmatprep.subr.mxu0 %v42
  %4709 = vmatpush1.msra.mxu0 %v41
  %4710 = vmatprep.subr.mxu0 %v46
  %4711 = vmatpush1.msra.mxu0 %v45
  %4712 = vmatprep.subr.mxu0 %v50
  %4713 = vmatpush1.msra.mxu0 %v49
  %4714 = vmatprep.subr.mxu0 %v54
  %4715 = vmatpush1.msra.mxu0 %v53
  %4716 = vmatprep.subr.mxu0 %v58
  %4717 = vmatpush1.msra.mxu0 %v57
  %4718 = vmatprep.subr.mxu0 %v62
  %4719 = vmatpush1.msra.mxu0 %v61
  %4720 = vmatprep.subr.mxu0 %v66
  %4721 = vmatpush1.msra.mxu0 %v65
  %4722 = vmatprep.subr.mxu0 %v70
  %4723 = vmatpush1.msra.mxu0 %v69
  %4724 = vmatprep.subr.mxu0 %v74
  %4725 = vmatpush1.msra.mxu0 %v73
  %4726 = vmatprep.subr.mxu0 %v78
  %4727 = vmatpush1.msra.mxu0 %v77
  %4728 = vmatprep.subr.mxu0 %v82
  %4729 = vmatpush1.msra.mxu0 %v81
  %4730 = vmatprep.subr.mxu0 %v86
  %4731 = vmatpush1.msra.mxu0 %v85
  %4732 = vmatprep.subr.mxu0 0.0
  %4733 = vmatpush1.msra.mxu0 0.0
  %4734 = vmatprep.subr.mxu0 0.0
  %4735 = vmatpush1.msra.mxu0 0.0
  %4736 = vmatprep.subr.mxu0 0.0
  %4737 = vmatpush1.msra.mxu0 0.0
  %4738 = vmatprep.subr.mxu0 0.0
  %4739 = vmatpush1.msra.mxu0 0.0
  %4740 = vmatprep.subr.mxu0 0.0
  %4741 = vmatpush1.msra.mxu0 0.0
  %4742 = vmatprep.subr.mxu0 0.0
  %4743 = vmatpush1.msra.mxu0 0.0
  %4744 = vmatprep.subr.mxu0 0.0
  %4745 = vmatpush1.msra.mxu0 0.0
  %4746 = vmatprep.subr.mxu0 0.0
  %4747 = vmatpush1.msra.mxu0 0.0
  %4748 = vmatprep.subr.mxu0 0.0
  %4749 = vmatpush1.msra.mxu0 0.0
  %4750 = vmatprep.subr.mxu0 0.0
  %4751 = vmatpush1.msra.mxu0 0.0
  %4752 = vmatprep.subr.mxu0 0.0
  %4753 = vmatpush1.msra.mxu0 0.0
  %4754 = vmatprep.subr.mxu0 0.0
  %4755 = vmatpush1.msra.mxu0 0.0
  %4756 = vmatprep.subr.mxu0 0.0
  %4757 = vmatpush1.msra.mxu0 0.0
  %4758 = vmatprep.subr.mxu0 0.0
  %4759 = vmatpush1.msra.mxu0 0.0
  %4760 = vmatprep.subr.mxu0 0.0
  %4761 = vmatpush1.msra.mxu0 0.0
  %4762 = vmatprep.subr.mxu0 0.0
  %4763 = vmatpush1.msra.mxu0 0.0
  %4764 = vmatprep.mubr.f32.mxu0 0.0
  %4765 = vmatmul.mubr.f32.gmra.mrb[0].mxu0 %v4689
  %v4766 = vpop.f32.mrb[0].mxu0
  %v4767 = vadd.f32 0.0, %v4766
  %v4768 = vpop.f32.mrb[0].mxu0
  %v4769 = vadd.f32 0.0, %v4768
  %4770 = vmatprep.mubr.f32.mxu0 0.0
  %4771 = vmatmul.mubr.f32.gmra.mrb[0].mxu0 %v4690
  %v4772 = vpop.f32.mrb[0].mxu0
  %v4773 = vadd.f32 0.0, %v4772
  %v4774 = vpop.f32.mrb[0].mxu0
  %v4775 = vadd.f32 0.0, %v4774
  %4776 = vdwg.mxu0
  %4777 = vmatprep.subr.mxu0 %v28
  %4778 = vmatpush1.msra.mxu0 %v27
  %4779 = vmatprep.subr.mxu0 %v32
  %4780 = vmatpush1.msra.mxu0 %v31
  %4781 = vmatprep.subr.mxu0 %v36
  %4782 = vmatpush1.msra.mxu0 %v35
  %4783 = vmatprep.subr.mxu0 %v40
  %4784 = vmatpush1.msra.mxu0 %v39
  %4785 = vmatprep.subr.mxu0 %v44
  %4786 = vmatpush1.msra.mxu0 %v43
  %4787 = vmatprep.subr.mxu0 %v48
  %4788 = vmatpush1.msra.mxu0 %v47
  %4789 = vmatprep.subr.mxu0 %v52
  %4790 = vmatpush1.msra.mxu0 %v51
  %4791 = vmatprep.subr.mxu0 %v56
  %4792 = vmatpush1.msra.mxu0 %v55
  %4793 = vmatprep.subr.mxu0 %v60
  %4794 = vmatpush1.msra.mxu0 %v59
  %4795 = vmatprep.subr.mxu0 %v64
  %4796 = vmatpush1.msra.mxu0 %v63
  %4797 = vmatprep.subr.mxu0 %v68
  %4798 = vmatpush1.msra.mxu0 %v67
  %4799 = vmatprep.subr.mxu0 %v72
  %4800 = vmatpush1.msra.mxu0 %v71
  %4801 = vmatprep.subr.mxu0 %v76
  %4802 = vmatpush1.msra.mxu0 %v75
  %4803 = vmatprep.subr.mxu0 %v80
  %4804 = vmatpush1.msra.mxu0 %v79
  %4805 = vmatprep.subr.mxu0 %v84
  %4806 = vmatpush1.msra.mxu0 %v83
  %4807 = vmatprep.subr.mxu0 %v88
  %4808 = vmatpush1.msra.mxu0 %v87
  %4809 = vmatprep.subr.mxu0 0.0
  %4810 = vmatpush1.msra.mxu0 0.0
  %4811 = vmatprep.subr.mxu0 0.0
  %4812 = vmatpush1.msra.mxu0 0.0
  %4813 = vmatprep.subr.mxu0 0.0
  %4814 = vmatpush1.msra.mxu0 0.0
  %4815 = vmatprep.subr.mxu0 0.0
  %4816 = vmatpush1.msra.mxu0 0.0
  %4817 = vmatprep.subr.mxu0 0.0
  %4818 = vmatpush1.msra.mxu0 0.0
  %4819 = vmatprep.subr.mxu0 0.0
  %4820 = vmatpush1.msra.mxu0 0.0
  %4821 = vmatprep.subr.mxu0 0.0
  %4822 = vmatpush1.msra.mxu0 0.0
  %4823 = vmatprep.subr.mxu0 0.0
  %4824 = vmatpush1.msra.mxu0 0.0
  %4825 = vmatprep.subr.mxu0 0.0
  %4826 = vmatpush1.msra.mxu0 0.0
  %4827 = vmatprep.subr.mxu0 0.0
  %4828 = vmatpush1.msra.mxu0 0.0
  %4829 = vmatprep.subr.mxu0 0.0
  %4830 = vmatpush1.msra.mxu0 0.0
  %4831 = vmatprep.subr.mxu0 0.0
  %4832 = vmatpush1.msra.mxu0 0.0
  %4833 = vmatprep.subr.mxu0 0.0
  %4834 = vmatpush1.msra.mxu0 0.0
  %4835 = vmatprep.subr.mxu0 0.0
  %4836 = vmatpush1.msra.mxu0 0.0
  %4837 = vmatprep.subr.mxu0 0.0
  %4838 = vmatpush1.msra.mxu0 0.0
  %4839 = vmatprep.subr.mxu0 0.0
  %4840 = vmatpush1.msra.mxu0 0.0
  %4841 = vmatprep.mubr.f32.mxu0 0.0
  %4842 = vmatmul.mubr.f32.gmra.mrb[0].mxu0 %v4689
  %v4843 = vpop.f32.mrb[0].mxu0
  %v4844 = vadd.f32 0.0, %v4843
  %v4845 = vpop.f32.mrb[0].mxu0
  %v4846 = vadd.f32 0.0, %v4845
  %4847 = vmatprep.mubr.f32.mxu0 0.0
  %4848 = vmatmul.mubr.f32.gmra.mrb[0].mxu0 %v4690
  %v4849 = vpop.f32.mrb[0].mxu0
  %v4850 = vadd.f32 0.0, %v4849
  %v4851 = vpop.f32.mrb[0].mxu0
  %v4852 = vadd.f32 0.0, %v4851
  %4853 = vdwg.mxu0
  %v4854 = vadd.f32 %v4692, %v4767
  %v4855 = vadd.f32 %v4693, %v4769
  %v4856 = vadd.f32 %v4694, %v4844
  %v4857 = vadd.f32 %v4695, %v4846
  %v4858 = vadd.f32 %v4696, %v4773
  %v4859 = vadd.f32 %v4697, %v4775
  %v4860 = vadd.f32 %v4698, %v4850
  %v4861 = vadd.f32 %v4699, %v4852
  %v4862 = vxor.u32 %v4854, 2147483648
  %v4863 = vxor.u32 %v4855, 2147483648
  %v4864 = vxor.u32 %v4858, 2147483648
  %v4865 = vxor.u32 %v4859, 2147483648
  %v4866 = vmul.f32 %v4862, 1.442695
  %v4867 = vpow.pop %v4866
  %v4868 = vmul.f32 %v4863, 1.442695
  %v4869 = vpow.pop %v4868
  %v4870 = vmul.f32 %v4864, 1.442695
  %v4871 = vpow.pop %v4870
  %v4872 = vmul.f32 %v4865, 1.442695
  %v4873 = vpow.pop %v4872
  %v4874 = vadd.f32 %v4867, 1.0
  %v4875 = vadd.f32 %v4869, 1.0
  %v4876 = vadd.f32 %v4871, 1.0
  %v4877 = vadd.f32 %v4873, 1.0
  %v4878 = vrcp.pop %v4874
  %v4879 = vmul.f32 1.0, %v4878
  %v4880 = vrcp.pop %v4875
  %v4881 = vmul.f32 1.0, %v4880
  %v4882 = vrcp.pop %v4876
  %v4883 = vmul.f32 1.0, %v4882
  %v4884 = vrcp.pop %v4877
  %v4885 = vmul.f32 1.0, %v4884
  %v4886 = vtanh.pop %v4856
  %v4887 = vtanh.pop %v4860
  %v4888 = vxor.u32 %v4857, 2147483648
  %v4889 = vxor.u32 %v4861, 2147483648
  %v4890 = vmul.f32 %v4888, 1.442695
  %v4891 = vpow.pop %v4890
  %v4892 = vmul.f32 %v4889, 1.442695
  %v4893 = vpow.pop %v4892
  %v4894 = vadd.f32 %v4891, 1.0
  %v4895 = vadd.f32 %v4893, 1.0
  %v4896 = vrcp.pop %v4894
  %v4897 = vmul.f32 1.0, %v4896
  %v4898 = vrcp.pop %v4895
  %v4899 = vmul.f32 1.0, %v4898
  %v4900 = vmul.f32 %v4881, %v4685
  %v4901 = vmul.f32 %v4885, %v4686
  %v4902 = vmul.f32 %v4879, %v4886
  %v4903 = vmul.f32 %v4883, %v4887
  %v4904 = vadd.f32 %v4900, %v4902
  %v4905 = vadd.f32 %v4901, %v4903
  %v4906 = vtanh.pop %v4904
  %v4907 = vtanh.pop %v4905
  %v4908 = vmul.f32 %v4897, %v4906
  %v4909 = vmul.f32 %v4899, %v4907
  %s4910 = scalar_lea.vmem %s0, 1408
  %v4911 = vld [vmem:[%s4910] sm:$0xff]
  %v4912 = vld [vmem:[%s4910 + $0x8] sm:$0xff]
  %v4913 = vld [vmem:[%s4910 + $0x10] sm:$0xff]
  %v4914 = vld [vmem:[%s4910 + $0x18] sm:$0xff]
  %v4915 = vld [vmem:[%s4910 + $0x20] sm:$0xff]
  %v4916 = vld [vmem:[%s4910 + $0x28] sm:$0xff]
  %v4917 = vld [vmem:[%s4910 + $0x30] sm:$0xff]
  %v4918 = vld [vmem:[%s4910 + $0x38] sm:$0xff]
  %4919 = vmatprep.subr.mxu0 %v26
  %4920 = vmatpush1.msra.mxu0 %v25
  %4921 = vmatprep.subr.mxu0 %v30
  %4922 = vmatpush1.msra.mxu0 %v29
  %4923 = vmatprep.subr.mxu0 %v34
  %4924 = vmatpush1.msra.mxu0 %v33
  %4925 = vmatprep.subr.mxu0 %v38
  %4926 = vmatpush1.msra.mxu0 %v37
  %4927 = vmatprep.subr.mxu0 %v42
  %4928 = vmatpush1.msra.mxu0 %v41
  %4929 = vmatprep.subr.mxu0 %v46
  %4930 = vmatpush1.msra.mxu0 %v45
  %4931 = vmatprep.subr.mxu0 %v50
  %4932 = vmatpush1.msra.mxu0 %v49
  %4933 = vmatprep.subr.mxu0 %v54
  %4934 = vmatpush1.msra.mxu0 %v53
  %4935 = vmatprep.subr.mxu0 %v58
  %4936 = vmatpush1.msra.mxu0 %v57
  %4937 = vmatprep.subr.mxu0 %v62
  %4938 = vmatpush1.msra.mxu0 %v61
  %4939 = vmatprep.subr.mxu0 %v66
  %4940 = vmatpush1.msra.mxu0 %v65
  %4941 = vmatprep.subr.mxu0 %v70
  %4942 = vmatpush1.msra.mxu0 %v69
  %4943 = vmatprep.subr.mxu0 %v74
  %4944 = vmatpush1.msra.mxu0 %v73
  %4945 = vmatprep.subr.mxu0 %v78
  %4946 = vmatpush1.msra.mxu0 %v77
  %4947 = vmatprep.subr.mxu0 %v82
  %4948 = vmatpush1.msra.mxu0 %v81
  %4949 = vmatprep.subr.mxu0 %v86
  %4950 = vmatpush1.msra.mxu0 %v85
  %4951 = vmatprep.subr.mxu0 0.0
  %4952 = vmatpush1.msra.mxu0 0.0
  %4953 = vmatprep.subr.mxu0 0.0
  %4954 = vmatpush1.msra.mxu0 0.0
  %4955 = vmatprep.subr.mxu0 0.0
  %4956 = vmatpush1.msra.mxu0 0.0
  %4957 = vmatprep.subr.mxu0 0.0
  %4958 = vmatpush1.msra.mxu0 0.0
  %4959 = vmatprep.subr.mxu0 0.0
  %4960 = vmatpush1.msra.mxu0 0.0
  %4961 = vmatprep.subr.mxu0 0.0
  %4962 = vmatpush1.msra.mxu0 0.0
  %4963 = vmatprep.subr.mxu0 0.0
  %4964 = vmatpush1.msra.mxu0 0.0
  %4965 = vmatprep.subr.mxu0 0.0
  %4966 = vmatpush1.msra.mxu0 0.0
  %4967 = vmatprep.subr.mxu0 0.0
  %4968 = vmatpush1.msra.mxu0 0.0
  %4969 = vmatprep.subr.mxu0 0.0
  %4970 = vmatpush1.msra.mxu0 0.0
  %4971 = vmatprep.subr.mxu0 0.0
  %4972 = vmatpush1.msra.mxu0 0.0
  %4973 = vmatprep.subr.mxu0 0.0
  %4974 = vmatpush1.msra.mxu0 0.0
  %4975 = vmatprep.subr.mxu0 0.0
  %4976 = vmatpush1.msra.mxu0 0.0
  %4977 = vmatprep.subr.mxu0 0.0
  %4978 = vmatpush1.msra.mxu0 0.0
  %4979 = vmatprep.subr.mxu0 0.0
  %4980 = vmatpush1.msra.mxu0 0.0
  %4981 = vmatprep.subr.mxu0 0.0
  %4982 = vmatpush1.msra.mxu0 0.0
  %4983 = vmatprep.mubr.f32.mxu0 0.0
  %4984 = vmatmul.mubr.f32.gmra.mrb[0].mxu0 %v4908
  %v4985 = vpop.f32.mrb[0].mxu0
  %v4986 = vadd.f32 0.0, %v4985
  %v4987 = vpop.f32.mrb[0].mxu0
  %v4988 = vadd.f32 0.0, %v4987
  %4989 = vmatprep.mubr.f32.mxu0 0.0
  %4990 = vmatmul.mubr.f32.gmra.mrb[0].mxu0 %v4909
  %v4991 = vpop.f32.mrb[0].mxu0
  %v4992 = vadd.f32 0.0, %v4991
  %v4993 = vpop.f32.mrb[0].mxu0
  %v4994 = vadd.f32 0.0, %v4993
  %4995 = vdwg.mxu0
  %4996 = vmatprep.subr.mxu0 %v28
  %4997 = vmatpush1.msra.mxu0 %v27
  %4998 = vmatprep.subr.mxu0 %v32
  %4999 = vmatpush1.msra.mxu0 %v31
  %5000 = vmatprep.subr.mxu0 %v36
  %5001 = vmatpush1.msra.mxu0 %v35
  %5002 = vmatprep.subr.mxu0 %v40
  %5003 = vmatpush1.msra.mxu0 %v39
  %5004 = vmatprep.subr.mxu0 %v44
  %5005 = vmatpush1.msra.mxu0 %v43
  %5006 = vmatprep.subr.mxu0 %v48
  %5007 = vmatpush1.msra.mxu0 %v47
  %5008 = vmatprep.subr.mxu0 %v52
  %5009 = vmatpush1.msra.mxu0 %v51
  %5010 = vmatprep.subr.mxu0 %v56
  %5011 = vmatpush1.msra.mxu0 %v55
  %5012 = vmatprep.subr.mxu0 %v60
  %5013 = vmatpush1.msra.mxu0 %v59
  %5014 = vmatprep.subr.mxu0 %v64
  %5015 = vmatpush1.msra.mxu0 %v63
  %5016 = vmatprep.subr.mxu0 %v68
  %5017 = vmatpush1.msra.mxu0 %v67
  %5018 = vmatprep.subr.mxu0 %v72
  %5019 = vmatpush1.msra.mxu0 %v71
  %5020 = vmatprep.subr.mxu0 %v76
  %5021 = vmatpush1.msra.mxu0 %v75
  %5022 = vmatprep.subr.mxu0 %v80
  %5023 = vmatpush1.msra.mxu0 %v79
  %5024 = vmatprep.subr.mxu0 %v84
  %5025 = vmatpush1.msra.mxu0 %v83
  %5026 = vmatprep.subr.mxu0 %v88
  %5027 = vmatpush1.msra.mxu0 %v87
  %5028 = vmatprep.subr.mxu0 0.0
  %5029 = vmatpush1.msra.mxu0 0.0
  %5030 = vmatprep.subr.mxu0 0.0
  %5031 = vmatpush1.msra.mxu0 0.0
  %5032 = vmatprep.subr.mxu0 0.0
  %5033 = vmatpush1.msra.mxu0 0.0
  %5034 = vmatprep.subr.mxu0 0.0
  %5035 = vmatpush1.msra.mxu0 0.0
  %5036 = vmatprep.subr.mxu0 0.0
  %5037 = vmatpush1.msra.mxu0 0.0
  %5038 = vmatprep.subr.mxu0 0.0
  %5039 = vmatpush1.msra.mxu0 0.0
  %5040 = vmatprep.subr.mxu0 0.0
  %5041 = vmatpush1.msra.mxu0 0.0
  %5042 = vmatprep.subr.mxu0 0.0
  %5043 = vmatpush1.msra.mxu0 0.0
  %5044 = vmatprep.subr.mxu0 0.0
  %5045 = vmatpush1.msra.mxu0 0.0
  %5046 = vmatprep.subr.mxu0 0.0
  %5047 = vmatpush1.msra.mxu0 0.0
  %5048 = vmatprep.subr.mxu0 0.0
  %5049 = vmatpush1.msra.mxu0 0.0
  %5050 = vmatprep.subr.mxu0 0.0
  %5051 = vmatpush1.msra.mxu0 0.0
  %5052 = vmatprep.subr.mxu0 0.0
  %5053 = vmatpush1.msra.mxu0 0.0
  %5054 = vmatprep.subr.mxu0 0.0
  %5055 = vmatpush1.msra.mxu0 0.0
  %5056 = vmatprep.subr.mxu0 0.0
  %5057 = vmatpush1.msra.mxu0 0.0
  %5058 = vmatprep.subr.mxu0 0.0
  %5059 = vmatpush1.msra.mxu0 0.0
  %5060 = vmatprep.mubr.f32.mxu0 0.0
  %5061 = vmatmul.mubr.f32.gmra.mrb[0].mxu0 %v4908
  %v5062 = vpop.f32.mrb[0].mxu0
  %v5063 = vadd.f32 0.0, %v5062
  %v5064 = vpop.f32.mrb[0].mxu0
  %v5065 = vadd.f32 0.0, %v5064
  %5066 = vmatprep.mubr.f32.mxu0 0.0
  %5067 = vmatmul.mubr.f32.gmra.mrb[0].mxu0 %v4909
  %v5068 = vpop.f32.mrb[0].mxu0
  %v5069 = vadd.f32 0.0, %v5068
  %v5070 = vpop.f32.mrb[0].mxu0
  %v5071 = vadd.f32 0.0, %v5070
  %5072 = vdwg.mxu0
  %v5073 = vadd.f32 %v4911, %v4986
  %v5074 = vadd.f32 %v4912, %v4988
  %v5075 = vadd.f32 %v4913, %v5063
  %v5076 = vadd.f32 %v4914, %v5065
  %v5077 = vadd.f32 %v4915, %v4992
  %v5078 = vadd.f32 %v4916, %v4994
  %v5079 = vadd.f32 %v4917, %v5069
  %v5080 = vadd.f32 %v4918, %v5071
  %v5081 = vxor.u32 %v5073, 2147483648
  %v5082 = vxor.u32 %v5074, 2147483648
  %v5083 = vxor.u32 %v5077, 2147483648
  %v5084 = vxor.u32 %v5078, 2147483648
  %v5085 = vmul.f32 %v5081, 1.442695
  %v5086 = vpow.pop %v5085
  %v5087 = vmul.f32 %v5082, 1.442695
  %v5088 = vpow.pop %v5087
  %v5089 = vmul.f32 %v5083, 1.442695
  %v5090 = vpow.pop %v5089
  %v5091 = vmul.f32 %v5084, 1.442695
  %v5092 = vpow.pop %v5091
  %v5093 = vadd.f32 %v5086, 1.0
  %v5094 = vadd.f32 %v5088, 1.0
  %v5095 = vadd.f32 %v5090, 1.0
  %v5096 = vadd.f32 %v5092, 1.0
  %v5097 = vrcp.pop %v5093
  %v5098 = vmul.f32 1.0, %v5097
  %v5099 = vrcp.pop %v5094
  %v5100 = vmul.f32 1.0, %v5099
  %v5101 = vrcp.pop %v5095
  %v5102 = vmul.f32 1.0, %v5101
  %v5103 = vrcp.pop %v5096
  %v5104 = vmul.f32 1.0, %v5103
  %v5105 = vtanh.pop %v5075
  %v5106 = vtanh.pop %v5079
  %v5107 = vxor.u32 %v5076, 2147483648
  %v5108 = vxor.u32 %v5080, 2147483648
  %v5109 = vmul.f32 %v5107, 1.442695
  %v5110 = vpow.pop %v5109
  %v5111 = vmul.f32 %v5108, 1.442695
  %v5112 = vpow.pop %v5111
  %v5113 = vadd.f32 %v5110, 1.0
  %v5114 = vadd.f32 %v5112, 1.0
  %v5115 = vrcp.pop %v5113
  %v5116 = vmul.f32 1.0, %v5115
  %v5117 = vrcp.pop %v5114
  %v5118 = vmul.f32 1.0, %v5117
  %v5119 = vmul.f32 %v5100, %v4904
  %v5120 = vmul.f32 %v5104, %v4905
  %v5121 = vmul.f32 %v5098, %v5105
  %v5122 = vmul.f32 %v5102, %v5106
  %v5123 = vadd.f32 %v5119, %v5121
  %v5124 = vadd.f32 %v5120, %v5122
  %v5125 = vtanh.pop %v5123
  %v5126 = vtanh.pop %v5124
  %v5127 = vmul.f32 %v5116, %v5125
  %v5128 = vmul.f32 %v5118, %v5126
  %s5129 = scalar_lea.vmem %s0, 1472
  %v5130 = vld [vmem:[%s5129] sm:$0xff]
  %v5131 = vld [vmem:[%s5129 + $0x8] sm:$0xff]
  %v5132 = vld [vmem:[%s5129 + $0x10] sm:$0xff]
  %v5133 = vld [vmem:[%s5129 + $0x18] sm:$0xff]
  %v5134 = vld [vmem:[%s5129 + $0x20] sm:$0xff]
  %v5135 = vld [vmem:[%s5129 + $0x28] sm:$0xff]
  %v5136 = vld [vmem:[%s5129 + $0x30] sm:$0xff]
  %v5137 = vld [vmem:[%s5129 + $0x38] sm:$0xff]
  %5138 = vmatprep.subr.mxu0 %v26
  %5139 = vmatpush1.msra.mxu0 %v25
  %5140 = vmatprep.subr.mxu0 %v30
  %5141 = vmatpush1.msra.mxu0 %v29
  %5142 = vmatprep.subr.mxu0 %v34
  %5143 = vmatpush1.msra.mxu0 %v33
  %5144 = vmatprep.subr.mxu0 %v38
  %5145 = vmatpush1.msra.mxu0 %v37
  %5146 = vmatprep.subr.mxu0 %v42
  %5147 = vmatpush1.msra.mxu0 %v41
  %5148 = vmatprep.subr.mxu0 %v46
  %5149 = vmatpush1.msra.mxu0 %v45
  %5150 = vmatprep.subr.mxu0 %v50
  %5151 = vmatpush1.msra.mxu0 %v49
  %5152 = vmatprep.subr.mxu0 %v54
  %5153 = vmatpush1.msra.mxu0 %v53
  %5154 = vmatprep.subr.mxu0 %v58
  %5155 = vmatpush1.msra.mxu0 %v57
  %5156 = vmatprep.subr.mxu0 %v62
  %5157 = vmatpush1.msra.mxu0 %v61
  %5158 = vmatprep.subr.mxu0 %v66
  %5159 = vmatpush1.msra.mxu0 %v65
  %5160 = vmatprep.subr.mxu0 %v70
  %5161 = vmatpush1.msra.mxu0 %v69
  %5162 = vmatprep.subr.mxu0 %v74
  %5163 = vmatpush1.msra.mxu0 %v73
  %5164 = vmatprep.subr.mxu0 %v78
  %5165 = vmatpush1.msra.mxu0 %v77
  %5166 = vmatprep.subr.mxu0 %v82
  %5167 = vmatpush1.msra.mxu0 %v81
  %5168 = vmatprep.subr.mxu0 %v86
  %5169 = vmatpush1.msra.mxu0 %v85
  %5170 = vmatprep.subr.mxu0 0.0
  %5171 = vmatpush1.msra.mxu0 0.0
  %5172 = vmatprep.subr.mxu0 0.0
  %5173 = vmatpush1.msra.mxu0 0.0
  %5174 = vmatprep.subr.mxu0 0.0
  %5175 = vmatpush1.msra.mxu0 0.0
  %5176 = vmatprep.subr.mxu0 0.0
  %5177 = vmatpush1.msra.mxu0 0.0
  %5178 = vmatprep.subr.mxu0 0.0
  %5179 = vmatpush1.msra.mxu0 0.0
  %5180 = vmatprep.subr.mxu0 0.0
  %5181 = vmatpush1.msra.mxu0 0.0
  %5182 = vmatprep.subr.mxu0 0.0
  %5183 = vmatpush1.msra.mxu0 0.0
  %5184 = vmatprep.subr.mxu0 0.0
  %5185 = vmatpush1.msra.mxu0 0.0
  %5186 = vmatprep.subr.mxu0 0.0
  %5187 = vmatpush1.msra.mxu0 0.0
  %5188 = vmatprep.subr.mxu0 0.0
  %5189 = vmatpush1.msra.mxu0 0.0
  %5190 = vmatprep.subr.mxu0 0.0
  %5191 = vmatpush1.msra.mxu0 0.0
  %5192 = vmatprep.subr.mxu0 0.0
  %5193 = vmatpush1.msra.mxu0 0.0
  %5194 = vmatprep.subr.mxu0 0.0
  %5195 = vmatpush1.msra.mxu0 0.0
  %5196 = vmatprep.subr.mxu0 0.0
  %5197 = vmatpush1.msra.mxu0 0.0
  %5198 = vmatprep.subr.mxu0 0.0
  %5199 = vmatpush1.msra.mxu0 0.0
  %5200 = vmatprep.subr.mxu0 0.0
  %5201 = vmatpush1.msra.mxu0 0.0
  %5202 = vmatprep.mubr.f32.mxu0 0.0
  %5203 = vmatmul.mubr.f32.gmra.mrb[0].mxu0 %v5127
  %v5204 = vpop.f32.mrb[0].mxu0
  %v5205 = vadd.f32 0.0, %v5204
  %v5206 = vpop.f32.mrb[0].mxu0
  %v5207 = vadd.f32 0.0, %v5206
  %5208 = vmatprep.mubr.f32.mxu0 0.0
  %5209 = vmatmul.mubr.f32.gmra.mrb[0].mxu0 %v5128
  %v5210 = vpop.f32.mrb[0].mxu0
  %v5211 = vadd.f32 0.0, %v5210
  %v5212 = vpop.f32.mrb[0].mxu0
  %v5213 = vadd.f32 0.0, %v5212
  %5214 = vdwg.mxu0
  %5215 = vmatprep.subr.mxu0 %v28
  %5216 = vmatpush1.msra.mxu0 %v27
  %5217 = vmatprep.subr.mxu0 %v32
  %5218 = vmatpush1.msra.mxu0 %v31
  %5219 = vmatprep.subr.mxu0 %v36
  %5220 = vmatpush1.msra.mxu0 %v35
  %5221 = vmatprep.subr.mxu0 %v40
  %5222 = vmatpush1.msra.mxu0 %v39
  %5223 = vmatprep.subr.mxu0 %v44
  %5224 = vmatpush1.msra.mxu0 %v43
  %5225 = vmatprep.subr.mxu0 %v48
  %5226 = vmatpush1.msra.mxu0 %v47
  %5227 = vmatprep.subr.mxu0 %v52
  %5228 = vmatpush1.msra.mxu0 %v51
  %5229 = vmatprep.subr.mxu0 %v56
  %5230 = vmatpush1.msra.mxu0 %v55
  %5231 = vmatprep.subr.mxu0 %v60
  %5232 = vmatpush1.msra.mxu0 %v59
  %5233 = vmatprep.subr.mxu0 %v64
  %5234 = vmatpush1.msra.mxu0 %v63
  %5235 = vmatprep.subr.mxu0 %v68
  %5236 = vmatpush1.msra.mxu0 %v67
  %5237 = vmatprep.subr.mxu0 %v72
  %5238 = vmatpush1.msra.mxu0 %v71
  %5239 = vmatprep.subr.mxu0 %v76
  %5240 = vmatpush1.msra.mxu0 %v75
  %5241 = vmatprep.subr.mxu0 %v80
  %5242 = vmatpush1.msra.mxu0 %v79
  %5243 = vmatprep.subr.mxu0 %v84
  %5244 = vmatpush1.msra.mxu0 %v83
  %5245 = vmatprep.subr.mxu0 %v88
  %5246 = vmatpush1.msra.mxu0 %v87
  %5247 = vmatprep.subr.mxu0 0.0
  %5248 = vmatpush1.msra.mxu0 0.0
  %5249 = vmatprep.subr.mxu0 0.0
  %5250 = vmatpush1.msra.mxu0 0.0
  %5251 = vmatprep.subr.mxu0 0.0
  %5252 = vmatpush1.msra.mxu0 0.0
  %5253 = vmatprep.subr.mxu0 0.0
  %5254 = vmatpush1.msra.mxu0 0.0
  %5255 = vmatprep.subr.mxu0 0.0
  %5256 = vmatpush1.msra.mxu0 0.0
  %5257 = vmatprep.subr.mxu0 0.0
  %5258 = vmatpush1.msra.mxu0 0.0
  %5259 = vmatprep.subr.mxu0 0.0
  %5260 = vmatpush1.msra.mxu0 0.0
  %5261 = vmatprep.subr.mxu0 0.0
  %5262 = vmatpush1.msra.mxu0 0.0
  %5263 = vmatprep.subr.mxu0 0.0
  %5264 = vmatpush1.msra.mxu0 0.0
  %5265 = vmatprep.subr.mxu0 0.0
  %5266 = vmatpush1.msra.mxu0 0.0
  %5267 = vmatprep.subr.mxu0 0.0
  %5268 = vmatpush1.msra.mxu0 0.0
  %5269 = vmatprep.subr.mxu0 0.0
  %5270 = vmatpush1.msra.mxu0 0.0
  %5271 = vmatprep.subr.mxu0 0.0
  %5272 = vmatpush1.msra.mxu0 0.0
  %5273 = vmatprep.subr.mxu0 0.0
  %5274 = vmatpush1.msra.mxu0 0.0
  %5275 = vmatprep.subr.mxu0 0.0
  %5276 = vmatpush1.msra.mxu0 0.0
  %5277 = vmatprep.subr.mxu0 0.0
  %5278 = vmatpush1.msra.mxu0 0.0
  %5279 = vmatprep.mubr.f32.mxu0 0.0
  %5280 = vmatmul.mubr.f32.gmra.mrb[0].mxu0 %v5127
  %v5281 = vpop.f32.mrb[0].mxu0
  %v5282 = vadd.f32 0.0, %v5281
  %v5283 = vpop.f32.mrb[0].mxu0
  %v5284 = vadd.f32 0.0, %v5283
  %5285 = vmatprep.mubr.f32.mxu0 0.0
  %5286 = vmatmul.mubr.f32.gmra.mrb[0].mxu0 %v5128
  %v5287 = vpop.f32.mrb[0].mxu0
  %v5288 = vadd.f32 0.0, %v5287
  %v5289 = vpop.f32.mrb[0].mxu0
  %v5290 = vadd.f32 0.0, %v5289
  %5291 = vdwg.mxu0
  %v5292 = vadd.f32 %v5130, %v5205
  %v5293 = vadd.f32 %v5131, %v5207
  %v5294 = vadd.f32 %v5132, %v5282
  %v5295 = vadd.f32 %v5133, %v5284
  %v5296 = vadd.f32 %v5134, %v5211
  %v5297 = vadd.f32 %v5135, %v5213
  %v5298 = vadd.f32 %v5136, %v5288
  %v5299 = vadd.f32 %v5137, %v5290
  %v5300 = vxor.u32 %v5292, 2147483648
  %v5301 = vxor.u32 %v5293, 2147483648
  %v5302 = vxor.u32 %v5296, 2147483648
  %v5303 = vxor.u32 %v5297, 2147483648
  %v5304 = vmul.f32 %v5300, 1.442695
  %v5305 = vpow.pop %v5304
  %v5306 = vmul.f32 %v5301, 1.442695
  %v5307 = vpow.pop %v5306
  %v5308 = vmul.f32 %v5302, 1.442695
  %v5309 = vpow.pop %v5308
  %v5310 = vmul.f32 %v5303, 1.442695
  %v5311 = vpow.pop %v5310
  %v5312 = vadd.f32 %v5305, 1.0
  %v5313 = vadd.f32 %v5307, 1.0
  %v5314 = vadd.f32 %v5309, 1.0
  %v5315 = vadd.f32 %v5311, 1.0
  %v5316 = vrcp.pop %v5312
  %v5317 = vmul.f32 1.0, %v5316
  %v5318 = vrcp.pop %v5313
  %v5319 = vmul.f32 1.0, %v5318
  %v5320 = vrcp.pop %v5314
  %v5321 = vmul.f32 1.0, %v5320
  %v5322 = vrcp.pop %v5315
  %v5323 = vmul.f32 1.0, %v5322
  %v5324 = vtanh.pop %v5294
  %v5325 = vtanh.pop %v5298
  %v5326 = vxor.u32 %v5295, 2147483648
  %v5327 = vxor.u32 %v5299, 2147483648
  %v5328 = vmul.f32 %v5326, 1.442695
  %v5329 = vpow.pop %v5328
  %v5330 = vmul.f32 %v5327, 1.442695
  %v5331 = vpow.pop %v5330
  %v5332 = vadd.f32 %v5329, 1.0
  %v5333 = vadd.f32 %v5331, 1.0
  %v5334 = vrcp.pop %v5332
  %v5335 = vmul.f32 1.0, %v5334
  %v5336 = vrcp.pop %v5333
  %v5337 = vmul.f32 1.0, %v5336
  %v5338 = vmul.f32 %v5319, %v5123
  %v5339 = vmul.f32 %v5323, %v5124
  %v5340 = vmul.f32 %v5317, %v5324
  %v5341 = vmul.f32 %v5321, %v5325
  %v5342 = vadd.f32 %v5338, %v5340
  %v5343 = vadd.f32 %v5339, %v5341
  %v5344 = vtanh.pop %v5342
  %v5345 = vtanh.pop %v5343
  %v5346 = vmul.f32 %v5335, %v5344
  %v5347 = vmul.f32 %v5337, %v5345
  %s5348 = scalar_lea.vmem %s0, 1536
  %v5349 = vld [vmem:[%s5348] sm:$0xff]
  %v5350 = vld [vmem:[%s5348 + $0x8] sm:$0xff]
  %v5351 = vld [vmem:[%s5348 + $0x10] sm:$0xff]
  %v5352 = vld [vmem:[%s5348 + $0x18] sm:$0xff]
  %v5353 = vld [vmem:[%s5348 + $0x20] sm:$0xff]
  %v5354 = vld [vmem:[%s5348 + $0x28] sm:$0xff]
  %v5355 = vld [vmem:[%s5348 + $0x30] sm:$0xff]
  %v5356 = vld [vmem:[%s5348 + $0x38] sm:$0xff]
  %5357 = vmatprep.subr.mxu0 %v26
  %5358 = vmatpush1.msra.mxu0 %v25
  %5359 = vmatprep.subr.mxu0 %v30
  %5360 = vmatpush1.msra.mxu0 %v29
  %5361 = vmatprep.subr.mxu0 %v34
  %5362 = vmatpush1.msra.mxu0 %v33
  %5363 = vmatprep.subr.mxu0 %v38
  %5364 = vmatpush1.msra.mxu0 %v37
  %5365 = vmatprep.subr.mxu0 %v42
  %5366 = vmatpush1.msra.mxu0 %v41
  %5367 = vmatprep.subr.mxu0 %v46
  %5368 = vmatpush1.msra.mxu0 %v45
  %5369 = vmatprep.subr.mxu0 %v50
  %5370 = vmatpush1.msra.mxu0 %v49
  %5371 = vmatprep.subr.mxu0 %v54
  %5372 = vmatpush1.msra.mxu0 %v53
  %5373 = vmatprep.subr.mxu0 %v58
  %5374 = vmatpush1.msra.mxu0 %v57
  %5375 = vmatprep.subr.mxu0 %v62
  %5376 = vmatpush1.msra.mxu0 %v61
  %5377 = vmatprep.subr.mxu0 %v66
  %5378 = vmatpush1.msra.mxu0 %v65
  %5379 = vmatprep.subr.mxu0 %v70
  %5380 = vmatpush1.msra.mxu0 %v69
  %5381 = vmatprep.subr.mxu0 %v74
  %5382 = vmatpush1.msra.mxu0 %v73
  %5383 = vmatprep.subr.mxu0 %v78
  %5384 = vmatpush1.msra.mxu0 %v77
  %5385 = vmatprep.subr.mxu0 %v82
  %5386 = vmatpush1.msra.mxu0 %v81
  %5387 = vmatprep.subr.mxu0 %v86
  %5388 = vmatpush1.msra.mxu0 %v85
  %5389 = vmatprep.subr.mxu0 0.0
  %5390 = vmatpush1.msra.mxu0 0.0
  %5391 = vmatprep.subr.mxu0 0.0
  %5392 = vmatpush1.msra.mxu0 0.0
  %5393 = vmatprep.subr.mxu0 0.0
  %5394 = vmatpush1.msra.mxu0 0.0
  %5395 = vmatprep.subr.mxu0 0.0
  %5396 = vmatpush1.msra.mxu0 0.0
  %5397 = vmatprep.subr.mxu0 0.0
  %5398 = vmatpush1.msra.mxu0 0.0
  %5399 = vmatprep.subr.mxu0 0.0
  %5400 = vmatpush1.msra.mxu0 0.0
  %5401 = vmatprep.subr.mxu0 0.0
  %5402 = vmatpush1.msra.mxu0 0.0
  %5403 = vmatprep.subr.mxu0 0.0
  %5404 = vmatpush1.msra.mxu0 0.0
  %5405 = vmatprep.subr.mxu0 0.0
  %5406 = vmatpush1.msra.mxu0 0.0
  %5407 = vmatprep.subr.mxu0 0.0
  %5408 = vmatpush1.msra.mxu0 0.0
  %5409 = vmatprep.subr.mxu0 0.0
  %5410 = vmatpush1.msra.mxu0 0.0
  %5411 = vmatprep.subr.mxu0 0.0
  %5412 = vmatpush1.msra.mxu0 0.0
  %5413 = vmatprep.subr.mxu0 0.0
  %5414 = vmatpush1.msra.mxu0 0.0
  %5415 = vmatprep.subr.mxu0 0.0
  %5416 = vmatpush1.msra.mxu0 0.0
  %5417 = vmatprep.subr.mxu0 0.0
  %5418 = vmatpush1.msra.mxu0 0.0
  %5419 = vmatprep.subr.mxu0 0.0
  %5420 = vmatpush1.msra.mxu0 0.0
  %5421 = vmatprep.mubr.f32.mxu0 0.0
  %5422 = vmatmul.mubr.f32.gmra.mrb[0].mxu0 %v5346
  %v5423 = vpop.f32.mrb[0].mxu0
  %v5424 = vadd.f32 0.0, %v5423
  %v5425 = vpop.f32.mrb[0].mxu0
  %v5426 = vadd.f32 0.0, %v5425
  %5427 = vmatprep.mubr.f32.mxu0 0.0
  %5428 = vmatmul.mubr.f32.gmra.mrb[0].mxu0 %v5347
  %v5429 = vpop.f32.mrb[0].mxu0
  %v5430 = vadd.f32 0.0, %v5429
  %v5431 = vpop.f32.mrb[0].mxu0
  %v5432 = vadd.f32 0.0, %v5431
  %5433 = vdwg.mxu0
  %5434 = vmatprep.subr.mxu0 %v28
  %5435 = vmatpush1.msra.mxu0 %v27
  %5436 = vmatprep.subr.mxu0 %v32
  %5437 = vmatpush1.msra.mxu0 %v31
  %5438 = vmatprep.subr.mxu0 %v36
  %5439 = vmatpush1.msra.mxu0 %v35
  %5440 = vmatprep.subr.mxu0 %v40
  %5441 = vmatpush1.msra.mxu0 %v39
  %5442 = vmatprep.subr.mxu0 %v44
  %5443 = vmatpush1.msra.mxu0 %v43
  %5444 = vmatprep.subr.mxu0 %v48
  %5445 = vmatpush1.msra.mxu0 %v47
  %5446 = vmatprep.subr.mxu0 %v52
  %5447 = vmatpush1.msra.mxu0 %v51
  %5448 = vmatprep.subr.mxu0 %v56
  %5449 = vmatpush1.msra.mxu0 %v55
  %5450 = vmatprep.subr.mxu0 %v60
  %5451 = vmatpush1.msra.mxu0 %v59
  %5452 = vmatprep.subr.mxu0 %v64
  %5453 = vmatpush1.msra.mxu0 %v63
  %5454 = vmatprep.subr.mxu0 %v68
  %5455 = vmatpush1.msra.mxu0 %v67
  %5456 = vmatprep.subr.mxu0 %v72
  %5457 = vmatpush1.msra.mxu0 %v71
  %5458 = vmatprep.subr.mxu0 %v76
  %5459 = vmatpush1.msra.mxu0 %v75
  %5460 = vmatprep.subr.mxu0 %v80
  %5461 = vmatpush1.msra.mxu0 %v79
  %5462 = vmatprep.subr.mxu0 %v84
  %5463 = vmatpush1.msra.mxu0 %v83
  %5464 = vmatprep.subr.mxu0 %v88
  %5465 = vmatpush1.msra.mxu0 %v87
  %5466 = vmatprep.subr.mxu0 0.0
  %5467 = vmatpush1.msra.mxu0 0.0
  %5468 = vmatprep.subr.mxu0 0.0
  %5469 = vmatpush1.msra.mxu0 0.0
  %5470 = vmatprep.subr.mxu0 0.0
  %5471 = vmatpush1.msra.mxu0 0.0
  %5472 = vmatprep.subr.mxu0 0.0
  %5473 = vmatpush1.msra.mxu0 0.0
  %5474 = vmatprep.subr.mxu0 0.0
  %5475 = vmatpush1.msra.mxu0 0.0
  %5476 = vmatprep.subr.mxu0 0.0
  %5477 = vmatpush1.msra.mxu0 0.0
  %5478 = vmatprep.subr.mxu0 0.0
  %5479 = vmatpush1.msra.mxu0 0.0
  %5480 = vmatprep.subr.mxu0 0.0
  %5481 = vmatpush1.msra.mxu0 0.0
  %5482 = vmatprep.subr.mxu0 0.0
  %5483 = vmatpush1.msra.mxu0 0.0
  %5484 = vmatprep.subr.mxu0 0.0
  %5485 = vmatpush1.msra.mxu0 0.0
  %5486 = vmatprep.subr.mxu0 0.0
  %5487 = vmatpush1.msra.mxu0 0.0
  %5488 = vmatprep.subr.mxu0 0.0
  %5489 = vmatpush1.msra.mxu0 0.0
  %5490 = vmatprep.subr.mxu0 0.0
  %5491 = vmatpush1.msra.mxu0 0.0
  %5492 = vmatprep.subr.mxu0 0.0
  %5493 = vmatpush1.msra.mxu0 0.0
  %5494 = vmatprep.subr.mxu0 0.0
  %5495 = vmatpush1.msra.mxu0 0.0
  %5496 = vmatprep.subr.mxu0 0.0
  %5497 = vmatpush1.msra.mxu0 0.0
  %5498 = vmatprep.mubr.f32.mxu0 0.0
  %5499 = vmatmul.mubr.f32.gmra.mrb[0].mxu0 %v5346
  %v5500 = vpop.f32.mrb[0].mxu0
  %v5501 = vadd.f32 0.0, %v5500
  %v5502 = vpop.f32.mrb[0].mxu0
  %v5503 = vadd.f32 0.0, %v5502
  %5504 = vmatprep.mubr.f32.mxu0 0.0
  %5505 = vmatmul.mubr.f32.gmra.mrb[0].mxu0 %v5347
  %v5506 = vpop.f32.mrb[0].mxu0
  %v5507 = vadd.f32 0.0, %v5506
  %v5508 = vpop.f32.mrb[0].mxu0
  %v5509 = vadd.f32 0.0, %v5508
  %5510 = vdwg.mxu0
  %v5511 = vadd.f32 %v5349, %v5424
  %v5512 = vadd.f32 %v5350, %v5426
  %v5513 = vadd.f32 %v5351, %v5501
  %v5514 = vadd.f32 %v5352, %v5503
  %v5515 = vadd.f32 %v5353, %v5430
  %v5516 = vadd.f32 %v5354, %v5432
  %v5517 = vadd.f32 %v5355, %v5507
  %v5518 = vadd.f32 %v5356, %v5509
  %v5519 = vxor.u32 %v5511, 2147483648
  %v5520 = vxor.u32 %v5512, 2147483648
  %v5521 = vxor.u32 %v5515, 2147483648
  %v5522 = vxor.u32 %v5516, 2147483648
  %v5523 = vmul.f32 %v5519, 1.442695
  %v5524 = vpow.pop %v5523
  %v5525 = vmul.f32 %v5520, 1.442695
  %v5526 = vpow.pop %v5525
  %v5527 = vmul.f32 %v5521, 1.442695
  %v5528 = vpow.pop %v5527
  %v5529 = vmul.f32 %v5522, 1.442695
  %v5530 = vpow.pop %v5529
  %v5531 = vadd.f32 %v5524, 1.0
  %v5532 = vadd.f32 %v5526, 1.0
  %v5533 = vadd.f32 %v5528, 1.0
  %v5534 = vadd.f32 %v5530, 1.0
  %v5535 = vrcp.pop %v5531
  %v5536 = vmul.f32 1.0, %v5535
  %v5537 = vrcp.pop %v5532
  %v5538 = vmul.f32 1.0, %v5537
  %v5539 = vrcp.pop %v5533
  %v5540 = vmul.f32 1.0, %v5539
  %v5541 = vrcp.pop %v5534
  %v5542 = vmul.f32 1.0, %v5541
  %v5543 = vtanh.pop %v5513
  %v5544 = vtanh.pop %v5517
  %v5545 = vxor.u32 %v5514, 2147483648
  %v5546 = vxor.u32 %v5518, 2147483648
  %v5547 = vmul.f32 %v5545, 1.442695
  %v5548 = vpow.pop %v5547
  %v5549 = vmul.f32 %v5546, 1.442695
  %v5550 = vpow.pop %v5549
  %v5551 = vadd.f32 %v5548, 1.0
  %v5552 = vadd.f32 %v5550, 1.0
  %v5553 = vrcp.pop %v5551
  %v5554 = vmul.f32 1.0, %v5553
  %v5555 = vrcp.pop %v5552
  %v5556 = vmul.f32 1.0, %v5555
  %v5557 = vmul.f32 %v5538, %v5342
  %v5558 = vmul.f32 %v5542, %v5343
  %v5559 = vmul.f32 %v5536, %v5543
  %v5560 = vmul.f32 %v5540, %v5544
  %v5561 = vadd.f32 %v5557, %v5559
  %v5562 = vadd.f32 %v5558, %v5560
  %v5563 = vtanh.pop %v5561
  %v5564 = vtanh.pop %v5562
  %v5565 = vmul.f32 %v5554, %v5563
  %v5566 = vmul.f32 %v5556, %v5564
  %s5567 = scalar_lea.vmem %s0, 1600
  %v5568 = vld [vmem:[%s5567] sm:$0xff]
  %v5569 = vld [vmem:[%s5567 + $0x8] sm:$0xff]
  %v5570 = vld [vmem:[%s5567 + $0x10] sm:$0xff]
  %v5571 = vld [vmem:[%s5567 + $0x18] sm:$0xff]
  %v5572 = vld [vmem:[%s5567 + $0x20] sm:$0xff]
  %v5573 = vld [vmem:[%s5567 + $0x28] sm:$0xff]
  %v5574 = vld [vmem:[%s5567 + $0x30] sm:$0xff]
  %v5575 = vld [vmem:[%s5567 + $0x38] sm:$0xff]
  %5576 = vmatprep.subr.mxu0 %v26
  %5577 = vmatpush1.msra.mxu0 %v25
  %5578 = vmatprep.subr.mxu0 %v30
  %5579 = vmatpush1.msra.mxu0 %v29
  %5580 = vmatprep.subr.mxu0 %v34
  %5581 = vmatpush1.msra.mxu0 %v33
  %5582 = vmatprep.subr.mxu0 %v38
  %5583 = vmatpush1.msra.mxu0 %v37
  %5584 = vmatprep.subr.mxu0 %v42
  %5585 = vmatpush1.msra.mxu0 %v41
  %5586 = vmatprep.subr.mxu0 %v46
  %5587 = vmatpush1.msra.mxu0 %v45
  %5588 = vmatprep.subr.mxu0 %v50
  %5589 = vmatpush1.msra.mxu0 %v49
  %5590 = vmatprep.subr.mxu0 %v54
  %5591 = vmatpush1.msra.mxu0 %v53
  %5592 = vmatprep.subr.mxu0 %v58
  %5593 = vmatpush1.msra.mxu0 %v57
  %5594 = vmatprep.subr.mxu0 %v62
  %5595 = vmatpush1.msra.mxu0 %v61
  %5596 = vmatprep.subr.mxu0 %v66
  %5597 = vmatpush1.msra.mxu0 %v65
  %5598 = vmatprep.subr.mxu0 %v70
  %5599 = vmatpush1.msra.mxu0 %v69
  %5600 = vmatprep.subr.mxu0 %v74
  %5601 = vmatpush1.msra.mxu0 %v73
  %5602 = vmatprep.subr.mxu0 %v78
  %5603 = vmatpush1.msra.mxu0 %v77
  %5604 = vmatprep.subr.mxu0 %v82
  %5605 = vmatpush1.msra.mxu0 %v81
  %5606 = vmatprep.subr.mxu0 %v86
  %5607 = vmatpush1.msra.mxu0 %v85
  %5608 = vmatprep.subr.mxu0 0.0
  %5609 = vmatpush1.msra.mxu0 0.0
  %5610 = vmatprep.subr.mxu0 0.0
  %5611 = vmatpush1.msra.mxu0 0.0
  %5612 = vmatprep.subr.mxu0 0.0
  %5613 = vmatpush1.msra.mxu0 0.0
  %5614 = vmatprep.subr.mxu0 0.0
  %5615 = vmatpush1.msra.mxu0 0.0
  %5616 = vmatprep.subr.mxu0 0.0
  %5617 = vmatpush1.msra.mxu0 0.0
  %5618 = vmatprep.subr.mxu0 0.0
  %5619 = vmatpush1.msra.mxu0 0.0
  %5620 = vmatprep.subr.mxu0 0.0
  %5621 = vmatpush1.msra.mxu0 0.0
  %5622 = vmatprep.subr.mxu0 0.0
  %5623 = vmatpush1.msra.mxu0 0.0
  %5624 = vmatprep.subr.mxu0 0.0
  %5625 = vmatpush1.msra.mxu0 0.0
  %5626 = vmatprep.subr.mxu0 0.0
  %5627 = vmatpush1.msra.mxu0 0.0
  %5628 = vmatprep.subr.mxu0 0.0
  %5629 = vmatpush1.msra.mxu0 0.0
  %5630 = vmatprep.subr.mxu0 0.0
  %5631 = vmatpush1.msra.mxu0 0.0
  %5632 = vmatprep.subr.mxu0 0.0
  %5633 = vmatpush1.msra.mxu0 0.0
  %5634 = vmatprep.subr.mxu0 0.0
  %5635 = vmatpush1.msra.mxu0 0.0
  %5636 = vmatprep.subr.mxu0 0.0
  %5637 = vmatpush1.msra.mxu0 0.0
  %5638 = vmatprep.subr.mxu0 0.0
  %5639 = vmatpush1.msra.mxu0 0.0
  %5640 = vmatprep.mubr.f32.mxu0 0.0
  %5641 = vmatmul.mubr.f32.gmra.mrb[0].mxu0 %v5565
  %v5642 = vpop.f32.mrb[0].mxu0
  %v5643 = vadd.f32 0.0, %v5642
  %v5644 = vpop.f32.mrb[0].mxu0
  %v5645 = vadd.f32 0.0, %v5644
  %5646 = vmatprep.mubr.f32.mxu0 0.0
  %5647 = vmatmul.mubr.f32.gmra.mrb[0].mxu0 %v5566
  %v5648 = vpop.f32.mrb[0].mxu0
  %v5649 = vadd.f32 0.0, %v5648
  %v5650 = vpop.f32.mrb[0].mxu0
  %v5651 = vadd.f32 0.0, %v5650
  %5652 = vdwg.mxu0
  %5653 = vmatprep.subr.mxu0 %v28
  %5654 = vmatpush1.msra.mxu0 %v27
  %5655 = vmatprep.subr.mxu0 %v32
  %5656 = vmatpush1.msra.mxu0 %v31
  %5657 = vmatprep.subr.mxu0 %v36
  %5658 = vmatpush1.msra.mxu0 %v35
  %5659 = vmatprep.subr.mxu0 %v40
  %5660 = vmatpush1.msra.mxu0 %v39
  %5661 = vmatprep.subr.mxu0 %v44
  %5662 = vmatpush1.msra.mxu0 %v43
  %5663 = vmatprep.subr.mxu0 %v48
  %5664 = vmatpush1.msra.mxu0 %v47
  %5665 = vmatprep.subr.mxu0 %v52
  %5666 = vmatpush1.msra.mxu0 %v51
  %5667 = vmatprep.subr.mxu0 %v56
  %5668 = vmatpush1.msra.mxu0 %v55
  %5669 = vmatprep.subr.mxu0 %v60
  %5670 = vmatpush1.msra.mxu0 %v59
  %5671 = vmatprep.subr.mxu0 %v64
  %5672 = vmatpush1.msra.mxu0 %v63
  %5673 = vmatprep.subr.mxu0 %v68
  %5674 = vmatpush1.msra.mxu0 %v67
  %5675 = vmatprep.subr.mxu0 %v72
  %5676 = vmatpush1.msra.mxu0 %v71
  %5677 = vmatprep.subr.mxu0 %v76
  %5678 = vmatpush1.msra.mxu0 %v75
  %5679 = vmatprep.subr.mxu0 %v80
  %5680 = vmatpush1.msra.mxu0 %v79
  %5681 = vmatprep.subr.mxu0 %v84
  %5682 = vmatpush1.msra.mxu0 %v83
  %5683 = vmatprep.subr.mxu0 %v88
  %5684 = vmatpush1.msra.mxu0 %v87
  %5685 = vmatprep.subr.mxu0 0.0
  %5686 = vmatpush1.msra.mxu0 0.0
  %5687 = vmatprep.subr.mxu0 0.0
  %5688 = vmatpush1.msra.mxu0 0.0
  %5689 = vmatprep.subr.mxu0 0.0
  %5690 = vmatpush1.msra.mxu0 0.0
  %5691 = vmatprep.subr.mxu0 0.0
  %5692 = vmatpush1.msra.mxu0 0.0
  %5693 = vmatprep.subr.mxu0 0.0
  %5694 = vmatpush1.msra.mxu0 0.0
  %5695 = vmatprep.subr.mxu0 0.0
  %5696 = vmatpush1.msra.mxu0 0.0
  %5697 = vmatprep.subr.mxu0 0.0
  %5698 = vmatpush1.msra.mxu0 0.0
  %5699 = vmatprep.subr.mxu0 0.0
  %5700 = vmatpush1.msra.mxu0 0.0
  %5701 = vmatprep.subr.mxu0 0.0
  %5702 = vmatpush1.msra.mxu0 0.0
  %5703 = vmatprep.subr.mxu0 0.0
  %5704 = vmatpush1.msra.mxu0 0.0
  %5705 = vmatprep.subr.mxu0 0.0
  %5706 = vmatpush1.msra.mxu0 0.0
  %5707 = vmatprep.subr.mxu0 0.0
  %5708 = vmatpush1.msra.mxu0 0.0
  %5709 = vmatprep.subr.mxu0 0.0
  %5710 = vmatpush1.msra.mxu0 0.0
  %5711 = vmatprep.subr.mxu0 0.0
  %5712 = vmatpush1.msra.mxu0 0.0
  %5713 = vmatprep.subr.mxu0 0.0
  %5714 = vmatpush1.msra.mxu0 0.0
  %5715 = vmatprep.subr.mxu0 0.0
  %5716 = vmatpush1.msra.mxu0 0.0
  %5717 = vmatprep.mubr.f32.mxu0 0.0
  %5718 = vmatmul.mubr.f32.gmra.mrb[0].mxu0 %v5565
  %v5719 = vpop.f32.mrb[0].mxu0
  %v5720 = vadd.f32 0.0, %v5719
  %v5721 = vpop.f32.mrb[0].mxu0
  %v5722 = vadd.f32 0.0, %v5721
  %5723 = vmatprep.mubr.f32.mxu0 0.0
  %5724 = vmatmul.mubr.f32.gmra.mrb[0].mxu0 %v5566
  %v5725 = vpop.f32.mrb[0].mxu0
  %v5726 = vadd.f32 0.0, %v5725
  %v5727 = vpop.f32.mrb[0].mxu0
  %v5728 = vadd.f32 0.0, %v5727
  %5729 = vdwg.mxu0
  %v5730 = vadd.f32 %v5568, %v5643
  %v5731 = vadd.f32 %v5569, %v5645
  %v5732 = vadd.f32 %v5570, %v5720
  %v5733 = vadd.f32 %v5571, %v5722
  %v5734 = vadd.f32 %v5572, %v5649
  %v5735 = vadd.f32 %v5573, %v5651
  %v5736 = vadd.f32 %v5574, %v5726
  %v5737 = vadd.f32 %v5575, %v5728
  %v5738 = vxor.u32 %v5730, 2147483648
  %v5739 = vxor.u32 %v5731, 2147483648
  %v5740 = vxor.u32 %v5734, 2147483648
  %v5741 = vxor.u32 %v5735, 2147483648
  %v5742 = vmul.f32 %v5738, 1.442695
  %v5743 = vpow.pop %v5742
  %v5744 = vmul.f32 %v5739, 1.442695
  %v5745 = vpow.pop %v5744
  %v5746 = vmul.f32 %v5740, 1.442695
  %v5747 = vpow.pop %v5746
  %v5748 = vmul.f32 %v5741, 1.442695
  %v5749 = vpow.pop %v5748
  %v5750 = vadd.f32 %v5743, 1.0
  %v5751 = vadd.f32 %v5745, 1.0
  %v5752 = vadd.f32 %v5747, 1.0
  %v5753 = vadd.f32 %v5749, 1.0
  %v5754 = vrcp.pop %v5750
  %v5755 = vmul.f32 1.0, %v5754
  %v5756 = vrcp.pop %v5751
  %v5757 = vmul.f32 1.0, %v5756
  %v5758 = vrcp.pop %v5752
  %v5759 = vmul.f32 1.0, %v5758
  %v5760 = vrcp.pop %v5753
  %v5761 = vmul.f32 1.0, %v5760
  %v5762 = vtanh.pop %v5732
  %v5763 = vtanh.pop %v5736
  %v5764 = vxor.u32 %v5733, 2147483648
  %v5765 = vxor.u32 %v5737, 2147483648
  %v5766 = vmul.f32 %v5764, 1.442695
  %v5767 = vpow.pop %v5766
  %v5768 = vmul.f32 %v5765, 1.442695
  %v5769 = vpow.pop %v5768
  %v5770 = vadd.f32 %v5767, 1.0
  %v5771 = vadd.f32 %v5769, 1.0
  %v5772 = vrcp.pop %v5770
  %v5773 = vmul.f32 1.0, %v5772
  %v5774 = vrcp.pop %v5771
  %v5775 = vmul.f32 1.0, %v5774
  %v5776 = vmul.f32 %v5757, %v5561
  %v5777 = vmul.f32 %v5761, %v5562
  %v5778 = vmul.f32 %v5755, %v5762
  %v5779 = vmul.f32 %v5759, %v5763
  %v5780 = vadd.f32 %v5776, %v5778
  %v5781 = vadd.f32 %v5777, %v5779
  %v5782 = vtanh.pop %v5780
  %v5783 = vtanh.pop %v5781
  %v5784 = vmul.f32 %v5773, %v5782
  %v5785 = vmul.f32 %v5775, %v5783
  %s5786 = scalar_lea.vmem %s0, 1664
  %v5787 = vld [vmem:[%s5786] sm:$0xff]
  %v5788 = vld [vmem:[%s5786 + $0x8] sm:$0xff]
  %v5789 = vld [vmem:[%s5786 + $0x10] sm:$0xff]
  %v5790 = vld [vmem:[%s5786 + $0x18] sm:$0xff]
  %v5791 = vld [vmem:[%s5786 + $0x20] sm:$0xff]
  %v5792 = vld [vmem:[%s5786 + $0x28] sm:$0xff]
  %v5793 = vld [vmem:[%s5786 + $0x30] sm:$0xff]
  %v5794 = vld [vmem:[%s5786 + $0x38] sm:$0xff]
  %5795 = vmatprep.subr.mxu0 %v26
  %5796 = vmatpush1.msra.mxu0 %v25
  %5797 = vmatprep.subr.mxu0 %v30
  %5798 = vmatpush1.msra.mxu0 %v29
  %5799 = vmatprep.subr.mxu0 %v34
  %5800 = vmatpush1.msra.mxu0 %v33
  %5801 = vmatprep.subr.mxu0 %v38
  %5802 = vmatpush1.msra.mxu0 %v37
  %5803 = vmatprep.subr.mxu0 %v42
  %5804 = vmatpush1.msra.mxu0 %v41
  %5805 = vmatprep.subr.mxu0 %v46
  %5806 = vmatpush1.msra.mxu0 %v45
  %5807 = vmatprep.subr.mxu0 %v50
  %5808 = vmatpush1.msra.mxu0 %v49
  %5809 = vmatprep.subr.mxu0 %v54
  %5810 = vmatpush1.msra.mxu0 %v53
  %5811 = vmatprep.subr.mxu0 %v58
  %5812 = vmatpush1.msra.mxu0 %v57
  %5813 = vmatprep.subr.mxu0 %v62
  %5814 = vmatpush1.msra.mxu0 %v61
  %5815 = vmatprep.subr.mxu0 %v66
  %5816 = vmatpush1.msra.mxu0 %v65
  %5817 = vmatprep.subr.mxu0 %v70
  %5818 = vmatpush1.msra.mxu0 %v69
  %5819 = vmatprep.subr.mxu0 %v74
  %5820 = vmatpush1.msra.mxu0 %v73
  %5821 = vmatprep.subr.mxu0 %v78
  %5822 = vmatpush1.msra.mxu0 %v77
  %5823 = vmatprep.subr.mxu0 %v82
  %5824 = vmatpush1.msra.mxu0 %v81
  %5825 = vmatprep.subr.mxu0 %v86
  %5826 = vmatpush1.msra.mxu0 %v85
  %5827 = vmatprep.subr.mxu0 0.0
  %5828 = vmatpush1.msra.mxu0 0.0
  %5829 = vmatprep.subr.mxu0 0.0
  %5830 = vmatpush1.msra.mxu0 0.0
  %5831 = vmatprep.subr.mxu0 0.0
  %5832 = vmatpush1.msra.mxu0 0.0
  %5833 = vmatprep.subr.mxu0 0.0
  %5834 = vmatpush1.msra.mxu0 0.0
  %5835 = vmatprep.subr.mxu0 0.0
  %5836 = vmatpush1.msra.mxu0 0.0
  %5837 = vmatprep.subr.mxu0 0.0
  %5838 = vmatpush1.msra.mxu0 0.0
  %5839 = vmatprep.subr.mxu0 0.0
  %5840 = vmatpush1.msra.mxu0 0.0
  %5841 = vmatprep.subr.mxu0 0.0
  %5842 = vmatpush1.msra.mxu0 0.0
  %5843 = vmatprep.subr.mxu0 0.0
  %5844 = vmatpush1.msra.mxu0 0.0
  %5845 = vmatprep.subr.mxu0 0.0
  %5846 = vmatpush1.msra.mxu0 0.0
  %5847 = vmatprep.subr.mxu0 0.0
  %5848 = vmatpush1.msra.mxu0 0.0
  %5849 = vmatprep.subr.mxu0 0.0
  %5850 = vmatpush1.msra.mxu0 0.0
  %5851 = vmatprep.subr.mxu0 0.0
  %5852 = vmatpush1.msra.mxu0 0.0
  %5853 = vmatprep.subr.mxu0 0.0
  %5854 = vmatpush1.msra.mxu0 0.0
  %5855 = vmatprep.subr.mxu0 0.0
  %5856 = vmatpush1.msra.mxu0 0.0
  %5857 = vmatprep.subr.mxu0 0.0
  %5858 = vmatpush1.msra.mxu0 0.0
  %5859 = vmatprep.mubr.f32.mxu0 0.0
  %5860 = vmatmul.mubr.f32.gmra.mrb[0].mxu0 %v5784
  %v5861 = vpop.f32.mrb[0].mxu0
  %v5862 = vadd.f32 0.0, %v5861
  %v5863 = vpop.f32.mrb[0].mxu0
  %v5864 = vadd.f32 0.0, %v5863
  %5865 = vmatprep.mubr.f32.mxu0 0.0
  %5866 = vmatmul.mubr.f32.gmra.mrb[0].mxu0 %v5785
  %v5867 = vpop.f32.mrb[0].mxu0
  %v5868 = vadd.f32 0.0, %v5867
  %v5869 = vpop.f32.mrb[0].mxu0
  %v5870 = vadd.f32 0.0, %v5869
  %5871 = vdwg.mxu0
  %5872 = vmatprep.subr.mxu0 %v28
  %5873 = vmatpush1.msra.mxu0 %v27
  %5874 = vmatprep.subr.mxu0 %v32
  %5875 = vmatpush1.msra.mxu0 %v31
  %5876 = vmatprep.subr.mxu0 %v36
  %5877 = vmatpush1.msra.mxu0 %v35
  %5878 = vmatprep.subr.mxu0 %v40
  %5879 = vmatpush1.msra.mxu0 %v39
  %5880 = vmatprep.subr.mxu0 %v44
  %5881 = vmatpush1.msra.mxu0 %v43
  %5882 = vmatprep.subr.mxu0 %v48
  %5883 = vmatpush1.msra.mxu0 %v47
  %5884 = vmatprep.subr.mxu0 %v52
  %5885 = vmatpush1.msra.mxu0 %v51
  %5886 = vmatprep.subr.mxu0 %v56
  %5887 = vmatpush1.msra.mxu0 %v55
  %5888 = vmatprep.subr.mxu0 %v60
  %5889 = vmatpush1.msra.mxu0 %v59
  %5890 = vmatprep.subr.mxu0 %v64
  %5891 = vmatpush1.msra.mxu0 %v63
  %5892 = vmatprep.subr.mxu0 %v68
  %5893 = vmatpush1.msra.mxu0 %v67
  %5894 = vmatprep.subr.mxu0 %v72
  %5895 = vmatpush1.msra.mxu0 %v71
  %5896 = vmatprep.subr.mxu0 %v76
  %5897 = vmatpush1.msra.mxu0 %v75
  %5898 = vmatprep.subr.mxu0 %v80
  %5899 = vmatpush1.msra.mxu0 %v79
  %5900 = vmatprep.subr.mxu0 %v84
  %5901 = vmatpush1.msra.mxu0 %v83
  %5902 = vmatprep.subr.mxu0 %v88
  %5903 = vmatpush1.msra.mxu0 %v87
  %5904 = vmatprep.subr.mxu0 0.0
  %5905 = vmatpush1.msra.mxu0 0.0
  %5906 = vmatprep.subr.mxu0 0.0
  %5907 = vmatpush1.msra.mxu0 0.0
  %5908 = vmatprep.subr.mxu0 0.0
  %5909 = vmatpush1.msra.mxu0 0.0
  %5910 = vmatprep.subr.mxu0 0.0
  %5911 = vmatpush1.msra.mxu0 0.0
  %5912 = vmatprep.subr.mxu0 0.0
  %5913 = vmatpush1.msra.mxu0 0.0
  %5914 = vmatprep.subr.mxu0 0.0
  %5915 = vmatpush1.msra.mxu0 0.0
  %5916 = vmatprep.subr.mxu0 0.0
  %5917 = vmatpush1.msra.mxu0 0.0
  %5918 = vmatprep.subr.mxu0 0.0
  %5919 = vmatpush1.msra.mxu0 0.0
  %5920 = vmatprep.subr.mxu0 0.0
  %5921 = vmatpush1.msra.mxu0 0.0
  %5922 = vmatprep.subr.mxu0 0.0
  %5923 = vmatpush1.msra.mxu0 0.0
  %5924 = vmatprep.subr.mxu0 0.0
  %5925 = vmatpush1.msra.mxu0 0.0
  %5926 = vmatprep.subr.mxu0 0.0
  %5927 = vmatpush1.msra.mxu0 0.0
  %5928 = vmatprep.subr.mxu0 0.0
  %5929 = vmatpush1.msra.mxu0 0.0
  %5930 = vmatprep.subr.mxu0 0.0
  %5931 = vmatpush1.msra.mxu0 0.0
  %5932 = vmatprep.subr.mxu0 0.0
  %5933 = vmatpush1.msra.mxu0 0.0
  %5934 = vmatprep.subr.mxu0 0.0
  %5935 = vmatpush1.msra.mxu0 0.0
  %5936 = vmatprep.mubr.f32.mxu0 0.0
  %5937 = vmatmul.mubr.f32.gmra.mrb[0].mxu0 %v5784
  %v5938 = vpop.f32.mrb[0].mxu0
  %v5939 = vadd.f32 0.0, %v5938
  %v5940 = vpop.f32.mrb[0].mxu0
  %v5941 = vadd.f32 0.0, %v5940
  %5942 = vmatprep.mubr.f32.mxu0 0.0
  %5943 = vmatmul.mubr.f32.gmra.mrb[0].mxu0 %v5785
  %v5944 = vpop.f32.mrb[0].mxu0
  %v5945 = vadd.f32 0.0, %v5944
  %v5946 = vpop.f32.mrb[0].mxu0
  %v5947 = vadd.f32 0.0, %v5946
  %5948 = vdwg.mxu0
  %v5949 = vadd.f32 %v5787, %v5862
  %v5950 = vadd.f32 %v5788, %v5864
  %v5951 = vadd.f32 %v5789, %v5939
  %v5952 = vadd.f32 %v5790, %v5941
  %v5953 = vadd.f32 %v5791, %v5868
  %v5954 = vadd.f32 %v5792, %v5870
  %v5955 = vadd.f32 %v5793, %v5945
  %v5956 = vadd.f32 %v5794, %v5947
  %v5957 = vxor.u32 %v5949, 2147483648
  %v5958 = vxor.u32 %v5950, 2147483648
  %v5959 = vxor.u32 %v5953, 2147483648
  %v5960 = vxor.u32 %v5954, 2147483648
  %v5961 = vmul.f32 %v5957, 1.442695
  %v5962 = vpow.pop %v5961
  %v5963 = vmul.f32 %v5958, 1.442695
  %v5964 = vpow.pop %v5963
  %v5965 = vmul.f32 %v5959, 1.442695
  %v5966 = vpow.pop %v5965
  %v5967 = vmul.f32 %v5960, 1.442695
  %v5968 = vpow.pop %v5967
  %v5969 = vadd.f32 %v5962, 1.0
  %v5970 = vadd.f32 %v5964, 1.0
  %v5971 = vadd.f32 %v5966, 1.0
  %v5972 = vadd.f32 %v5968, 1.0
  %v5973 = vrcp.pop %v5969
  %v5974 = vmul.f32 1.0, %v5973
  %v5975 = vrcp.pop %v5970
  %v5976 = vmul.f32 1.0, %v5975
  %v5977 = vrcp.pop %v5971
  %v5978 = vmul.f32 1.0, %v5977
  %v5979 = vrcp.pop %v5972
  %v5980 = vmul.f32 1.0, %v5979
  %v5981 = vtanh.pop %v5951
  %v5982 = vtanh.pop %v5955
  %v5983 = vxor.u32 %v5952, 2147483648
  %v5984 = vxor.u32 %v5956, 2147483648
  %v5985 = vmul.f32 %v5983, 1.442695
  %v5986 = vpow.pop %v5985
  %v5987 = vmul.f32 %v5984, 1.442695
  %v5988 = vpow.pop %v5987
  %v5989 = vadd.f32 %v5986, 1.0
  %v5990 = vadd.f32 %v5988, 1.0
  %v5991 = vrcp.pop %v5989
  %v5992 = vmul.f32 1.0, %v5991
  %v5993 = vrcp.pop %v5990
  %v5994 = vmul.f32 1.0, %v5993
  %v5995 = vmul.f32 %v5976, %v5780
  %v5996 = vmul.f32 %v5980, %v5781
  %v5997 = vmul.f32 %v5974, %v5981
  %v5998 = vmul.f32 %v5978, %v5982
  %v5999 = vadd.f32 %v5995, %v5997
  %v6000 = vadd.f32 %v5996, %v5998
  %v6001 = vtanh.pop %v5999
  %v6002 = vtanh.pop %v6000
  %v6003 = vmul.f32 %v5992, %v6001
  %v6004 = vmul.f32 %v5994, %v6002
  %s6005 = scalar_lea.vmem %s0, 1728
  %v6006 = vld [vmem:[%s6005] sm:$0xff]
  %v6007 = vld [vmem:[%s6005 + $0x8] sm:$0xff]
  %v6008 = vld [vmem:[%s6005 + $0x10] sm:$0xff]
  %v6009 = vld [vmem:[%s6005 + $0x18] sm:$0xff]
  %v6010 = vld [vmem:[%s6005 + $0x20] sm:$0xff]
  %v6011 = vld [vmem:[%s6005 + $0x28] sm:$0xff]
  %v6012 = vld [vmem:[%s6005 + $0x30] sm:$0xff]
  %v6013 = vld [vmem:[%s6005 + $0x38] sm:$0xff]
  %6014 = vmatprep.subr.mxu0 %v26
  %6015 = vmatpush1.msra.mxu0 %v25
  %6016 = vmatprep.subr.mxu0 %v30
  %6017 = vmatpush1.msra.mxu0 %v29
  %6018 = vmatprep.subr.mxu0 %v34
  %6019 = vmatpush1.msra.mxu0 %v33
  %6020 = vmatprep.subr.mxu0 %v38
  %6021 = vmatpush1.msra.mxu0 %v37
  %6022 = vmatprep.subr.mxu0 %v42
  %6023 = vmatpush1.msra.mxu0 %v41
  %6024 = vmatprep.subr.mxu0 %v46
  %6025 = vmatpush1.msra.mxu0 %v45
  %6026 = vmatprep.subr.mxu0 %v50
  %6027 = vmatpush1.msra.mxu0 %v49
  %6028 = vmatprep.subr.mxu0 %v54
  %6029 = vmatpush1.msra.mxu0 %v53
  %6030 = vmatprep.subr.mxu0 %v58
  %6031 = vmatpush1.msra.mxu0 %v57
  %6032 = vmatprep.subr.mxu0 %v62
  %6033 = vmatpush1.msra.mxu0 %v61
  %6034 = vmatprep.subr.mxu0 %v66
  %6035 = vmatpush1.msra.mxu0 %v65
  %6036 = vmatprep.subr.mxu0 %v70
  %6037 = vmatpush1.msra.mxu0 %v69
  %6038 = vmatprep.subr.mxu0 %v74
  %6039 = vmatpush1.msra.mxu0 %v73
  %6040 = vmatprep.subr.mxu0 %v78
  %6041 = vmatpush1.msra.mxu0 %v77
  %6042 = vmatprep.subr.mxu0 %v82
  %6043 = vmatpush1.msra.mxu0 %v81
  %6044 = vmatprep.subr.mxu0 %v86
  %6045 = vmatpush1.msra.mxu0 %v85
  %6046 = vmatprep.subr.mxu0 0.0
  %6047 = vmatpush1.msra.mxu0 0.0
  %6048 = vmatprep.subr.mxu0 0.0
  %6049 = vmatpush1.msra.mxu0 0.0
  %6050 = vmatprep.subr.mxu0 0.0
  %6051 = vmatpush1.msra.mxu0 0.0
  %6052 = vmatprep.subr.mxu0 0.0
  %6053 = vmatpush1.msra.mxu0 0.0
  %6054 = vmatprep.subr.mxu0 0.0
  %6055 = vmatpush1.msra.mxu0 0.0
  %6056 = vmatprep.subr.mxu0 0.0
  %6057 = vmatpush1.msra.mxu0 0.0
  %6058 = vmatprep.subr.mxu0 0.0
  %6059 = vmatpush1.msra.mxu0 0.0
  %6060 = vmatprep.subr.mxu0 0.0
  %6061 = vmatpush1.msra.mxu0 0.0
  %6062 = vmatprep.subr.mxu0 0.0
  %6063 = vmatpush1.msra.mxu0 0.0
  %6064 = vmatprep.subr.mxu0 0.0
  %6065 = vmatpush1.msra.mxu0 0.0
  %6066 = vmatprep.subr.mxu0 0.0
  %6067 = vmatpush1.msra.mxu0 0.0
  %6068 = vmatprep.subr.mxu0 0.0
  %6069 = vmatpush1.msra.mxu0 0.0
  %6070 = vmatprep.subr.mxu0 0.0
  %6071 = vmatpush1.msra.mxu0 0.0
  %6072 = vmatprep.subr.mxu0 0.0
  %6073 = vmatpush1.msra.mxu0 0.0
  %6074 = vmatprep.subr.mxu0 0.0
  %6075 = vmatpush1.msra.mxu0 0.0
  %6076 = vmatprep.subr.mxu0 0.0
  %6077 = vmatpush1.msra.mxu0 0.0
  %6078 = vmatprep.mubr.f32.mxu0 0.0
  %6079 = vmatmul.mubr.f32.gmra.mrb[0].mxu0 %v6003
  %v6080 = vpop.f32.mrb[0].mxu0
  %v6081 = vadd.f32 0.0, %v6080
  %v6082 = vpop.f32.mrb[0].mxu0
  %v6083 = vadd.f32 0.0, %v6082
  %6084 = vmatprep.mubr.f32.mxu0 0.0
  %6085 = vmatmul.mubr.f32.gmra.mrb[0].mxu0 %v6004
  %v6086 = vpop.f32.mrb[0].mxu0
  %v6087 = vadd.f32 0.0, %v6086
  %v6088 = vpop.f32.mrb[0].mxu0
  %v6089 = vadd.f32 0.0, %v6088
  %6090 = vdwg.mxu0
  %6091 = vmatprep.subr.mxu0 %v28
  %6092 = vmatpush1.msra.mxu0 %v27
  %6093 = vmatprep.subr.mxu0 %v32
  %6094 = vmatpush1.msra.mxu0 %v31
  %6095 = vmatprep.subr.mxu0 %v36
  %6096 = vmatpush1.msra.mxu0 %v35
  %6097 = vmatprep.subr.mxu0 %v40
  %6098 = vmatpush1.msra.mxu0 %v39
  %6099 = vmatprep.subr.mxu0 %v44
  %6100 = vmatpush1.msra.mxu0 %v43
  %6101 = vmatprep.subr.mxu0 %v48
  %6102 = vmatpush1.msra.mxu0 %v47
  %6103 = vmatprep.subr.mxu0 %v52
  %6104 = vmatpush1.msra.mxu0 %v51
  %6105 = vmatprep.subr.mxu0 %v56
  %6106 = vmatpush1.msra.mxu0 %v55
  %6107 = vmatprep.subr.mxu0 %v60
  %6108 = vmatpush1.msra.mxu0 %v59
  %6109 = vmatprep.subr.mxu0 %v64
  %6110 = vmatpush1.msra.mxu0 %v63
  %6111 = vmatprep.subr.mxu0 %v68
  %6112 = vmatpush1.msra.mxu0 %v67
  %6113 = vmatprep.subr.mxu0 %v72
  %6114 = vmatpush1.msra.mxu0 %v71
  %6115 = vmatprep.subr.mxu0 %v76
  %6116 = vmatpush1.msra.mxu0 %v75
  %6117 = vmatprep.subr.mxu0 %v80
  %6118 = vmatpush1.msra.mxu0 %v79
  %6119 = vmatprep.subr.mxu0 %v84
  %6120 = vmatpush1.msra.mxu0 %v83
  %6121 = vmatprep.subr.mxu0 %v88
  %6122 = vmatpush1.msra.mxu0 %v87
  %6123 = vmatprep.subr.mxu0 0.0
  %6124 = vmatpush1.msra.mxu0 0.0
  %6125 = vmatprep.subr.mxu0 0.0
  %6126 = vmatpush1.msra.mxu0 0.0
  %6127 = vmatprep.subr.mxu0 0.0
  %6128 = vmatpush1.msra.mxu0 0.0
  %6129 = vmatprep.subr.mxu0 0.0
  %6130 = vmatpush1.msra.mxu0 0.0
  %6131 = vmatprep.subr.mxu0 0.0
  %6132 = vmatpush1.msra.mxu0 0.0
  %6133 = vmatprep.subr.mxu0 0.0
  %6134 = vmatpush1.msra.mxu0 0.0
  %6135 = vmatprep.subr.mxu0 0.0
  %6136 = vmatpush1.msra.mxu0 0.0
  %6137 = vmatprep.subr.mxu0 0.0
  %6138 = vmatpush1.msra.mxu0 0.0
  %6139 = vmatprep.subr.mxu0 0.0
  %6140 = vmatpush1.msra.mxu0 0.0
  %6141 = vmatprep.subr.mxu0 0.0
  %6142 = vmatpush1.msra.mxu0 0.0
  %6143 = vmatprep.subr.mxu0 0.0
  %6144 = vmatpush1.msra.mxu0 0.0
  %6145 = vmatprep.subr.mxu0 0.0
  %6146 = vmatpush1.msra.mxu0 0.0
  %6147 = vmatprep.subr.mxu0 0.0
  %6148 = vmatpush1.msra.mxu0 0.0
  %6149 = vmatprep.subr.mxu0 0.0
  %6150 = vmatpush1.msra.mxu0 0.0
  %6151 = vmatprep.subr.mxu0 0.0
  %6152 = vmatpush1.msra.mxu0 0.0
  %6153 = vmatprep.subr.mxu0 0.0
  %6154 = vmatpush1.msra.mxu0 0.0
  %6155 = vmatprep.mubr.f32.mxu0 0.0
  %6156 = vmatmul.mubr.f32.gmra.mrb[0].mxu0 %v6003
  %v6157 = vpop.f32.mrb[0].mxu0
  %v6158 = vadd.f32 0.0, %v6157
  %v6159 = vpop.f32.mrb[0].mxu0
  %v6160 = vadd.f32 0.0, %v6159
  %6161 = vmatprep.mubr.f32.mxu0 0.0
  %6162 = vmatmul.mubr.f32.gmra.mrb[0].mxu0 %v6004
  %v6163 = vpop.f32.mrb[0].mxu0
  %v6164 = vadd.f32 0.0, %v6163
  %v6165 = vpop.f32.mrb[0].mxu0
  %v6166 = vadd.f32 0.0, %v6165
  %6167 = vdwg.mxu0
  %v6168 = vadd.f32 %v6006, %v6081
  %v6169 = vadd.f32 %v6007, %v6083
  %v6170 = vadd.f32 %v6008, %v6158
  %v6171 = vadd.f32 %v6009, %v6160
  %v6172 = vadd.f32 %v6010, %v6087
  %v6173 = vadd.f32 %v6011, %v6089
  %v6174 = vadd.f32 %v6012, %v6164
  %v6175 = vadd.f32 %v6013, %v6166
  %v6176 = vxor.u32 %v6168, 2147483648
  %v6177 = vxor.u32 %v6169, 2147483648
  %v6178 = vxor.u32 %v6172, 2147483648
  %v6179 = vxor.u32 %v6173, 2147483648
  %v6180 = vmul.f32 %v6176, 1.442695
  %v6181 = vpow.pop %v6180
  %v6182 = vmul.f32 %v6177, 1.442695
  %v6183 = vpow.pop %v6182
  %v6184 = vmul.f32 %v6178, 1.442695
  %v6185 = vpow.pop %v6184
  %v6186 = vmul.f32 %v6179, 1.442695
  %v6187 = vpow.pop %v6186
  %v6188 = vadd.f32 %v6181, 1.0
  %v6189 = vadd.f32 %v6183, 1.0
  %v6190 = vadd.f32 %v6185, 1.0
  %v6191 = vadd.f32 %v6187, 1.0
  %v6192 = vrcp.pop %v6188
  %v6193 = vmul.f32 1.0, %v6192
  %v6194 = vrcp.pop %v6189
  %v6195 = vmul.f32 1.0, %v6194
  %v6196 = vrcp.pop %v6190
  %v6197 = vmul.f32 1.0, %v6196
  %v6198 = vrcp.pop %v6191
  %v6199 = vmul.f32 1.0, %v6198
  %v6200 = vtanh.pop %v6170
  %v6201 = vtanh.pop %v6174
  %v6202 = vxor.u32 %v6171, 2147483648
  %v6203 = vxor.u32 %v6175, 2147483648
  %v6204 = vmul.f32 %v6202, 1.442695
  %v6205 = vpow.pop %v6204
  %v6206 = vmul.f32 %v6203, 1.442695
  %v6207 = vpow.pop %v6206
  %v6208 = vadd.f32 %v6205, 1.0
  %v6209 = vadd.f32 %v6207, 1.0
  %v6210 = vrcp.pop %v6208
  %v6211 = vmul.f32 1.0, %v6210
  %v6212 = vrcp.pop %v6209
  %v6213 = vmul.f32 1.0, %v6212
  %v6214 = vmul.f32 %v6195, %v5999
  %v6215 = vmul.f32 %v6199, %v6000
  %v6216 = vmul.f32 %v6193, %v6200
  %v6217 = vmul.f32 %v6197, %v6201
  %v6218 = vadd.f32 %v6214, %v6216
  %v6219 = vadd.f32 %v6215, %v6217
  %v6220 = vtanh.pop %v6218
  %v6221 = vtanh.pop %v6219
  %v6222 = vmul.f32 %v6211, %v6220
  %v6223 = vmul.f32 %v6213, %v6221
  %s6224 = scalar_lea.vmem %s0, 1792
  %v6225 = vld [vmem:[%s6224] sm:$0xff]
  %v6226 = vld [vmem:[%s6224 + $0x8] sm:$0xff]
  %v6227 = vld [vmem:[%s6224 + $0x10] sm:$0xff]
  %v6228 = vld [vmem:[%s6224 + $0x18] sm:$0xff]
  %v6229 = vld [vmem:[%s6224 + $0x20] sm:$0xff]
  %v6230 = vld [vmem:[%s6224 + $0x28] sm:$0xff]
  %v6231 = vld [vmem:[%s6224 + $0x30] sm:$0xff]
  %v6232 = vld [vmem:[%s6224 + $0x38] sm:$0xff]
  %6233 = vmatprep.subr.mxu0 %v26
  %6234 = vmatpush1.msra.mxu0 %v25
  %6235 = vmatprep.subr.mxu0 %v30
  %6236 = vmatpush1.msra.mxu0 %v29
  %6237 = vmatprep.subr.mxu0 %v34
  %6238 = vmatpush1.msra.mxu0 %v33
  %6239 = vmatprep.subr.mxu0 %v38
  %6240 = vmatpush1.msra.mxu0 %v37
  %6241 = vmatprep.subr.mxu0 %v42
  %6242 = vmatpush1.msra.mxu0 %v41
  %6243 = vmatprep.subr.mxu0 %v46
  %6244 = vmatpush1.msra.mxu0 %v45
  %6245 = vmatprep.subr.mxu0 %v50
  %6246 = vmatpush1.msra.mxu0 %v49
  %6247 = vmatprep.subr.mxu0 %v54
  %6248 = vmatpush1.msra.mxu0 %v53
  %6249 = vmatprep.subr.mxu0 %v58
  %6250 = vmatpush1.msra.mxu0 %v57
  %6251 = vmatprep.subr.mxu0 %v62
  %6252 = vmatpush1.msra.mxu0 %v61
  %6253 = vmatprep.subr.mxu0 %v66
  %6254 = vmatpush1.msra.mxu0 %v65
  %6255 = vmatprep.subr.mxu0 %v70
  %6256 = vmatpush1.msra.mxu0 %v69
  %6257 = vmatprep.subr.mxu0 %v74
  %6258 = vmatpush1.msra.mxu0 %v73
  %6259 = vmatprep.subr.mxu0 %v78
  %6260 = vmatpush1.msra.mxu0 %v77
  %6261 = vmatprep.subr.mxu0 %v82
  %6262 = vmatpush1.msra.mxu0 %v81
  %6263 = vmatprep.subr.mxu0 %v86
  %6264 = vmatpush1.msra.mxu0 %v85
  %6265 = vmatprep.subr.mxu0 0.0
  %6266 = vmatpush1.msra.mxu0 0.0
  %6267 = vmatprep.subr.mxu0 0.0
  %6268 = vmatpush1.msra.mxu0 0.0
  %6269 = vmatprep.subr.mxu0 0.0
  %6270 = vmatpush1.msra.mxu0 0.0
  %6271 = vmatprep.subr.mxu0 0.0
  %6272 = vmatpush1.msra.mxu0 0.0
  %6273 = vmatprep.subr.mxu0 0.0
  %6274 = vmatpush1.msra.mxu0 0.0
  %6275 = vmatprep.subr.mxu0 0.0
  %6276 = vmatpush1.msra.mxu0 0.0
  %6277 = vmatprep.subr.mxu0 0.0
  %6278 = vmatpush1.msra.mxu0 0.0
  %6279 = vmatprep.subr.mxu0 0.0
  %6280 = vmatpush1.msra.mxu0 0.0
  %6281 = vmatprep.subr.mxu0 0.0
  %6282 = vmatpush1.msra.mxu0 0.0
  %6283 = vmatprep.subr.mxu0 0.0
  %6284 = vmatpush1.msra.mxu0 0.0
  %6285 = vmatprep.subr.mxu0 0.0
  %6286 = vmatpush1.msra.mxu0 0.0
  %6287 = vmatprep.subr.mxu0 0.0
  %6288 = vmatpush1.msra.mxu0 0.0
  %6289 = vmatprep.subr.mxu0 0.0
  %6290 = vmatpush1.msra.mxu0 0.0
  %6291 = vmatprep.subr.mxu0 0.0
  %6292 = vmatpush1.msra.mxu0 0.0
  %6293 = vmatprep.subr.mxu0 0.0
  %6294 = vmatpush1.msra.mxu0 0.0
  %6295 = vmatprep.subr.mxu0 0.0
  %6296 = vmatpush1.msra.mxu0 0.0
  %6297 = vmatprep.mubr.f32.mxu0 0.0
  %6298 = vmatmul.mubr.f32.gmra.mrb[0].mxu0 %v6222
  %v6299 = vpop.f32.mrb[0].mxu0
  %v6300 = vadd.f32 0.0, %v6299
  %v6301 = vpop.f32.mrb[0].mxu0
  %v6302 = vadd.f32 0.0, %v6301
  %6303 = vmatprep.mubr.f32.mxu0 0.0
  %6304 = vmatmul.mubr.f32.gmra.mrb[0].mxu0 %v6223
  %v6305 = vpop.f32.mrb[0].mxu0
  %v6306 = vadd.f32 0.0, %v6305
  %v6307 = vpop.f32.mrb[0].mxu0
  %v6308 = vadd.f32 0.0, %v6307
  %6309 = vdwg.mxu0
  %6310 = vmatprep.subr.mxu0 %v28
  %6311 = vmatpush1.msra.mxu0 %v27
  %6312 = vmatprep.subr.mxu0 %v32
  %6313 = vmatpush1.msra.mxu0 %v31
  %6314 = vmatprep.subr.mxu0 %v36
  %6315 = vmatpush1.msra.mxu0 %v35
  %6316 = vmatprep.subr.mxu0 %v40
  %6317 = vmatpush1.msra.mxu0 %v39
  %6318 = vmatprep.subr.mxu0 %v44
  %6319 = vmatpush1.msra.mxu0 %v43
  %6320 = vmatprep.subr.mxu0 %v48
  %6321 = vmatpush1.msra.mxu0 %v47
  %6322 = vmatprep.subr.mxu0 %v52
  %6323 = vmatpush1.msra.mxu0 %v51
  %6324 = vmatprep.subr.mxu0 %v56
  %6325 = vmatpush1.msra.mxu0 %v55
  %6326 = vmatprep.subr.mxu0 %v60
  %6327 = vmatpush1.msra.mxu0 %v59
  %6328 = vmatprep.subr.mxu0 %v64
  %6329 = vmatpush1.msra.mxu0 %v63
  %6330 = vmatprep.subr.mxu0 %v68
  %6331 = vmatpush1.msra.mxu0 %v67
  %6332 = vmatprep.subr.mxu0 %v72
  %6333 = vmatpush1.msra.mxu0 %v71
  %6334 = vmatprep.subr.mxu0 %v76
  %6335 = vmatpush1.msra.mxu0 %v75
  %6336 = vmatprep.subr.mxu0 %v80
  %6337 = vmatpush1.msra.mxu0 %v79
  %6338 = vmatprep.subr.mxu0 %v84
  %6339 = vmatpush1.msra.mxu0 %v83
  %6340 = vmatprep.subr.mxu0 %v88
  %6341 = vmatpush1.msra.mxu0 %v87
  %6342 = vmatprep.subr.mxu0 0.0
  %6343 = vmatpush1.msra.mxu0 0.0
  %6344 = vmatprep.subr.mxu0 0.0
  %6345 = vmatpush1.msra.mxu0 0.0
  %6346 = vmatprep.subr.mxu0 0.0
  %6347 = vmatpush1.msra.mxu0 0.0
  %6348 = vmatprep.subr.mxu0 0.0
  %6349 = vmatpush1.msra.mxu0 0.0
  %6350 = vmatprep.subr.mxu0 0.0
  %6351 = vmatpush1.msra.mxu0 0.0
  %6352 = vmatprep.subr.mxu0 0.0
  %6353 = vmatpush1.msra.mxu0 0.0
  %6354 = vmatprep.subr.mxu0 0.0
  %6355 = vmatpush1.msra.mxu0 0.0
  %6356 = vmatprep.subr.mxu0 0.0
  %6357 = vmatpush1.msra.mxu0 0.0
  %6358 = vmatprep.subr.mxu0 0.0
  %6359 = vmatpush1.msra.mxu0 0.0
  %6360 = vmatprep.subr.mxu0 0.0
  %6361 = vmatpush1.msra.mxu0 0.0
  %6362 = vmatprep.subr.mxu0 0.0
  %6363 = vmatpush1.msra.mxu0 0.0
  %6364 = vmatprep.subr.mxu0 0.0
  %6365 = vmatpush1.msra.mxu0 0.0
  %6366 = vmatprep.subr.mxu0 0.0
  %6367 = vmatpush1.msra.mxu0 0.0
  %6368 = vmatprep.subr.mxu0 0.0
  %6369 = vmatpush1.msra.mxu0 0.0
  %6370 = vmatprep.subr.mxu0 0.0
  %6371 = vmatpush1.msra.mxu0 0.0
  %6372 = vmatprep.subr.mxu0 0.0
  %6373 = vmatpush1.msra.mxu0 0.0
  %6374 = vmatprep.mubr.f32.mxu0 0.0
  %6375 = vmatmul.mubr.f32.gmra.mrb[0].mxu0 %v6222
  %v6376 = vpop.f32.mrb[0].mxu0
  %v6377 = vadd.f32 0.0, %v6376
  %v6378 = vpop.f32.mrb[0].mxu0
  %v6379 = vadd.f32 0.0, %v6378
  %6380 = vmatprep.mubr.f32.mxu0 0.0
  %6381 = vmatmul.mubr.f32.gmra.mrb[0].mxu0 %v6223
  %v6382 = vpop.f32.mrb[0].mxu0
  %v6383 = vadd.f32 0.0, %v6382
  %v6384 = vpop.f32.mrb[0].mxu0
  %v6385 = vadd.f32 0.0, %v6384
  %6386 = vdwg.mxu0
  %v6387 = vadd.f32 %v6225, %v6300
  %v6388 = vadd.f32 %v6226, %v6302
  %v6389 = vadd.f32 %v6227, %v6377
  %v6390 = vadd.f32 %v6228, %v6379
  %v6391 = vadd.f32 %v6229, %v6306
  %v6392 = vadd.f32 %v6230, %v6308
  %v6393 = vadd.f32 %v6231, %v6383
  %v6394 = vadd.f32 %v6232, %v6385
  %v6395 = vxor.u32 %v6387, 2147483648
  %v6396 = vxor.u32 %v6388, 2147483648
  %v6397 = vxor.u32 %v6391, 2147483648
  %v6398 = vxor.u32 %v6392, 2147483648
  %v6399 = vmul.f32 %v6395, 1.442695
  %v6400 = vpow.pop %v6399
  %v6401 = vmul.f32 %v6396, 1.442695
  %v6402 = vpow.pop %v6401
  %v6403 = vmul.f32 %v6397, 1.442695
  %v6404 = vpow.pop %v6403
  %v6405 = vmul.f32 %v6398, 1.442695
  %v6406 = vpow.pop %v6405
  %v6407 = vadd.f32 %v6400, 1.0
  %v6408 = vadd.f32 %v6402, 1.0
  %v6409 = vadd.f32 %v6404, 1.0
  %v6410 = vadd.f32 %v6406, 1.0
  %v6411 = vrcp.pop %v6407
  %v6412 = vmul.f32 1.0, %v6411
  %v6413 = vrcp.pop %v6408
  %v6414 = vmul.f32 1.0, %v6413
  %v6415 = vrcp.pop %v6409
  %v6416 = vmul.f32 1.0, %v6415
  %v6417 = vrcp.pop %v6410
  %v6418 = vmul.f32 1.0, %v6417
  %v6419 = vtanh.pop %v6389
  %v6420 = vtanh.pop %v6393
  %v6421 = vxor.u32 %v6390, 2147483648
  %v6422 = vxor.u32 %v6394, 2147483648
  %v6423 = vmul.f32 %v6421, 1.442695
  %v6424 = vpow.pop %v6423
  %v6425 = vmul.f32 %v6422, 1.442695
  %v6426 = vpow.pop %v6425
  %v6427 = vadd.f32 %v6424, 1.0
  %v6428 = vadd.f32 %v6426, 1.0
  %v6429 = vrcp.pop %v6427
  %v6430 = vmul.f32 1.0, %v6429
  %v6431 = vrcp.pop %v6428
  %v6432 = vmul.f32 1.0, %v6431
  %v6433 = vmul.f32 %v6414, %v6218
  %v6434 = vmul.f32 %v6418, %v6219
  %v6435 = vmul.f32 %v6412, %v6419
  %v6436 = vmul.f32 %v6416, %v6420
  %v6437 = vadd.f32 %v6433, %v6435
  %v6438 = vadd.f32 %v6434, %v6436
  %v6439 = vtanh.pop %v6437
  %v6440 = vtanh.pop %v6438
  %v6441 = vmul.f32 %v6430, %v6439
  %v6442 = vmul.f32 %v6432, %v6440
  %s6443 = scalar_lea.vmem %s0, 1856
  %v6444 = vld [vmem:[%s6443] sm:$0xff]
  %v6445 = vld [vmem:[%s6443 + $0x8] sm:$0xff]
  %v6446 = vld [vmem:[%s6443 + $0x10] sm:$0xff]
  %v6447 = vld [vmem:[%s6443 + $0x18] sm:$0xff]
  %v6448 = vld [vmem:[%s6443 + $0x20] sm:$0xff]
  %v6449 = vld [vmem:[%s6443 + $0x28] sm:$0xff]
  %v6450 = vld [vmem:[%s6443 + $0x30] sm:$0xff]
  %v6451 = vld [vmem:[%s6443 + $0x38] sm:$0xff]
  %6452 = vmatprep.subr.mxu0 %v26
  %6453 = vmatpush1.msra.mxu0 %v25
  %6454 = vmatprep.subr.mxu0 %v30
  %6455 = vmatpush1.msra.mxu0 %v29
  %6456 = vmatprep.subr.mxu0 %v34
  %6457 = vmatpush1.msra.mxu0 %v33
  %6458 = vmatprep.subr.mxu0 %v38
  %6459 = vmatpush1.msra.mxu0 %v37
  %6460 = vmatprep.subr.mxu0 %v42
  %6461 = vmatpush1.msra.mxu0 %v41
  %6462 = vmatprep.subr.mxu0 %v46
  %6463 = vmatpush1.msra.mxu0 %v45
  %6464 = vmatprep.subr.mxu0 %v50
  %6465 = vmatpush1.msra.mxu0 %v49
  %6466 = vmatprep.subr.mxu0 %v54
  %6467 = vmatpush1.msra.mxu0 %v53
  %6468 = vmatprep.subr.mxu0 %v58
  %6469 = vmatpush1.msra.mxu0 %v57
  %6470 = vmatprep.subr.mxu0 %v62
  %6471 = vmatpush1.msra.mxu0 %v61
  %6472 = vmatprep.subr.mxu0 %v66
  %6473 = vmatpush1.msra.mxu0 %v65
  %6474 = vmatprep.subr.mxu0 %v70
  %6475 = vmatpush1.msra.mxu0 %v69
  %6476 = vmatprep.subr.mxu0 %v74
  %6477 = vmatpush1.msra.mxu0 %v73
  %6478 = vmatprep.subr.mxu0 %v78
  %6479 = vmatpush1.msra.mxu0 %v77
  %6480 = vmatprep.subr.mxu0 %v82
  %6481 = vmatpush1.msra.mxu0 %v81
  %6482 = vmatprep.subr.mxu0 %v86
  %6483 = vmatpush1.msra.mxu0 %v85
  %6484 = vmatprep.subr.mxu0 0.0
  %6485 = vmatpush1.msra.mxu0 0.0
  %6486 = vmatprep.subr.mxu0 0.0
  %6487 = vmatpush1.msra.mxu0 0.0
  %6488 = vmatprep.subr.mxu0 0.0
  %6489 = vmatpush1.msra.mxu0 0.0
  %6490 = vmatprep.subr.mxu0 0.0
  %6491 = vmatpush1.msra.mxu0 0.0
  %6492 = vmatprep.subr.mxu0 0.0
  %6493 = vmatpush1.msra.mxu0 0.0
  %6494 = vmatprep.subr.mxu0 0.0
  %6495 = vmatpush1.msra.mxu0 0.0
  %6496 = vmatprep.subr.mxu0 0.0
  %6497 = vmatpush1.msra.mxu0 0.0
  %6498 = vmatprep.subr.mxu0 0.0
  %6499 = vmatpush1.msra.mxu0 0.0
  %6500 = vmatprep.subr.mxu0 0.0
  %6501 = vmatpush1.msra.mxu0 0.0
  %6502 = vmatprep.subr.mxu0 0.0
  %6503 = vmatpush1.msra.mxu0 0.0
  %6504 = vmatprep.subr.mxu0 0.0
  %6505 = vmatpush1.msra.mxu0 0.0
  %6506 = vmatprep.subr.mxu0 0.0
  %6507 = vmatpush1.msra.mxu0 0.0
  %6508 = vmatprep.subr.mxu0 0.0
  %6509 = vmatpush1.msra.mxu0 0.0
  %6510 = vmatprep.subr.mxu0 0.0
  %6511 = vmatpush1.msra.mxu0 0.0
  %6512 = vmatprep.subr.mxu0 0.0
  %6513 = vmatpush1.msra.mxu0 0.0
  %6514 = vmatprep.subr.mxu0 0.0
  %6515 = vmatpush1.msra.mxu0 0.0
  %6516 = vmatprep.mubr.f32.mxu0 0.0
  %6517 = vmatmul.mubr.f32.gmra.mrb[0].mxu0 %v6441
  %v6518 = vpop.f32.mrb[0].mxu0
  %v6519 = vadd.f32 0.0, %v6518
  %v6520 = vpop.f32.mrb[0].mxu0
  %v6521 = vadd.f32 0.0, %v6520
  %6522 = vmatprep.mubr.f32.mxu0 0.0
  %6523 = vmatmul.mubr.f32.gmra.mrb[0].mxu0 %v6442
  %v6524 = vpop.f32.mrb[0].mxu0
  %v6525 = vadd.f32 0.0, %v6524
  %v6526 = vpop.f32.mrb[0].mxu0
  %v6527 = vadd.f32 0.0, %v6526
  %6528 = vdwg.mxu0
  %6529 = vmatprep.subr.mxu0 %v28
  %6530 = vmatpush1.msra.mxu0 %v27
  %6531 = vmatprep.subr.mxu0 %v32
  %6532 = vmatpush1.msra.mxu0 %v31
  %6533 = vmatprep.subr.mxu0 %v36
  %6534 = vmatpush1.msra.mxu0 %v35
  %6535 = vmatprep.subr.mxu0 %v40
  %6536 = vmatpush1.msra.mxu0 %v39
  %6537 = vmatprep.subr.mxu0 %v44
  %6538 = vmatpush1.msra.mxu0 %v43
  %6539 = vmatprep.subr.mxu0 %v48
  %6540 = vmatpush1.msra.mxu0 %v47
  %6541 = vmatprep.subr.mxu0 %v52
  %6542 = vmatpush1.msra.mxu0 %v51
  %6543 = vmatprep.subr.mxu0 %v56
  %6544 = vmatpush1.msra.mxu0 %v55
  %6545 = vmatprep.subr.mxu0 %v60
  %6546 = vmatpush1.msra.mxu0 %v59
  %6547 = vmatprep.subr.mxu0 %v64
  %6548 = vmatpush1.msra.mxu0 %v63
  %6549 = vmatprep.subr.mxu0 %v68
  %6550 = vmatpush1.msra.mxu0 %v67
  %6551 = vmatprep.subr.mxu0 %v72
  %6552 = vmatpush1.msra.mxu0 %v71
  %6553 = vmatprep.subr.mxu0 %v76
  %6554 = vmatpush1.msra.mxu0 %v75
  %6555 = vmatprep.subr.mxu0 %v80
  %6556 = vmatpush1.msra.mxu0 %v79
  %6557 = vmatprep.subr.mxu0 %v84
  %6558 = vmatpush1.msra.mxu0 %v83
  %6559 = vmatprep.subr.mxu0 %v88
  %6560 = vmatpush1.msra.mxu0 %v87
  %6561 = vmatprep.subr.mxu0 0.0
  %6562 = vmatpush1.msra.mxu0 0.0
  %6563 = vmatprep.subr.mxu0 0.0
  %6564 = vmatpush1.msra.mxu0 0.0
  %6565 = vmatprep.subr.mxu0 0.0
  %6566 = vmatpush1.msra.mxu0 0.0
  %6567 = vmatprep.subr.mxu0 0.0
  %6568 = vmatpush1.msra.mxu0 0.0
  %6569 = vmatprep.subr.mxu0 0.0
  %6570 = vmatpush1.msra.mxu0 0.0
  %6571 = vmatprep.subr.mxu0 0.0
  %6572 = vmatpush1.msra.mxu0 0.0
  %6573 = vmatprep.subr.mxu0 0.0
  %6574 = vmatpush1.msra.mxu0 0.0
  %6575 = vmatprep.subr.mxu0 0.0
  %6576 = vmatpush1.msra.mxu0 0.0
  %6577 = vmatprep.subr.mxu0 0.0
  %6578 = vmatpush1.msra.mxu0 0.0
  %6579 = vmatprep.subr.mxu0 0.0
  %6580 = vmatpush1.msra.mxu0 0.0
  %6581 = vmatprep.subr.mxu0 0.0
  %6582 = vmatpush1.msra.mxu0 0.0
  %6583 = vmatprep.subr.mxu0 0.0
  %6584 = vmatpush1.msra.mxu0 0.0
  %6585 = vmatprep.subr.mxu0 0.0
  %6586 = vmatpush1.msra.mxu0 0.0
  %6587 = vmatprep.subr.mxu0 0.0
  %6588 = vmatpush1.msra.mxu0 0.0
  %6589 = vmatprep.subr.mxu0 0.0
  %6590 = vmatpush1.msra.mxu0 0.0
  %6591 = vmatprep.subr.mxu0 0.0
  %6592 = vmatpush1.msra.mxu0 0.0
  %6593 = vmatprep.mubr.f32.mxu0 0.0
  %6594 = vmatmul.mubr.f32.gmra.mrb[0].mxu0 %v6441
  %v6595 = vpop.f32.mrb[0].mxu0
  %v6596 = vadd.f32 0.0, %v6595
  %v6597 = vpop.f32.mrb[0].mxu0
  %v6598 = vadd.f32 0.0, %v6597
  %6599 = vmatprep.mubr.f32.mxu0 0.0
  %6600 = vmatmul.mubr.f32.gmra.mrb[0].mxu0 %v6442
  %v6601 = vpop.f32.mrb[0].mxu0
  %v6602 = vadd.f32 0.0, %v6601
  %v6603 = vpop.f32.mrb[0].mxu0
  %v6604 = vadd.f32 0.0, %v6603
  %6605 = vdwg.mxu0
  %v6606 = vadd.f32 %v6444, %v6519
  %v6607 = vadd.f32 %v6445, %v6521
  %v6608 = vadd.f32 %v6446, %v6596
  %v6609 = vadd.f32 %v6447, %v6598
  %v6610 = vadd.f32 %v6448, %v6525
  %v6611 = vadd.f32 %v6449, %v6527
  %v6612 = vadd.f32 %v6450, %v6602
  %v6613 = vadd.f32 %v6451, %v6604
  %v6614 = vxor.u32 %v6606, 2147483648
  %v6615 = vxor.u32 %v6607, 2147483648
  %v6616 = vxor.u32 %v6610, 2147483648
  %v6617 = vxor.u32 %v6611, 2147483648
  %v6618 = vmul.f32 %v6614, 1.442695
  %v6619 = vpow.pop %v6618
  %v6620 = vmul.f32 %v6615, 1.442695
  %v6621 = vpow.pop %v6620
  %v6622 = vmul.f32 %v6616, 1.442695
  %v6623 = vpow.pop %v6622
  %v6624 = vmul.f32 %v6617, 1.442695
  %v6625 = vpow.pop %v6624
  %v6626 = vadd.f32 %v6619, 1.0
  %v6627 = vadd.f32 %v6621, 1.0
  %v6628 = vadd.f32 %v6623, 1.0
  %v6629 = vadd.f32 %v6625, 1.0
  %v6630 = vrcp.pop %v6626
  %v6631 = vmul.f32 1.0, %v6630
  %v6632 = vrcp.pop %v6627
  %v6633 = vmul.f32 1.0, %v6632
  %v6634 = vrcp.pop %v6628
  %v6635 = vmul.f32 1.0, %v6634
  %v6636 = vrcp.pop %v6629
  %v6637 = vmul.f32 1.0, %v6636
  %v6638 = vtanh.pop %v6608
  %v6639 = vtanh.pop %v6612
  %v6640 = vxor.u32 %v6609, 2147483648
  %v6641 = vxor.u32 %v6613, 2147483648
  %v6642 = vmul.f32 %v6640, 1.442695
  %v6643 = vpow.pop %v6642
  %v6644 = vmul.f32 %v6641, 1.442695
  %v6645 = vpow.pop %v6644
  %v6646 = vadd.f32 %v6643, 1.0
  %v6647 = vadd.f32 %v6645, 1.0
  %v6648 = vrcp.pop %v6646
  %v6649 = vmul.f32 1.0, %v6648
  %v6650 = vrcp.pop %v6647
  %v6651 = vmul.f32 1.0, %v6650
  %v6652 = vmul.f32 %v6633, %v6437
  %v6653 = vmul.f32 %v6637, %v6438
  %v6654 = vmul.f32 %v6631, %v6638
  %v6655 = vmul.f32 %v6635, %v6639
  %v6656 = vadd.f32 %v6652, %v6654
  %v6657 = vadd.f32 %v6653, %v6655
  %v6658 = vtanh.pop %v6656
  %v6659 = vtanh.pop %v6657
  %v6660 = vmul.f32 %v6649, %v6658
  %v6661 = vmul.f32 %v6651, %v6659
  %s6662 = scalar_lea.vmem %s0, 1920
  %v6663 = vld [vmem:[%s6662] sm:$0xff]
  %v6664 = vld [vmem:[%s6662 + $0x8] sm:$0xff]
  %v6665 = vld [vmem:[%s6662 + $0x10] sm:$0xff]
  %v6666 = vld [vmem:[%s6662 + $0x18] sm:$0xff]
  %v6667 = vld [vmem:[%s6662 + $0x20] sm:$0xff]
  %v6668 = vld [vmem:[%s6662 + $0x28] sm:$0xff]
  %v6669 = vld [vmem:[%s6662 + $0x30] sm:$0xff]
  %v6670 = vld [vmem:[%s6662 + $0x38] sm:$0xff]
  %6671 = vmatprep.subr.mxu0 %v26
  %6672 = vmatpush1.msra.mxu0 %v25
  %6673 = vmatprep.subr.mxu0 %v30
  %6674 = vmatpush1.msra.mxu0 %v29
  %6675 = vmatprep.subr.mxu0 %v34
  %6676 = vmatpush1.msra.mxu0 %v33
  %6677 = vmatprep.subr.mxu0 %v38
  %6678 = vmatpush1.msra.mxu0 %v37
  %6679 = vmatprep.subr.mxu0 %v42
  %6680 = vmatpush1.msra.mxu0 %v41
  %6681 = vmatprep.subr.mxu0 %v46
  %6682 = vmatpush1.msra.mxu0 %v45
  %6683 = vmatprep.subr.mxu0 %v50
  %6684 = vmatpush1.msra.mxu0 %v49
  %6685 = vmatprep.subr.mxu0 %v54
  %6686 = vmatpush1.msra.mxu0 %v53
  %6687 = vmatprep.subr.mxu0 %v58
  %6688 = vmatpush1.msra.mxu0 %v57
  %6689 = vmatprep.subr.mxu0 %v62
  %6690 = vmatpush1.msra.mxu0 %v61
  %6691 = vmatprep.subr.mxu0 %v66
  %6692 = vmatpush1.msra.mxu0 %v65
  %6693 = vmatprep.subr.mxu0 %v70
  %6694 = vmatpush1.msra.mxu0 %v69
  %6695 = vmatprep.subr.mxu0 %v74
  %6696 = vmatpush1.msra.mxu0 %v73
  %6697 = vmatprep.subr.mxu0 %v78
  %6698 = vmatpush1.msra.mxu0 %v77
  %6699 = vmatprep.subr.mxu0 %v82
  %6700 = vmatpush1.msra.mxu0 %v81
  %6701 = vmatprep.subr.mxu0 %v86
  %6702 = vmatpush1.msra.mxu0 %v85
  %6703 = vmatprep.subr.mxu0 0.0
  %6704 = vmatpush1.msra.mxu0 0.0
  %6705 = vmatprep.subr.mxu0 0.0
  %6706 = vmatpush1.msra.mxu0 0.0
  %6707 = vmatprep.subr.mxu0 0.0
  %6708 = vmatpush1.msra.mxu0 0.0
  %6709 = vmatprep.subr.mxu0 0.0
  %6710 = vmatpush1.msra.mxu0 0.0
  %6711 = vmatprep.subr.mxu0 0.0
  %6712 = vmatpush1.msra.mxu0 0.0
  %6713 = vmatprep.subr.mxu0 0.0
  %6714 = vmatpush1.msra.mxu0 0.0
  %6715 = vmatprep.subr.mxu0 0.0
  %6716 = vmatpush1.msra.mxu0 0.0
  %6717 = vmatprep.subr.mxu0 0.0
  %6718 = vmatpush1.msra.mxu0 0.0
  %6719 = vmatprep.subr.mxu0 0.0
  %6720 = vmatpush1.msra.mxu0 0.0
  %6721 = vmatprep.subr.mxu0 0.0
  %6722 = vmatpush1.msra.mxu0 0.0
  %6723 = vmatprep.subr.mxu0 0.0
  %6724 = vmatpush1.msra.mxu0 0.0
  %6725 = vmatprep.subr.mxu0 0.0
  %6726 = vmatpush1.msra.mxu0 0.0
  %6727 = vmatprep.subr.mxu0 0.0
  %6728 = vmatpush1.msra.mxu0 0.0
  %6729 = vmatprep.subr.mxu0 0.0
  %6730 = vmatpush1.msra.mxu0 0.0
  %6731 = vmatprep.subr.mxu0 0.0
  %6732 = vmatpush1.msra.mxu0 0.0
  %6733 = vmatprep.subr.mxu0 0.0
  %6734 = vmatpush1.msra.mxu0 0.0
  %6735 = vmatprep.mubr.f32.mxu0 0.0
  %6736 = vmatmul.mubr.f32.gmra.mrb[0].mxu0 %v6660
  %v6737 = vpop.f32.mrb[0].mxu0
  %v6738 = vadd.f32 0.0, %v6737
  %v6739 = vpop.f32.mrb[0].mxu0
  %v6740 = vadd.f32 0.0, %v6739
  %6741 = vmatprep.mubr.f32.mxu0 0.0
  %6742 = vmatmul.mubr.f32.gmra.mrb[0].mxu0 %v6661
  %v6743 = vpop.f32.mrb[0].mxu0
  %v6744 = vadd.f32 0.0, %v6743
  %v6745 = vpop.f32.mrb[0].mxu0
  %v6746 = vadd.f32 0.0, %v6745
  %6747 = vdwg.mxu0
  %6748 = vmatprep.subr.mxu0 %v28
  %6749 = vmatpush1.msra.mxu0 %v27
  %6750 = vmatprep.subr.mxu0 %v32
  %6751 = vmatpush1.msra.mxu0 %v31
  %6752 = vmatprep.subr.mxu0 %v36
  %6753 = vmatpush1.msra.mxu0 %v35
  %6754 = vmatprep.subr.mxu0 %v40
  %6755 = vmatpush1.msra.mxu0 %v39
  %6756 = vmatprep.subr.mxu0 %v44
  %6757 = vmatpush1.msra.mxu0 %v43
  %6758 = vmatprep.subr.mxu0 %v48
  %6759 = vmatpush1.msra.mxu0 %v47
  %6760 = vmatprep.subr.mxu0 %v52
  %6761 = vmatpush1.msra.mxu0 %v51
  %6762 = vmatprep.subr.mxu0 %v56
  %6763 = vmatpush1.msra.mxu0 %v55
  %6764 = vmatprep.subr.mxu0 %v60
  %6765 = vmatpush1.msra.mxu0 %v59
  %6766 = vmatprep.subr.mxu0 %v64
  %6767 = vmatpush1.msra.mxu0 %v63
  %6768 = vmatprep.subr.mxu0 %v68
  %6769 = vmatpush1.msra.mxu0 %v67
  %6770 = vmatprep.subr.mxu0 %v72
  %6771 = vmatpush1.msra.mxu0 %v71
  %6772 = vmatprep.subr.mxu0 %v76
  %6773 = vmatpush1.msra.mxu0 %v75
  %6774 = vmatprep.subr.mxu0 %v80
  %6775 = vmatpush1.msra.mxu0 %v79
  %6776 = vmatprep.subr.mxu0 %v84
  %6777 = vmatpush1.msra.mxu0 %v83
  %6778 = vmatprep.subr.mxu0 %v88
  %6779 = vmatpush1.msra.mxu0 %v87
  %6780 = vmatprep.subr.mxu0 0.0
  %6781 = vmatpush1.msra.mxu0 0.0
  %6782 = vmatprep.subr.mxu0 0.0
  %6783 = vmatpush1.msra.mxu0 0.0
  %6784 = vmatprep.subr.mxu0 0.0
  %6785 = vmatpush1.msra.mxu0 0.0
  %6786 = vmatprep.subr.mxu0 0.0
  %6787 = vmatpush1.msra.mxu0 0.0
  %6788 = vmatprep.subr.mxu0 0.0
  %6789 = vmatpush1.msra.mxu0 0.0
  %6790 = vmatprep.subr.mxu0 0.0
  %6791 = vmatpush1.msra.mxu0 0.0
  %6792 = vmatprep.subr.mxu0 0.0
  %6793 = vmatpush1.msra.mxu0 0.0
  %6794 = vmatprep.subr.mxu0 0.0
  %6795 = vmatpush1.msra.mxu0 0.0
  %6796 = vmatprep.subr.mxu0 0.0
  %6797 = vmatpush1.msra.mxu0 0.0
  %6798 = vmatprep.subr.mxu0 0.0
  %6799 = vmatpush1.msra.mxu0 0.0
  %6800 = vmatprep.subr.mxu0 0.0
  %6801 = vmatpush1.msra.mxu0 0.0
  %6802 = vmatprep.subr.mxu0 0.0
  %6803 = vmatpush1.msra.mxu0 0.0
  %6804 = vmatprep.subr.mxu0 0.0
  %6805 = vmatpush1.msra.mxu0 0.0
  %6806 = vmatprep.subr.mxu0 0.0
  %6807 = vmatpush1.msra.mxu0 0.0
  %6808 = vmatprep.subr.mxu0 0.0
  %6809 = vmatpush1.msra.mxu0 0.0
  %6810 = vmatprep.subr.mxu0 0.0
  %6811 = vmatpush1.msra.mxu0 0.0
  %6812 = vmatprep.mubr.f32.mxu0 0.0
  %6813 = vmatmul.mubr.f32.gmra.mrb[0].mxu0 %v6660
  %v6814 = vpop.f32.mrb[0].mxu0
  %v6815 = vadd.f32 0.0, %v6814
  %v6816 = vpop.f32.mrb[0].mxu0
  %v6817 = vadd.f32 0.0, %v6816
  %6818 = vmatprep.mubr.f32.mxu0 0.0
  %6819 = vmatmul.mubr.f32.gmra.mrb[0].mxu0 %v6661
  %v6820 = vpop.f32.mrb[0].mxu0
  %v6821 = vadd.f32 0.0, %v6820
  %v6822 = vpop.f32.mrb[0].mxu0
  %v6823 = vadd.f32 0.0, %v6822
  %6824 = vdwg.mxu0
  %v6825 = vadd.f32 %v6663, %v6738
  %v6826 = vadd.f32 %v6664, %v6740
  %v6827 = vadd.f32 %v6665, %v6815
  %v6828 = vadd.f32 %v6666, %v6817
  %v6829 = vadd.f32 %v6667, %v6744
  %v6830 = vadd.f32 %v6668, %v6746
  %v6831 = vadd.f32 %v6669, %v6821
  %v6832 = vadd.f32 %v6670, %v6823
  %v6833 = vxor.u32 %v6825, 2147483648
  %v6834 = vxor.u32 %v6826, 2147483648
  %v6835 = vxor.u32 %v6829, 2147483648
  %v6836 = vxor.u32 %v6830, 2147483648
  %v6837 = vmul.f32 %v6833, 1.442695
  %v6838 = vpow.pop %v6837
  %v6839 = vmul.f32 %v6834, 1.442695
  %v6840 = vpow.pop %v6839
  %v6841 = vmul.f32 %v6835, 1.442695
  %v6842 = vpow.pop %v6841
  %v6843 = vmul.f32 %v6836, 1.442695
  %v6844 = vpow.pop %v6843
  %v6845 = vadd.f32 %v6838, 1.0
  %v6846 = vadd.f32 %v6840, 1.0
  %v6847 = vadd.f32 %v6842, 1.0
  %v6848 = vadd.f32 %v6844, 1.0
  %v6849 = vrcp.pop %v6845
  %v6850 = vmul.f32 1.0, %v6849
  %v6851 = vrcp.pop %v6846
  %v6852 = vmul.f32 1.0, %v6851
  %v6853 = vrcp.pop %v6847
  %v6854 = vmul.f32 1.0, %v6853
  %v6855 = vrcp.pop %v6848
  %v6856 = vmul.f32 1.0, %v6855
  %v6857 = vtanh.pop %v6827
  %v6858 = vtanh.pop %v6831
  %v6859 = vxor.u32 %v6828, 2147483648
  %v6860 = vxor.u32 %v6832, 2147483648
  %v6861 = vmul.f32 %v6859, 1.442695
  %v6862 = vpow.pop %v6861
  %v6863 = vmul.f32 %v6860, 1.442695
  %v6864 = vpow.pop %v6863
  %v6865 = vadd.f32 %v6862, 1.0
  %v6866 = vadd.f32 %v6864, 1.0
  %v6867 = vrcp.pop %v6865
  %v6868 = vmul.f32 1.0, %v6867
  %v6869 = vrcp.pop %v6866
  %v6870 = vmul.f32 1.0, %v6869
  %v6871 = vmul.f32 %v6852, %v6656
  %v6872 = vmul.f32 %v6856, %v6657
  %v6873 = vmul.f32 %v6850, %v6857
  %v6874 = vmul.f32 %v6854, %v6858
  %v6875 = vadd.f32 %v6871, %v6873
  %v6876 = vadd.f32 %v6872, %v6874
  %v6877 = vtanh.pop %v6875
  %v6878 = vtanh.pop %v6876
  %v6879 = vmul.f32 %v6868, %v6877
  %v6880 = vmul.f32 %v6870, %v6878
  %s6881 = scalar_lea.vmem %s0, 1984
  %v6882 = vld [vmem:[%s6881] sm:$0xff]
  %v6883 = vld [vmem:[%s6881 + $0x8] sm:$0xff]
  %v6884 = vld [vmem:[%s6881 + $0x10] sm:$0xff]
  %v6885 = vld [vmem:[%s6881 + $0x18] sm:$0xff]
  %v6886 = vld [vmem:[%s6881 + $0x20] sm:$0xff]
  %v6887 = vld [vmem:[%s6881 + $0x28] sm:$0xff]
  %v6888 = vld [vmem:[%s6881 + $0x30] sm:$0xff]
  %v6889 = vld [vmem:[%s6881 + $0x38] sm:$0xff]
  %6890 = vmatprep.subr.mxu0 %v26
  %6891 = vmatpush1.msra.mxu0 %v25
  %6892 = vmatprep.subr.mxu0 %v30
  %6893 = vmatpush1.msra.mxu0 %v29
  %6894 = vmatprep.subr.mxu0 %v34
  %6895 = vmatpush1.msra.mxu0 %v33
  %6896 = vmatprep.subr.mxu0 %v38
  %6897 = vmatpush1.msra.mxu0 %v37
  %6898 = vmatprep.subr.mxu0 %v42
  %6899 = vmatpush1.msra.mxu0 %v41
  %6900 = vmatprep.subr.mxu0 %v46
  %6901 = vmatpush1.msra.mxu0 %v45
  %6902 = vmatprep.subr.mxu0 %v50
  %6903 = vmatpush1.msra.mxu0 %v49
  %6904 = vmatprep.subr.mxu0 %v54
  %6905 = vmatpush1.msra.mxu0 %v53
  %6906 = vmatprep.subr.mxu0 %v58
  %6907 = vmatpush1.msra.mxu0 %v57
  %6908 = vmatprep.subr.mxu0 %v62
  %6909 = vmatpush1.msra.mxu0 %v61
  %6910 = vmatprep.subr.mxu0 %v66
  %6911 = vmatpush1.msra.mxu0 %v65
  %6912 = vmatprep.subr.mxu0 %v70
  %6913 = vmatpush1.msra.mxu0 %v69
  %6914 = vmatprep.subr.mxu0 %v74
  %6915 = vmatpush1.msra.mxu0 %v73
  %6916 = vmatprep.subr.mxu0 %v78
  %6917 = vmatpush1.msra.mxu0 %v77
  %6918 = vmatprep.subr.mxu0 %v82
  %6919 = vmatpush1.msra.mxu0 %v81
  %6920 = vmatprep.subr.mxu0 %v86
  %6921 = vmatpush1.msra.mxu0 %v85
  %6922 = vmatprep.subr.mxu0 0.0
  %6923 = vmatpush1.msra.mxu0 0.0
  %6924 = vmatprep.subr.mxu0 0.0
  %6925 = vmatpush1.msra.mxu0 0.0
  %6926 = vmatprep.subr.mxu0 0.0
  %6927 = vmatpush1.msra.mxu0 0.0
  %6928 = vmatprep.subr.mxu0 0.0
  %6929 = vmatpush1.msra.mxu0 0.0
  %6930 = vmatprep.subr.mxu0 0.0
  %6931 = vmatpush1.msra.mxu0 0.0
  %6932 = vmatprep.subr.mxu0 0.0
  %6933 = vmatpush1.msra.mxu0 0.0
  %6934 = vmatprep.subr.mxu0 0.0
  %6935 = vmatpush1.msra.mxu0 0.0
  %6936 = vmatprep.subr.mxu0 0.0
  %6937 = vmatpush1.msra.mxu0 0.0
  %6938 = vmatprep.subr.mxu0 0.0
  %6939 = vmatpush1.msra.mxu0 0.0
  %6940 = vmatprep.subr.mxu0 0.0
  %6941 = vmatpush1.msra.mxu0 0.0
  %6942 = vmatprep.subr.mxu0 0.0
  %6943 = vmatpush1.msra.mxu0 0.0
  %6944 = vmatprep.subr.mxu0 0.0
  %6945 = vmatpush1.msra.mxu0 0.0
  %6946 = vmatprep.subr.mxu0 0.0
  %6947 = vmatpush1.msra.mxu0 0.0
  %6948 = vmatprep.subr.mxu0 0.0
  %6949 = vmatpush1.msra.mxu0 0.0
  %6950 = vmatprep.subr.mxu0 0.0
  %6951 = vmatpush1.msra.mxu0 0.0
  %6952 = vmatprep.subr.mxu0 0.0
  %6953 = vmatpush1.msra.mxu0 0.0
  %6954 = vmatprep.mubr.f32.mxu0 0.0
  %6955 = vmatmul.mubr.f32.gmra.mrb[0].mxu0 %v6879
  %v6956 = vpop.f32.mrb[0].mxu0
  %v6957 = vadd.f32 0.0, %v6956
  %v6958 = vpop.f32.mrb[0].mxu0
  %v6959 = vadd.f32 0.0, %v6958
  %6960 = vmatprep.mubr.f32.mxu0 0.0
  %6961 = vmatmul.mubr.f32.gmra.mrb[0].mxu0 %v6880
  %v6962 = vpop.f32.mrb[0].mxu0
  %v6963 = vadd.f32 0.0, %v6962
  %v6964 = vpop.f32.mrb[0].mxu0
  %v6965 = vadd.f32 0.0, %v6964
  %6966 = vdwg.mxu0
  %6967 = vmatprep.subr.mxu0 %v28
  %6968 = vmatpush1.msra.mxu0 %v27
  %6969 = vmatprep.subr.mxu0 %v32
  %6970 = vmatpush1.msra.mxu0 %v31
  %6971 = vmatprep.subr.mxu0 %v36
  %6972 = vmatpush1.msra.mxu0 %v35
  %6973 = vmatprep.subr.mxu0 %v40
  %6974 = vmatpush1.msra.mxu0 %v39
  %6975 = vmatprep.subr.mxu0 %v44
  %6976 = vmatpush1.msra.mxu0 %v43
  %6977 = vmatprep.subr.mxu0 %v48
  %6978 = vmatpush1.msra.mxu0 %v47
  %6979 = vmatprep.subr.mxu0 %v52
  %6980 = vmatpush1.msra.mxu0 %v51
  %6981 = vmatprep.subr.mxu0 %v56
  %6982 = vmatpush1.msra.mxu0 %v55
  %6983 = vmatprep.subr.mxu0 %v60
  %6984 = vmatpush1.msra.mxu0 %v59
  %6985 = vmatprep.subr.mxu0 %v64
  %6986 = vmatpush1.msra.mxu0 %v63
  %6987 = vmatprep.subr.mxu0 %v68
  %6988 = vmatpush1.msra.mxu0 %v67
  %6989 = vmatprep.subr.mxu0 %v72
  %6990 = vmatpush1.msra.mxu0 %v71
  %6991 = vmatprep.subr.mxu0 %v76
  %6992 = vmatpush1.msra.mxu0 %v75
  %6993 = vmatprep.subr.mxu0 %v80
  %6994 = vmatpush1.msra.mxu0 %v79
  %6995 = vmatprep.subr.mxu0 %v84
  %6996 = vmatpush1.msra.mxu0 %v83
  %6997 = vmatprep.subr.mxu0 %v88
  %6998 = vmatpush1.msra.mxu0 %v87
  %6999 = vmatprep.subr.mxu0 0.0
  %7000 = vmatpush1.msra.mxu0 0.0
  %7001 = vmatprep.subr.mxu0 0.0
  %7002 = vmatpush1.msra.mxu0 0.0
  %7003 = vmatprep.subr.mxu0 0.0
  %7004 = vmatpush1.msra.mxu0 0.0
  %7005 = vmatprep.subr.mxu0 0.0
  %7006 = vmatpush1.msra.mxu0 0.0
  %7007 = vmatprep.subr.mxu0 0.0
  %7008 = vmatpush1.msra.mxu0 0.0
  %7009 = vmatprep.subr.mxu0 0.0
  %7010 = vmatpush1.msra.mxu0 0.0
  %7011 = vmatprep.subr.mxu0 0.0
  %7012 = vmatpush1.msra.mxu0 0.0
  %7013 = vmatprep.subr.mxu0 0.0
  %7014 = vmatpush1.msra.mxu0 0.0
  %7015 = vmatprep.subr.mxu0 0.0
  %7016 = vmatpush1.msra.mxu0 0.0
  %7017 = vmatprep.subr.mxu0 0.0
  %7018 = vmatpush1.msra.mxu0 0.0
  %7019 = vmatprep.subr.mxu0 0.0
  %7020 = vmatpush1.msra.mxu0 0.0
  %7021 = vmatprep.subr.mxu0 0.0
  %7022 = vmatpush1.msra.mxu0 0.0
  %7023 = vmatprep.subr.mxu0 0.0
  %7024 = vmatpush1.msra.mxu0 0.0
  %7025 = vmatprep.subr.mxu0 0.0
  %7026 = vmatpush1.msra.mxu0 0.0
  %7027 = vmatprep.subr.mxu0 0.0
  %7028 = vmatpush1.msra.mxu0 0.0
  %7029 = vmatprep.subr.mxu0 0.0
  %7030 = vmatpush1.msra.mxu0 0.0
  %7031 = vmatprep.mubr.f32.mxu0 0.0
  %7032 = vmatmul.mubr.f32.gmra.mrb[0].mxu0 %v6879
  %v7033 = vpop.f32.mrb[0].mxu0
  %v7034 = vadd.f32 0.0, %v7033
  %v7035 = vpop.f32.mrb[0].mxu0
  %v7036 = vadd.f32 0.0, %v7035
  %7037 = vmatprep.mubr.f32.mxu0 0.0
  %7038 = vmatmul.mubr.f32.gmra.mrb[0].mxu0 %v6880
  %v7039 = vpop.f32.mrb[0].mxu0
  %v7040 = vadd.f32 0.0, %v7039
  %v7041 = vpop.f32.mrb[0].mxu0
  %v7042 = vadd.f32 0.0, %v7041
  %7043 = vdwg.mxu0
  %v7044 = vadd.f32 %v6882, %v6957
  %v7045 = vadd.f32 %v6883, %v6959
  %v7046 = vadd.f32 %v6884, %v7034
  %v7047 = vadd.f32 %v6885, %v7036
  %v7048 = vadd.f32 %v6886, %v6963
  %v7049 = vadd.f32 %v6887, %v6965
  %v7050 = vadd.f32 %v6888, %v7040
  %v7051 = vadd.f32 %v6889, %v7042
  %v7052 = vxor.u32 %v7044, 2147483648
  %v7053 = vxor.u32 %v7045, 2147483648
  %v7054 = vxor.u32 %v7048, 2147483648
  %v7055 = vxor.u32 %v7049, 2147483648
  %v7056 = vmul.f32 %v7052, 1.442695
  %v7057 = vpow.pop %v7056
  %v7058 = vmul.f32 %v7053, 1.442695
  %v7059 = vpow.pop %v7058
  %v7060 = vmul.f32 %v7054, 1.442695
  %v7061 = vpow.pop %v7060
  %v7062 = vmul.f32 %v7055, 1.442695
  %v7063 = vpow.pop %v7062
  %v7064 = vadd.f32 %v7057, 1.0
  %v7065 = vadd.f32 %v7059, 1.0
  %v7066 = vadd.f32 %v7061, 1.0
  %v7067 = vadd.f32 %v7063, 1.0
  %v7068 = vrcp.pop %v7064
  %v7069 = vmul.f32 1.0, %v7068
  %v7070 = vrcp.pop %v7065
  %v7071 = vmul.f32 1.0, %v7070
  %v7072 = vrcp.pop %v7066
  %v7073 = vmul.f32 1.0, %v7072
  %v7074 = vrcp.pop %v7067
  %v7075 = vmul.f32 1.0, %v7074
  %v7076 = vtanh.pop %v7046
  %v7077 = vtanh.pop %v7050
  %v7078 = vxor.u32 %v7047, 2147483648
  %v7079 = vxor.u32 %v7051, 2147483648
  %v7080 = vmul.f32 %v7078, 1.442695
  %v7081 = vpow.pop %v7080
  %v7082 = vmul.f32 %v7079, 1.442695
  %v7083 = vpow.pop %v7082
  %v7084 = vadd.f32 %v7081, 1.0
  %v7085 = vadd.f32 %v7083, 1.0
  %v7086 = vrcp.pop %v7084
  %v7087 = vmul.f32 1.0, %v7086
  %v7088 = vrcp.pop %v7085
  %v7089 = vmul.f32 1.0, %v7088
  %v7090 = vmul.f32 %v7071, %v6875
  %v7091 = vmul.f32 %v7075, %v6876
  %v7092 = vmul.f32 %v7069, %v7076
  %v7093 = vmul.f32 %v7073, %v7077
  %v7094 = vadd.f32 %v7090, %v7092
  %v7095 = vadd.f32 %v7091, %v7093
  %v7096 = vtanh.pop %v7094
  %v7097 = vtanh.pop %v7095
  %v7098 = vmul.f32 %v7087, %v7096
  %v7099 = vmul.f32 %v7089, %v7097
  %7100 = vst [vmem:[#allocation2] sm:$0xff] %v7098
  %7101 = vst [vmem:[#allocation2 + $0x8] sm:$0xff] %v7099
  %7102 = vst [vmem:[#allocation3] sm:$0xff] %v7094
  %7103 = vst [vmem:[#allocation3 + $0x8] sm:$0xff] %v7095
  // Predicated region
  $region22: #{sentence_classifier_forward.1} parent=0 // pred_check
    %p7104 = pneg %p17
  $region23: #{sentence_classifier_forward.1} parent=0 // pred_check_branch
    %7106 = sbr.rel (%p7104) target = $region25
  $region24: #{sentence_classifier_forward.1} parent=0 // pred_region
    %v7107 = vld [vmem:[#allocation2] sm:$0xff]
    %v7108 = vld [vmem:[#allocation2 + $0x8] sm:$0xff]
    %v7109 = vld [vmem:[%s2] sm:$0xff]
    %v7110 = vld [vmem:[%s2 + $0x8] sm:$0xff]
    %v7111 = vld [vmem:[%s2 + $0x10] sm:$0xff]
    %v7112 = vld [vmem:[%s2 + $0x18] sm:$0xff]
    %v7113 = vld [vmem:[%s2 + $0x20] sm:$0xff]
    %v7114 = vld [vmem:[%s2 + $0x28] sm:$0xff]
    %v7115 = vld [vmem:[%s2 + $0x30] sm:$0xff]
    %v7116 = vld [vmem:[%s2 + $0x38] sm:$0xff]
    %v7117 = vld [vmem:[%s2 + $0x40] sm:$0xff]
    %v7118 = vld [vmem:[%s2 + $0x48] sm:$0xff]
    %v7119 = vld [vmem:[%s2 + $0x50] sm:$0xff]
    %v7120 = vld [vmem:[%s2 + $0x58] sm:$0xff]
    %v7121 = vld [vmem:[%s2 + $0x60] sm:$0xff]
    %v7122 = vld [vmem:[%s2 + $0x68] sm:$0xff]
    %v7123 = vld [vmem:[%s2 + $0x70] sm:$0xff]
    %v7124 = vld [vmem:[%s2 + $0x78] sm:$0xff]
    %v7125 = vld [vmem:[%s3] sm:$0x1]
    %v7127 = vlaneseq
    %v7128 = vshrl.u32 %v7127, 7
    %v7129 = vsub.s32 0, %v7128
    %v7130 = vrot.slane %v7125, %v7129
    %7132 = vmatprep.subr.mxu0 0.0
    %7133 = vmatpush1.msra.mxu0 %v7109
    %7134 = vmatprep.subr.mxu0 0.0
    %7135 = vmatpush1.msra.mxu0 %v7110
    %7136 = vmatprep.subr.mxu0 0.0
    %7137 = vmatpush1.msra.mxu0 %v7111
    %7138 = vmatprep.subr.mxu0 0.0
    %7139 = vmatpush1.msra.mxu0 %v7112
    %7140 = vmatprep.subr.mxu0 0.0
    %7141 = vmatpush1.msra.mxu0 %v7113
    %7142 = vmatprep.subr.mxu0 0.0
    %7143 = vmatpush1.msra.mxu0 %v7114
    %7144 = vmatprep.subr.mxu0 0.0
    %7145 = vmatpush1.msra.mxu0 %v7115
    %7146 = vmatprep.subr.mxu0 0.0
    %7147 = vmatpush1.msra.mxu0 %v7116
    %7148 = vmatprep.subr.mxu0 0.0
    %7149 = vmatpush1.msra.mxu0 %v7117
    %7150 = vmatprep.subr.mxu0 0.0
    %7151 = vmatpush1.msra.mxu0 %v7118
    %7152 = vmatprep.subr.mxu0 0.0
    %7153 = vmatpush1.msra.mxu0 %v7119
    %7154 = vmatprep.subr.mxu0 0.0
    %7155 = vmatpush1.msra.mxu0 %v7120
    %7156 = vmatprep.subr.mxu0 0.0
    %7157 = vmatpush1.msra.mxu0 %v7121
    %7158 = vmatprep.subr.mxu0 0.0
    %7159 = vmatpush1.msra.mxu0 %v7122
    %7160 = vmatprep.subr.mxu0 0.0
    %7161 = vmatpush1.msra.mxu0 %v7123
    %7162 = vmatprep.subr.mxu0 0.0
    %7163 = vmatpush1.msra.mxu0 %v7124
    %7164 = vmatprep.subr.mxu0 0.0
    %7165 = vmatpush1.msra.mxu0 0.0
    %7166 = vmatprep.subr.mxu0 0.0
    %7167 = vmatpush1.msra.mxu0 0.0
    %7168 = vmatprep.subr.mxu0 0.0
    %7169 = vmatpush1.msra.mxu0 0.0
    %7170 = vmatprep.subr.mxu0 0.0
    %7171 = vmatpush1.msra.mxu0 0.0
    %7172 = vmatprep.subr.mxu0 0.0
    %7173 = vmatpush1.msra.mxu0 0.0
    %7174 = vmatprep.subr.mxu0 0.0
    %7175 = vmatpush1.msra.mxu0 0.0
    %7176 = vmatprep.subr.mxu0 0.0
    %7177 = vmatpush1.msra.mxu0 0.0
    %7178 = vmatprep.subr.mxu0 0.0
    %7179 = vmatpush1.msra.mxu0 0.0
    %7180 = vmatprep.subr.mxu0 0.0
    %7181 = vmatpush1.msra.mxu0 0.0
    %7182 = vmatprep.subr.mxu0 0.0
    %7183 = vmatpush1.msra.mxu0 0.0
    %7184 = vmatprep.subr.mxu0 0.0
    %7185 = vmatpush1.msra.mxu0 0.0
    %7186 = vmatprep.subr.mxu0 0.0
    %7187 = vmatpush1.msra.mxu0 0.0
    %7188 = vmatprep.subr.mxu0 0.0
    %7189 = vmatpush1.msra.mxu0 0.0
    %7190 = vmatprep.subr.mxu0 0.0
    %7191 = vmatpush1.msra.mxu0 0.0
    %7192 = vmatprep.subr.mxu0 0.0
    %7193 = vmatpush1.msra.mxu0 0.0
    %7194 = vmatprep.subr.mxu0 0.0
    %7195 = vmatpush1.msra.mxu0 0.0
    %7196 = vmatprep.mubr.f32.mxu0 0.0
    %7197 = vmatmul.mubr.f32.gmra.mrb[0].mxu0 %v7107
    %v7198 = vpop.f32.mrb[0].mxu0
    %v7199 = vadd.f32 %v7130, %v7198
    %v7200 = vpop.f32.mrb[0].mxu0
    %7201 = vmatprep.mubr.f32.mxu0 0.0
    %7202 = vmatmul.mubr.f32.gmra.mrb[0].mxu0 %v7108
    %v7203 = vpop.f32.mrb[0].mxu0
    %v7204 = vadd.f32 %v7130, %v7203
    %v7205 = vpop.f32.mrb[0].mxu0
    %7206 = vdwg.mxu0
    %7207 = vst [vmem:[%s4] sm:$0xff] %v7199
    %7208 = vst [vmem:[%s4 + $0x8] sm:$0xff] %v7204
  $region25: #{sentence_classifier_forward.1} parent=0 // pred_fallthru
    _
  // Predicated region
  $region26: #{sentence_classifier_forward.1} parent=0 // pred_check
    _
  $region27: #{sentence_classifier_forward.1} parent=0 // pred_check_branch
    %7210 = sbr.rel (0) target = $region29
  $region28: #{sentence_classifier_forward.1} parent=0 // pred_region
    _
  $region29: #{sentence_classifier_forward.1} parent=0 // pred_fallthru
    _
  // Predicated region
  $region30: #{sentence_classifier_forward.1} parent=0 // pred_check
    _
  $region31: #{sentence_classifier_forward.1} parent=0 // pred_check_branch
    %7212 = sbr.rel (0) target = $region33
  $region32: #{sentence_classifier_forward.1} parent=0 // pred_region
    _
  $region33: #{sentence_classifier_forward.1} parent=0 // pred_fallthru
    _

</llo_original>
